<compile_context>
chip_gen: v7x
topology: tpu7x:2x2x1
jax: 0.10.0
libtpu: 0.0.40
codegen_flags: <defaults>
</compile_context>

<pallas_src>
import functools

import numpy as np
import jax
import jax.numpy as jnp
from jax import lax
from jax.experimental import pallas as pl
from jax.experimental.pallas import tpu as pltpu


C_PAD = 128  # lane-dense channel width used for all intermediate activations


# ----------------------------------------------------------------------------
# Trace-time constants
# ----------------------------------------------------------------------------
@functools.lru_cache(maxsize=None)
def _selection_matrices(n, h, w, k, stride, pad):
    """0/1 matrices S[t] (t = i*k + j) with
       S[t][(n,oh,ow), (n,h,w)] = 1  iff  h = stride*oh + i - pad, w = stride*ow + j - pad
    (zero rows encode the conv's zero padding).  (S[t] @ act) is the im2col tap."""
    ho = (h + 2 * pad - k) // stride + 1
    wo = (w + 2 * pad - k) // stride + 1
    s = np.zeros((k * k, n * ho * wo, n * h * w), np.float32)
    for i in range(k):
        for j in range(k):
            t = i * k + j
            for b in range(n):
                for oh in range(ho):
                    for ow in range(wo):
                        hh = stride * oh + i - pad
                        ww = stride * ow + j - pad
                        if 0 <= hh < h and 0 <= ww < w:
                            s[t, b * ho * wo + oh * wo + ow,
                              b * h * w + hh * w + ww] = 1.0
    return s


@functools.lru_cache(maxsize=None)
def _batch_reduce_matrix(n, rows_per_image):
    """0/1 matrix (N, N*rows) summing the per-pixel partial sums of each image."""
    r = np.zeros((n, n * rows_per_image), np.float32)
    for b in range(n):
        r[b, b * rows_per_image:(b + 1) * rows_per_image] = 1.0
    return r


# ----------------------------------------------------------------------------
# Fused Pallas kernel: conv1+ReLU -> conv2+ReLU -> conv3+ReLU -> conv4+Sigmoid
# ----------------------------------------------------------------------------
def _fused_kernel(cols1_ref, w1_ref, s2_ref, w2_ref, s3_ref, w3_ref,
                  w4_ref, rsel_ref, o_ref):
    f32, bf16 = jnp.float32, jnp.bfloat16

    # ---- conv1 + ReLU (im2col rows prepared outside; one lane-dense MXU matmul)
    act1 = jnp.dot(cols1_ref[...], w1_ref[...], preferred_element_type=f32)
    act1 = jnp.maximum(act1, 0.0).astype(bf16)                     # (N*256, 128)

    # ---- conv2 + ReLU: sum over 16 taps of (S_t @ act1) @ W2_t  (all 2-D MXU dots)
    rows2 = s2_ref.shape[1]
    acc2 = jnp.zeros((rows2, C_PAD), f32)
    for t in range(16):
        sel = jnp.dot(s2_ref[t], act1, preferred_element_type=f32).astype(bf16)
        acc2 = acc2 + jnp.dot(sel, w2_ref[t], preferred_element_type=f32)
    act2 = jnp.maximum(acc2, 0.0).astype(bf16)                     # (N*64, 128)

    # ---- conv3 + ReLU: 9 taps
    rows3 = s3_ref.shape[1]
    acc3 = jnp.zeros((rows3, C_PAD), f32)
    for t in range(9):
        sel = jnp.dot(s3_ref[t], act2, preferred_element_type=f32).astype(bf16)
        acc3 = acc3 + jnp.dot(sel, w3_ref[t], preferred_element_type=f32)
    act3 = jnp.maximum(acc3, 0.0)                                  # (N*16, 128) f32

    # ---- conv4 + Sigmoid: full 4x4x128 window -> VPU multiply + lane reduction
    #      (avoids a 1-output-lane MXU matmul), then a tiny per-image row combine.
    prod = act3 * w4_ref[...]                                      # (N*16, 128)
    row_sums = jnp.sum(prod, axis=1, keepdims=True)                # (N*16, 1)
    logits = jnp.dot(rsel_ref[...], row_sums, preferred_element_type=f32)  # (N, 1)
    o_ref[...] = (1.0 / (1.0 + jnp.exp(-logits))).astype(o_ref.dtype)


# ----------------------------------------------------------------------------
# Parameters (PyTorch layout) and one-time kernel-ready packing
# ----------------------------------------------------------------------------
def init_params(key):
    """Raw parameters in PyTorch Conv2d layout (Cout, Cin, kh, kw), bias=False."""
    k1, k2, k3, k4 = jax.random.split(key, 4)
    scale = 0.05  # deterministic synthetic init (not a checkpoint load)
    return {
        "conv1": scale * jax.random.normal(k1, (32, 1, 4, 4), jnp.float32),
        "conv2": scale * jax.random.normal(k2, (64, 32, 4, 4), jnp.float32),
        "conv3": scale * jax.random.normal(k3, (128, 64, 3, 3), jnp.float32),
        "conv4": scale * jax.random.normal(k4, (1, 128, 4, 4), jnp.float32),
    }


def pack_params(raw):
    """One-time repack: PyTorch-layout weights -> kernel-ready, channel-padded (128),
    bf16 matrices.  Hoisted out of the forward pass."""
    w1, w2, w3, w4 = raw["conv1"], raw["conv2"], raw["conv3"], raw["conv4"]
    # conv1: (32,1,4,4) -> (16,32) with rows ordered i*4+j, zero-padded to (128,128)
    w1m = w1.reshape(32, 16).T
    w1p = jnp.zeros((C_PAD, C_PAD), jnp.float32).at[:16, :32].set(w1m)
    # conv2: per tap (i,j): (Cin=32, Cout=64) -> padded (16, 128, 128)
    w2t = jnp.transpose(w2, (2, 3, 1, 0)).reshape(16, 32, 64)
    w2p = jnp.zeros((16, C_PAD, C_PAD), jnp.float32).at[:, :32, :64].set(w2t)
    # conv3: per tap (i,j): (Cin=64, Cout=128) -> padded (9, 128, 128)
    w3t = jnp.transpose(w3, (2, 3, 1, 0)).reshape(9, 64, 128)
    w3p = jnp.zeros((9, C_PAD, C_PAD), jnp.float32).at[:, :64, :].set(w3t)
    # conv4: (1,128,4,4) -> (16,128) with [i*4+j, c] = w4[0, c, i, j]
    w4flat = jnp.transpose(w4[0], (1, 2, 0)).reshape(16, 128)
    return {
        "w1": w1p.astype(jnp.bfloat16),
        "w2": w2p.astype(jnp.bfloat16),
        "w3": w3p.astype(jnp.bfloat16),
        "w4flat": w4flat.astype(jnp.float32),   # used on the VPU in f32
    }


# ----------------------------------------------------------------------------
# Host-side glue: im2col of the raw input for conv1 only (XLA-fused preprocessing)
# ----------------------------------------------------------------------------
def _im2col_conv1(x):
    """x: (N, 1, 32, 32) -> rows (N*16*16, 16) for conv1 (4x4, stride 2, pad 1)."""
    n, c, h, w = x.shape
    assert c == 1 and h == 32 and w == 32, "CNNDiscriminator expects (N, 1, 32, 32)"
    k, stride, pad = 4, 2, 1
    ho = wo = 16
    xp = jnp.pad(x[:, 0], ((0, 0), (pad, pad), (pad, pad)))        # (N, 34, 34)
    taps = []
    for i in range(k):
        for j in range(k):
            taps.append(xp[:, i:i + stride * ho:stride, j:j + stride * wo:stride])
    cols = jnp.stack(taps, axis=-1)                                # (N,16,16,16), tap=i*4+j
    return cols.reshape(n * ho * wo, k * k)


# ----------------------------------------------------------------------------
# Forward pass: one fused pallas_call
# ----------------------------------------------------------------------------
@jax.jit
def cnn_discriminator_forward(packed, x):
    n = x.shape[0]
    cols1 = _im2col_conv1(x)                                       # (N*256, 16)
    cols1 = jnp.pad(cols1, ((0, 0), (0, C_PAD - cols1.shape[1])))  # lane-dense K=128
    cols1 = cols1.astype(jnp.bfloat16)

    # Trace-time constants (0/1 matrices, exact in bf16); embedded once per batch size.
    s2 = jnp.asarray(_selection_matrices(n, 16, 16, 4, 2, 1), jnp.bfloat16)
    s3 = jnp.asarray(_selection_matrices(n, 8, 8, 3, 2, 1), jnp.bfloat16)
    rsel = jnp.asarray(_batch_reduce_matrix(n, 16), jnp.float32)
    w4tile = jnp.tile(packed["w4flat"], (n, 1))                    # (N*16, 128)

    full = lambda shape: pl.BlockSpec(shape, lambda: (0,) * len(shape))
    out = pl.pallas_call(
        _fused_kernel,
        out_shape=jax.ShapeDtypeStruct((n, 1), jnp.float32),
        in_specs=[
            full(cols1.shape),
            full(packed["w1"].shape),
            full(s2.shape),
            full(packed["w2"].shape),
            full(s3.shape),
            full(packed["w3"].shape),
            full(w4tile.shape),
            full(rsel.shape),
        ],
        out_specs=full((n, 1)),
        compiler_params=pltpu.CompilerParams(vmem_limit_bytes=32 * 1024 * 1024),
    )(cols1, packed["w1"], s2, packed["w2"], s3, packed["w3"], w4tile, rsel)
    return out  # (N, 1)  == out.view(-1, 1)


# ----------------------------------------------------------------------------
# Pure-JAX reference (f32) for correctness checking
# ----------------------------------------------------------------------------
def reference_forward(raw, x):
    def conv(v, w, stride, pad):
        return lax.conv_general_dilated(
            v, w, (stride, stride), [(pad, pad), (pad, pad)],
            dimension_numbers=("NCHW", "OIHW", "NCHW"),
            precision=lax.Precision.HIGHEST)
    out = jax.nn.relu(conv(x, raw["conv1"], 2, 1))
    out = jax.nn.relu(conv(out, raw["conv2"], 2, 1))
    out = jax.nn.relu(conv(out, raw["conv3"], 2, 1))
    out = jax.nn.sigmoid(conv(out, raw["conv4"], 1, 0))
    return out.reshape(-1, 1)


if __name__ == "__main__":
    key = jax.random.PRNGKey(0)
    pkey, xkey = jax.random.split(key)
    raw = init_params(pkey)
    packed = pack_params(raw)

    # 32x32 single-channel input -> (N, 1) sigmoid scores
    x = jax.random.normal(xkey, (2, 1, 32, 32), jnp.float32)

    out = cnn_discriminator_forward(packed, x)
    out = jax.block_until_ready(out)

    assert out.shape == (2, 1), out.shape
    assert bool(jnp.all((out >= 0.0) & (out <= 1.0)))

    # bf16 matmul operands / f32 accumulation -> loose tolerance vs f32 reference.
    ref = reference_forward(raw, x)
    np.testing.assert_allclose(np.asarray(out), np.asarray(ref), atol=2.5e-2, rtol=0.0)

    print("KERNEL_OK")
</pallas_src>

<mosaic_0001>
module attributes {stable_mosaic.version = 11 : i64} {
  func.func @_fused_kernel(%arg0: memref<512x128xbf16, #tpu.memory_space<vmem>>, %arg1: memref<128x128xbf16, #tpu.memory_space<vmem>>, %arg2: memref<16x128x512xbf16, #tpu.memory_space<vmem>>, %arg3: memref<16x128x128xbf16, #tpu.memory_space<vmem>>, %arg4: memref<9x32x128xbf16, #tpu.memory_space<vmem>>, %arg5: memref<9x128x128xbf16, #tpu.memory_space<vmem>>, %arg6: memref<32x128xf32, #tpu.memory_space<vmem>>, %arg7: memref<2x32xf32, #tpu.memory_space<vmem>>, %arg8: memref<2x1xf32, #tpu.memory_space<vmem>>) attributes {dimension_semantics = [], scalar_prefetch = 0 : i64, scratch_operands = 0 : i64, tpu.core_type = #tpu.core_type<tc>} {
    %c0 = arith.constant 0 : index
    %c0_0 = arith.constant 0 : index
    %0 = vector.load %arg0[%c0, %c0_0] : memref<512x128xbf16, #tpu.memory_space<vmem>>, vector<512x128xbf16>
    %c0_1 = arith.constant 0 : index
    %c0_2 = arith.constant 0 : index
    %1 = vector.load %arg1[%c0_1, %c0_2] : memref<128x128xbf16, #tpu.memory_space<vmem>>, vector<128x128xbf16>
    %cst = arith.constant dense<0.000000e+00> : vector<512x128xf32>
    %2 = tpu.matmul %0, %1, %cst {dimension_numbers = #tpu.dot_dimension_numbers<[1], [0], [0], [1], [0, 0, 1, 1], [], []>} : vector<512x128xbf16>, vector<128x128xbf16>, vector<512x128xf32> -> vector<512x128xf32>
    %cst_3 = arith.constant 0.000000e+00 : f32
    %3 = vector.broadcast %cst_3 : f32 to vector<512x128xf32>
    %4 = arith.maximumf %2, %3 : vector<512x128xf32>
    %5 = arith.truncf %4 : vector<512x128xf32> to vector<512x128xbf16>
    %cst_4 = arith.constant 0.000000e+00 : f32
    %6 = vector.broadcast %cst_4 : f32 to vector<128x128xf32>
    %c0_5 = arith.constant 0 : index
    %c0_6 = arith.constant 0 : index
    %c0_7 = arith.constant 0 : index
    %7 = vector.load %arg2[%c0_5, %c0_6, %c0_7] : memref<16x128x512xbf16, #tpu.memory_space<vmem>>, vector<1x128x512xbf16>
    %8 = vector.shape_cast %7 : vector<1x128x512xbf16> to vector<128x512xbf16>
    %cst_8 = arith.constant dense<0.000000e+00> : vector<128x128xf32>
    %9 = tpu.matmul %8, %5, %cst_8 {dimension_numbers = #tpu.dot_dimension_numbers<[1], [0], [0], [1], [0, 0, 1, 1], [], []>} : vector<128x512xbf16>, vector<512x128xbf16>, vector<128x128xf32> -> vector<128x128xf32>
    %10 = arith.truncf %9 : vector<128x128xf32> to vector<128x128xbf16>
    %c0_9 = arith.constant 0 : index
    %c0_10 = arith.constant 0 : index
    %c0_11 = arith.constant 0 : index
    %11 = vector.load %arg3[%c0_9, %c0_10, %c0_11] : memref<16x128x128xbf16, #tpu.memory_space<vmem>>, vector<1x128x128xbf16>
    %12 = vector.shape_cast %11 : vector<1x128x128xbf16> to vector<128x128xbf16>
    %cst_12 = arith.constant dense<0.000000e+00> : vector<128x128xf32>
    %13 = tpu.matmul %10, %12, %cst_12 {dimension_numbers = #tpu.dot_dimension_numbers<[1], [0], [0], [1], [0, 0, 1, 1], [], []>} : vector<128x128xbf16>, vector<128x128xbf16>, vector<128x128xf32> -> vector<128x128xf32>
    %14 = arith.addf %6, %13 : vector<128x128xf32>
    %c1 = arith.constant 1 : index
    %c0_13 = arith.constant 0 : index
    %c0_14 = arith.constant 0 : index
    %15 = vector.load %arg2[%c1, %c0_13, %c0_14] : memref<16x128x512xbf16, #tpu.memory_space<vmem>>, vector<1x128x512xbf16>
    %16 = vector.shape_cast %15 : vector<1x128x512xbf16> to vector<128x512xbf16>
    %cst_15 = arith.constant dense<0.000000e+00> : vector<128x128xf32>
    %17 = tpu.matmul %16, %5, %cst_15 {dimension_numbers = #tpu.dot_dimension_numbers<[1], [0], [0], [1], [0, 0, 1, 1], [], []>} : vector<128x512xbf16>, vector<512x128xbf16>, vector<128x128xf32> -> vector<128x128xf32>
    %18 = arith.truncf %17 : vector<128x128xf32> to vector<128x128xbf16>
    %c1_16 = arith.constant 1 : index
    %c0_17 = arith.constant 0 : index
    %c0_18 = arith.constant 0 : index
    %19 = vector.load %arg3[%c1_16, %c0_17, %c0_18] : memref<16x128x128xbf16, #tpu.memory_space<vmem>>, vector<1x128x128xbf16>
    %20 = vector.shape_cast %19 : vector<1x128x128xbf16> to vector<128x128xbf16>
    %cst_19 = arith.constant dense<0.000000e+00> : vector<128x128xf32>
    %21 = tpu.matmul %18, %20, %cst_19 {dimension_numbers = #tpu.dot_dimension_numbers<[1], [0], [0], [1], [0, 0, 1, 1], [], []>} : vector<128x128xbf16>, vector<128x128xbf16>, vector<128x128xf32> -> vector<128x128xf32>
    %22 = arith.addf %14, %21 : vector<128x128xf32>
    %c2 = arith.constant 2 : index
    %c0_20 = arith.constant 0 : index
    %c0_21 = arith.constant 0 : index
    %23 = vector.load %arg2[%c2, %c0_20, %c0_21] : memref<16x128x512xbf16, #tpu.memory_space<vmem>>, vector<1x128x512xbf16>
    %24 = vector.shape_cast %23 : vector<1x128x512xbf16> to vector<128x512xbf16>
    %cst_22 = arith.constant dense<0.000000e+00> : vector<128x128xf32>
    %25 = tpu.matmul %24, %5, %cst_22 {dimension_numbers = #tpu.dot_dimension_numbers<[1], [0], [0], [1], [0, 0, 1, 1], [], []>} : vector<128x512xbf16>, vector<512x128xbf16>, vector<128x128xf32> -> vector<128x128xf32>
    %26 = arith.truncf %25 : vector<128x128xf32> to vector<128x128xbf16>
    %c2_23 = arith.constant 2 : index
    %c0_24 = arith.constant 0 : index
    %c0_25 = arith.constant 0 : index
    %27 = vector.load %arg3[%c2_23, %c0_24, %c0_25] : memref<16x128x128xbf16, #tpu.memory_space<vmem>>, vector<1x128x128xbf16>
    %28 = vector.shape_cast %27 : vector<1x128x128xbf16> to vector<128x128xbf16>
    %cst_26 = arith.constant dense<0.000000e+00> : vector<128x128xf32>
    %29 = tpu.matmul %26, %28, %cst_26 {dimension_numbers = #tpu.dot_dimension_numbers<[1], [0], [0], [1], [0, 0, 1, 1], [], []>} : vector<128x128xbf16>, vector<128x128xbf16>, vector<128x128xf32> -> vector<128x128xf32>
    %30 = arith.addf %22, %29 : vector<128x128xf32>
    %c3 = arith.constant 3 : index
    %c0_27 = arith.constant 0 : index
    %c0_28 = arith.constant 0 : index
    %31 = vector.load %arg2[%c3, %c0_27, %c0_28] : memref<16x128x512xbf16, #tpu.memory_space<vmem>>, vector<1x128x512xbf16>
    %32 = vector.shape_cast %31 : vector<1x128x512xbf16> to vector<128x512xbf16>
    %cst_29 = arith.constant dense<0.000000e+00> : vector<128x128xf32>
    %33 = tpu.matmul %32, %5, %cst_29 {dimension_numbers = #tpu.dot_dimension_numbers<[1], [0], [0], [1], [0, 0, 1, 1], [], []>} : vector<128x512xbf16>, vector<512x128xbf16>, vector<128x128xf32> -> vector<128x128xf32>
    %34 = arith.truncf %33 : vector<128x128xf32> to vector<128x128xbf16>
    %c3_30 = arith.constant 3 : index
    %c0_31 = arith.constant 0 : index
    %c0_32 = arith.constant 0 : index
    %35 = vector.load %arg3[%c3_30, %c0_31, %c0_32] : memref<16x128x128xbf16, #tpu.memory_space<vmem>>, vector<1x128x128xbf16>
    %36 = vector.shape_cast %35 : vector<1x128x128xbf16> to vector<128x128xbf16>
    %cst_33 = arith.constant dense<0.000000e+00> : vector<128x128xf32>
    %37 = tpu.matmul %34, %36, %cst_33 {dimension_numbers = #tpu.dot_dimension_numbers<[1], [0], [0], [1], [0, 0, 1, 1], [], []>} : vector<128x128xbf16>, vector<128x128xbf16>, vector<128x128xf32> -> vector<128x128xf32>
    %38 = arith.addf %30, %37 : vector<128x128xf32>
    %c4 = arith.constant 4 : index
    %c0_34 = arith.constant 0 : index
    %c0_35 = arith.constant 0 : index
    %39 = vector.load %arg2[%c4, %c0_34, %c0_35] : memref<16x128x512xbf16, #tpu.memory_space<vmem>>, vector<1x128x512xbf16>
    %40 = vector.shape_cast %39 : vector<1x128x512xbf16> to vector<128x512xbf16>
    %cst_36 = arith.constant dense<0.000000e+00> : vector<128x128xf32>
    %41 = tpu.matmul %40, %5, %cst_36 {dimension_numbers = #tpu.dot_dimension_numbers<[1], [0], [0], [1], [0, 0, 1, 1], [], []>} : vector<128x512xbf16>, vector<512x128xbf16>, vector<128x128xf32> -> vector<128x128xf32>
    %42 = arith.truncf %41 : vector<128x128xf32> to vector<128x128xbf16>
    %c4_37 = arith.constant 4 : index
    %c0_38 = arith.constant 0 : index
    %c0_39 = arith.constant 0 : index
    %43 = vector.load %arg3[%c4_37, %c0_38, %c0_39] : memref<16x128x128xbf16, #tpu.memory_space<vmem>>, vector<1x128x128xbf16>
    %44 = vector.shape_cast %43 : vector<1x128x128xbf16> to vector<128x128xbf16>
    %cst_40 = arith.constant dense<0.000000e+00> : vector<128x128xf32>
    %45 = tpu.matmul %42, %44, %cst_40 {dimension_numbers = #tpu.dot_dimension_numbers<[1], [0], [0], [1], [0, 0, 1, 1], [], []>} : vector<128x128xbf16>, vector<128x128xbf16>, vector<128x128xf32> -> vector<128x128xf32>
    %46 = arith.addf %38, %45 : vector<128x128xf32>
    %c5 = arith.constant 5 : index
    %c0_41 = arith.constant 0 : index
    %c0_42 = arith.constant 0 : index
    %47 = vector.load %arg2[%c5, %c0_41, %c0_42] : memref<16x128x512xbf16, #tpu.memory_space<vmem>>, vector<1x128x512xbf16>
    %48 = vector.shape_cast %47 : vector<1x128x512xbf16> to vector<128x512xbf16>
    %cst_43 = arith.constant dense<0.000000e+00> : vector<128x128xf32>
    %49 = tpu.matmul %48, %5, %cst_43 {dimension_numbers = #tpu.dot_dimension_numbers<[1], [0], [0], [1], [0, 0, 1, 1], [], []>} : vector<128x512xbf16>, vector<512x128xbf16>, vector<128x128xf32> -> vector<128x128xf32>
    %50 = arith.truncf %49 : vector<128x128xf32> to vector<128x128xbf16>
    %c5_44 = arith.constant 5 : index
    %c0_45 = arith.constant 0 : index
    %c0_46 = arith.constant 0 : index
    %51 = vector.load %arg3[%c5_44, %c0_45, %c0_46] : memref<16x128x128xbf16, #tpu.memory_space<vmem>>, vector<1x128x128xbf16>
    %52 = vector.shape_cast %51 : vector<1x128x128xbf16> to vector<128x128xbf16>
    %cst_47 = arith.constant dense<0.000000e+00> : vector<128x128xf32>
    %53 = tpu.matmul %50, %52, %cst_47 {dimension_numbers = #tpu.dot_dimension_numbers<[1], [0], [0], [1], [0, 0, 1, 1], [], []>} : vector<128x128xbf16>, vector<128x128xbf16>, vector<128x128xf32> -> vector<128x128xf32>
    %54 = arith.addf %46, %53 : vector<128x128xf32>
    %c6 = arith.constant 6 : index
    %c0_48 = arith.constant 0 : index
    %c0_49 = arith.constant 0 : index
    %55 = vector.load %arg2[%c6, %c0_48, %c0_49] : memref<16x128x512xbf16, #tpu.memory_space<vmem>>, vector<1x128x512xbf16>
    %56 = vector.shape_cast %55 : vector<1x128x512xbf16> to vector<128x512xbf16>
    %cst_50 = arith.constant dense<0.000000e+00> : vector<128x128xf32>
    %57 = tpu.matmul %56, %5, %cst_50 {dimension_numbers = #tpu.dot_dimension_numbers<[1], [0], [0], [1], [0, 0, 1, 1], [], []>} : vector<128x512xbf16>, vector<512x128xbf16>, vector<128x128xf32> -> vector<128x128xf32>
    %58 = arith.truncf %57 : vector<128x128xf32> to vector<128x128xbf16>
    %c6_51 = arith.constant 6 : index
    %c0_52 = arith.constant 0 : index
    %c0_53 = arith.constant 0 : index
    %59 = vector.load %arg3[%c6_51, %c0_52, %c0_53] : memref<16x128x128xbf16, #tpu.memory_space<vmem>>, vector<1x128x128xbf16>
    %60 = vector.shape_cast %59 : vector<1x128x128xbf16> to vector<128x128xbf16>
    %cst_54 = arith.constant dense<0.000000e+00> : vector<128x128xf32>
    %61 = tpu.matmul %58, %60, %cst_54 {dimension_numbers = #tpu.dot_dimension_numbers<[1], [0], [0], [1], [0, 0, 1, 1], [], []>} : vector<128x128xbf16>, vector<128x128xbf16>, vector<128x128xf32> -> vector<128x128xf32>
    %62 = arith.addf %54, %61 : vector<128x128xf32>
    %c7 = arith.constant 7 : index
    %c0_55 = arith.constant 0 : index
    %c0_56 = arith.constant 0 : index
    %63 = vector.load %arg2[%c7, %c0_55, %c0_56] : memref<16x128x512xbf16, #tpu.memory_space<vmem>>, vector<1x128x512xbf16>
    %64 = vector.shape_cast %63 : vector<1x128x512xbf16> to vector<128x512xbf16>
    %cst_57 = arith.constant dense<0.000000e+00> : vector<128x128xf32>
    %65 = tpu.matmul %64, %5, %cst_57 {dimension_numbers = #tpu.dot_dimension_numbers<[1], [0], [0], [1], [0, 0, 1, 1], [], []>} : vector<128x512xbf16>, vector<512x128xbf16>, vector<128x128xf32> -> vector<128x128xf32>
    %66 = arith.truncf %65 : vector<128x128xf32> to vector<128x128xbf16>
    %c7_58 = arith.constant 7 : index
    %c0_59 = arith.constant 0 : index
    %c0_60 = arith.constant 0 : index
    %67 = vector.load %arg3[%c7_58, %c0_59, %c0_60] : memref<16x128x128xbf16, #tpu.memory_space<vmem>>, vector<1x128x128xbf16>
    %68 = vector.shape_cast %67 : vector<1x128x128xbf16> to vector<128x128xbf16>
    %cst_61 = arith.constant dense<0.000000e+00> : vector<128x128xf32>
    %69 = tpu.matmul %66, %68, %cst_61 {dimension_numbers = #tpu.dot_dimension_numbers<[1], [0], [0], [1], [0, 0, 1, 1], [], []>} : vector<128x128xbf16>, vector<128x128xbf16>, vector<128x128xf32> -> vector<128x128xf32>
    %70 = arith.addf %62, %69 : vector<128x128xf32>
    %c8 = arith.constant 8 : index
    %c0_62 = arith.constant 0 : index
    %c0_63 = arith.constant 0 : index
    %71 = vector.load %arg2[%c8, %c0_62, %c0_63] : memref<16x128x512xbf16, #tpu.memory_space<vmem>>, vector<1x128x512xbf16>
    %72 = vector.shape_cast %71 : vector<1x128x512xbf16> to vector<128x512xbf16>
    %cst_64 = arith.constant dense<0.000000e+00> : vector<128x128xf32>
    %73 = tpu.matmul %72, %5, %cst_64 {dimension_numbers = #tpu.dot_dimension_numbers<[1], [0], [0], [1], [0, 0, 1, 1], [], []>} : vector<128x512xbf16>, vector<512x128xbf16>, vector<128x128xf32> -> vector<128x128xf32>
    %74 = arith.truncf %73 : vector<128x128xf32> to vector<128x128xbf16>
    %c8_65 = arith.constant 8 : index
    %c0_66 = arith.constant 0 : index
    %c0_67 = arith.constant 0 : index
    %75 = vector.load %arg3[%c8_65, %c0_66, %c0_67] : memref<16x128x128xbf16, #tpu.memory_space<vmem>>, vector<1x128x128xbf16>
    %76 = vector.shape_cast %75 : vector<1x128x128xbf16> to vector<128x128xbf16>
    %cst_68 = arith.constant dense<0.000000e+00> : vector<128x128xf32>
    %77 = tpu.matmul %74, %76, %cst_68 {dimension_numbers = #tpu.dot_dimension_numbers<[1], [0], [0], [1], [0, 0, 1, 1], [], []>} : vector<128x128xbf16>, vector<128x128xbf16>, vector<128x128xf32> -> vector<128x128xf32>
    %78 = arith.addf %70, %77 : vector<128x128xf32>
    %c9 = arith.constant 9 : index
    %c0_69 = arith.constant 0 : index
    %c0_70 = arith.constant 0 : index
    %79 = vector.load %arg2[%c9, %c0_69, %c0_70] : memref<16x128x512xbf16, #tpu.memory_space<vmem>>, vector<1x128x512xbf16>
    %80 = vector.shape_cast %79 : vector<1x128x512xbf16> to vector<128x512xbf16>
    %cst_71 = arith.constant dense<0.000000e+00> : vector<128x128xf32>
    %81 = tpu.matmul %80, %5, %cst_71 {dimension_numbers = #tpu.dot_dimension_numbers<[1], [0], [0], [1], [0, 0, 1, 1], [], []>} : vector<128x512xbf16>, vector<512x128xbf16>, vector<128x128xf32> -> vector<128x128xf32>
    %82 = arith.truncf %81 : vector<128x128xf32> to vector<128x128xbf16>
    %c9_72 = arith.constant 9 : index
    %c0_73 = arith.constant 0 : index
    %c0_74 = arith.constant 0 : index
    %83 = vector.load %arg3[%c9_72, %c0_73, %c0_74] : memref<16x128x128xbf16, #tpu.memory_space<vmem>>, vector<1x128x128xbf16>
    %84 = vector.shape_cast %83 : vector<1x128x128xbf16> to vector<128x128xbf16>
    %cst_75 = arith.constant dense<0.000000e+00> : vector<128x128xf32>
    %85 = tpu.matmul %82, %84, %cst_75 {dimension_numbers = #tpu.dot_dimension_numbers<[1], [0], [0], [1], [0, 0, 1, 1], [], []>} : vector<128x128xbf16>, vector<128x128xbf16>, vector<128x128xf32> -> vector<128x128xf32>
    %86 = arith.addf %78, %85 : vector<128x128xf32>
    %c10 = arith.constant 10 : index
    %c0_76 = arith.constant 0 : index
    %c0_77 = arith.constant 0 : index
    %87 = vector.load %arg2[%c10, %c0_76, %c0_77] : memref<16x128x512xbf16, #tpu.memory_space<vmem>>, vector<1x128x512xbf16>
    %88 = vector.shape_cast %87 : vector<1x128x512xbf16> to vector<128x512xbf16>
    %cst_78 = arith.constant dense<0.000000e+00> : vector<128x128xf32>
    %89 = tpu.matmul %88, %5, %cst_78 {dimension_numbers = #tpu.dot_dimension_numbers<[1], [0], [0], [1], [0, 0, 1, 1], [], []>} : vector<128x512xbf16>, vector<512x128xbf16>, vector<128x128xf32> -> vector<128x128xf32>
    %90 = arith.truncf %89 : vector<128x128xf32> to vector<128x128xbf16>
    %c10_79 = arith.constant 10 : index
    %c0_80 = arith.constant 0 : index
    %c0_81 = arith.constant 0 : index
    %91 = vector.load %arg3[%c10_79, %c0_80, %c0_81] : memref<16x128x128xbf16, #tpu.memory_space<vmem>>, vector<1x128x128xbf16>
    %92 = vector.shape_cast %91 : vector<1x128x128xbf16> to vector<128x128xbf16>
    %cst_82 = arith.constant dense<0.000000e+00> : vector<128x128xf32>
    %93 = tpu.matmul %90, %92, %cst_82 {dimension_numbers = #tpu.dot_dimension_numbers<[1], [0], [0], [1], [0, 0, 1, 1], [], []>} : vector<128x128xbf16>, vector<128x128xbf16>, vector<128x128xf32> -> vector<128x128xf32>
    %94 = arith.addf %86, %93 : vector<128x128xf32>
    %c11 = arith.constant 11 : index
    %c0_83 = arith.constant 0 : index
    %c0_84 = arith.constant 0 : index
    %95 = vector.load %arg2[%c11, %c0_83, %c0_84] : memref<16x128x512xbf16, #tpu.memory_space<vmem>>, vector<1x128x512xbf16>
    %96 = vector.shape_cast %95 : vector<1x128x512xbf16> to vector<128x512xbf16>
    %cst_85 = arith.constant dense<0.000000e+00> : vector<128x128xf32>
    %97 = tpu.matmul %96, %5, %cst_85 {dimension_numbers = #tpu.dot_dimension_numbers<[1], [0], [0], [1], [0, 0, 1, 1], [], []>} : vector<128x512xbf16>, vector<512x128xbf16>, vector<128x128xf32> -> vector<128x128xf32>
    %98 = arith.truncf %97 : vector<128x128xf32> to vector<128x128xbf16>
    %c11_86 = arith.constant 11 : index
    %c0_87 = arith.constant 0 : index
    %c0_88 = arith.constant 0 : index
    %99 = vector.load %arg3[%c11_86, %c0_87, %c0_88] : memref<16x128x128xbf16, #tpu.memory_space<vmem>>, vector<1x128x128xbf16>
    %100 = vector.shape_cast %99 : vector<1x128x128xbf16> to vector<128x128xbf16>
    %cst_89 = arith.constant dense<0.000000e+00> : vector<128x128xf32>
    %101 = tpu.matmul %98, %100, %cst_89 {dimension_numbers = #tpu.dot_dimension_numbers<[1], [0], [0], [1], [0, 0, 1, 1], [], []>} : vector<128x128xbf16>, vector<128x128xbf16>, vector<128x128xf32> -> vector<128x128xf32>
    %102 = arith.addf %94, %101 : vector<128x128xf32>
    %c12 = arith.constant 12 : index
    %c0_90 = arith.constant 0 : index
    %c0_91 = arith.constant 0 : index
    %103 = vector.load %arg2[%c12, %c0_90, %c0_91] : memref<16x128x512xbf16, #tpu.memory_space<vmem>>, vector<1x128x512xbf16>
    %104 = vector.shape_cast %103 : vector<1x128x512xbf16> to vector<128x512xbf16>
    %cst_92 = arith.constant dense<0.000000e+00> : vector<128x128xf32>
    %105 = tpu.matmul %104, %5, %cst_92 {dimension_numbers = #tpu.dot_dimension_numbers<[1], [0], [0], [1], [0, 0, 1, 1], [], []>} : vector<128x512xbf16>, vector<512x128xbf16>, vector<128x128xf32> -> vector<128x128xf32>
    %106 = arith.truncf %105 : vector<128x128xf32> to vector<128x128xbf16>
    %c12_93 = arith.constant 12 : index
    %c0_94 = arith.constant 0 : index
    %c0_95 = arith.constant 0 : index
    %107 = vector.load %arg3[%c12_93, %c0_94, %c0_95] : memref<16x128x128xbf16, #tpu.memory_space<vmem>>, vector<1x128x128xbf16>
    %108 = vector.shape_cast %107 : vector<1x128x128xbf16> to vector<128x128xbf16>
    %cst_96 = arith.constant dense<0.000000e+00> : vector<128x128xf32>
    %109 = tpu.matmul %106, %108, %cst_96 {dimension_numbers = #tpu.dot_dimension_numbers<[1], [0], [0], [1], [0, 0, 1, 1], [], []>} : vector<128x128xbf16>, vector<128x128xbf16>, vector<128x128xf32> -> vector<128x128xf32>
    %110 = arith.addf %102, %109 : vector<128x128xf32>
    %c13 = arith.constant 13 : index
    %c0_97 = arith.constant 0 : index
    %c0_98 = arith.constant 0 : index
    %111 = vector.load %arg2[%c13, %c0_97, %c0_98] : memref<16x128x512xbf16, #tpu.memory_space<vmem>>, vector<1x128x512xbf16>
    %112 = vector.shape_cast %111 : vector<1x128x512xbf16> to vector<128x512xbf16>
    %cst_99 = arith.constant dense<0.000000e+00> : vector<128x128xf32>
    %113 = tpu.matmul %112, %5, %cst_99 {dimension_numbers = #tpu.dot_dimension_numbers<[1], [0], [0], [1], [0, 0, 1, 1], [], []>} : vector<128x512xbf16>, vector<512x128xbf16>, vector<128x128xf32> -> vector<128x128xf32>
    %114 = arith.truncf %113 : vector<128x128xf32> to vector<128x128xbf16>
    %c13_100 = arith.constant 13 : index
    %c0_101 = arith.constant 0 : index
    %c0_102 = arith.constant 0 : index
    %115 = vector.load %arg3[%c13_100, %c0_101, %c0_102] : memref<16x128x128xbf16, #tpu.memory_space<vmem>>, vector<1x128x128xbf16>
    %116 = vector.shape_cast %115 : vector<1x128x128xbf16> to vector<128x128xbf16>
    %cst_103 = arith.constant dense<0.000000e+00> : vector<128x128xf32>
    %117 = tpu.matmul %114, %116, %cst_103 {dimension_numbers = #tpu.dot_dimension_numbers<[1], [0], [0], [1], [0, 0, 1, 1], [], []>} : vector<128x128xbf16>, vector<128x128xbf16>, vector<128x128xf32> -> vector<128x128xf32>
    %118 = arith.addf %110, %117 : vector<128x128xf32>
    %c14 = arith.constant 14 : index
    %c0_104 = arith.constant 0 : index
    %c0_105 = arith.constant 0 : index
    %119 = vector.load %arg2[%c14, %c0_104, %c0_105] : memref<16x128x512xbf16, #tpu.memory_space<vmem>>, vector<1x128x512xbf16>
    %120 = vector.shape_cast %119 : vector<1x128x512xbf16> to vector<128x512xbf16>
    %cst_106 = arith.constant dense<0.000000e+00> : vector<128x128xf32>
    %121 = tpu.matmul %120, %5, %cst_106 {dimension_numbers = #tpu.dot_dimension_numbers<[1], [0], [0], [1], [0, 0, 1, 1], [], []>} : vector<128x512xbf16>, vector<512x128xbf16>, vector<128x128xf32> -> vector<128x128xf32>
    %122 = arith.truncf %121 : vector<128x128xf32> to vector<128x128xbf16>
    %c14_107 = arith.constant 14 : index
    %c0_108 = arith.constant 0 : index
    %c0_109 = arith.constant 0 : index
    %123 = vector.load %arg3[%c14_107, %c0_108, %c0_109] : memref<16x128x128xbf16, #tpu.memory_space<vmem>>, vector<1x128x128xbf16>
    %124 = vector.shape_cast %123 : vector<1x128x128xbf16> to vector<128x128xbf16>
    %cst_110 = arith.constant dense<0.000000e+00> : vector<128x128xf32>
    %125 = tpu.matmul %122, %124, %cst_110 {dimension_numbers = #tpu.dot_dimension_numbers<[1], [0], [0], [1], [0, 0, 1, 1], [], []>} : vector<128x128xbf16>, vector<128x128xbf16>, vector<128x128xf32> -> vector<128x128xf32>
    %126 = arith.addf %118, %125 : vector<128x128xf32>
    %c15 = arith.constant 15 : index
    %c0_111 = arith.constant 0 : index
    %c0_112 = arith.constant 0 : index
    %127 = vector.load %arg2[%c15, %c0_111, %c0_112] : memref<16x128x512xbf16, #tpu.memory_space<vmem>>, vector<1x128x512xbf16>
    %128 = vector.shape_cast %127 : vector<1x128x512xbf16> to vector<128x512xbf16>
    %cst_113 = arith.constant dense<0.000000e+00> : vector<128x128xf32>
    %129 = tpu.matmul %128, %5, %cst_113 {dimension_numbers = #tpu.dot_dimension_numbers<[1], [0], [0], [1], [0, 0, 1, 1], [], []>} : vector<128x512xbf16>, vector<512x128xbf16>, vector<128x128xf32> -> vector<128x128xf32>
    %130 = arith.truncf %129 : vector<128x128xf32> to vector<128x128xbf16>
    %c15_114 = arith.constant 15 : index
    %c0_115 = arith.constant 0 : index
    %c0_116 = arith.constant 0 : index
    %131 = vector.load %arg3[%c15_114, %c0_115, %c0_116] : memref<16x128x128xbf16, #tpu.memory_space<vmem>>, vector<1x128x128xbf16>
    %132 = vector.shape_cast %131 : vector<1x128x128xbf16> to vector<128x128xbf16>
    %cst_117 = arith.constant dense<0.000000e+00> : vector<128x128xf32>
    %133 = tpu.matmul %130, %132, %cst_117 {dimension_numbers = #tpu.dot_dimension_numbers<[1], [0], [0], [1], [0, 0, 1, 1], [], []>} : vector<128x128xbf16>, vector<128x128xbf16>, vector<128x128xf32> -> vector<128x128xf32>
    %134 = arith.addf %126, %133 : vector<128x128xf32>
    %cst_118 = arith.constant 0.000000e+00 : f32
    %135 = vector.broadcast %cst_118 : f32 to vector<128x128xf32>
    %136 = arith.maximumf %134, %135 : vector<128x128xf32>
    %137 = arith.truncf %136 : vector<128x128xf32> to vector<128x128xbf16>
    %cst_119 = arith.constant 0.000000e+00 : f32
    %138 = vector.broadcast %cst_119 : f32 to vector<32x128xf32>
    %c0_120 = arith.constant 0 : index
    %c0_121 = arith.constant 0 : index
    %c0_122 = arith.constant 0 : index
    %139 = vector.load %arg4[%c0_120, %c0_121, %c0_122] : memref<9x32x128xbf16, #tpu.memory_space<vmem>>, vector<1x32x128xbf16>
    %140 = vector.shape_cast %139 : vector<1x32x128xbf16> to vector<32x128xbf16>
    %cst_123 = arith.constant dense<0.000000e+00> : vector<32x128xf32>
    %141 = tpu.matmul %140, %137, %cst_123 {dimension_numbers = #tpu.dot_dimension_numbers<[1], [0], [0], [1], [0, 0, 1, 1], [], []>} : vector<32x128xbf16>, vector<128x128xbf16>, vector<32x128xf32> -> vector<32x128xf32>
    %142 = arith.truncf %141 : vector<32x128xf32> to vector<32x128xbf16>
    %c0_124 = arith.constant 0 : index
    %c0_125 = arith.constant 0 : index
    %c0_126 = arith.constant 0 : index
    %143 = vector.load %arg5[%c0_124, %c0_125, %c0_126] : memref<9x128x128xbf16, #tpu.memory_space<vmem>>, vector<1x128x128xbf16>
    %144 = vector.shape_cast %143 : vector<1x128x128xbf16> to vector<128x128xbf16>
    %cst_127 = arith.constant dense<0.000000e+00> : vector<32x128xf32>
    %145 = tpu.matmul %142, %144, %cst_127 {dimension_numbers = #tpu.dot_dimension_numbers<[1], [0], [0], [1], [0, 0, 1, 1], [], []>} : vector<32x128xbf16>, vector<128x128xbf16>, vector<32x128xf32> -> vector<32x128xf32>
    %146 = arith.addf %138, %145 : vector<32x128xf32>
    %c1_128 = arith.constant 1 : index
    %c0_129 = arith.constant 0 : index
    %c0_130 = arith.constant 0 : index
    %147 = vector.load %arg4[%c1_128, %c0_129, %c0_130] : memref<9x32x128xbf16, #tpu.memory_space<vmem>>, vector<1x32x128xbf16>
    %148 = vector.shape_cast %147 : vector<1x32x128xbf16> to vector<32x128xbf16>
    %cst_131 = arith.constant dense<0.000000e+00> : vector<32x128xf32>
    %149 = tpu.matmul %148, %137, %cst_131 {dimension_numbers = #tpu.dot_dimension_numbers<[1], [0], [0], [1], [0, 0, 1, 1], [], []>} : vector<32x128xbf16>, vector<128x128xbf16>, vector<32x128xf32> -> vector<32x128xf32>
    %150 = arith.truncf %149 : vector<32x128xf32> to vector<32x128xbf16>
    %c1_132 = arith.constant 1 : index
    %c0_133 = arith.constant 0 : index
    %c0_134 = arith.constant 0 : index
    %151 = vector.load %arg5[%c1_132, %c0_133, %c0_134] : memref<9x128x128xbf16, #tpu.memory_space<vmem>>, vector<1x128x128xbf16>
    %152 = vector.shape_cast %151 : vector<1x128x128xbf16> to vector<128x128xbf16>
    %cst_135 = arith.constant dense<0.000000e+00> : vector<32x128xf32>
    %153 = tpu.matmul %150, %152, %cst_135 {dimension_numbers = #tpu.dot_dimension_numbers<[1], [0], [0], [1], [0, 0, 1, 1], [], []>} : vector<32x128xbf16>, vector<128x128xbf16>, vector<32x128xf32> -> vector<32x128xf32>
    %154 = arith.addf %146, %153 : vector<32x128xf32>
    %c2_136 = arith.constant 2 : index
    %c0_137 = arith.constant 0 : index
    %c0_138 = arith.constant 0 : index
    %155 = vector.load %arg4[%c2_136, %c0_137, %c0_138] : memref<9x32x128xbf16, #tpu.memory_space<vmem>>, vector<1x32x128xbf16>
    %156 = vector.shape_cast %155 : vector<1x32x128xbf16> to vector<32x128xbf16>
    %cst_139 = arith.constant dense<0.000000e+00> : vector<32x128xf32>
    %157 = tpu.matmul %156, %137, %cst_139 {dimension_numbers = #tpu.dot_dimension_numbers<[1], [0], [0], [1], [0, 0, 1, 1], [], []>} : vector<32x128xbf16>, vector<128x128xbf16>, vector<32x128xf32> -> vector<32x128xf32>
    %158 = arith.truncf %157 : vector<32x128xf32> to vector<32x128xbf16>
    %c2_140 = arith.constant 2 : index
    %c0_141 = arith.constant 0 : index
    %c0_142 = arith.constant 0 : index
    %159 = vector.load %arg5[%c2_140, %c0_141, %c0_142] : memref<9x128x128xbf16, #tpu.memory_space<vmem>>, vector<1x128x128xbf16>
    %160 = vector.shape_cast %159 : vector<1x128x128xbf16> to vector<128x128xbf16>
    %cst_143 = arith.constant dense<0.000000e+00> : vector<32x128xf32>
    %161 = tpu.matmul %158, %160, %cst_143 {dimension_numbers = #tpu.dot_dimension_numbers<[1], [0], [0], [1], [0, 0, 1, 1], [], []>} : vector<32x128xbf16>, vector<128x128xbf16>, vector<32x128xf32> -> vector<32x128xf32>
    %162 = arith.addf %154, %161 : vector<32x128xf32>
    %c3_144 = arith.constant 3 : index
    %c0_145 = arith.constant 0 : index
    %c0_146 = arith.constant 0 : index
    %163 = vector.load %arg4[%c3_144, %c0_145, %c0_146] : memref<9x32x128xbf16, #tpu.memory_space<vmem>>, vector<1x32x128xbf16>
    %164 = vector.shape_cast %163 : vector<1x32x128xbf16> to vector<32x128xbf16>
    %cst_147 = arith.constant dense<0.000000e+00> : vector<32x128xf32>
    %165 = tpu.matmul %164, %137, %cst_147 {dimension_numbers = #tpu.dot_dimension_numbers<[1], [0], [0], [1], [0, 0, 1, 1], [], []>} : vector<32x128xbf16>, vector<128x128xbf16>, vector<32x128xf32> -> vector<32x128xf32>
    %166 = arith.truncf %165 : vector<32x128xf32> to vector<32x128xbf16>
    %c3_148 = arith.constant 3 : index
    %c0_149 = arith.constant 0 : index
    %c0_150 = arith.constant 0 : index
    %167 = vector.load %arg5[%c3_148, %c0_149, %c0_150] : memref<9x128x128xbf16, #tpu.memory_space<vmem>>, vector<1x128x128xbf16>
    %168 = vector.shape_cast %167 : vector<1x128x128xbf16> to vector<128x128xbf16>
    %cst_151 = arith.constant dense<0.000000e+00> : vector<32x128xf32>
    %169 = tpu.matmul %166, %168, %cst_151 {dimension_numbers = #tpu.dot_dimension_numbers<[1], [0], [0], [1], [0, 0, 1, 1], [], []>} : vector<32x128xbf16>, vector<128x128xbf16>, vector<32x128xf32> -> vector<32x128xf32>
    %170 = arith.addf %162, %169 : vector<32x128xf32>
    %c4_152 = arith.constant 4 : index
    %c0_153 = arith.constant 0 : index
    %c0_154 = arith.constant 0 : index
    %171 = vector.load %arg4[%c4_152, %c0_153, %c0_154] : memref<9x32x128xbf16, #tpu.memory_space<vmem>>, vector<1x32x128xbf16>
    %172 = vector.shape_cast %171 : vector<1x32x128xbf16> to vector<32x128xbf16>
    %cst_155 = arith.constant dense<0.000000e+00> : vector<32x128xf32>
    %173 = tpu.matmul %172, %137, %cst_155 {dimension_numbers = #tpu.dot_dimension_numbers<[1], [0], [0], [1], [0, 0, 1, 1], [], []>} : vector<32x128xbf16>, vector<128x128xbf16>, vector<32x128xf32> -> vector<32x128xf32>
    %174 = arith.truncf %173 : vector<32x128xf32> to vector<32x128xbf16>
    %c4_156 = arith.constant 4 : index
    %c0_157 = arith.constant 0 : index
    %c0_158 = arith.constant 0 : index
    %175 = vector.load %arg5[%c4_156, %c0_157, %c0_158] : memref<9x128x128xbf16, #tpu.memory_space<vmem>>, vector<1x128x128xbf16>
    %176 = vector.shape_cast %175 : vector<1x128x128xbf16> to vector<128x128xbf16>
    %cst_159 = arith.constant dense<0.000000e+00> : vector<32x128xf32>
    %177 = tpu.matmul %174, %176, %cst_159 {dimension_numbers = #tpu.dot_dimension_numbers<[1], [0], [0], [1], [0, 0, 1, 1], [], []>} : vector<32x128xbf16>, vector<128x128xbf16>, vector<32x128xf32> -> vector<32x128xf32>
    %178 = arith.addf %170, %177 : vector<32x128xf32>
    %c5_160 = arith.constant 5 : index
    %c0_161 = arith.constant 0 : index
    %c0_162 = arith.constant 0 : index
    %179 = vector.load %arg4[%c5_160, %c0_161, %c0_162] : memref<9x32x128xbf16, #tpu.memory_space<vmem>>, vector<1x32x128xbf16>
    %180 = vector.shape_cast %179 : vector<1x32x128xbf16> to vector<32x128xbf16>
    %cst_163 = arith.constant dense<0.000000e+00> : vector<32x128xf32>
    %181 = tpu.matmul %180, %137, %cst_163 {dimension_numbers = #tpu.dot_dimension_numbers<[1], [0], [0], [1], [0, 0, 1, 1], [], []>} : vector<32x128xbf16>, vector<128x128xbf16>, vector<32x128xf32> -> vector<32x128xf32>
    %182 = arith.truncf %181 : vector<32x128xf32> to vector<32x128xbf16>
    %c5_164 = arith.constant 5 : index
    %c0_165 = arith.constant 0 : index
    %c0_166 = arith.constant 0 : index
    %183 = vector.load %arg5[%c5_164, %c0_165, %c0_166] : memref<9x128x128xbf16, #tpu.memory_space<vmem>>, vector<1x128x128xbf16>
    %184 = vector.shape_cast %183 : vector<1x128x128xbf16> to vector<128x128xbf16>
    %cst_167 = arith.constant dense<0.000000e+00> : vector<32x128xf32>
    %185 = tpu.matmul %182, %184, %cst_167 {dimension_numbers = #tpu.dot_dimension_numbers<[1], [0], [0], [1], [0, 0, 1, 1], [], []>} : vector<32x128xbf16>, vector<128x128xbf16>, vector<32x128xf32> -> vector<32x128xf32>
    %186 = arith.addf %178, %185 : vector<32x128xf32>
    %c6_168 = arith.constant 6 : index
    %c0_169 = arith.constant 0 : index
    %c0_170 = arith.constant 0 : index
    %187 = vector.load %arg4[%c6_168, %c0_169, %c0_170] : memref<9x32x128xbf16, #tpu.memory_space<vmem>>, vector<1x32x128xbf16>
    %188 = vector.shape_cast %187 : vector<1x32x128xbf16> to vector<32x128xbf16>
    %cst_171 = arith.constant dense<0.000000e+00> : vector<32x128xf32>
    %189 = tpu.matmul %188, %137, %cst_171 {dimension_numbers = #tpu.dot_dimension_numbers<[1], [0], [0], [1], [0, 0, 1, 1], [], []>} : vector<32x128xbf16>, vector<128x128xbf16>, vector<32x128xf32> -> vector<32x128xf32>
    %190 = arith.truncf %189 : vector<32x128xf32> to vector<32x128xbf16>
    %c6_172 = arith.constant 6 : index
    %c0_173 = arith.constant 0 : index
    %c0_174 = arith.constant 0 : index
    %191 = vector.load %arg5[%c6_172, %c0_173, %c0_174] : memref<9x128x128xbf16, #tpu.memory_space<vmem>>, vector<1x128x128xbf16>
    %192 = vector.shape_cast %191 : vector<1x128x128xbf16> to vector<128x128xbf16>
    %cst_175 = arith.constant dense<0.000000e+00> : vector<32x128xf32>
    %193 = tpu.matmul %190, %192, %cst_175 {dimension_numbers = #tpu.dot_dimension_numbers<[1], [0], [0], [1], [0, 0, 1, 1], [], []>} : vector<32x128xbf16>, vector<128x128xbf16>, vector<32x128xf32> -> vector<32x128xf32>
    %194 = arith.addf %186, %193 : vector<32x128xf32>
    %c7_176 = arith.constant 7 : index
    %c0_177 = arith.constant 0 : index
    %c0_178 = arith.constant 0 : index
    %195 = vector.load %arg4[%c7_176, %c0_177, %c0_178] : memref<9x32x128xbf16, #tpu.memory_space<vmem>>, vector<1x32x128xbf16>
    %196 = vector.shape_cast %195 : vector<1x32x128xbf16> to vector<32x128xbf16>
    %cst_179 = arith.constant dense<0.000000e+00> : vector<32x128xf32>
    %197 = tpu.matmul %196, %137, %cst_179 {dimension_numbers = #tpu.dot_dimension_numbers<[1], [0], [0], [1], [0, 0, 1, 1], [], []>} : vector<32x128xbf16>, vector<128x128xbf16>, vector<32x128xf32> -> vector<32x128xf32>
    %198 = arith.truncf %197 : vector<32x128xf32> to vector<32x128xbf16>
    %c7_180 = arith.constant 7 : index
    %c0_181 = arith.constant 0 : index
    %c0_182 = arith.constant 0 : index
    %199 = vector.load %arg5[%c7_180, %c0_181, %c0_182] : memref<9x128x128xbf16, #tpu.memory_space<vmem>>, vector<1x128x128xbf16>
    %200 = vector.shape_cast %199 : vector<1x128x128xbf16> to vector<128x128xbf16>
    %cst_183 = arith.constant dense<0.000000e+00> : vector<32x128xf32>
    %201 = tpu.matmul %198, %200, %cst_183 {dimension_numbers = #tpu.dot_dimension_numbers<[1], [0], [0], [1], [0, 0, 1, 1], [], []>} : vector<32x128xbf16>, vector<128x128xbf16>, vector<32x128xf32> -> vector<32x128xf32>
    %202 = arith.addf %194, %201 : vector<32x128xf32>
    %c8_184 = arith.constant 8 : index
    %c0_185 = arith.constant 0 : index
    %c0_186 = arith.constant 0 : index
    %203 = vector.load %arg4[%c8_184, %c0_185, %c0_186] : memref<9x32x128xbf16, #tpu.memory_space<vmem>>, vector<1x32x128xbf16>
    %204 = vector.shape_cast %203 : vector<1x32x128xbf16> to vector<32x128xbf16>
    %cst_187 = arith.constant dense<0.000000e+00> : vector<32x128xf32>
    %205 = tpu.matmul %204, %137, %cst_187 {dimension_numbers = #tpu.dot_dimension_numbers<[1], [0], [0], [1], [0, 0, 1, 1], [], []>} : vector<32x128xbf16>, vector<128x128xbf16>, vector<32x128xf32> -> vector<32x128xf32>
    %206 = arith.truncf %205 : vector<32x128xf32> to vector<32x128xbf16>
    %c8_188 = arith.constant 8 : index
    %c0_189 = arith.constant 0 : index
    %c0_190 = arith.constant 0 : index
    %207 = vector.load %arg5[%c8_188, %c0_189, %c0_190] : memref<9x128x128xbf16, #tpu.memory_space<vmem>>, vector<1x128x128xbf16>
    %208 = vector.shape_cast %207 : vector<1x128x128xbf16> to vector<128x128xbf16>
    %cst_191 = arith.constant dense<0.000000e+00> : vector<32x128xf32>
    %209 = tpu.matmul %206, %208, %cst_191 {dimension_numbers = #tpu.dot_dimension_numbers<[1], [0], [0], [1], [0, 0, 1, 1], [], []>} : vector<32x128xbf16>, vector<128x128xbf16>, vector<32x128xf32> -> vector<32x128xf32>
    %210 = arith.addf %202, %209 : vector<32x128xf32>
    %cst_192 = arith.constant 0.000000e+00 : f32
    %211 = vector.broadcast %cst_192 : f32 to vector<32x128xf32>
    %212 = arith.maximumf %210, %211 : vector<32x128xf32>
    %c0_193 = arith.constant 0 : index
    %c0_194 = arith.constant 0 : index
    %213 = vector.load %arg6[%c0_193, %c0_194] : memref<32x128xf32, #tpu.memory_space<vmem>>, vector<32x128xf32>
    %214 = arith.mulf %212, %213 : vector<32x128xf32>
    %cst_195 = arith.constant dense<0.000000e+00> : vector<32xf32>
    %215 = vector.multi_reduction <add>, %214, %cst_195 [1] : vector<32x128xf32> to vector<32xf32>
    %216 = vector.shape_cast %215 : vector<32xf32> to vector<32x1xf32>
    %c0_196 = arith.constant 0 : index
    %c0_197 = arith.constant 0 : index
    %217 = vector.load %arg7[%c0_196, %c0_197] : memref<2x32xf32, #tpu.memory_space<vmem>>, vector<2x32xf32>
    %cst_198 = arith.constant dense<0.000000e+00> : vector<2x1xf32>
    %218 = tpu.matmul %217, %216, %cst_198 {dimension_numbers = #tpu.dot_dimension_numbers<[1], [0], [0], [1], [0, 0, 1, 1], [], []>} : vector<2x32xf32>, vector<32x1xf32>, vector<2x1xf32> -> vector<2x1xf32>
    %cst_199 = arith.constant 0.000000e+00 : f32
    %219 = vector.broadcast %cst_199 : f32 to vector<2x1xf32>
    %220 = arith.subf %219, %218 : vector<2x1xf32>
    %221 = math.exp %220 : vector<2x1xf32>
    %cst_200 = arith.constant 1.000000e+00 : f32
    %222 = vector.broadcast %cst_200 : f32 to vector<2x1xf32>
    %223 = arith.addf %222, %221 : vector<2x1xf32>
    %cst_201 = arith.constant 1.000000e+00 : f32
    %224 = vector.broadcast %cst_201 : f32 to vector<2x1xf32>
    %225 = arith.divf %224, %223 : vector<2x1xf32>
    %c0_202 = arith.constant 0 : index
    %c0_203 = arith.constant 0 : index
    %226 = vector.load %arg8[%c0_202, %c0_203] : memref<2x1xf32, #tpu.memory_space<vmem>>, vector<2x1xf32>
    tpu.vector_store %arg8[%c0_202, %c0_203], %225 {strides = array<i32>} : memref<2x1xf32, #tpu.memory_space<vmem>>, vector<2x1xf32>,
    return
  }
}

</mosaic_0001>

<llo_original>
// kernel: cnn_discriminator_forward.1
$region0: #{cnn_discriminator_forward.1}
  #allocation0 [shape = 'u32[]', space=smem, size = 0x4, offset = 0x4, fixed_abs, tag = 'smem constant byte address 0x4 - core index']
  #allocation1 [shape = 'u32[144,128]{1,0:T(1,128)}', space=vmem, size = 0x12000, scoped, tag = 'internal scratch']
  %s0 = inlined_call_operand.vmem [shape: bf16[512,128], index: 0, kind: input, shape index: {}]
  %s1 = inlined_call_operand.vmem [shape: bf16[128,128], index: 1, kind: input, shape index: {}]
  %s2 = inlined_call_operand.vmem [shape: bf16[16,128,512], index: 2, kind: input, shape index: {}]
  %s3 = inlined_call_operand.vmem [shape: bf16[16,128,128], index: 3, kind: input, shape index: {}]
  %s4 = inlined_call_operand.vmem [shape: bf16[9,32,128], index: 4, kind: input, shape index: {}]
  %s5 = inlined_call_operand.vmem [shape: bf16[9,128,128], index: 5, kind: input, shape index: {}]
  %s6 = inlined_call_operand.vmem [shape: f32[32,128], index: 6, kind: input, shape index: {}]
  %s7 = inlined_call_operand.vmem [shape: f32[2,32], index: 7, kind: input, shape index: {}]
  %s8 = inlined_call_operand.vmem [shape: f32[2,1], index: 8, kind: output, shape index: {}]
  %s9 = sld [smem:[#allocation0]]
  $region42: #{cnn_discriminator_forward.1} parent=0
    _
  %s11 = ssub.s32 1, %s9
  %s12 = scalar_select 0, %s11, %s9
  // Predicated region
  $region2: #{cnn_discriminator_forward.1} parent=0 // pred_check
    _
  $region3: #{cnn_discriminator_forward.1} parent=0 // pred_check_branch
    %14 = sbr.rel (0) target = $region5
  $region4: #{cnn_discriminator_forward.1} parent=0 // pred_region
    _
  $region5: #{cnn_discriminator_forward.1} parent=0 // pred_fallthru
    _
  // Predicated region
  $region6: #{cnn_discriminator_forward.1} parent=0 // pred_check
    _
  $region7: #{cnn_discriminator_forward.1} parent=0 // pred_check_branch
    %16 = sbr.rel (0) target = $region9
  $region8: #{cnn_discriminator_forward.1} parent=0 // pred_region
    _
  $region9: #{cnn_discriminator_forward.1} parent=0 // pred_fallthru
    _
  // Predicated region
  $region10: #{cnn_discriminator_forward.1} parent=0 // pred_check
    _
  $region11: #{cnn_discriminator_forward.1} parent=0 // pred_check_branch
    %18 = sbr.rel (0) target = $region13
  $region12: #{cnn_discriminator_forward.1} parent=0 // pred_region
    _
  $region13: #{cnn_discriminator_forward.1} parent=0 // pred_fallthru
    _
  // Predicated region
  $region14: #{cnn_discriminator_forward.1} parent=0 // pred_check
    _
  $region15: #{cnn_discriminator_forward.1} parent=0 // pred_check_branch
    %20 = sbr.rel (0) target = $region17
  $region16: #{cnn_discriminator_forward.1} parent=0 // pred_region
    _
  $region17: #{cnn_discriminator_forward.1} parent=0 // pred_fallthru
    _
  // Predicated region
  $region18: #{cnn_discriminator_forward.1} parent=0 // pred_check
    _
  $region19: #{cnn_discriminator_forward.1} parent=0 // pred_check_branch
    %22 = sbr.rel (0) target = $region21
  $region20: #{cnn_discriminator_forward.1} parent=0 // pred_region
    _
  $region21: #{cnn_discriminator_forward.1} parent=0 // pred_fallthru
    _
  // Predicated region
  $region22: #{cnn_discriminator_forward.1} parent=0 // pred_check
    _
  $region23: #{cnn_discriminator_forward.1} parent=0 // pred_check_branch
    %24 = sbr.rel (0) target = $region25
  $region24: #{cnn_discriminator_forward.1} parent=0 // pred_region
    _
  $region25: #{cnn_discriminator_forward.1} parent=0 // pred_fallthru
    _
  // Predicated region
  $region26: #{cnn_discriminator_forward.1} parent=0 // pred_check
    _
  $region27: #{cnn_discriminator_forward.1} parent=0 // pred_check_branch
    %26 = sbr.rel (0) target = $region29
  $region28: #{cnn_discriminator_forward.1} parent=0 // pred_region
    _
  $region29: #{cnn_discriminator_forward.1} parent=0 // pred_fallthru
    _
  // Predicated region
  $region30: #{cnn_discriminator_forward.1} parent=0 // pred_check
    _
  $region31: #{cnn_discriminator_forward.1} parent=0 // pred_check_branch
    %28 = sbr.rel (0) target = $region33
  $region32: #{cnn_discriminator_forward.1} parent=0 // pred_region
    _
  $region33: #{cnn_discriminator_forward.1} parent=0 // pred_fallthru
    _
  %v30 = vld [vmem:[%s0] sm:$0xf]
  %v31 = vld [vmem:[%s0 + $0x4] sm:$0xf]
  %v32 = vld [vmem:[%s0 + $0x8] sm:$0xf]
  %v33 = vld [vmem:[%s0 + $0xc] sm:$0xf]
  %v34 = vld [vmem:[%s0 + $0x10] sm:$0xf]
  %v35 = vld [vmem:[%s0 + $0x14] sm:$0xf]
  %v36 = vld [vmem:[%s0 + $0x18] sm:$0xf]
  %v37 = vld [vmem:[%s0 + $0x1c] sm:$0xf]
  %v38 = vld [vmem:[%s0 + $0x20] sm:$0xf]
  %v39 = vld [vmem:[%s0 + $0x24] sm:$0xf]
  %v40 = vld [vmem:[%s0 + $0x28] sm:$0xf]
  %v41 = vld [vmem:[%s0 + $0x2c] sm:$0xf]
  %v42 = vld [vmem:[%s0 + $0x30] sm:$0xf]
  %v43 = vld [vmem:[%s0 + $0x34] sm:$0xf]
  %v44 = vld [vmem:[%s0 + $0x38] sm:$0xf]
  %v45 = vld [vmem:[%s0 + $0x3c] sm:$0xf]
  %v46 = vld [vmem:[%s0 + $0x40] sm:$0xf]
  %v47 = vld [vmem:[%s0 + $0x44] sm:$0xf]
  %v48 = vld [vmem:[%s0 + $0x48] sm:$0xf]
  %v49 = vld [vmem:[%s0 + $0x4c] sm:$0xf]
  %v50 = vld [vmem:[%s0 + $0x50] sm:$0xf]
  %v51 = vld [vmem:[%s0 + $0x54] sm:$0xf]
  %v52 = vld [vmem:[%s0 + $0x58] sm:$0xf]
  %v53 = vld [vmem:[%s0 + $0x5c] sm:$0xf]
  %v54 = vld [vmem:[%s0 + $0x60] sm:$0xf]
  %v55 = vld [vmem:[%s0 + $0x64] sm:$0xf]
  %v56 = vld [vmem:[%s0 + $0x68] sm:$0xf]
  %v57 = vld [vmem:[%s0 + $0x6c] sm:$0xf]
  %v58 = vld [vmem:[%s0 + $0x70] sm:$0xf]
  %v59 = vld [vmem:[%s0 + $0x74] sm:$0xf]
  %v60 = vld [vmem:[%s0 + $0x78] sm:$0xf]
  %v61 = vld [vmem:[%s0 + $0x7c] sm:$0xf]
  %v62 = vld [vmem:[%s0 + $0x80] sm:$0xf]
  %v63 = vld [vmem:[%s0 + $0x84] sm:$0xf]
  %v64 = vld [vmem:[%s0 + $0x88] sm:$0xf]
  %v65 = vld [vmem:[%s0 + $0x8c] sm:$0xf]
  %v66 = vld [vmem:[%s0 + $0x90] sm:$0xf]
  %v67 = vld [vmem:[%s0 + $0x94] sm:$0xf]
  %v68 = vld [vmem:[%s0 + $0x98] sm:$0xf]
  %v69 = vld [vmem:[%s0 + $0x9c] sm:$0xf]
  %v70 = vld [vmem:[%s0 + $0xa0] sm:$0xf]
  %v71 = vld [vmem:[%s0 + $0xa4] sm:$0xf]
  %v72 = vld [vmem:[%s0 + $0xa8] sm:$0xf]
  %v73 = vld [vmem:[%s0 + $0xac] sm:$0xf]
  %v74 = vld [vmem:[%s0 + $0xb0] sm:$0xf]
  %v75 = vld [vmem:[%s0 + $0xb4] sm:$0xf]
  %v76 = vld [vmem:[%s0 + $0xb8] sm:$0xf]
  %v77 = vld [vmem:[%s0 + $0xbc] sm:$0xf]
  %v78 = vld [vmem:[%s0 + $0xc0] sm:$0xf]
  %v79 = vld [vmem:[%s0 + $0xc4] sm:$0xf]
  %v80 = vld [vmem:[%s0 + $0xc8] sm:$0xf]
  %v81 = vld [vmem:[%s0 + $0xcc] sm:$0xf]
  %v82 = vld [vmem:[%s0 + $0xd0] sm:$0xf]
  %v83 = vld [vmem:[%s0 + $0xd4] sm:$0xf]
  %v84 = vld [vmem:[%s0 + $0xd8] sm:$0xf]
  %v85 = vld [vmem:[%s0 + $0xdc] sm:$0xf]
  %v86 = vld [vmem:[%s0 + $0xe0] sm:$0xf]
  %v87 = vld [vmem:[%s0 + $0xe4] sm:$0xf]
  %v88 = vld [vmem:[%s0 + $0xe8] sm:$0xf]
  %v89 = vld [vmem:[%s0 + $0xec] sm:$0xf]
  %v90 = vld [vmem:[%s0 + $0xf0] sm:$0xf]
  %v91 = vld [vmem:[%s0 + $0xf4] sm:$0xf]
  %v92 = vld [vmem:[%s0 + $0xf8] sm:$0xf]
  %v93 = vld [vmem:[%s0 + $0xfc] sm:$0xf]
  %v94 = vld [vmem:[%s1] sm:$0xf]
  %v95 = vld [vmem:[%s1 + $0x4] sm:$0xf]
  %v96 = vld [vmem:[%s1 + $0x8] sm:$0xf]
  %v97 = vld [vmem:[%s1 + $0xc] sm:$0xf]
  %v98 = vld [vmem:[%s1 + $0x10] sm:$0xf]
  %v99 = vld [vmem:[%s1 + $0x14] sm:$0xf]
  %v100 = vld [vmem:[%s1 + $0x18] sm:$0xf]
  %v101 = vld [vmem:[%s1 + $0x1c] sm:$0xf]
  %v102 = vld [vmem:[%s1 + $0x20] sm:$0xf]
  %v103 = vld [vmem:[%s1 + $0x24] sm:$0xf]
  %v104 = vld [vmem:[%s1 + $0x28] sm:$0xf]
  %v105 = vld [vmem:[%s1 + $0x2c] sm:$0xf]
  %v106 = vld [vmem:[%s1 + $0x30] sm:$0xf]
  %v107 = vld [vmem:[%s1 + $0x34] sm:$0xf]
  %v108 = vld [vmem:[%s1 + $0x38] sm:$0xf]
  %v109 = vld [vmem:[%s1 + $0x3c] sm:$0xf]
  %v174 = vunpack.c.l.b16 %v30
  %v175 = vunpack.c.l.b16 %v31
  %v176 = vunpack.c.l.b16 %v32
  %v177 = vunpack.c.l.b16 %v33
  %v178 = vunpack.c.l.b16 %v34
  %v179 = vunpack.c.l.b16 %v35
  %v180 = vunpack.c.l.b16 %v36
  %v181 = vunpack.c.l.b16 %v37
  %v182 = vunpack.c.l.b16 %v38
  %v183 = vunpack.c.l.b16 %v39
  %v184 = vunpack.c.l.b16 %v40
  %v185 = vunpack.c.l.b16 %v41
  %v186 = vunpack.c.l.b16 %v42
  %v187 = vunpack.c.l.b16 %v43
  %v188 = vunpack.c.l.b16 %v44
  %v189 = vunpack.c.l.b16 %v45
  %v190 = vunpack.c.l.b16 %v46
  %v191 = vunpack.c.l.b16 %v47
  %v192 = vunpack.c.l.b16 %v48
  %v193 = vunpack.c.l.b16 %v49
  %v194 = vunpack.c.l.b16 %v50
  %v195 = vunpack.c.l.b16 %v51
  %v196 = vunpack.c.l.b16 %v52
  %v197 = vunpack.c.l.b16 %v53
  %v198 = vunpack.c.l.b16 %v54
  %v199 = vunpack.c.l.b16 %v55
  %v200 = vunpack.c.l.b16 %v56
  %v201 = vunpack.c.l.b16 %v57
  %v202 = vunpack.c.l.b16 %v58
  %v203 = vunpack.c.l.b16 %v59
  %v204 = vunpack.c.l.b16 %v60
  %v205 = vunpack.c.l.b16 %v61
  %v206 = vunpack.c.l.b16 %v62
  %v207 = vunpack.c.l.b16 %v63
  %v208 = vunpack.c.l.b16 %v64
  %v209 = vunpack.c.l.b16 %v65
  %v210 = vunpack.c.l.b16 %v66
  %v211 = vunpack.c.l.b16 %v67
  %v212 = vunpack.c.l.b16 %v68
  %v213 = vunpack.c.l.b16 %v69
  %v214 = vunpack.c.l.b16 %v70
  %v215 = vunpack.c.l.b16 %v71
  %v216 = vunpack.c.l.b16 %v72
  %v217 = vunpack.c.l.b16 %v73
  %v218 = vunpack.c.l.b16 %v74
  %v219 = vunpack.c.l.b16 %v75
  %v220 = vunpack.c.l.b16 %v76
  %v221 = vunpack.c.l.b16 %v77
  %v222 = vunpack.c.l.b16 %v78
  %v223 = vunpack.c.l.b16 %v79
  %v224 = vunpack.c.l.b16 %v80
  %v225 = vunpack.c.l.b16 %v81
  %v226 = vunpack.c.l.b16 %v82
  %v227 = vunpack.c.l.b16 %v83
  %v228 = vunpack.c.l.b16 %v84
  %v229 = vunpack.c.l.b16 %v85
  %v230 = vunpack.c.l.b16 %v86
  %v231 = vunpack.c.l.b16 %v87
  %v232 = vunpack.c.l.b16 %v88
  %v233 = vunpack.c.l.b16 %v89
  %v234 = vunpack.c.l.b16 %v90
  %v235 = vunpack.c.l.b16 %v91
  %v236 = vunpack.c.l.b16 %v92
  %v237 = vunpack.c.l.b16 %v93
  %v238 = vpack.c.b16 %v175, %v174
  %v239 = vpack.c.b16 %v177, %v176
  %v240 = vpack.c.b16 %v179, %v178
  %v241 = vpack.c.b16 %v181, %v180
  %v242 = vpack.c.b16 %v183, %v182
  %v243 = vpack.c.b16 %v185, %v184
  %v244 = vpack.c.b16 %v187, %v186
  %v245 = vpack.c.b16 %v189, %v188
  %v246 = vpack.c.b16 %v191, %v190
  %v247 = vpack.c.b16 %v193, %v192
  %v248 = vpack.c.b16 %v195, %v194
  %v249 = vpack.c.b16 %v197, %v196
  %v250 = vpack.c.b16 %v199, %v198
  %v251 = vpack.c.b16 %v201, %v200
  %v252 = vpack.c.b16 %v203, %v202
  %v253 = vpack.c.b16 %v205, %v204
  %v254 = vpack.c.b16 %v207, %v206
  %v255 = vpack.c.b16 %v209, %v208
  %v256 = vpack.c.b16 %v211, %v210
  %v257 = vpack.c.b16 %v213, %v212
  %v258 = vpack.c.b16 %v215, %v214
  %v259 = vpack.c.b16 %v217, %v216
  %v260 = vpack.c.b16 %v219, %v218
  %v261 = vpack.c.b16 %v221, %v220
  %v262 = vpack.c.b16 %v223, %v222
  %v263 = vpack.c.b16 %v225, %v224
  %v264 = vpack.c.b16 %v227, %v226
  %v265 = vpack.c.b16 %v229, %v228
  %v266 = vpack.c.b16 %v231, %v230
  %v267 = vpack.c.b16 %v233, %v232
  %v268 = vpack.c.b16 %v235, %v234
  %v269 = vpack.c.b16 %v237, %v236
  %v318 = vunpack.c.l.b16 %v94
  %v319 = vunpack.c.l.b16 %v95
  %v320 = vunpack.c.l.b16 %v96
  %v321 = vunpack.c.l.b16 %v97
  %v322 = vunpack.c.l.b16 %v98
  %v323 = vunpack.c.l.b16 %v99
  %v324 = vunpack.c.l.b16 %v100
  %v325 = vunpack.c.l.b16 %v101
  %v326 = vunpack.c.l.b16 %v102
  %v327 = vunpack.c.l.b16 %v103
  %v328 = vunpack.c.l.b16 %v104
  %v329 = vunpack.c.l.b16 %v105
  %v330 = vunpack.c.l.b16 %v106
  %v331 = vunpack.c.l.b16 %v107
  %v332 = vunpack.c.l.b16 %v108
  %v333 = vunpack.c.l.b16 %v109
  %v334 = vpack.c.b16 %v319, %v318
  %v335 = vpack.c.b16 %v321, %v320
  %v336 = vpack.c.b16 %v323, %v322
  %v337 = vpack.c.b16 %v325, %v324
  %v338 = vpack.c.b16 %v327, %v326
  %v339 = vpack.c.b16 %v329, %v328
  %v340 = vpack.c.b16 %v331, %v330
  %v341 = vpack.c.b16 %v333, %v332
  %350 = vmatprep.subr.bf16.mxu0 0
  %351 = vmatpush1.bf16.msra.mxu0 %v334
  %352 = vmatprep.subr.bf16.mxu0 0
  %353 = vmatpush1.bf16.msra.mxu0 %v335
  %354 = vmatprep.subr.bf16.mxu0 0
  %355 = vmatpush1.bf16.msra.mxu0 %v336
  %356 = vmatprep.subr.bf16.mxu0 0
  %357 = vmatpush1.bf16.msra.mxu0 %v337
  %358 = vmatprep.subr.bf16.mxu0 0
  %359 = vmatpush1.bf16.msra.mxu0 %v338
  %360 = vmatprep.subr.bf16.mxu0 0
  %361 = vmatpush1.bf16.msra.mxu0 %v339
  %362 = vmatprep.subr.bf16.mxu0 0
  %363 = vmatpush1.bf16.msra.mxu0 %v340
  %364 = vmatprep.subr.bf16.mxu0 0
  %365 = vmatpush1.bf16.msra.mxu0 %v341
  %366 = vmatprep.subr.bf16.mxu0 0
  %367 = vmatpush1.bf16.msra.mxu0 0
  %368 = vmatprep.subr.bf16.mxu0 0
  %369 = vmatpush1.bf16.msra.mxu0 0
  %370 = vmatprep.subr.bf16.mxu0 0
  %371 = vmatpush1.bf16.msra.mxu0 0
  %372 = vmatprep.subr.bf16.mxu0 0
  %373 = vmatpush1.bf16.msra.mxu0 0
  %374 = vmatprep.subr.bf16.mxu0 0
  %375 = vmatpush1.bf16.msra.mxu0 0
  %376 = vmatprep.subr.bf16.mxu0 0
  %377 = vmatpush1.bf16.msra.mxu0 0
  %378 = vmatprep.subr.bf16.mxu0 0
  %379 = vmatpush1.bf16.msra.mxu0 0
  %380 = vmatprep.subr.bf16.mxu0 0
  %381 = vmatpush1.bf16.msra.mxu0 0
  %382 = vmatprep.mubr.bf16.mxu0 0
  %383 = vmatmul.mubr.bf16.gmra.mrb[0].mxu0 %v238
  %v384 = vpop.f32.mrb[0].mxu0
  %v385 = vadd.f32 0.0, %v384
  %v386 = vpop.f32.mrb[0].mxu0
  %v387 = vpop.f32.mrb[0].mxu0
  %v388 = vadd.f32 0.0, %v387
  %v389 = vpop.f32.mrb[0].mxu0
  %390 = vmatprep.mubr.bf16.mxu0 0
  %391 = vmatmul.mubr.bf16.gmra.mrb[0].mxu0 %v239
  %v392 = vpop.f32.mrb[0].mxu0
  %v393 = vadd.f32 0.0, %v392
  %v394 = vpop.f32.mrb[0].mxu0
  %v395 = vpop.f32.mrb[0].mxu0
  %v396 = vadd.f32 0.0, %v395
  %v397 = vpop.f32.mrb[0].mxu0
  %398 = vmatprep.mubr.bf16.mxu0 0
  %399 = vmatmul.mubr.bf16.gmra.mrb[0].mxu0 %v240
  %v400 = vpop.f32.mrb[0].mxu0
  %v401 = vadd.f32 0.0, %v400
  %v402 = vpop.f32.mrb[0].mxu0
  %v403 = vpop.f32.mrb[0].mxu0
  %v404 = vadd.f32 0.0, %v403
  %v405 = vpop.f32.mrb[0].mxu0
  %406 = vmatprep.mubr.bf16.mxu0 0
  %407 = vmatmul.mubr.bf16.gmra.mrb[0].mxu0 %v241
  %v408 = vpop.f32.mrb[0].mxu0
  %v409 = vadd.f32 0.0, %v408
  %v410 = vpop.f32.mrb[0].mxu0
  %v411 = vpop.f32.mrb[0].mxu0
  %v412 = vadd.f32 0.0, %v411
  %v413 = vpop.f32.mrb[0].mxu0
  %414 = vmatprep.mubr.bf16.mxu0 0
  %415 = vmatmul.mubr.bf16.gmra.mrb[0].mxu0 %v242
  %v416 = vpop.f32.mrb[0].mxu0
  %v417 = vadd.f32 0.0, %v416
  %v418 = vpop.f32.mrb[0].mxu0
  %v419 = vpop.f32.mrb[0].mxu0
  %v420 = vadd.f32 0.0, %v419
  %v421 = vpop.f32.mrb[0].mxu0
  %422 = vmatprep.mubr.bf16.mxu0 0
  %423 = vmatmul.mubr.bf16.gmra.mrb[0].mxu0 %v243
  %v424 = vpop.f32.mrb[0].mxu0
  %v425 = vadd.f32 0.0, %v424
  %v426 = vpop.f32.mrb[0].mxu0
  %v427 = vpop.f32.mrb[0].mxu0
  %v428 = vadd.f32 0.0, %v427
  %v429 = vpop.f32.mrb[0].mxu0
  %430 = vmatprep.mubr.bf16.mxu0 0
  %431 = vmatmul.mubr.bf16.gmra.mrb[0].mxu0 %v244
  %v432 = vpop.f32.mrb[0].mxu0
  %v433 = vadd.f32 0.0, %v432
  %v434 = vpop.f32.mrb[0].mxu0
  %v435 = vpop.f32.mrb[0].mxu0
  %v436 = vadd.f32 0.0, %v435
  %v437 = vpop.f32.mrb[0].mxu0
  %438 = vmatprep.mubr.bf16.mxu0 0
  %439 = vmatmul.mubr.bf16.gmra.mrb[0].mxu0 %v245
  %v440 = vpop.f32.mrb[0].mxu0
  %v441 = vadd.f32 0.0, %v440
  %v442 = vpop.f32.mrb[0].mxu0
  %v443 = vpop.f32.mrb[0].mxu0
  %v444 = vadd.f32 0.0, %v443
  %v445 = vpop.f32.mrb[0].mxu0
  %446 = vmatprep.mubr.bf16.mxu0 0
  %447 = vmatmul.mubr.bf16.gmra.mrb[0].mxu0 %v246
  %v448 = vpop.f32.mrb[0].mxu0
  %v449 = vadd.f32 0.0, %v448
  %v450 = vpop.f32.mrb[0].mxu0
  %v451 = vpop.f32.mrb[0].mxu0
  %v452 = vadd.f32 0.0, %v451
  %v453 = vpop.f32.mrb[0].mxu0
  %454 = vmatprep.mubr.bf16.mxu0 0
  %455 = vmatmul.mubr.bf16.gmra.mrb[0].mxu0 %v247
  %v456 = vpop.f32.mrb[0].mxu0
  %v457 = vadd.f32 0.0, %v456
  %v458 = vpop.f32.mrb[0].mxu0
  %v459 = vpop.f32.mrb[0].mxu0
  %v460 = vadd.f32 0.0, %v459
  %v461 = vpop.f32.mrb[0].mxu0
  %462 = vmatprep.mubr.bf16.mxu0 0
  %463 = vmatmul.mubr.bf16.gmra.mrb[0].mxu0 %v248
  %v464 = vpop.f32.mrb[0].mxu0
  %v465 = vadd.f32 0.0, %v464
  %v466 = vpop.f32.mrb[0].mxu0
  %v467 = vpop.f32.mrb[0].mxu0
  %v468 = vadd.f32 0.0, %v467
  %v469 = vpop.f32.mrb[0].mxu0
  %470 = vmatprep.mubr.bf16.mxu0 0
  %471 = vmatmul.mubr.bf16.gmra.mrb[0].mxu0 %v249
  %v472 = vpop.f32.mrb[0].mxu0
  %v473 = vadd.f32 0.0, %v472
  %v474 = vpop.f32.mrb[0].mxu0
  %v475 = vpop.f32.mrb[0].mxu0
  %v476 = vadd.f32 0.0, %v475
  %v477 = vpop.f32.mrb[0].mxu0
  %478 = vmatprep.mubr.bf16.mxu0 0
  %479 = vmatmul.mubr.bf16.gmra.mrb[0].mxu0 %v250
  %v480 = vpop.f32.mrb[0].mxu0
  %v481 = vadd.f32 0.0, %v480
  %v482 = vpop.f32.mrb[0].mxu0
  %v483 = vpop.f32.mrb[0].mxu0
  %v484 = vadd.f32 0.0, %v483
  %v485 = vpop.f32.mrb[0].mxu0
  %486 = vmatprep.mubr.bf16.mxu0 0
  %487 = vmatmul.mubr.bf16.gmra.mrb[0].mxu0 %v251
  %v488 = vpop.f32.mrb[0].mxu0
  %v489 = vadd.f32 0.0, %v488
  %v490 = vpop.f32.mrb[0].mxu0
  %v491 = vpop.f32.mrb[0].mxu0
  %v492 = vadd.f32 0.0, %v491
  %v493 = vpop.f32.mrb[0].mxu0
  %494 = vmatprep.mubr.bf16.mxu0 0
  %495 = vmatmul.mubr.bf16.gmra.mrb[0].mxu0 %v252
  %v496 = vpop.f32.mrb[0].mxu0
  %v497 = vadd.f32 0.0, %v496
  %v498 = vpop.f32.mrb[0].mxu0
  %v499 = vpop.f32.mrb[0].mxu0
  %v500 = vadd.f32 0.0, %v499
  %v501 = vpop.f32.mrb[0].mxu0
  %502 = vmatprep.mubr.bf16.mxu0 0
  %503 = vmatmul.mubr.bf16.gmra.mrb[0].mxu0 %v253
  %v504 = vpop.f32.mrb[0].mxu0
  %v505 = vadd.f32 0.0, %v504
  %v506 = vpop.f32.mrb[0].mxu0
  %v507 = vpop.f32.mrb[0].mxu0
  %v508 = vadd.f32 0.0, %v507
  %v509 = vpop.f32.mrb[0].mxu0
  %510 = vmatprep.mubr.bf16.mxu0 0
  %511 = vmatmul.mubr.bf16.gmra.mrb[0].mxu0 %v254
  %v512 = vpop.f32.mrb[0].mxu0
  %v513 = vadd.f32 0.0, %v512
  %v514 = vpop.f32.mrb[0].mxu0
  %v515 = vpop.f32.mrb[0].mxu0
  %v516 = vadd.f32 0.0, %v515
  %v517 = vpop.f32.mrb[0].mxu0
  %518 = vmatprep.mubr.bf16.mxu0 0
  %519 = vmatmul.mubr.bf16.gmra.mrb[0].mxu0 %v255
  %v520 = vpop.f32.mrb[0].mxu0
  %v521 = vadd.f32 0.0, %v520
  %v522 = vpop.f32.mrb[0].mxu0
  %v523 = vpop.f32.mrb[0].mxu0
  %v524 = vadd.f32 0.0, %v523
  %v525 = vpop.f32.mrb[0].mxu0
  %526 = vmatprep.mubr.bf16.mxu0 0
  %527 = vmatmul.mubr.bf16.gmra.mrb[0].mxu0 %v256
  %v528 = vpop.f32.mrb[0].mxu0
  %v529 = vadd.f32 0.0, %v528
  %v530 = vpop.f32.mrb[0].mxu0
  %v531 = vpop.f32.mrb[0].mxu0
  %v532 = vadd.f32 0.0, %v531
  %v533 = vpop.f32.mrb[0].mxu0
  %534 = vmatprep.mubr.bf16.mxu0 0
  %535 = vmatmul.mubr.bf16.gmra.mrb[0].mxu0 %v257
  %v536 = vpop.f32.mrb[0].mxu0
  %v537 = vadd.f32 0.0, %v536
  %v538 = vpop.f32.mrb[0].mxu0
  %v539 = vpop.f32.mrb[0].mxu0
  %v540 = vadd.f32 0.0, %v539
  %v541 = vpop.f32.mrb[0].mxu0
  %542 = vmatprep.mubr.bf16.mxu0 0
  %543 = vmatmul.mubr.bf16.gmra.mrb[0].mxu0 %v258
  %v544 = vpop.f32.mrb[0].mxu0
  %v545 = vadd.f32 0.0, %v544
  %v546 = vpop.f32.mrb[0].mxu0
  %v547 = vpop.f32.mrb[0].mxu0
  %v548 = vadd.f32 0.0, %v547
  %v549 = vpop.f32.mrb[0].mxu0
  %550 = vmatprep.mubr.bf16.mxu0 0
  %551 = vmatmul.mubr.bf16.gmra.mrb[0].mxu0 %v259
  %v552 = vpop.f32.mrb[0].mxu0
  %v553 = vadd.f32 0.0, %v552
  %v554 = vpop.f32.mrb[0].mxu0
  %v555 = vpop.f32.mrb[0].mxu0
  %v556 = vadd.f32 0.0, %v555
  %v557 = vpop.f32.mrb[0].mxu0
  %558 = vmatprep.mubr.bf16.mxu0 0
  %559 = vmatmul.mubr.bf16.gmra.mrb[0].mxu0 %v260
  %v560 = vpop.f32.mrb[0].mxu0
  %v561 = vadd.f32 0.0, %v560
  %v562 = vpop.f32.mrb[0].mxu0
  %v563 = vpop.f32.mrb[0].mxu0
  %v564 = vadd.f32 0.0, %v563
  %v565 = vpop.f32.mrb[0].mxu0
  %566 = vmatprep.mubr.bf16.mxu0 0
  %567 = vmatmul.mubr.bf16.gmra.mrb[0].mxu0 %v261
  %v568 = vpop.f32.mrb[0].mxu0
  %v569 = vadd.f32 0.0, %v568
  %v570 = vpop.f32.mrb[0].mxu0
  %v571 = vpop.f32.mrb[0].mxu0
  %v572 = vadd.f32 0.0, %v571
  %v573 = vpop.f32.mrb[0].mxu0
  %574 = vmatprep.mubr.bf16.mxu0 0
  %575 = vmatmul.mubr.bf16.gmra.mrb[0].mxu0 %v262
  %v576 = vpop.f32.mrb[0].mxu0
  %v577 = vadd.f32 0.0, %v576
  %v578 = vpop.f32.mrb[0].mxu0
  %v579 = vpop.f32.mrb[0].mxu0
  %v580 = vadd.f32 0.0, %v579
  %v581 = vpop.f32.mrb[0].mxu0
  %582 = vmatprep.mubr.bf16.mxu0 0
  %583 = vmatmul.mubr.bf16.gmra.mrb[0].mxu0 %v263
  %v584 = vpop.f32.mrb[0].mxu0
  %v585 = vadd.f32 0.0, %v584
  %v586 = vpop.f32.mrb[0].mxu0
  %v587 = vpop.f32.mrb[0].mxu0
  %v588 = vadd.f32 0.0, %v587
  %v589 = vpop.f32.mrb[0].mxu0
  %590 = vmatprep.mubr.bf16.mxu0 0
  %591 = vmatmul.mubr.bf16.gmra.mrb[0].mxu0 %v264
  %v592 = vpop.f32.mrb[0].mxu0
  %v593 = vadd.f32 0.0, %v592
  %v594 = vpop.f32.mrb[0].mxu0
  %v595 = vpop.f32.mrb[0].mxu0
  %v596 = vadd.f32 0.0, %v595
  %v597 = vpop.f32.mrb[0].mxu0
  %598 = vmatprep.mubr.bf16.mxu0 0
  %599 = vmatmul.mubr.bf16.gmra.mrb[0].mxu0 %v265
  %v600 = vpop.f32.mrb[0].mxu0
  %v601 = vadd.f32 0.0, %v600
  %v602 = vpop.f32.mrb[0].mxu0
  %v603 = vpop.f32.mrb[0].mxu0
  %v604 = vadd.f32 0.0, %v603
  %v605 = vpop.f32.mrb[0].mxu0
  %606 = vmatprep.mubr.bf16.mxu0 0
  %607 = vmatmul.mubr.bf16.gmra.mrb[0].mxu0 %v266
  %v608 = vpop.f32.mrb[0].mxu0
  %v609 = vadd.f32 0.0, %v608
  %v610 = vpop.f32.mrb[0].mxu0
  %v611 = vpop.f32.mrb[0].mxu0
  %v612 = vadd.f32 0.0, %v611
  %v613 = vpop.f32.mrb[0].mxu0
  %614 = vmatprep.mubr.bf16.mxu0 0
  %615 = vmatmul.mubr.bf16.gmra.mrb[0].mxu0 %v267
  %v616 = vpop.f32.mrb[0].mxu0
  %v617 = vadd.f32 0.0, %v616
  %v618 = vpop.f32.mrb[0].mxu0
  %v619 = vpop.f32.mrb[0].mxu0
  %v620 = vadd.f32 0.0, %v619
  %v621 = vpop.f32.mrb[0].mxu0
  %622 = vmatprep.mubr.bf16.mxu0 0
  %623 = vmatmul.mubr.bf16.gmra.mrb[0].mxu0 %v268
  %v624 = vpop.f32.mrb[0].mxu0
  %v625 = vadd.f32 0.0, %v624
  %v626 = vpop.f32.mrb[0].mxu0
  %v627 = vpop.f32.mrb[0].mxu0
  %v628 = vadd.f32 0.0, %v627
  %v629 = vpop.f32.mrb[0].mxu0
  %630 = vmatprep.mubr.bf16.mxu0 0
  %631 = vmatmul.mubr.bf16.gmra.mrb[0].mxu0 %v269
  %v632 = vpop.f32.mrb[0].mxu0
  %v633 = vadd.f32 0.0, %v632
  %v634 = vpop.f32.mrb[0].mxu0
  %v635 = vpop.f32.mrb[0].mxu0
  %v636 = vadd.f32 0.0, %v635
  %v637 = vpop.f32.mrb[0].mxu0
  %638 = vdwg.mxu0
  %v639 = vmax.f32 %v385, 0.0
  %v640 = vmax.f32 %v388, 0.0
  %v641 = vmax.f32 %v393, 0.0
  %v642 = vmax.f32 %v396, 0.0
  %v643 = vmax.f32 %v401, 0.0
  %v644 = vmax.f32 %v404, 0.0
  %v645 = vmax.f32 %v409, 0.0
  %v646 = vmax.f32 %v412, 0.0
  %v647 = vmax.f32 %v417, 0.0
  %v648 = vmax.f32 %v420, 0.0
  %v649 = vmax.f32 %v425, 0.0
  %v650 = vmax.f32 %v428, 0.0
  %v651 = vmax.f32 %v433, 0.0
  %v652 = vmax.f32 %v436, 0.0
  %v653 = vmax.f32 %v441, 0.0
  %v654 = vmax.f32 %v444, 0.0
  %v655 = vmax.f32 %v449, 0.0
  %v656 = vmax.f32 %v452, 0.0
  %v657 = vmax.f32 %v457, 0.0
  %v658 = vmax.f32 %v460, 0.0
  %v659 = vmax.f32 %v465, 0.0
  %v660 = vmax.f32 %v468, 0.0
  %v661 = vmax.f32 %v473, 0.0
  %v662 = vmax.f32 %v476, 0.0
  %v663 = vmax.f32 %v481, 0.0
  %v664 = vmax.f32 %v484, 0.0
  %v665 = vmax.f32 %v489, 0.0
  %v666 = vmax.f32 %v492, 0.0
  %v667 = vmax.f32 %v497, 0.0
  %v668 = vmax.f32 %v500, 0.0
  %v669 = vmax.f32 %v505, 0.0
  %v670 = vmax.f32 %v508, 0.0
  %v671 = vmax.f32 %v513, 0.0
  %v672 = vmax.f32 %v516, 0.0
  %v673 = vmax.f32 %v521, 0.0
  %v674 = vmax.f32 %v524, 0.0
  %v675 = vmax.f32 %v529, 0.0
  %v676 = vmax.f32 %v532, 0.0
  %v677 = vmax.f32 %v537, 0.0
  %v678 = vmax.f32 %v540, 0.0
  %v679 = vmax.f32 %v545, 0.0
  %v680 = vmax.f32 %v548, 0.0
  %v681 = vmax.f32 %v553, 0.0
  %v682 = vmax.f32 %v556, 0.0
  %v683 = vmax.f32 %v561, 0.0
  %v684 = vmax.f32 %v564, 0.0
  %v685 = vmax.f32 %v569, 0.0
  %v686 = vmax.f32 %v572, 0.0
  %v687 = vmax.f32 %v577, 0.0
  %v688 = vmax.f32 %v580, 0.0
  %v689 = vmax.f32 %v585, 0.0
  %v690 = vmax.f32 %v588, 0.0
  %v691 = vmax.f32 %v593, 0.0
  %v692 = vmax.f32 %v596, 0.0
  %v693 = vmax.f32 %v601, 0.0
  %v694 = vmax.f32 %v604, 0.0
  %v695 = vmax.f32 %v609, 0.0
  %v696 = vmax.f32 %v612, 0.0
  %v697 = vmax.f32 %v617, 0.0
  %v698 = vmax.f32 %v620, 0.0
  %v699 = vmax.f32 %v625, 0.0
  %v700 = vmax.f32 %v628, 0.0
  %v701 = vmax.f32 %v633, 0.0
  %v702 = vmax.f32 %v636, 0.0
  %v703 = vpack.c.bf16 %v640, %v639
  %v704 = vpack.c.bf16 %v642, %v641
  %v705 = vpack.c.bf16 %v644, %v643
  %v706 = vpack.c.bf16 %v646, %v645
  %v707 = vpack.c.bf16 %v648, %v647
  %v708 = vpack.c.bf16 %v650, %v649
  %v709 = vpack.c.bf16 %v652, %v651
  %v710 = vpack.c.bf16 %v654, %v653
  %v711 = vpack.c.bf16 %v656, %v655
  %v712 = vpack.c.bf16 %v658, %v657
  %v713 = vpack.c.bf16 %v660, %v659
  %v714 = vpack.c.bf16 %v662, %v661
  %v715 = vpack.c.bf16 %v664, %v663
  %v716 = vpack.c.bf16 %v666, %v665
  %v717 = vpack.c.bf16 %v668, %v667
  %v718 = vpack.c.bf16 %v670, %v669
  %v719 = vpack.c.bf16 %v672, %v671
  %v720 = vpack.c.bf16 %v674, %v673
  %v721 = vpack.c.bf16 %v676, %v675
  %v722 = vpack.c.bf16 %v678, %v677
  %v723 = vpack.c.bf16 %v680, %v679
  %v724 = vpack.c.bf16 %v682, %v681
  %v725 = vpack.c.bf16 %v684, %v683
  %v726 = vpack.c.bf16 %v686, %v685
  %v727 = vpack.c.bf16 %v688, %v687
  %v728 = vpack.c.bf16 %v690, %v689
  %v729 = vpack.c.bf16 %v692, %v691
  %v730 = vpack.c.bf16 %v694, %v693
  %v731 = vpack.c.bf16 %v696, %v695
  %v732 = vpack.c.bf16 %v698, %v697
  %v733 = vpack.c.bf16 %v700, %v699
  %v734 = vpack.c.bf16 %v702, %v701
  %v735 = vld [vmem:[%s2] sm:$0xff]
  %v736 = vld [vmem:[%s2 + $0x8] sm:$0xff]
  %v737 = vld [vmem:[%s2 + $0x10] sm:$0xff]
  %v738 = vld [vmem:[%s2 + $0x18] sm:$0xff]
  %v739 = vld [vmem:[%s2 + $0x20] sm:$0xff]
  %v740 = vld [vmem:[%s2 + $0x28] sm:$0xff]
  %v741 = vld [vmem:[%s2 + $0x30] sm:$0xff]
  %v742 = vld [vmem:[%s2 + $0x38] sm:$0xff]
  %v743 = vld [vmem:[%s2 + $0x40] sm:$0xff]
  %v744 = vld [vmem:[%s2 + $0x48] sm:$0xff]
  %v745 = vld [vmem:[%s2 + $0x50] sm:$0xff]
  %v746 = vld [vmem:[%s2 + $0x58] sm:$0xff]
  %v747 = vld [vmem:[%s2 + $0x60] sm:$0xff]
  %v748 = vld [vmem:[%s2 + $0x68] sm:$0xff]
  %v749 = vld [vmem:[%s2 + $0x70] sm:$0xff]
  %v750 = vld [vmem:[%s2 + $0x78] sm:$0xff]
  %v751 = vld [vmem:[%s2 + $0x80] sm:$0xff]
  %v752 = vld [vmem:[%s2 + $0x88] sm:$0xff]
  %v753 = vld [vmem:[%s2 + $0x90] sm:$0xff]
  %v754 = vld [vmem:[%s2 + $0x98] sm:$0xff]
  %v755 = vld [vmem:[%s2 + $0xa0] sm:$0xff]
  %v756 = vld [vmem:[%s2 + $0xa8] sm:$0xff]
  %v757 = vld [vmem:[%s2 + $0xb0] sm:$0xff]
  %v758 = vld [vmem:[%s2 + $0xb8] sm:$0xff]
  %v759 = vld [vmem:[%s2 + $0xc0] sm:$0xff]
  %v760 = vld [vmem:[%s2 + $0xc8] sm:$0xff]
  %v761 = vld [vmem:[%s2 + $0xd0] sm:$0xff]
  %v762 = vld [vmem:[%s2 + $0xd8] sm:$0xff]
  %v763 = vld [vmem:[%s2 + $0xe0] sm:$0xff]
  %v764 = vld [vmem:[%s2 + $0xe8] sm:$0xff]
  %v765 = vld [vmem:[%s2 + $0xf0] sm:$0xff]
  %v766 = vld [vmem:[%s2 + $0xf8] sm:$0xff]
  %v799 = vunpack.c.l.b16 %v735
  %v800 = vunpack.c.h.b16 %v735
  %v801 = vunpack.c.l.b16 %v736
  %v802 = vunpack.c.h.b16 %v736
  %v803 = vunpack.c.l.b16 %v737
  %v804 = vunpack.c.h.b16 %v737
  %v805 = vunpack.c.l.b16 %v738
  %v806 = vunpack.c.h.b16 %v738
  %v807 = vunpack.c.l.b16 %v739
  %v808 = vunpack.c.h.b16 %v739
  %v809 = vunpack.c.l.b16 %v740
  %v810 = vunpack.c.h.b16 %v740
  %v811 = vunpack.c.l.b16 %v741
  %v812 = vunpack.c.h.b16 %v741
  %v813 = vunpack.c.l.b16 %v742
  %v814 = vunpack.c.h.b16 %v742
  %v815 = vunpack.c.l.b16 %v743
  %v816 = vunpack.c.h.b16 %v743
  %v817 = vunpack.c.l.b16 %v744
  %v818 = vunpack.c.h.b16 %v744
  %v819 = vunpack.c.l.b16 %v745
  %v820 = vunpack.c.h.b16 %v745
  %v821 = vunpack.c.l.b16 %v746
  %v822 = vunpack.c.h.b16 %v746
  %v823 = vunpack.c.l.b16 %v747
  %v824 = vunpack.c.h.b16 %v747
  %v825 = vunpack.c.l.b16 %v748
  %v826 = vunpack.c.h.b16 %v748
  %v827 = vunpack.c.l.b16 %v749
  %v828 = vunpack.c.h.b16 %v749
  %v829 = vunpack.c.l.b16 %v750
  %v830 = vunpack.c.h.b16 %v750
  %v831 = vunpack.c.l.b16 %v751
  %v832 = vunpack.c.h.b16 %v751
  %v833 = vunpack.c.l.b16 %v752
  %v834 = vunpack.c.h.b16 %v752
  %v835 = vunpack.c.l.b16 %v753
  %v836 = vunpack.c.h.b16 %v753
  %v837 = vunpack.c.l.b16 %v754
  %v838 = vunpack.c.h.b16 %v754
  %v839 = vunpack.c.l.b16 %v755
  %v840 = vunpack.c.h.b16 %v755
  %v841 = vunpack.c.l.b16 %v756
  %v842 = vunpack.c.h.b16 %v756
  %v843 = vunpack.c.l.b16 %v757
  %v844 = vunpack.c.h.b16 %v757
  %v845 = vunpack.c.l.b16 %v758
  %v846 = vunpack.c.h.b16 %v758
  %v847 = vunpack.c.l.b16 %v759
  %v848 = vunpack.c.h.b16 %v759
  %v849 = vunpack.c.l.b16 %v760
  %v850 = vunpack.c.h.b16 %v760
  %v851 = vunpack.c.l.b16 %v761
  %v852 = vunpack.c.h.b16 %v761
  %v853 = vunpack.c.l.b16 %v762
  %v854 = vunpack.c.h.b16 %v762
  %v855 = vunpack.c.l.b16 %v763
  %v856 = vunpack.c.h.b16 %v763
  %v857 = vunpack.c.l.b16 %v764
  %v858 = vunpack.c.h.b16 %v764
  %v859 = vunpack.c.l.b16 %v765
  %v860 = vunpack.c.h.b16 %v765
  %v861 = vunpack.c.l.b16 %v766
  %v862 = vunpack.c.h.b16 %v766
  %v863 = vpack.c.b16 %v803, %v799
  %v864 = vpack.c.b16 %v804, %v800
  %v865 = vpack.c.b16 %v805, %v801
  %v866 = vpack.c.b16 %v806, %v802
  %v867 = vpack.c.b16 %v811, %v807
  %v868 = vpack.c.b16 %v812, %v808
  %v869 = vpack.c.b16 %v813, %v809
  %v870 = vpack.c.b16 %v814, %v810
  %v871 = vpack.c.b16 %v819, %v815
  %v872 = vpack.c.b16 %v820, %v816
  %v873 = vpack.c.b16 %v821, %v817
  %v874 = vpack.c.b16 %v822, %v818
  %v875 = vpack.c.b16 %v827, %v823
  %v876 = vpack.c.b16 %v828, %v824
  %v877 = vpack.c.b16 %v829, %v825
  %v878 = vpack.c.b16 %v830, %v826
  %v879 = vpack.c.b16 %v835, %v831
  %v880 = vpack.c.b16 %v836, %v832
  %v881 = vpack.c.b16 %v837, %v833
  %v882 = vpack.c.b16 %v838, %v834
  %v883 = vpack.c.b16 %v843, %v839
  %v884 = vpack.c.b16 %v844, %v840
  %v885 = vpack.c.b16 %v845, %v841
  %v886 = vpack.c.b16 %v846, %v842
  %v887 = vpack.c.b16 %v851, %v847
  %v888 = vpack.c.b16 %v852, %v848
  %v889 = vpack.c.b16 %v853, %v849
  %v890 = vpack.c.b16 %v854, %v850
  %v891 = vpack.c.b16 %v859, %v855
  %v892 = vpack.c.b16 %v860, %v856
  %v893 = vpack.c.b16 %v861, %v857
  %v894 = vpack.c.b16 %v862, %v858
  %927 = vmatprep.subr.bf16.mxu0 0
  %928 = vmatpush1.bf16.msra.mxu0 %v703
  %929 = vmatprep.subr.bf16.mxu0 0
  %930 = vmatpush1.bf16.msra.mxu0 %v704
  %931 = vmatprep.subr.bf16.mxu0 0
  %932 = vmatpush1.bf16.msra.mxu0 %v705
  %933 = vmatprep.subr.bf16.mxu0 0
  %934 = vmatpush1.bf16.msra.mxu0 %v706
  %935 = vmatprep.subr.bf16.mxu0 0
  %936 = vmatpush1.bf16.msra.mxu0 %v707
  %937 = vmatprep.subr.bf16.mxu0 0
  %938 = vmatpush1.bf16.msra.mxu0 %v708
  %939 = vmatprep.subr.bf16.mxu0 0
  %940 = vmatpush1.bf16.msra.mxu0 %v709
  %941 = vmatprep.subr.bf16.mxu0 0
  %942 = vmatpush1.bf16.msra.mxu0 %v710
  %943 = vmatprep.subr.bf16.mxu0 0
  %944 = vmatpush1.bf16.msra.mxu0 %v711
  %945 = vmatprep.subr.bf16.mxu0 0
  %946 = vmatpush1.bf16.msra.mxu0 %v712
  %947 = vmatprep.subr.bf16.mxu0 0
  %948 = vmatpush1.bf16.msra.mxu0 %v713
  %949 = vmatprep.subr.bf16.mxu0 0
  %950 = vmatpush1.bf16.msra.mxu0 %v714
  %951 = vmatprep.subr.bf16.mxu0 0
  %952 = vmatpush1.bf16.msra.mxu0 %v715
  %953 = vmatprep.subr.bf16.mxu0 0
  %954 = vmatpush1.bf16.msra.mxu0 %v716
  %955 = vmatprep.subr.bf16.mxu0 0
  %956 = vmatpush1.bf16.msra.mxu0 %v717
  %957 = vmatprep.subr.bf16.mxu0 0
  %958 = vmatpush1.bf16.msra.mxu0 %v718
  %959 = vmatprep.mubr.bf16.mxu0 %v864
  %960 = vmatmul.mubr.bf16.gmra.mrb[0].mxu0 %v863
  %v961 = vpop.f32.mrb[0].mxu0
  %v962 = vadd.f32 0.0, %v961
  %v963 = vpop.f32.mrb[0].mxu0
  %v964 = vpop.f32.mrb[0].mxu0
  %v965 = vadd.f32 0.0, %v964
  %v966 = vpop.f32.mrb[0].mxu0
  %967 = vmatprep.mubr.bf16.mxu0 %v868
  %968 = vmatmul.mubr.bf16.gmra.mrb[0].mxu0 %v867
  %v969 = vpop.f32.mrb[0].mxu0
  %v970 = vadd.f32 0.0, %v969
  %v971 = vpop.f32.mrb[0].mxu0
  %v972 = vpop.f32.mrb[0].mxu0
  %v973 = vadd.f32 0.0, %v972
  %v974 = vpop.f32.mrb[0].mxu0
  %975 = vmatprep.mubr.bf16.mxu0 %v872
  %976 = vmatmul.mubr.bf16.gmra.mrb[0].mxu0 %v871
  %v977 = vpop.f32.mrb[0].mxu0
  %v978 = vadd.f32 0.0, %v977
  %v979 = vpop.f32.mrb[0].mxu0
  %v980 = vpop.f32.mrb[0].mxu0
  %v981 = vadd.f32 0.0, %v980
  %v982 = vpop.f32.mrb[0].mxu0
  %983 = vmatprep.mubr.bf16.mxu0 %v876
  %984 = vmatmul.mubr.bf16.gmra.mrb[0].mxu0 %v875
  %v985 = vpop.f32.mrb[0].mxu0
  %v986 = vadd.f32 0.0, %v985
  %v987 = vpop.f32.mrb[0].mxu0
  %v988 = vpop.f32.mrb[0].mxu0
  %v989 = vadd.f32 0.0, %v988
  %v990 = vpop.f32.mrb[0].mxu0
  %991 = vmatprep.mubr.bf16.mxu0 %v880
  %992 = vmatmul.mubr.bf16.gmra.mrb[0].mxu0 %v879
  %v993 = vpop.f32.mrb[0].mxu0
  %v994 = vadd.f32 0.0, %v993
  %v995 = vpop.f32.mrb[0].mxu0
  %v996 = vpop.f32.mrb[0].mxu0
  %v997 = vadd.f32 0.0, %v996
  %v998 = vpop.f32.mrb[0].mxu0
  %999 = vmatprep.mubr.bf16.mxu0 %v884
  %1000 = vmatmul.mubr.bf16.gmra.mrb[0].mxu0 %v883
  %v1001 = vpop.f32.mrb[0].mxu0
  %v1002 = vadd.f32 0.0, %v1001
  %v1003 = vpop.f32.mrb[0].mxu0
  %v1004 = vpop.f32.mrb[0].mxu0
  %v1005 = vadd.f32 0.0, %v1004
  %v1006 = vpop.f32.mrb[0].mxu0
  %1007 = vmatprep.mubr.bf16.mxu0 %v888
  %1008 = vmatmul.mubr.bf16.gmra.mrb[0].mxu0 %v887
  %v1009 = vpop.f32.mrb[0].mxu0
  %v1010 = vadd.f32 0.0, %v1009
  %v1011 = vpop.f32.mrb[0].mxu0
  %v1012 = vpop.f32.mrb[0].mxu0
  %v1013 = vadd.f32 0.0, %v1012
  %v1014 = vpop.f32.mrb[0].mxu0
  %1015 = vmatprep.mubr.bf16.mxu0 %v892
  %1016 = vmatmul.mubr.bf16.gmra.mrb[0].mxu0 %v891
  %v1017 = vpop.f32.mrb[0].mxu0
  %v1018 = vadd.f32 0.0, %v1017
  %v1019 = vpop.f32.mrb[0].mxu0
  %v1020 = vpop.f32.mrb[0].mxu0
  %v1021 = vadd.f32 0.0, %v1020
  %v1022 = vpop.f32.mrb[0].mxu0
  %1023 = vdwg.mxu0
  %1024 = vmatprep.subr.bf16.mxu0 0
  %1025 = vmatpush1.bf16.msra.mxu0 %v719
  %1026 = vmatprep.subr.bf16.mxu0 0
  %1027 = vmatpush1.bf16.msra.mxu0 %v720
  %1028 = vmatprep.subr.bf16.mxu0 0
  %1029 = vmatpush1.bf16.msra.mxu0 %v721
  %1030 = vmatprep.subr.bf16.mxu0 0
  %1031 = vmatpush1.bf16.msra.mxu0 %v722
  %1032 = vmatprep.subr.bf16.mxu0 0
  %1033 = vmatpush1.bf16.msra.mxu0 %v723
  %1034 = vmatprep.subr.bf16.mxu0 0
  %1035 = vmatpush1.bf16.msra.mxu0 %v724
  %1036 = vmatprep.subr.bf16.mxu0 0
  %1037 = vmatpush1.bf16.msra.mxu0 %v725
  %1038 = vmatprep.subr.bf16.mxu0 0
  %1039 = vmatpush1.bf16.msra.mxu0 %v726
  %1040 = vmatprep.subr.bf16.mxu0 0
  %1041 = vmatpush1.bf16.msra.mxu0 %v727
  %1042 = vmatprep.subr.bf16.mxu0 0
  %1043 = vmatpush1.bf16.msra.mxu0 %v728
  %1044 = vmatprep.subr.bf16.mxu0 0
  %1045 = vmatpush1.bf16.msra.mxu0 %v729
  %1046 = vmatprep.subr.bf16.mxu0 0
  %1047 = vmatpush1.bf16.msra.mxu0 %v730
  %1048 = vmatprep.subr.bf16.mxu0 0
  %1049 = vmatpush1.bf16.msra.mxu0 %v731
  %1050 = vmatprep.subr.bf16.mxu0 0
  %1051 = vmatpush1.bf16.msra.mxu0 %v732
  %1052 = vmatprep.subr.bf16.mxu0 0
  %1053 = vmatpush1.bf16.msra.mxu0 %v733
  %1054 = vmatprep.subr.bf16.mxu0 0
  %1055 = vmatpush1.bf16.msra.mxu0 %v734
  %1056 = vmatprep.mubr.bf16.mxu0 %v866
  %1057 = vmatmul.mubr.bf16.gmra.mrb[0].mxu0 %v865
  %v1058 = vpop.f32.mrb[0].mxu0
  %v1059 = vadd.f32 %v962, %v1058
  %v1060 = vpop.f32.mrb[0].mxu0
  %v1061 = vpop.f32.mrb[0].mxu0
  %v1062 = vadd.f32 %v965, %v1061
  %v1063 = vpop.f32.mrb[0].mxu0
  %1064 = vmatprep.mubr.bf16.mxu0 %v870
  %1065 = vmatmul.mubr.bf16.gmra.mrb[0].mxu0 %v869
  %v1066 = vpop.f32.mrb[0].mxu0
  %v1067 = vadd.f32 %v970, %v1066
  %v1068 = vpop.f32.mrb[0].mxu0
  %v1069 = vpop.f32.mrb[0].mxu0
  %v1070 = vadd.f32 %v973, %v1069
  %v1071 = vpop.f32.mrb[0].mxu0
  %1072 = vmatprep.mubr.bf16.mxu0 %v874
  %1073 = vmatmul.mubr.bf16.gmra.mrb[0].mxu0 %v873
  %v1074 = vpop.f32.mrb[0].mxu0
  %v1075 = vadd.f32 %v978, %v1074
  %v1076 = vpop.f32.mrb[0].mxu0
  %v1077 = vpop.f32.mrb[0].mxu0
  %v1078 = vadd.f32 %v981, %v1077
  %v1079 = vpop.f32.mrb[0].mxu0
  %1080 = vmatprep.mubr.bf16.mxu0 %v878
  %1081 = vmatmul.mubr.bf16.gmra.mrb[0].mxu0 %v877
  %v1082 = vpop.f32.mrb[0].mxu0
  %v1083 = vadd.f32 %v986, %v1082
  %v1084 = vpop.f32.mrb[0].mxu0
  %v1085 = vpop.f32.mrb[0].mxu0
  %v1086 = vadd.f32 %v989, %v1085
  %v1087 = vpop.f32.mrb[0].mxu0
  %1088 = vmatprep.mubr.bf16.mxu0 %v882
  %1089 = vmatmul.mubr.bf16.gmra.mrb[0].mxu0 %v881
  %v1090 = vpop.f32.mrb[0].mxu0
  %v1091 = vadd.f32 %v994, %v1090
  %v1092 = vpop.f32.mrb[0].mxu0
  %v1093 = vpop.f32.mrb[0].mxu0
  %v1094 = vadd.f32 %v997, %v1093
  %v1095 = vpop.f32.mrb[0].mxu0
  %1096 = vmatprep.mubr.bf16.mxu0 %v886
  %1097 = vmatmul.mubr.bf16.gmra.mrb[0].mxu0 %v885
  %v1098 = vpop.f32.mrb[0].mxu0
  %v1099 = vadd.f32 %v1002, %v1098
  %v1100 = vpop.f32.mrb[0].mxu0
  %v1101 = vpop.f32.mrb[0].mxu0
  %v1102 = vadd.f32 %v1005, %v1101
  %v1103 = vpop.f32.mrb[0].mxu0
  %1104 = vmatprep.mubr.bf16.mxu0 %v890
  %1105 = vmatmul.mubr.bf16.gmra.mrb[0].mxu0 %v889
  %v1106 = vpop.f32.mrb[0].mxu0
  %v1107 = vadd.f32 %v1010, %v1106
  %v1108 = vpop.f32.mrb[0].mxu0
  %v1109 = vpop.f32.mrb[0].mxu0
  %v1110 = vadd.f32 %v1013, %v1109
  %v1111 = vpop.f32.mrb[0].mxu0
  %1112 = vmatprep.mubr.bf16.mxu0 %v894
  %1113 = vmatmul.mubr.bf16.gmra.mrb[0].mxu0 %v893
  %v1114 = vpop.f32.mrb[0].mxu0
  %v1115 = vadd.f32 %v1018, %v1114
  %v1116 = vpop.f32.mrb[0].mxu0
  %v1117 = vpop.f32.mrb[0].mxu0
  %v1118 = vadd.f32 %v1021, %v1117
  %v1119 = vpop.f32.mrb[0].mxu0
  %1120 = vdwg.mxu0
  %v1121 = vpack.c.bf16 %v1062, %v1059
  %v1122 = vpack.c.bf16 %v1070, %v1067
  %v1123 = vpack.c.bf16 %v1078, %v1075
  %v1124 = vpack.c.bf16 %v1086, %v1083
  %v1125 = vpack.c.bf16 %v1094, %v1091
  %v1126 = vpack.c.bf16 %v1102, %v1099
  %v1127 = vpack.c.bf16 %v1110, %v1107
  %v1128 = vpack.c.bf16 %v1118, %v1115
  %v1129 = vld [vmem:[%s3] sm:$0xf]
  %v1130 = vld [vmem:[%s3 + $0x4] sm:$0xf]
  %v1131 = vld [vmem:[%s3 + $0x8] sm:$0xf]
  %v1132 = vld [vmem:[%s3 + $0xc] sm:$0xf]
  %v1133 = vld [vmem:[%s3 + $0x10] sm:$0xf]
  %v1134 = vld [vmem:[%s3 + $0x14] sm:$0xf]
  %v1135 = vld [vmem:[%s3 + $0x18] sm:$0xf]
  %v1136 = vld [vmem:[%s3 + $0x1c] sm:$0xf]
  %v1137 = vld [vmem:[%s3 + $0x20] sm:$0xf]
  %v1138 = vld [vmem:[%s3 + $0x24] sm:$0xf]
  %v1139 = vld [vmem:[%s3 + $0x28] sm:$0xf]
  %v1140 = vld [vmem:[%s3 + $0x2c] sm:$0xf]
  %v1141 = vld [vmem:[%s3 + $0x30] sm:$0xf]
  %v1142 = vld [vmem:[%s3 + $0x34] sm:$0xf]
  %v1143 = vld [vmem:[%s3 + $0x38] sm:$0xf]
  %v1144 = vld [vmem:[%s3 + $0x3c] sm:$0xf]
  %s1145 = scalar_lea.vmem %s2, 256
  %v1146 = vld [vmem:[%s1145] sm:$0xff]
  %v1147 = vld [vmem:[%s1145 + $0x8] sm:$0xff]
  %v1148 = vld [vmem:[%s1145 + $0x10] sm:$0xff]
  %v1149 = vld [vmem:[%s1145 + $0x18] sm:$0xff]
  %v1150 = vld [vmem:[%s1145 + $0x20] sm:$0xff]
  %v1151 = vld [vmem:[%s1145 + $0x28] sm:$0xff]
  %v1152 = vld [vmem:[%s1145 + $0x30] sm:$0xff]
  %v1153 = vld [vmem:[%s1145 + $0x38] sm:$0xff]
  %v1154 = vld [vmem:[%s1145 + $0x40] sm:$0xff]
  %v1155 = vld [vmem:[%s1145 + $0x48] sm:$0xff]
  %v1156 = vld [vmem:[%s1145 + $0x50] sm:$0xff]
  %v1157 = vld [vmem:[%s1145 + $0x58] sm:$0xff]
  %v1158 = vld [vmem:[%s1145 + $0x60] sm:$0xff]
  %v1159 = vld [vmem:[%s1145 + $0x68] sm:$0xff]
  %v1160 = vld [vmem:[%s1145 + $0x70] sm:$0xff]
  %v1161 = vld [vmem:[%s1145 + $0x78] sm:$0xff]
  %v1162 = vld [vmem:[%s1145 + $0x80] sm:$0xff]
  %v1163 = vld [vmem:[%s1145 + $0x88] sm:$0xff]
  %v1164 = vld [vmem:[%s1145 + $0x90] sm:$0xff]
  %v1165 = vld [vmem:[%s1145 + $0x98] sm:$0xff]
  %v1166 = vld [vmem:[%s1145 + $0xa0] sm:$0xff]
  %v1167 = vld [vmem:[%s1145 + $0xa8] sm:$0xff]
  %v1168 = vld [vmem:[%s1145 + $0xb0] sm:$0xff]
  %v1169 = vld [vmem:[%s1145 + $0xb8] sm:$0xff]
  %v1170 = vld [vmem:[%s1145 + $0xc0] sm:$0xff]
  %v1171 = vld [vmem:[%s1145 + $0xc8] sm:$0xff]
  %v1172 = vld [vmem:[%s1145 + $0xd0] sm:$0xff]
  %v1173 = vld [vmem:[%s1145 + $0xd8] sm:$0xff]
  %v1174 = vld [vmem:[%s1145 + $0xe0] sm:$0xff]
  %v1175 = vld [vmem:[%s1145 + $0xe8] sm:$0xff]
  %v1176 = vld [vmem:[%s1145 + $0xf0] sm:$0xff]
  %v1177 = vld [vmem:[%s1145 + $0xf8] sm:$0xff]
  %v1210 = vunpack.c.l.b16 %v1146
  %v1211 = vunpack.c.h.b16 %v1146
  %v1212 = vunpack.c.l.b16 %v1147
  %v1213 = vunpack.c.h.b16 %v1147
  %v1214 = vunpack.c.l.b16 %v1148
  %v1215 = vunpack.c.h.b16 %v1148
  %v1216 = vunpack.c.l.b16 %v1149
  %v1217 = vunpack.c.h.b16 %v1149
  %v1218 = vunpack.c.l.b16 %v1150
  %v1219 = vunpack.c.h.b16 %v1150
  %v1220 = vunpack.c.l.b16 %v1151
  %v1221 = vunpack.c.h.b16 %v1151
  %v1222 = vunpack.c.l.b16 %v1152
  %v1223 = vunpack.c.h.b16 %v1152
  %v1224 = vunpack.c.l.b16 %v1153
  %v1225 = vunpack.c.h.b16 %v1153
  %v1226 = vunpack.c.l.b16 %v1154
  %v1227 = vunpack.c.h.b16 %v1154
  %v1228 = vunpack.c.l.b16 %v1155
  %v1229 = vunpack.c.h.b16 %v1155
  %v1230 = vunpack.c.l.b16 %v1156
  %v1231 = vunpack.c.h.b16 %v1156
  %v1232 = vunpack.c.l.b16 %v1157
  %v1233 = vunpack.c.h.b16 %v1157
  %v1234 = vunpack.c.l.b16 %v1158
  %v1235 = vunpack.c.h.b16 %v1158
  %v1236 = vunpack.c.l.b16 %v1159
  %v1237 = vunpack.c.h.b16 %v1159
  %v1238 = vunpack.c.l.b16 %v1160
  %v1239 = vunpack.c.h.b16 %v1160
  %v1240 = vunpack.c.l.b16 %v1161
  %v1241 = vunpack.c.h.b16 %v1161
  %v1242 = vunpack.c.l.b16 %v1162
  %v1243 = vunpack.c.h.b16 %v1162
  %v1244 = vunpack.c.l.b16 %v1163
  %v1245 = vunpack.c.h.b16 %v1163
  %v1246 = vunpack.c.l.b16 %v1164
  %v1247 = vunpack.c.h.b16 %v1164
  %v1248 = vunpack.c.l.b16 %v1165
  %v1249 = vunpack.c.h.b16 %v1165
  %v1250 = vunpack.c.l.b16 %v1166
  %v1251 = vunpack.c.h.b16 %v1166
  %v1252 = vunpack.c.l.b16 %v1167
  %v1253 = vunpack.c.h.b16 %v1167
  %v1254 = vunpack.c.l.b16 %v1168
  %v1255 = vunpack.c.h.b16 %v1168
  %v1256 = vunpack.c.l.b16 %v1169
  %v1257 = vunpack.c.h.b16 %v1169
  %v1258 = vunpack.c.l.b16 %v1170
  %v1259 = vunpack.c.h.b16 %v1170
  %v1260 = vunpack.c.l.b16 %v1171
  %v1261 = vunpack.c.h.b16 %v1171
  %v1262 = vunpack.c.l.b16 %v1172
  %v1263 = vunpack.c.h.b16 %v1172
  %v1264 = vunpack.c.l.b16 %v1173
  %v1265 = vunpack.c.h.b16 %v1173
  %v1266 = vunpack.c.l.b16 %v1174
  %v1267 = vunpack.c.h.b16 %v1174
  %v1268 = vunpack.c.l.b16 %v1175
  %v1269 = vunpack.c.h.b16 %v1175
  %v1270 = vunpack.c.l.b16 %v1176
  %v1271 = vunpack.c.h.b16 %v1176
  %v1272 = vunpack.c.l.b16 %v1177
  %v1273 = vunpack.c.h.b16 %v1177
  %v1274 = vpack.c.b16 %v1214, %v1210
  %v1275 = vpack.c.b16 %v1215, %v1211
  %v1276 = vpack.c.b16 %v1216, %v1212
  %v1277 = vpack.c.b16 %v1217, %v1213
  %v1278 = vpack.c.b16 %v1222, %v1218
  %v1279 = vpack.c.b16 %v1223, %v1219
  %v1280 = vpack.c.b16 %v1224, %v1220
  %v1281 = vpack.c.b16 %v1225, %v1221
  %v1282 = vpack.c.b16 %v1230, %v1226
  %v1283 = vpack.c.b16 %v1231, %v1227
  %v1284 = vpack.c.b16 %v1232, %v1228
  %v1285 = vpack.c.b16 %v1233, %v1229
  %v1286 = vpack.c.b16 %v1238, %v1234
  %v1287 = vpack.c.b16 %v1239, %v1235
  %v1288 = vpack.c.b16 %v1240, %v1236
  %v1289 = vpack.c.b16 %v1241, %v1237
  %v1290 = vpack.c.b16 %v1246, %v1242
  %v1291 = vpack.c.b16 %v1247, %v1243
  %v1292 = vpack.c.b16 %v1248, %v1244
  %v1293 = vpack.c.b16 %v1249, %v1245
  %v1294 = vpack.c.b16 %v1254, %v1250
  %v1295 = vpack.c.b16 %v1255, %v1251
  %v1296 = vpack.c.b16 %v1256, %v1252
  %v1297 = vpack.c.b16 %v1257, %v1253
  %v1298 = vpack.c.b16 %v1262, %v1258
  %v1299 = vpack.c.b16 %v1263, %v1259
  %v1300 = vpack.c.b16 %v1264, %v1260
  %v1301 = vpack.c.b16 %v1265, %v1261
  %v1302 = vpack.c.b16 %v1270, %v1266
  %v1303 = vpack.c.b16 %v1271, %v1267
  %v1304 = vpack.c.b16 %v1272, %v1268
  %v1305 = vpack.c.b16 %v1273, %v1269
  %1338 = vmatprep.subr.bf16.mxu0 0
  %1339 = vmatpush1.bf16.msra.mxu0 %v703
  %1340 = vmatprep.subr.bf16.mxu0 0
  %1341 = vmatpush1.bf16.msra.mxu0 %v704
  %1342 = vmatprep.subr.bf16.mxu0 0
  %1343 = vmatpush1.bf16.msra.mxu0 %v705
  %1344 = vmatprep.subr.bf16.mxu0 0
  %1345 = vmatpush1.bf16.msra.mxu0 %v706
  %1346 = vmatprep.subr.bf16.mxu0 0
  %1347 = vmatpush1.bf16.msra.mxu0 %v707
  %1348 = vmatprep.subr.bf16.mxu0 0
  %1349 = vmatpush1.bf16.msra.mxu0 %v708
  %1350 = vmatprep.subr.bf16.mxu0 0
  %1351 = vmatpush1.bf16.msra.mxu0 %v709
  %1352 = vmatprep.subr.bf16.mxu0 0
  %1353 = vmatpush1.bf16.msra.mxu0 %v710
  %1354 = vmatprep.subr.bf16.mxu0 0
  %1355 = vmatpush1.bf16.msra.mxu0 %v711
  %1356 = vmatprep.subr.bf16.mxu0 0
  %1357 = vmatpush1.bf16.msra.mxu0 %v712
  %1358 = vmatprep.subr.bf16.mxu0 0
  %1359 = vmatpush1.bf16.msra.mxu0 %v713
  %1360 = vmatprep.subr.bf16.mxu0 0
  %1361 = vmatpush1.bf16.msra.mxu0 %v714
  %1362 = vmatprep.subr.bf16.mxu0 0
  %1363 = vmatpush1.bf16.msra.mxu0 %v715
  %1364 = vmatprep.subr.bf16.mxu0 0
  %1365 = vmatpush1.bf16.msra.mxu0 %v716
  %1366 = vmatprep.subr.bf16.mxu0 0
  %1367 = vmatpush1.bf16.msra.mxu0 %v717
  %1368 = vmatprep.subr.bf16.mxu0 0
  %1369 = vmatpush1.bf16.msra.mxu0 %v718
  %1370 = vmatprep.mubr.bf16.mxu0 %v1275
  %1371 = vmatmul.mubr.bf16.gmra.mrb[0].mxu0 %v1274
  %v1372 = vpop.f32.mrb[0].mxu0
  %v1373 = vadd.f32 0.0, %v1372
  %v1374 = vpop.f32.mrb[0].mxu0
  %v1375 = vpop.f32.mrb[0].mxu0
  %v1376 = vadd.f32 0.0, %v1375
  %v1377 = vpop.f32.mrb[0].mxu0
  %1378 = vmatprep.mubr.bf16.mxu0 %v1279
  %1379 = vmatmul.mubr.bf16.gmra.mrb[0].mxu0 %v1278
  %v1380 = vpop.f32.mrb[0].mxu0
  %v1381 = vadd.f32 0.0, %v1380
  %v1382 = vpop.f32.mrb[0].mxu0
  %v1383 = vpop.f32.mrb[0].mxu0
  %v1384 = vadd.f32 0.0, %v1383
  %v1385 = vpop.f32.mrb[0].mxu0
  %1386 = vmatprep.mubr.bf16.mxu0 %v1283
  %1387 = vmatmul.mubr.bf16.gmra.mrb[0].mxu0 %v1282
  %v1388 = vpop.f32.mrb[0].mxu0
  %v1389 = vadd.f32 0.0, %v1388
  %v1390 = vpop.f32.mrb[0].mxu0
  %v1391 = vpop.f32.mrb[0].mxu0
  %v1392 = vadd.f32 0.0, %v1391
  %v1393 = vpop.f32.mrb[0].mxu0
  %1394 = vmatprep.mubr.bf16.mxu0 %v1287
  %1395 = vmatmul.mubr.bf16.gmra.mrb[0].mxu0 %v1286
  %v1396 = vpop.f32.mrb[0].mxu0
  %v1397 = vadd.f32 0.0, %v1396
  %v1398 = vpop.f32.mrb[0].mxu0
  %v1399 = vpop.f32.mrb[0].mxu0
  %v1400 = vadd.f32 0.0, %v1399
  %v1401 = vpop.f32.mrb[0].mxu0
  %1402 = vmatprep.mubr.bf16.mxu0 %v1291
  %1403 = vmatmul.mubr.bf16.gmra.mrb[0].mxu0 %v1290
  %v1404 = vpop.f32.mrb[0].mxu0
  %v1405 = vadd.f32 0.0, %v1404
  %v1406 = vpop.f32.mrb[0].mxu0
  %v1407 = vpop.f32.mrb[0].mxu0
  %v1408 = vadd.f32 0.0, %v1407
  %v1409 = vpop.f32.mrb[0].mxu0
  %1410 = vmatprep.mubr.bf16.mxu0 %v1295
  %1411 = vmatmul.mubr.bf16.gmra.mrb[0].mxu0 %v1294
  %v1412 = vpop.f32.mrb[0].mxu0
  %v1413 = vadd.f32 0.0, %v1412
  %v1414 = vpop.f32.mrb[0].mxu0
  %v1415 = vpop.f32.mrb[0].mxu0
  %v1416 = vadd.f32 0.0, %v1415
  %v1417 = vpop.f32.mrb[0].mxu0
  %1418 = vmatprep.mubr.bf16.mxu0 %v1299
  %1419 = vmatmul.mubr.bf16.gmra.mrb[0].mxu0 %v1298
  %v1420 = vpop.f32.mrb[0].mxu0
  %v1421 = vadd.f32 0.0, %v1420
  %v1422 = vpop.f32.mrb[0].mxu0
  %v1423 = vpop.f32.mrb[0].mxu0
  %v1424 = vadd.f32 0.0, %v1423
  %v1425 = vpop.f32.mrb[0].mxu0
  %1426 = vmatprep.mubr.bf16.mxu0 %v1303
  %1427 = vmatmul.mubr.bf16.gmra.mrb[0].mxu0 %v1302
  %v1428 = vpop.f32.mrb[0].mxu0
  %v1429 = vadd.f32 0.0, %v1428
  %v1430 = vpop.f32.mrb[0].mxu0
  %v1431 = vpop.f32.mrb[0].mxu0
  %v1432 = vadd.f32 0.0, %v1431
  %v1433 = vpop.f32.mrb[0].mxu0
  %1434 = vdwg.mxu0
  %1435 = vmatprep.subr.bf16.mxu0 0
  %1436 = vmatpush1.bf16.msra.mxu0 %v719
  %1437 = vmatprep.subr.bf16.mxu0 0
  %1438 = vmatpush1.bf16.msra.mxu0 %v720
  %1439 = vmatprep.subr.bf16.mxu0 0
  %1440 = vmatpush1.bf16.msra.mxu0 %v721
  %1441 = vmatprep.subr.bf16.mxu0 0
  %1442 = vmatpush1.bf16.msra.mxu0 %v722
  %1443 = vmatprep.subr.bf16.mxu0 0
  %1444 = vmatpush1.bf16.msra.mxu0 %v723
  %1445 = vmatprep.subr.bf16.mxu0 0
  %1446 = vmatpush1.bf16.msra.mxu0 %v724
  %1447 = vmatprep.subr.bf16.mxu0 0
  %1448 = vmatpush1.bf16.msra.mxu0 %v725
  %1449 = vmatprep.subr.bf16.mxu0 0
  %1450 = vmatpush1.bf16.msra.mxu0 %v726
  %1451 = vmatprep.subr.bf16.mxu0 0
  %1452 = vmatpush1.bf16.msra.mxu0 %v727
  %1453 = vmatprep.subr.bf16.mxu0 0
  %1454 = vmatpush1.bf16.msra.mxu0 %v728
  %1455 = vmatprep.subr.bf16.mxu0 0
  %1456 = vmatpush1.bf16.msra.mxu0 %v729
  %1457 = vmatprep.subr.bf16.mxu0 0
  %1458 = vmatpush1.bf16.msra.mxu0 %v730
  %1459 = vmatprep.subr.bf16.mxu0 0
  %1460 = vmatpush1.bf16.msra.mxu0 %v731
  %1461 = vmatprep.subr.bf16.mxu0 0
  %1462 = vmatpush1.bf16.msra.mxu0 %v732
  %1463 = vmatprep.subr.bf16.mxu0 0
  %1464 = vmatpush1.bf16.msra.mxu0 %v733
  %1465 = vmatprep.subr.bf16.mxu0 0
  %1466 = vmatpush1.bf16.msra.mxu0 %v734
  %1467 = vmatprep.mubr.bf16.mxu0 %v1277
  %1468 = vmatmul.mubr.bf16.gmra.mrb[0].mxu0 %v1276
  %v1469 = vpop.f32.mrb[0].mxu0
  %v1470 = vadd.f32 %v1373, %v1469
  %v1471 = vpop.f32.mrb[0].mxu0
  %v1472 = vpop.f32.mrb[0].mxu0
  %v1473 = vadd.f32 %v1376, %v1472
  %v1474 = vpop.f32.mrb[0].mxu0
  %1475 = vmatprep.mubr.bf16.mxu0 %v1281
  %1476 = vmatmul.mubr.bf16.gmra.mrb[0].mxu0 %v1280
  %v1477 = vpop.f32.mrb[0].mxu0
  %v1478 = vadd.f32 %v1381, %v1477
  %v1479 = vpop.f32.mrb[0].mxu0
  %v1480 = vpop.f32.mrb[0].mxu0
  %v1481 = vadd.f32 %v1384, %v1480
  %v1482 = vpop.f32.mrb[0].mxu0
  %1483 = vmatprep.mubr.bf16.mxu0 %v1285
  %1484 = vmatmul.mubr.bf16.gmra.mrb[0].mxu0 %v1284
  %v1485 = vpop.f32.mrb[0].mxu0
  %v1486 = vadd.f32 %v1389, %v1485
  %v1487 = vpop.f32.mrb[0].mxu0
  %v1488 = vpop.f32.mrb[0].mxu0
  %v1489 = vadd.f32 %v1392, %v1488
  %v1490 = vpop.f32.mrb[0].mxu0
  %1491 = vmatprep.mubr.bf16.mxu0 %v1289
  %1492 = vmatmul.mubr.bf16.gmra.mrb[0].mxu0 %v1288
  %v1493 = vpop.f32.mrb[0].mxu0
  %v1494 = vadd.f32 %v1397, %v1493
  %v1495 = vpop.f32.mrb[0].mxu0
  %v1496 = vpop.f32.mrb[0].mxu0
  %v1497 = vadd.f32 %v1400, %v1496
  %v1498 = vpop.f32.mrb[0].mxu0
  %1499 = vmatprep.mubr.bf16.mxu0 %v1293
  %1500 = vmatmul.mubr.bf16.gmra.mrb[0].mxu0 %v1292
  %v1501 = vpop.f32.mrb[0].mxu0
  %v1502 = vadd.f32 %v1405, %v1501
  %v1503 = vpop.f32.mrb[0].mxu0
  %v1504 = vpop.f32.mrb[0].mxu0
  %v1505 = vadd.f32 %v1408, %v1504
  %v1506 = vpop.f32.mrb[0].mxu0
  %1507 = vmatprep.mubr.bf16.mxu0 %v1297
  %1508 = vmatmul.mubr.bf16.gmra.mrb[0].mxu0 %v1296
  %v1509 = vpop.f32.mrb[0].mxu0
  %v1510 = vadd.f32 %v1413, %v1509
  %v1511 = vpop.f32.mrb[0].mxu0
  %v1512 = vpop.f32.mrb[0].mxu0
  %v1513 = vadd.f32 %v1416, %v1512
  %v1514 = vpop.f32.mrb[0].mxu0
  %1515 = vmatprep.mubr.bf16.mxu0 %v1301
  %1516 = vmatmul.mubr.bf16.gmra.mrb[0].mxu0 %v1300
  %v1517 = vpop.f32.mrb[0].mxu0
  %v1518 = vadd.f32 %v1421, %v1517
  %v1519 = vpop.f32.mrb[0].mxu0
  %v1520 = vpop.f32.mrb[0].mxu0
  %v1521 = vadd.f32 %v1424, %v1520
  %v1522 = vpop.f32.mrb[0].mxu0
  %1523 = vmatprep.mubr.bf16.mxu0 %v1305
  %1524 = vmatmul.mubr.bf16.gmra.mrb[0].mxu0 %v1304
  %v1525 = vpop.f32.mrb[0].mxu0
  %v1526 = vadd.f32 %v1429, %v1525
  %v1527 = vpop.f32.mrb[0].mxu0
  %v1528 = vpop.f32.mrb[0].mxu0
  %v1529 = vadd.f32 %v1432, %v1528
  %v1530 = vpop.f32.mrb[0].mxu0
  %1531 = vdwg.mxu0
  %v1532 = vpack.c.bf16 %v1473, %v1470
  %v1533 = vpack.c.bf16 %v1481, %v1478
  %v1534 = vpack.c.bf16 %v1489, %v1486
  %v1535 = vpack.c.bf16 %v1497, %v1494
  %v1536 = vpack.c.bf16 %v1505, %v1502
  %v1537 = vpack.c.bf16 %v1513, %v1510
  %v1538 = vpack.c.bf16 %v1521, %v1518
  %v1539 = vpack.c.bf16 %v1529, %v1526
  %s1540 = scalar_lea.vmem %s3, 64
  %v1541 = vld [vmem:[%s1540] sm:$0xf]
  %v1542 = vld [vmem:[%s1540 + $0x4] sm:$0xf]
  %v1543 = vld [vmem:[%s1540 + $0x8] sm:$0xf]
  %v1544 = vld [vmem:[%s1540 + $0xc] sm:$0xf]
  %v1545 = vld [vmem:[%s1540 + $0x10] sm:$0xf]
  %v1546 = vld [vmem:[%s1540 + $0x14] sm:$0xf]
  %v1547 = vld [vmem:[%s1540 + $0x18] sm:$0xf]
  %v1548 = vld [vmem:[%s1540 + $0x1c] sm:$0xf]
  %v1549 = vld [vmem:[%s1540 + $0x20] sm:$0xf]
  %v1550 = vld [vmem:[%s1540 + $0x24] sm:$0xf]
  %v1551 = vld [vmem:[%s1540 + $0x28] sm:$0xf]
  %v1552 = vld [vmem:[%s1540 + $0x2c] sm:$0xf]
  %v1553 = vld [vmem:[%s1540 + $0x30] sm:$0xf]
  %v1554 = vld [vmem:[%s1540 + $0x34] sm:$0xf]
  %v1555 = vld [vmem:[%s1540 + $0x38] sm:$0xf]
  %v1556 = vld [vmem:[%s1540 + $0x3c] sm:$0xf]
  %v1573 = vunpack.c.l.b16 %v1541
  %v1574 = vunpack.c.l.b16 %v1542
  %v1575 = vunpack.c.l.b16 %v1543
  %v1576 = vunpack.c.l.b16 %v1544
  %v1577 = vunpack.c.l.b16 %v1545
  %v1578 = vunpack.c.l.b16 %v1546
  %v1579 = vunpack.c.l.b16 %v1547
  %v1580 = vunpack.c.l.b16 %v1548
  %v1581 = vunpack.c.l.b16 %v1549
  %v1582 = vunpack.c.l.b16 %v1550
  %v1583 = vunpack.c.l.b16 %v1551
  %v1584 = vunpack.c.l.b16 %v1552
  %v1585 = vunpack.c.l.b16 %v1553
  %v1586 = vunpack.c.l.b16 %v1554
  %v1587 = vunpack.c.l.b16 %v1555
  %v1588 = vunpack.c.l.b16 %v1556
  %v1589 = vpack.c.b16 %v1574, %v1573
  %v1590 = vpack.c.b16 %v1576, %v1575
  %v1591 = vpack.c.b16 %v1578, %v1577
  %v1592 = vpack.c.b16 %v1580, %v1579
  %v1593 = vpack.c.b16 %v1582, %v1581
  %v1594 = vpack.c.b16 %v1584, %v1583
  %v1595 = vpack.c.b16 %v1586, %v1585
  %v1596 = vpack.c.b16 %v1588, %v1587
  %1605 = vmatprep.subr.bf16.mxu0 0
  %1606 = vmatpush1.bf16.msra.mxu0 %v1589
  %1607 = vmatprep.subr.bf16.mxu0 0
  %1608 = vmatpush1.bf16.msra.mxu0 %v1590
  %1609 = vmatprep.subr.bf16.mxu0 0
  %1610 = vmatpush1.bf16.msra.mxu0 %v1591
  %1611 = vmatprep.subr.bf16.mxu0 0
  %1612 = vmatpush1.bf16.msra.mxu0 %v1592
  %1613 = vmatprep.subr.bf16.mxu0 0
  %1614 = vmatpush1.bf16.msra.mxu0 %v1593
  %1615 = vmatprep.subr.bf16.mxu0 0
  %1616 = vmatpush1.bf16.msra.mxu0 %v1594
  %1617 = vmatprep.subr.bf16.mxu0 0
  %1618 = vmatpush1.bf16.msra.mxu0 %v1595
  %1619 = vmatprep.subr.bf16.mxu0 0
  %1620 = vmatpush1.bf16.msra.mxu0 %v1596
  %1621 = vmatprep.subr.bf16.mxu0 0
  %1622 = vmatpush1.bf16.msra.mxu0 0
  %1623 = vmatprep.subr.bf16.mxu0 0
  %1624 = vmatpush1.bf16.msra.mxu0 0
  %1625 = vmatprep.subr.bf16.mxu0 0
  %1626 = vmatpush1.bf16.msra.mxu0 0
  %1627 = vmatprep.subr.bf16.mxu0 0
  %1628 = vmatpush1.bf16.msra.mxu0 0
  %1629 = vmatprep.subr.bf16.mxu0 0
  %1630 = vmatpush1.bf16.msra.mxu0 0
  %1631 = vmatprep.subr.bf16.mxu0 0
  %1632 = vmatpush1.bf16.msra.mxu0 0
  %1633 = vmatprep.subr.bf16.mxu0 0
  %1634 = vmatpush1.bf16.msra.mxu0 0
  %1635 = vmatprep.subr.bf16.mxu0 0
  %1636 = vmatpush1.bf16.msra.mxu0 0
  %1637 = vmatprep.mubr.bf16.mxu0 0
  %1638 = vmatmul.mubr.bf16.gmra.mrb[0].mxu0 %v1532
  %v1639 = vpop.f32.mrb[0].mxu0
  %v1640 = vadd.f32 0.0, %v1639
  %v1641 = vpop.f32.mrb[0].mxu0
  %v1642 = vpop.f32.mrb[0].mxu0
  %v1643 = vadd.f32 0.0, %v1642
  %v1644 = vpop.f32.mrb[0].mxu0
  %1645 = vmatprep.mubr.bf16.mxu0 0
  %1646 = vmatmul.mubr.bf16.gmra.mrb[0].mxu0 %v1533
  %v1647 = vpop.f32.mrb[0].mxu0
  %v1648 = vadd.f32 0.0, %v1647
  %v1649 = vpop.f32.mrb[0].mxu0
  %v1650 = vpop.f32.mrb[0].mxu0
  %v1651 = vadd.f32 0.0, %v1650
  %v1652 = vpop.f32.mrb[0].mxu0
  %1653 = vmatprep.mubr.bf16.mxu0 0
  %1654 = vmatmul.mubr.bf16.gmra.mrb[0].mxu0 %v1534
  %v1655 = vpop.f32.mrb[0].mxu0
  %v1656 = vadd.f32 0.0, %v1655
  %v1657 = vpop.f32.mrb[0].mxu0
  %v1658 = vpop.f32.mrb[0].mxu0
  %v1659 = vadd.f32 0.0, %v1658
  %v1660 = vpop.f32.mrb[0].mxu0
  %1661 = vmatprep.mubr.bf16.mxu0 0
  %1662 = vmatmul.mubr.bf16.gmra.mrb[0].mxu0 %v1535
  %v1663 = vpop.f32.mrb[0].mxu0
  %v1664 = vadd.f32 0.0, %v1663
  %v1665 = vpop.f32.mrb[0].mxu0
  %v1666 = vpop.f32.mrb[0].mxu0
  %v1667 = vadd.f32 0.0, %v1666
  %v1668 = vpop.f32.mrb[0].mxu0
  %1669 = vmatprep.mubr.bf16.mxu0 0
  %1670 = vmatmul.mubr.bf16.gmra.mrb[0].mxu0 %v1536
  %v1671 = vpop.f32.mrb[0].mxu0
  %v1672 = vadd.f32 0.0, %v1671
  %v1673 = vpop.f32.mrb[0].mxu0
  %v1674 = vpop.f32.mrb[0].mxu0
  %v1675 = vadd.f32 0.0, %v1674
  %v1676 = vpop.f32.mrb[0].mxu0
  %1677 = vmatprep.mubr.bf16.mxu0 0
  %1678 = vmatmul.mubr.bf16.gmra.mrb[0].mxu0 %v1537
  %v1679 = vpop.f32.mrb[0].mxu0
  %v1680 = vadd.f32 0.0, %v1679
  %v1681 = vpop.f32.mrb[0].mxu0
  %v1682 = vpop.f32.mrb[0].mxu0
  %v1683 = vadd.f32 0.0, %v1682
  %v1684 = vpop.f32.mrb[0].mxu0
  %1685 = vmatprep.mubr.bf16.mxu0 0
  %1686 = vmatmul.mubr.bf16.gmra.mrb[0].mxu0 %v1538
  %v1687 = vpop.f32.mrb[0].mxu0
  %v1688 = vadd.f32 0.0, %v1687
  %v1689 = vpop.f32.mrb[0].mxu0
  %v1690 = vpop.f32.mrb[0].mxu0
  %v1691 = vadd.f32 0.0, %v1690
  %v1692 = vpop.f32.mrb[0].mxu0
  %1693 = vmatprep.mubr.bf16.mxu0 0
  %1694 = vmatmul.mubr.bf16.gmra.mrb[0].mxu0 %v1539
  %v1695 = vpop.f32.mrb[0].mxu0
  %v1696 = vadd.f32 0.0, %v1695
  %v1697 = vpop.f32.mrb[0].mxu0
  %v1698 = vpop.f32.mrb[0].mxu0
  %v1699 = vadd.f32 0.0, %v1698
  %v1700 = vpop.f32.mrb[0].mxu0
  %1701 = vdwg.mxu0
  %v1718 = vunpack.c.l.b16 %v1129
  %v1719 = vunpack.c.l.b16 %v1130
  %v1720 = vunpack.c.l.b16 %v1131
  %v1721 = vunpack.c.l.b16 %v1132
  %v1722 = vunpack.c.l.b16 %v1133
  %v1723 = vunpack.c.l.b16 %v1134
  %v1724 = vunpack.c.l.b16 %v1135
  %v1725 = vunpack.c.l.b16 %v1136
  %v1726 = vunpack.c.l.b16 %v1137
  %v1727 = vunpack.c.l.b16 %v1138
  %v1728 = vunpack.c.l.b16 %v1139
  %v1729 = vunpack.c.l.b16 %v1140
  %v1730 = vunpack.c.l.b16 %v1141
  %v1731 = vunpack.c.l.b16 %v1142
  %v1732 = vunpack.c.l.b16 %v1143
  %v1733 = vunpack.c.l.b16 %v1144
  %v1734 = vpack.c.b16 %v1719, %v1718
  %v1735 = vpack.c.b16 %v1721, %v1720
  %v1736 = vpack.c.b16 %v1723, %v1722
  %v1737 = vpack.c.b16 %v1725, %v1724
  %v1738 = vpack.c.b16 %v1727, %v1726
  %v1739 = vpack.c.b16 %v1729, %v1728
  %v1740 = vpack.c.b16 %v1731, %v1730
  %v1741 = vpack.c.b16 %v1733, %v1732
  %1750 = vmatprep.subr.bf16.mxu0 0
  %1751 = vmatpush1.bf16.msra.mxu0 %v1734
  %1752 = vmatprep.subr.bf16.mxu0 0
  %1753 = vmatpush1.bf16.msra.mxu0 %v1735
  %1754 = vmatprep.subr.bf16.mxu0 0
  %1755 = vmatpush1.bf16.msra.mxu0 %v1736
  %1756 = vmatprep.subr.bf16.mxu0 0
  %1757 = vmatpush1.bf16.msra.mxu0 %v1737
  %1758 = vmatprep.subr.bf16.mxu0 0
  %1759 = vmatpush1.bf16.msra.mxu0 %v1738
  %1760 = vmatprep.subr.bf16.mxu0 0
  %1761 = vmatpush1.bf16.msra.mxu0 %v1739
  %1762 = vmatprep.subr.bf16.mxu0 0
  %1763 = vmatpush1.bf16.msra.mxu0 %v1740
  %1764 = vmatprep.subr.bf16.mxu0 0
  %1765 = vmatpush1.bf16.msra.mxu0 %v1741
  %1766 = vmatprep.subr.bf16.mxu0 0
  %1767 = vmatpush1.bf16.msra.mxu0 0
  %1768 = vmatprep.subr.bf16.mxu0 0
  %1769 = vmatpush1.bf16.msra.mxu0 0
  %1770 = vmatprep.subr.bf16.mxu0 0
  %1771 = vmatpush1.bf16.msra.mxu0 0
  %1772 = vmatprep.subr.bf16.mxu0 0
  %1773 = vmatpush1.bf16.msra.mxu0 0
  %1774 = vmatprep.subr.bf16.mxu0 0
  %1775 = vmatpush1.bf16.msra.mxu0 0
  %1776 = vmatprep.subr.bf16.mxu0 0
  %1777 = vmatpush1.bf16.msra.mxu0 0
  %1778 = vmatprep.subr.bf16.mxu0 0
  %1779 = vmatpush1.bf16.msra.mxu0 0
  %1780 = vmatprep.subr.bf16.mxu0 0
  %1781 = vmatpush1.bf16.msra.mxu0 0
  %1782 = vmatprep.mubr.bf16.mxu0 0
  %1783 = vmatmul.mubr.bf16.gmra.mrb[0].mxu0 %v1121
  %v1784 = vpop.f32.mrb[0].mxu0
  %v1785 = vadd.f32 %v1640, %v1784
  %v1786 = vpop.f32.mrb[0].mxu0
  %v1787 = vpop.f32.mrb[0].mxu0
  %v1788 = vadd.f32 %v1643, %v1787
  %v1789 = vpop.f32.mrb[0].mxu0
  %1790 = vmatprep.mubr.bf16.mxu0 0
  %1791 = vmatmul.mubr.bf16.gmra.mrb[0].mxu0 %v1122
  %v1792 = vpop.f32.mrb[0].mxu0
  %v1793 = vadd.f32 %v1648, %v1792
  %v1794 = vpop.f32.mrb[0].mxu0
  %v1795 = vpop.f32.mrb[0].mxu0
  %v1796 = vadd.f32 %v1651, %v1795
  %v1797 = vpop.f32.mrb[0].mxu0
  %1798 = vmatprep.mubr.bf16.mxu0 0
  %1799 = vmatmul.mubr.bf16.gmra.mrb[0].mxu0 %v1123
  %v1800 = vpop.f32.mrb[0].mxu0
  %v1801 = vadd.f32 %v1656, %v1800
  %v1802 = vpop.f32.mrb[0].mxu0
  %v1803 = vpop.f32.mrb[0].mxu0
  %v1804 = vadd.f32 %v1659, %v1803
  %v1805 = vpop.f32.mrb[0].mxu0
  %1806 = vmatprep.mubr.bf16.mxu0 0
  %1807 = vmatmul.mubr.bf16.gmra.mrb[0].mxu0 %v1124
  %v1808 = vpop.f32.mrb[0].mxu0
  %v1809 = vadd.f32 %v1664, %v1808
  %v1810 = vpop.f32.mrb[0].mxu0
  %v1811 = vpop.f32.mrb[0].mxu0
  %v1812 = vadd.f32 %v1667, %v1811
  %v1813 = vpop.f32.mrb[0].mxu0
  %1814 = vmatprep.mubr.bf16.mxu0 0
  %1815 = vmatmul.mubr.bf16.gmra.mrb[0].mxu0 %v1125
  %v1816 = vpop.f32.mrb[0].mxu0
  %v1817 = vadd.f32 %v1672, %v1816
  %v1818 = vpop.f32.mrb[0].mxu0
  %v1819 = vpop.f32.mrb[0].mxu0
  %v1820 = vadd.f32 %v1675, %v1819
  %v1821 = vpop.f32.mrb[0].mxu0
  %1822 = vmatprep.mubr.bf16.mxu0 0
  %1823 = vmatmul.mubr.bf16.gmra.mrb[0].mxu0 %v1126
  %v1824 = vpop.f32.mrb[0].mxu0
  %v1825 = vadd.f32 %v1680, %v1824
  %v1826 = vpop.f32.mrb[0].mxu0
  %v1827 = vpop.f32.mrb[0].mxu0
  %v1828 = vadd.f32 %v1683, %v1827
  %v1829 = vpop.f32.mrb[0].mxu0
  %1830 = vmatprep.mubr.bf16.mxu0 0
  %1831 = vmatmul.mubr.bf16.gmra.mrb[0].mxu0 %v1127
  %v1832 = vpop.f32.mrb[0].mxu0
  %v1833 = vadd.f32 %v1688, %v1832
  %v1834 = vpop.f32.mrb[0].mxu0
  %v1835 = vpop.f32.mrb[0].mxu0
  %v1836 = vadd.f32 %v1691, %v1835
  %v1837 = vpop.f32.mrb[0].mxu0
  %1838 = vmatprep.mubr.bf16.mxu0 0
  %1839 = vmatmul.mubr.bf16.gmra.mrb[0].mxu0 %v1128
  %v1840 = vpop.f32.mrb[0].mxu0
  %v1841 = vadd.f32 %v1696, %v1840
  %v1842 = vpop.f32.mrb[0].mxu0
  %v1843 = vpop.f32.mrb[0].mxu0
  %v1844 = vadd.f32 %v1699, %v1843
  %v1845 = vpop.f32.mrb[0].mxu0
  %1846 = vdwg.mxu0
  %s1847 = scalar_lea.vmem %s2, 512
  %v1848 = vld [vmem:[%s1847] sm:$0xff]
  %v1849 = vld [vmem:[%s1847 + $0x8] sm:$0xff]
  %v1850 = vld [vmem:[%s1847 + $0x10] sm:$0xff]
  %v1851 = vld [vmem:[%s1847 + $0x18] sm:$0xff]
  %v1852 = vld [vmem:[%s1847 + $0x20] sm:$0xff]
  %v1853 = vld [vmem:[%s1847 + $0x28] sm:$0xff]
  %v1854 = vld [vmem:[%s1847 + $0x30] sm:$0xff]
  %v1855 = vld [vmem:[%s1847 + $0x38] sm:$0xff]
  %v1856 = vld [vmem:[%s1847 + $0x40] sm:$0xff]
  %v1857 = vld [vmem:[%s1847 + $0x48] sm:$0xff]
  %v1858 = vld [vmem:[%s1847 + $0x50] sm:$0xff]
  %v1859 = vld [vmem:[%s1847 + $0x58] sm:$0xff]
  %v1860 = vld [vmem:[%s1847 + $0x60] sm:$0xff]
  %v1861 = vld [vmem:[%s1847 + $0x68] sm:$0xff]
  %v1862 = vld [vmem:[%s1847 + $0x70] sm:$0xff]
  %v1863 = vld [vmem:[%s1847 + $0x78] sm:$0xff]
  %v1864 = vld [vmem:[%s1847 + $0x80] sm:$0xff]
  %v1865 = vld [vmem:[%s1847 + $0x88] sm:$0xff]
  %v1866 = vld [vmem:[%s1847 + $0x90] sm:$0xff]
  %v1867 = vld [vmem:[%s1847 + $0x98] sm:$0xff]
  %v1868 = vld [vmem:[%s1847 + $0xa0] sm:$0xff]
  %v1869 = vld [vmem:[%s1847 + $0xa8] sm:$0xff]
  %v1870 = vld [vmem:[%s1847 + $0xb0] sm:$0xff]
  %v1871 = vld [vmem:[%s1847 + $0xb8] sm:$0xff]
  %v1872 = vld [vmem:[%s1847 + $0xc0] sm:$0xff]
  %v1873 = vld [vmem:[%s1847 + $0xc8] sm:$0xff]
  %v1874 = vld [vmem:[%s1847 + $0xd0] sm:$0xff]
  %v1875 = vld [vmem:[%s1847 + $0xd8] sm:$0xff]
  %v1876 = vld [vmem:[%s1847 + $0xe0] sm:$0xff]
  %v1877 = vld [vmem:[%s1847 + $0xe8] sm:$0xff]
  %v1878 = vld [vmem:[%s1847 + $0xf0] sm:$0xff]
  %v1879 = vld [vmem:[%s1847 + $0xf8] sm:$0xff]
  %v1912 = vunpack.c.l.b16 %v1848
  %v1913 = vunpack.c.h.b16 %v1848
  %v1914 = vunpack.c.l.b16 %v1849
  %v1915 = vunpack.c.h.b16 %v1849
  %v1916 = vunpack.c.l.b16 %v1850
  %v1917 = vunpack.c.h.b16 %v1850
  %v1918 = vunpack.c.l.b16 %v1851
  %v1919 = vunpack.c.h.b16 %v1851
  %v1920 = vunpack.c.l.b16 %v1852
  %v1921 = vunpack.c.h.b16 %v1852
  %v1922 = vunpack.c.l.b16 %v1853
  %v1923 = vunpack.c.h.b16 %v1853
  %v1924 = vunpack.c.l.b16 %v1854
  %v1925 = vunpack.c.h.b16 %v1854
  %v1926 = vunpack.c.l.b16 %v1855
  %v1927 = vunpack.c.h.b16 %v1855
  %v1928 = vunpack.c.l.b16 %v1856
  %v1929 = vunpack.c.h.b16 %v1856
  %v1930 = vunpack.c.l.b16 %v1857
  %v1931 = vunpack.c.h.b16 %v1857
  %v1932 = vunpack.c.l.b16 %v1858
  %v1933 = vunpack.c.h.b16 %v1858
  %v1934 = vunpack.c.l.b16 %v1859
  %v1935 = vunpack.c.h.b16 %v1859
  %v1936 = vunpack.c.l.b16 %v1860
  %v1937 = vunpack.c.h.b16 %v1860
  %v1938 = vunpack.c.l.b16 %v1861
  %v1939 = vunpack.c.h.b16 %v1861
  %v1940 = vunpack.c.l.b16 %v1862
  %v1941 = vunpack.c.h.b16 %v1862
  %v1942 = vunpack.c.l.b16 %v1863
  %v1943 = vunpack.c.h.b16 %v1863
  %v1944 = vunpack.c.l.b16 %v1864
  %v1945 = vunpack.c.h.b16 %v1864
  %v1946 = vunpack.c.l.b16 %v1865
  %v1947 = vunpack.c.h.b16 %v1865
  %v1948 = vunpack.c.l.b16 %v1866
  %v1949 = vunpack.c.h.b16 %v1866
  %v1950 = vunpack.c.l.b16 %v1867
  %v1951 = vunpack.c.h.b16 %v1867
  %v1952 = vunpack.c.l.b16 %v1868
  %v1953 = vunpack.c.h.b16 %v1868
  %v1954 = vunpack.c.l.b16 %v1869
  %v1955 = vunpack.c.h.b16 %v1869
  %v1956 = vunpack.c.l.b16 %v1870
  %v1957 = vunpack.c.h.b16 %v1870
  %v1958 = vunpack.c.l.b16 %v1871
  %v1959 = vunpack.c.h.b16 %v1871
  %v1960 = vunpack.c.l.b16 %v1872
  %v1961 = vunpack.c.h.b16 %v1872
  %v1962 = vunpack.c.l.b16 %v1873
  %v1963 = vunpack.c.h.b16 %v1873
  %v1964 = vunpack.c.l.b16 %v1874
  %v1965 = vunpack.c.h.b16 %v1874
  %v1966 = vunpack.c.l.b16 %v1875
  %v1967 = vunpack.c.h.b16 %v1875
  %v1968 = vunpack.c.l.b16 %v1876
  %v1969 = vunpack.c.h.b16 %v1876
  %v1970 = vunpack.c.l.b16 %v1877
  %v1971 = vunpack.c.h.b16 %v1877
  %v1972 = vunpack.c.l.b16 %v1878
  %v1973 = vunpack.c.h.b16 %v1878
  %v1974 = vunpack.c.l.b16 %v1879
  %v1975 = vunpack.c.h.b16 %v1879
  %v1976 = vpack.c.b16 %v1916, %v1912
  %v1977 = vpack.c.b16 %v1917, %v1913
  %v1978 = vpack.c.b16 %v1918, %v1914
  %v1979 = vpack.c.b16 %v1919, %v1915
  %v1980 = vpack.c.b16 %v1924, %v1920
  %v1981 = vpack.c.b16 %v1925, %v1921
  %v1982 = vpack.c.b16 %v1926, %v1922
  %v1983 = vpack.c.b16 %v1927, %v1923
  %v1984 = vpack.c.b16 %v1932, %v1928
  %v1985 = vpack.c.b16 %v1933, %v1929
  %v1986 = vpack.c.b16 %v1934, %v1930
  %v1987 = vpack.c.b16 %v1935, %v1931
  %v1988 = vpack.c.b16 %v1940, %v1936
  %v1989 = vpack.c.b16 %v1941, %v1937
  %v1990 = vpack.c.b16 %v1942, %v1938
  %v1991 = vpack.c.b16 %v1943, %v1939
  %v1992 = vpack.c.b16 %v1948, %v1944
  %v1993 = vpack.c.b16 %v1949, %v1945
  %v1994 = vpack.c.b16 %v1950, %v1946
  %v1995 = vpack.c.b16 %v1951, %v1947
  %v1996 = vpack.c.b16 %v1956, %v1952
  %v1997 = vpack.c.b16 %v1957, %v1953
  %v1998 = vpack.c.b16 %v1958, %v1954
  %v1999 = vpack.c.b16 %v1959, %v1955
  %v2000 = vpack.c.b16 %v1964, %v1960
  %v2001 = vpack.c.b16 %v1965, %v1961
  %v2002 = vpack.c.b16 %v1966, %v1962
  %v2003 = vpack.c.b16 %v1967, %v1963
  %v2004 = vpack.c.b16 %v1972, %v1968
  %v2005 = vpack.c.b16 %v1973, %v1969
  %v2006 = vpack.c.b16 %v1974, %v1970
  %v2007 = vpack.c.b16 %v1975, %v1971
  %2040 = vmatprep.subr.bf16.mxu0 0
  %2041 = vmatpush1.bf16.msra.mxu0 %v703
  %2042 = vmatprep.subr.bf16.mxu0 0
  %2043 = vmatpush1.bf16.msra.mxu0 %v704
  %2044 = vmatprep.subr.bf16.mxu0 0
  %2045 = vmatpush1.bf16.msra.mxu0 %v705
  %2046 = vmatprep.subr.bf16.mxu0 0
  %2047 = vmatpush1.bf16.msra.mxu0 %v706
  %2048 = vmatprep.subr.bf16.mxu0 0
  %2049 = vmatpush1.bf16.msra.mxu0 %v707
  %2050 = vmatprep.subr.bf16.mxu0 0
  %2051 = vmatpush1.bf16.msra.mxu0 %v708
  %2052 = vmatprep.subr.bf16.mxu0 0
  %2053 = vmatpush1.bf16.msra.mxu0 %v709
  %2054 = vmatprep.subr.bf16.mxu0 0
  %2055 = vmatpush1.bf16.msra.mxu0 %v710
  %2056 = vmatprep.subr.bf16.mxu0 0
  %2057 = vmatpush1.bf16.msra.mxu0 %v711
  %2058 = vmatprep.subr.bf16.mxu0 0
  %2059 = vmatpush1.bf16.msra.mxu0 %v712
  %2060 = vmatprep.subr.bf16.mxu0 0
  %2061 = vmatpush1.bf16.msra.mxu0 %v713
  %2062 = vmatprep.subr.bf16.mxu0 0
  %2063 = vmatpush1.bf16.msra.mxu0 %v714
  %2064 = vmatprep.subr.bf16.mxu0 0
  %2065 = vmatpush1.bf16.msra.mxu0 %v715
  %2066 = vmatprep.subr.bf16.mxu0 0
  %2067 = vmatpush1.bf16.msra.mxu0 %v716
  %2068 = vmatprep.subr.bf16.mxu0 0
  %2069 = vmatpush1.bf16.msra.mxu0 %v717
  %2070 = vmatprep.subr.bf16.mxu0 0
  %2071 = vmatpush1.bf16.msra.mxu0 %v718
  %2072 = vmatprep.mubr.bf16.mxu0 %v1977
  %2073 = vmatmul.mubr.bf16.gmra.mrb[0].mxu0 %v1976
  %v2074 = vpop.f32.mrb[0].mxu0
  %v2075 = vadd.f32 0.0, %v2074
  %v2076 = vpop.f32.mrb[0].mxu0
  %v2077 = vpop.f32.mrb[0].mxu0
  %v2078 = vadd.f32 0.0, %v2077
  %v2079 = vpop.f32.mrb[0].mxu0
  %2080 = vmatprep.mubr.bf16.mxu0 %v1981
  %2081 = vmatmul.mubr.bf16.gmra.mrb[0].mxu0 %v1980
  %v2082 = vpop.f32.mrb[0].mxu0
  %v2083 = vadd.f32 0.0, %v2082
  %v2084 = vpop.f32.mrb[0].mxu0
  %v2085 = vpop.f32.mrb[0].mxu0
  %v2086 = vadd.f32 0.0, %v2085
  %v2087 = vpop.f32.mrb[0].mxu0
  %2088 = vmatprep.mubr.bf16.mxu0 %v1985
  %2089 = vmatmul.mubr.bf16.gmra.mrb[0].mxu0 %v1984
  %v2090 = vpop.f32.mrb[0].mxu0
  %v2091 = vadd.f32 0.0, %v2090
  %v2092 = vpop.f32.mrb[0].mxu0
  %v2093 = vpop.f32.mrb[0].mxu0
  %v2094 = vadd.f32 0.0, %v2093
  %v2095 = vpop.f32.mrb[0].mxu0
  %2096 = vmatprep.mubr.bf16.mxu0 %v1989
  %2097 = vmatmul.mubr.bf16.gmra.mrb[0].mxu0 %v1988
  %v2098 = vpop.f32.mrb[0].mxu0
  %v2099 = vadd.f32 0.0, %v2098
  %v2100 = vpop.f32.mrb[0].mxu0
  %v2101 = vpop.f32.mrb[0].mxu0
  %v2102 = vadd.f32 0.0, %v2101
  %v2103 = vpop.f32.mrb[0].mxu0
  %2104 = vmatprep.mubr.bf16.mxu0 %v1993
  %2105 = vmatmul.mubr.bf16.gmra.mrb[0].mxu0 %v1992
  %v2106 = vpop.f32.mrb[0].mxu0
  %v2107 = vadd.f32 0.0, %v2106
  %v2108 = vpop.f32.mrb[0].mxu0
  %v2109 = vpop.f32.mrb[0].mxu0
  %v2110 = vadd.f32 0.0, %v2109
  %v2111 = vpop.f32.mrb[0].mxu0
  %2112 = vmatprep.mubr.bf16.mxu0 %v1997
  %2113 = vmatmul.mubr.bf16.gmra.mrb[0].mxu0 %v1996
  %v2114 = vpop.f32.mrb[0].mxu0
  %v2115 = vadd.f32 0.0, %v2114
  %v2116 = vpop.f32.mrb[0].mxu0
  %v2117 = vpop.f32.mrb[0].mxu0
  %v2118 = vadd.f32 0.0, %v2117
  %v2119 = vpop.f32.mrb[0].mxu0
  %2120 = vmatprep.mubr.bf16.mxu0 %v2001
  %2121 = vmatmul.mubr.bf16.gmra.mrb[0].mxu0 %v2000
  %v2122 = vpop.f32.mrb[0].mxu0
  %v2123 = vadd.f32 0.0, %v2122
  %v2124 = vpop.f32.mrb[0].mxu0
  %v2125 = vpop.f32.mrb[0].mxu0
  %v2126 = vadd.f32 0.0, %v2125
  %v2127 = vpop.f32.mrb[0].mxu0
  %2128 = vmatprep.mubr.bf16.mxu0 %v2005
  %2129 = vmatmul.mubr.bf16.gmra.mrb[0].mxu0 %v2004
  %v2130 = vpop.f32.mrb[0].mxu0
  %v2131 = vadd.f32 0.0, %v2130
  %v2132 = vpop.f32.mrb[0].mxu0
  %v2133 = vpop.f32.mrb[0].mxu0
  %v2134 = vadd.f32 0.0, %v2133
  %v2135 = vpop.f32.mrb[0].mxu0
  %2136 = vdwg.mxu0
  %2137 = vmatprep.subr.bf16.mxu0 0
  %2138 = vmatpush1.bf16.msra.mxu0 %v719
  %2139 = vmatprep.subr.bf16.mxu0 0
  %2140 = vmatpush1.bf16.msra.mxu0 %v720
  %2141 = vmatprep.subr.bf16.mxu0 0
  %2142 = vmatpush1.bf16.msra.mxu0 %v721
  %2143 = vmatprep.subr.bf16.mxu0 0
  %2144 = vmatpush1.bf16.msra.mxu0 %v722
  %2145 = vmatprep.subr.bf16.mxu0 0
  %2146 = vmatpush1.bf16.msra.mxu0 %v723
  %2147 = vmatprep.subr.bf16.mxu0 0
  %2148 = vmatpush1.bf16.msra.mxu0 %v724
  %2149 = vmatprep.subr.bf16.mxu0 0
  %2150 = vmatpush1.bf16.msra.mxu0 %v725
  %2151 = vmatprep.subr.bf16.mxu0 0
  %2152 = vmatpush1.bf16.msra.mxu0 %v726
  %2153 = vmatprep.subr.bf16.mxu0 0
  %2154 = vmatpush1.bf16.msra.mxu0 %v727
  %2155 = vmatprep.subr.bf16.mxu0 0
  %2156 = vmatpush1.bf16.msra.mxu0 %v728
  %2157 = vmatprep.subr.bf16.mxu0 0
  %2158 = vmatpush1.bf16.msra.mxu0 %v729
  %2159 = vmatprep.subr.bf16.mxu0 0
  %2160 = vmatpush1.bf16.msra.mxu0 %v730
  %2161 = vmatprep.subr.bf16.mxu0 0
  %2162 = vmatpush1.bf16.msra.mxu0 %v731
  %2163 = vmatprep.subr.bf16.mxu0 0
  %2164 = vmatpush1.bf16.msra.mxu0 %v732
  %2165 = vmatprep.subr.bf16.mxu0 0
  %2166 = vmatpush1.bf16.msra.mxu0 %v733
  %2167 = vmatprep.subr.bf16.mxu0 0
  %2168 = vmatpush1.bf16.msra.mxu0 %v734
  %2169 = vmatprep.mubr.bf16.mxu0 %v1979
  %2170 = vmatmul.mubr.bf16.gmra.mrb[0].mxu0 %v1978
  %v2171 = vpop.f32.mrb[0].mxu0
  %v2172 = vadd.f32 %v2075, %v2171
  %v2173 = vpop.f32.mrb[0].mxu0
  %v2174 = vpop.f32.mrb[0].mxu0
  %v2175 = vadd.f32 %v2078, %v2174
  %v2176 = vpop.f32.mrb[0].mxu0
  %2177 = vmatprep.mubr.bf16.mxu0 %v1983
  %2178 = vmatmul.mubr.bf16.gmra.mrb[0].mxu0 %v1982
  %v2179 = vpop.f32.mrb[0].mxu0
  %v2180 = vadd.f32 %v2083, %v2179
  %v2181 = vpop.f32.mrb[0].mxu0
  %v2182 = vpop.f32.mrb[0].mxu0
  %v2183 = vadd.f32 %v2086, %v2182
  %v2184 = vpop.f32.mrb[0].mxu0
  %2185 = vmatprep.mubr.bf16.mxu0 %v1987
  %2186 = vmatmul.mubr.bf16.gmra.mrb[0].mxu0 %v1986
  %v2187 = vpop.f32.mrb[0].mxu0
  %v2188 = vadd.f32 %v2091, %v2187
  %v2189 = vpop.f32.mrb[0].mxu0
  %v2190 = vpop.f32.mrb[0].mxu0
  %v2191 = vadd.f32 %v2094, %v2190
  %v2192 = vpop.f32.mrb[0].mxu0
  %2193 = vmatprep.mubr.bf16.mxu0 %v1991
  %2194 = vmatmul.mubr.bf16.gmra.mrb[0].mxu0 %v1990
  %v2195 = vpop.f32.mrb[0].mxu0
  %v2196 = vadd.f32 %v2099, %v2195
  %v2197 = vpop.f32.mrb[0].mxu0
  %v2198 = vpop.f32.mrb[0].mxu0
  %v2199 = vadd.f32 %v2102, %v2198
  %v2200 = vpop.f32.mrb[0].mxu0
  %2201 = vmatprep.mubr.bf16.mxu0 %v1995
  %2202 = vmatmul.mubr.bf16.gmra.mrb[0].mxu0 %v1994
  %v2203 = vpop.f32.mrb[0].mxu0
  %v2204 = vadd.f32 %v2107, %v2203
  %v2205 = vpop.f32.mrb[0].mxu0
  %v2206 = vpop.f32.mrb[0].mxu0
  %v2207 = vadd.f32 %v2110, %v2206
  %v2208 = vpop.f32.mrb[0].mxu0
  %2209 = vmatprep.mubr.bf16.mxu0 %v1999
  %2210 = vmatmul.mubr.bf16.gmra.mrb[0].mxu0 %v1998
  %v2211 = vpop.f32.mrb[0].mxu0
  %v2212 = vadd.f32 %v2115, %v2211
  %v2213 = vpop.f32.mrb[0].mxu0
  %v2214 = vpop.f32.mrb[0].mxu0
  %v2215 = vadd.f32 %v2118, %v2214
  %v2216 = vpop.f32.mrb[0].mxu0
  %2217 = vmatprep.mubr.bf16.mxu0 %v2003
  %2218 = vmatmul.mubr.bf16.gmra.mrb[0].mxu0 %v2002
  %v2219 = vpop.f32.mrb[0].mxu0
  %v2220 = vadd.f32 %v2123, %v2219
  %v2221 = vpop.f32.mrb[0].mxu0
  %v2222 = vpop.f32.mrb[0].mxu0
  %v2223 = vadd.f32 %v2126, %v2222
  %v2224 = vpop.f32.mrb[0].mxu0
  %2225 = vmatprep.mubr.bf16.mxu0 %v2007
  %2226 = vmatmul.mubr.bf16.gmra.mrb[0].mxu0 %v2006
  %v2227 = vpop.f32.mrb[0].mxu0
  %v2228 = vadd.f32 %v2131, %v2227
  %v2229 = vpop.f32.mrb[0].mxu0
  %v2230 = vpop.f32.mrb[0].mxu0
  %v2231 = vadd.f32 %v2134, %v2230
  %v2232 = vpop.f32.mrb[0].mxu0
  %2233 = vdwg.mxu0
  %v2234 = vpack.c.bf16 %v2175, %v2172
  %v2235 = vpack.c.bf16 %v2183, %v2180
  %v2236 = vpack.c.bf16 %v2191, %v2188
  %v2237 = vpack.c.bf16 %v2199, %v2196
  %v2238 = vpack.c.bf16 %v2207, %v2204
  %v2239 = vpack.c.bf16 %v2215, %v2212
  %v2240 = vpack.c.bf16 %v2223, %v2220
  %v2241 = vpack.c.bf16 %v2231, %v2228
  %s2242 = scalar_lea.vmem %s3, 128
  %v2243 = vld [vmem:[%s2242] sm:$0xf]
  %v2244 = vld [vmem:[%s2242 + $0x4] sm:$0xf]
  %v2245 = vld [vmem:[%s2242 + $0x8] sm:$0xf]
  %v2246 = vld [vmem:[%s2242 + $0xc] sm:$0xf]
  %v2247 = vld [vmem:[%s2242 + $0x10] sm:$0xf]
  %v2248 = vld [vmem:[%s2242 + $0x14] sm:$0xf]
  %v2249 = vld [vmem:[%s2242 + $0x18] sm:$0xf]
  %v2250 = vld [vmem:[%s2242 + $0x1c] sm:$0xf]
  %v2251 = vld [vmem:[%s2242 + $0x20] sm:$0xf]
  %v2252 = vld [vmem:[%s2242 + $0x24] sm:$0xf]
  %v2253 = vld [vmem:[%s2242 + $0x28] sm:$0xf]
  %v2254 = vld [vmem:[%s2242 + $0x2c] sm:$0xf]
  %v2255 = vld [vmem:[%s2242 + $0x30] sm:$0xf]
  %v2256 = vld [vmem:[%s2242 + $0x34] sm:$0xf]
  %v2257 = vld [vmem:[%s2242 + $0x38] sm:$0xf]
  %v2258 = vld [vmem:[%s2242 + $0x3c] sm:$0xf]
  %v2275 = vunpack.c.l.b16 %v2243
  %v2276 = vunpack.c.l.b16 %v2244
  %v2277 = vunpack.c.l.b16 %v2245
  %v2278 = vunpack.c.l.b16 %v2246
  %v2279 = vunpack.c.l.b16 %v2247
  %v2280 = vunpack.c.l.b16 %v2248
  %v2281 = vunpack.c.l.b16 %v2249
  %v2282 = vunpack.c.l.b16 %v2250
  %v2283 = vunpack.c.l.b16 %v2251
  %v2284 = vunpack.c.l.b16 %v2252
  %v2285 = vunpack.c.l.b16 %v2253
  %v2286 = vunpack.c.l.b16 %v2254
  %v2287 = vunpack.c.l.b16 %v2255
  %v2288 = vunpack.c.l.b16 %v2256
  %v2289 = vunpack.c.l.b16 %v2257
  %v2290 = vunpack.c.l.b16 %v2258
  %v2291 = vpack.c.b16 %v2276, %v2275
  %v2292 = vpack.c.b16 %v2278, %v2277
  %v2293 = vpack.c.b16 %v2280, %v2279
  %v2294 = vpack.c.b16 %v2282, %v2281
  %v2295 = vpack.c.b16 %v2284, %v2283
  %v2296 = vpack.c.b16 %v2286, %v2285
  %v2297 = vpack.c.b16 %v2288, %v2287
  %v2298 = vpack.c.b16 %v2290, %v2289
  %2307 = vmatprep.subr.bf16.mxu0 0
  %2308 = vmatpush1.bf16.msra.mxu0 %v2291
  %2309 = vmatprep.subr.bf16.mxu0 0
  %2310 = vmatpush1.bf16.msra.mxu0 %v2292
  %2311 = vmatprep.subr.bf16.mxu0 0
  %2312 = vmatpush1.bf16.msra.mxu0 %v2293
  %2313 = vmatprep.subr.bf16.mxu0 0
  %2314 = vmatpush1.bf16.msra.mxu0 %v2294
  %2315 = vmatprep.subr.bf16.mxu0 0
  %2316 = vmatpush1.bf16.msra.mxu0 %v2295
  %2317 = vmatprep.subr.bf16.mxu0 0
  %2318 = vmatpush1.bf16.msra.mxu0 %v2296
  %2319 = vmatprep.subr.bf16.mxu0 0
  %2320 = vmatpush1.bf16.msra.mxu0 %v2297
  %2321 = vmatprep.subr.bf16.mxu0 0
  %2322 = vmatpush1.bf16.msra.mxu0 %v2298
  %2323 = vmatprep.subr.bf16.mxu0 0
  %2324 = vmatpush1.bf16.msra.mxu0 0
  %2325 = vmatprep.subr.bf16.mxu0 0
  %2326 = vmatpush1.bf16.msra.mxu0 0
  %2327 = vmatprep.subr.bf16.mxu0 0
  %2328 = vmatpush1.bf16.msra.mxu0 0
  %2329 = vmatprep.subr.bf16.mxu0 0
  %2330 = vmatpush1.bf16.msra.mxu0 0
  %2331 = vmatprep.subr.bf16.mxu0 0
  %2332 = vmatpush1.bf16.msra.mxu0 0
  %2333 = vmatprep.subr.bf16.mxu0 0
  %2334 = vmatpush1.bf16.msra.mxu0 0
  %2335 = vmatprep.subr.bf16.mxu0 0
  %2336 = vmatpush1.bf16.msra.mxu0 0
  %2337 = vmatprep.subr.bf16.mxu0 0
  %2338 = vmatpush1.bf16.msra.mxu0 0
  %2339 = vmatprep.mubr.bf16.mxu0 0
  %2340 = vmatmul.mubr.bf16.gmra.mrb[0].mxu0 %v2234
  %v2341 = vpop.f32.mrb[0].mxu0
  %v2342 = vadd.f32 0.0, %v2341
  %v2343 = vpop.f32.mrb[0].mxu0
  %v2344 = vpop.f32.mrb[0].mxu0
  %v2345 = vadd.f32 0.0, %v2344
  %v2346 = vpop.f32.mrb[0].mxu0
  %2347 = vmatprep.mubr.bf16.mxu0 0
  %2348 = vmatmul.mubr.bf16.gmra.mrb[0].mxu0 %v2235
  %v2349 = vpop.f32.mrb[0].mxu0
  %v2350 = vadd.f32 0.0, %v2349
  %v2351 = vpop.f32.mrb[0].mxu0
  %v2352 = vpop.f32.mrb[0].mxu0
  %v2353 = vadd.f32 0.0, %v2352
  %v2354 = vpop.f32.mrb[0].mxu0
  %2355 = vmatprep.mubr.bf16.mxu0 0
  %2356 = vmatmul.mubr.bf16.gmra.mrb[0].mxu0 %v2236
  %v2357 = vpop.f32.mrb[0].mxu0
  %v2358 = vadd.f32 0.0, %v2357
  %v2359 = vpop.f32.mrb[0].mxu0
  %v2360 = vpop.f32.mrb[0].mxu0
  %v2361 = vadd.f32 0.0, %v2360
  %v2362 = vpop.f32.mrb[0].mxu0
  %2363 = vmatprep.mubr.bf16.mxu0 0
  %2364 = vmatmul.mubr.bf16.gmra.mrb[0].mxu0 %v2237
  %v2365 = vpop.f32.mrb[0].mxu0
  %v2366 = vadd.f32 0.0, %v2365
  %v2367 = vpop.f32.mrb[0].mxu0
  %v2368 = vpop.f32.mrb[0].mxu0
  %v2369 = vadd.f32 0.0, %v2368
  %v2370 = vpop.f32.mrb[0].mxu0
  %2371 = vmatprep.mubr.bf16.mxu0 0
  %2372 = vmatmul.mubr.bf16.gmra.mrb[0].mxu0 %v2238
  %v2373 = vpop.f32.mrb[0].mxu0
  %v2374 = vadd.f32 0.0, %v2373
  %v2375 = vpop.f32.mrb[0].mxu0
  %v2376 = vpop.f32.mrb[0].mxu0
  %v2377 = vadd.f32 0.0, %v2376
  %v2378 = vpop.f32.mrb[0].mxu0
  %2379 = vmatprep.mubr.bf16.mxu0 0
  %2380 = vmatmul.mubr.bf16.gmra.mrb[0].mxu0 %v2239
  %v2381 = vpop.f32.mrb[0].mxu0
  %v2382 = vadd.f32 0.0, %v2381
  %v2383 = vpop.f32.mrb[0].mxu0
  %v2384 = vpop.f32.mrb[0].mxu0
  %v2385 = vadd.f32 0.0, %v2384
  %v2386 = vpop.f32.mrb[0].mxu0
  %2387 = vmatprep.mubr.bf16.mxu0 0
  %2388 = vmatmul.mubr.bf16.gmra.mrb[0].mxu0 %v2240
  %v2389 = vpop.f32.mrb[0].mxu0
  %v2390 = vadd.f32 0.0, %v2389
  %v2391 = vpop.f32.mrb[0].mxu0
  %v2392 = vpop.f32.mrb[0].mxu0
  %v2393 = vadd.f32 0.0, %v2392
  %v2394 = vpop.f32.mrb[0].mxu0
  %2395 = vmatprep.mubr.bf16.mxu0 0
  %2396 = vmatmul.mubr.bf16.gmra.mrb[0].mxu0 %v2241
  %v2397 = vpop.f32.mrb[0].mxu0
  %v2398 = vadd.f32 0.0, %v2397
  %v2399 = vpop.f32.mrb[0].mxu0
  %v2400 = vpop.f32.mrb[0].mxu0
  %v2401 = vadd.f32 0.0, %v2400
  %v2402 = vpop.f32.mrb[0].mxu0
  %2403 = vdwg.mxu0
  %v2404 = vadd.f32 %v1785, %v2342
  %v2405 = vadd.f32 %v1788, %v2345
  %v2406 = vadd.f32 %v1793, %v2350
  %v2407 = vadd.f32 %v1796, %v2353
  %v2408 = vadd.f32 %v1801, %v2358
  %v2409 = vadd.f32 %v1804, %v2361
  %v2410 = vadd.f32 %v1809, %v2366
  %v2411 = vadd.f32 %v1812, %v2369
  %v2412 = vadd.f32 %v1817, %v2374
  %v2413 = vadd.f32 %v1820, %v2377
  %v2414 = vadd.f32 %v1825, %v2382
  %v2415 = vadd.f32 %v1828, %v2385
  %v2416 = vadd.f32 %v1833, %v2390
  %v2417 = vadd.f32 %v1836, %v2393
  %v2418 = vadd.f32 %v1841, %v2398
  %v2419 = vadd.f32 %v1844, %v2401
  %s2420 = scalar_lea.vmem %s2, 768
  %v2421 = vld [vmem:[%s2420] sm:$0xff]
  %v2422 = vld [vmem:[%s2420 + $0x8] sm:$0xff]
  %v2423 = vld [vmem:[%s2420 + $0x10] sm:$0xff]
  %v2424 = vld [vmem:[%s2420 + $0x18] sm:$0xff]
  %v2425 = vld [vmem:[%s2420 + $0x20] sm:$0xff]
  %v2426 = vld [vmem:[%s2420 + $0x28] sm:$0xff]
  %v2427 = vld [vmem:[%s2420 + $0x30] sm:$0xff]
  %v2428 = vld [vmem:[%s2420 + $0x38] sm:$0xff]
  %v2429 = vld [vmem:[%s2420 + $0x40] sm:$0xff]
  %v2430 = vld [vmem:[%s2420 + $0x48] sm:$0xff]
  %v2431 = vld [vmem:[%s2420 + $0x50] sm:$0xff]
  %v2432 = vld [vmem:[%s2420 + $0x58] sm:$0xff]
  %v2433 = vld [vmem:[%s2420 + $0x60] sm:$0xff]
  %v2434 = vld [vmem:[%s2420 + $0x68] sm:$0xff]
  %v2435 = vld [vmem:[%s2420 + $0x70] sm:$0xff]
  %v2436 = vld [vmem:[%s2420 + $0x78] sm:$0xff]
  %v2437 = vld [vmem:[%s2420 + $0x80] sm:$0xff]
  %v2438 = vld [vmem:[%s2420 + $0x88] sm:$0xff]
  %v2439 = vld [vmem:[%s2420 + $0x90] sm:$0xff]
  %v2440 = vld [vmem:[%s2420 + $0x98] sm:$0xff]
  %v2441 = vld [vmem:[%s2420 + $0xa0] sm:$0xff]
  %v2442 = vld [vmem:[%s2420 + $0xa8] sm:$0xff]
  %v2443 = vld [vmem:[%s2420 + $0xb0] sm:$0xff]
  %v2444 = vld [vmem:[%s2420 + $0xb8] sm:$0xff]
  %v2445 = vld [vmem:[%s2420 + $0xc0] sm:$0xff]
  %v2446 = vld [vmem:[%s2420 + $0xc8] sm:$0xff]
  %v2447 = vld [vmem:[%s2420 + $0xd0] sm:$0xff]
  %v2448 = vld [vmem:[%s2420 + $0xd8] sm:$0xff]
  %v2449 = vld [vmem:[%s2420 + $0xe0] sm:$0xff]
  %v2450 = vld [vmem:[%s2420 + $0xe8] sm:$0xff]
  %v2451 = vld [vmem:[%s2420 + $0xf0] sm:$0xff]
  %v2452 = vld [vmem:[%s2420 + $0xf8] sm:$0xff]
  %v2485 = vunpack.c.l.b16 %v2421
  %v2486 = vunpack.c.h.b16 %v2421
  %v2487 = vunpack.c.l.b16 %v2422
  %v2488 = vunpack.c.h.b16 %v2422
  %v2489 = vunpack.c.l.b16 %v2423
  %v2490 = vunpack.c.h.b16 %v2423
  %v2491 = vunpack.c.l.b16 %v2424
  %v2492 = vunpack.c.h.b16 %v2424
  %v2493 = vunpack.c.l.b16 %v2425
  %v2494 = vunpack.c.h.b16 %v2425
  %v2495 = vunpack.c.l.b16 %v2426
  %v2496 = vunpack.c.h.b16 %v2426
  %v2497 = vunpack.c.l.b16 %v2427
  %v2498 = vunpack.c.h.b16 %v2427
  %v2499 = vunpack.c.l.b16 %v2428
  %v2500 = vunpack.c.h.b16 %v2428
  %v2501 = vunpack.c.l.b16 %v2429
  %v2502 = vunpack.c.h.b16 %v2429
  %v2503 = vunpack.c.l.b16 %v2430
  %v2504 = vunpack.c.h.b16 %v2430
  %v2505 = vunpack.c.l.b16 %v2431
  %v2506 = vunpack.c.h.b16 %v2431
  %v2507 = vunpack.c.l.b16 %v2432
  %v2508 = vunpack.c.h.b16 %v2432
  %v2509 = vunpack.c.l.b16 %v2433
  %v2510 = vunpack.c.h.b16 %v2433
  %v2511 = vunpack.c.l.b16 %v2434
  %v2512 = vunpack.c.h.b16 %v2434
  %v2513 = vunpack.c.l.b16 %v2435
  %v2514 = vunpack.c.h.b16 %v2435
  %v2515 = vunpack.c.l.b16 %v2436
  %v2516 = vunpack.c.h.b16 %v2436
  %v2517 = vunpack.c.l.b16 %v2437
  %v2518 = vunpack.c.h.b16 %v2437
  %v2519 = vunpack.c.l.b16 %v2438
  %v2520 = vunpack.c.h.b16 %v2438
  %v2521 = vunpack.c.l.b16 %v2439
  %v2522 = vunpack.c.h.b16 %v2439
  %v2523 = vunpack.c.l.b16 %v2440
  %v2524 = vunpack.c.h.b16 %v2440
  %v2525 = vunpack.c.l.b16 %v2441
  %v2526 = vunpack.c.h.b16 %v2441
  %v2527 = vunpack.c.l.b16 %v2442
  %v2528 = vunpack.c.h.b16 %v2442
  %v2529 = vunpack.c.l.b16 %v2443
  %v2530 = vunpack.c.h.b16 %v2443
  %v2531 = vunpack.c.l.b16 %v2444
  %v2532 = vunpack.c.h.b16 %v2444
  %v2533 = vunpack.c.l.b16 %v2445
  %v2534 = vunpack.c.h.b16 %v2445
  %v2535 = vunpack.c.l.b16 %v2446
  %v2536 = vunpack.c.h.b16 %v2446
  %v2537 = vunpack.c.l.b16 %v2447
  %v2538 = vunpack.c.h.b16 %v2447
  %v2539 = vunpack.c.l.b16 %v2448
  %v2540 = vunpack.c.h.b16 %v2448
  %v2541 = vunpack.c.l.b16 %v2449
  %v2542 = vunpack.c.h.b16 %v2449
  %v2543 = vunpack.c.l.b16 %v2450
  %v2544 = vunpack.c.h.b16 %v2450
  %v2545 = vunpack.c.l.b16 %v2451
  %v2546 = vunpack.c.h.b16 %v2451
  %v2547 = vunpack.c.l.b16 %v2452
  %v2548 = vunpack.c.h.b16 %v2452
  %v2549 = vpack.c.b16 %v2489, %v2485
  %v2550 = vpack.c.b16 %v2490, %v2486
  %v2551 = vpack.c.b16 %v2491, %v2487
  %v2552 = vpack.c.b16 %v2492, %v2488
  %v2553 = vpack.c.b16 %v2497, %v2493
  %v2554 = vpack.c.b16 %v2498, %v2494
  %v2555 = vpack.c.b16 %v2499, %v2495
  %v2556 = vpack.c.b16 %v2500, %v2496
  %v2557 = vpack.c.b16 %v2505, %v2501
  %v2558 = vpack.c.b16 %v2506, %v2502
  %v2559 = vpack.c.b16 %v2507, %v2503
  %v2560 = vpack.c.b16 %v2508, %v2504
  %v2561 = vpack.c.b16 %v2513, %v2509
  %v2562 = vpack.c.b16 %v2514, %v2510
  %v2563 = vpack.c.b16 %v2515, %v2511
  %v2564 = vpack.c.b16 %v2516, %v2512
  %v2565 = vpack.c.b16 %v2521, %v2517
  %v2566 = vpack.c.b16 %v2522, %v2518
  %v2567 = vpack.c.b16 %v2523, %v2519
  %v2568 = vpack.c.b16 %v2524, %v2520
  %v2569 = vpack.c.b16 %v2529, %v2525
  %v2570 = vpack.c.b16 %v2530, %v2526
  %v2571 = vpack.c.b16 %v2531, %v2527
  %v2572 = vpack.c.b16 %v2532, %v2528
  %v2573 = vpack.c.b16 %v2537, %v2533
  %v2574 = vpack.c.b16 %v2538, %v2534
  %v2575 = vpack.c.b16 %v2539, %v2535
  %v2576 = vpack.c.b16 %v2540, %v2536
  %v2577 = vpack.c.b16 %v2545, %v2541
  %v2578 = vpack.c.b16 %v2546, %v2542
  %v2579 = vpack.c.b16 %v2547, %v2543
  %v2580 = vpack.c.b16 %v2548, %v2544
  %2613 = vmatprep.subr.bf16.mxu0 0
  %2614 = vmatpush1.bf16.msra.mxu0 %v703
  %2615 = vmatprep.subr.bf16.mxu0 0
  %2616 = vmatpush1.bf16.msra.mxu0 %v704
  %2617 = vmatprep.subr.bf16.mxu0 0
  %2618 = vmatpush1.bf16.msra.mxu0 %v705
  %2619 = vmatprep.subr.bf16.mxu0 0
  %2620 = vmatpush1.bf16.msra.mxu0 %v706
  %2621 = vmatprep.subr.bf16.mxu0 0
  %2622 = vmatpush1.bf16.msra.mxu0 %v707
  %2623 = vmatprep.subr.bf16.mxu0 0
  %2624 = vmatpush1.bf16.msra.mxu0 %v708
  %2625 = vmatprep.subr.bf16.mxu0 0
  %2626 = vmatpush1.bf16.msra.mxu0 %v709
  %2627 = vmatprep.subr.bf16.mxu0 0
  %2628 = vmatpush1.bf16.msra.mxu0 %v710
  %2629 = vmatprep.subr.bf16.mxu0 0
  %2630 = vmatpush1.bf16.msra.mxu0 %v711
  %2631 = vmatprep.subr.bf16.mxu0 0
  %2632 = vmatpush1.bf16.msra.mxu0 %v712
  %2633 = vmatprep.subr.bf16.mxu0 0
  %2634 = vmatpush1.bf16.msra.mxu0 %v713
  %2635 = vmatprep.subr.bf16.mxu0 0
  %2636 = vmatpush1.bf16.msra.mxu0 %v714
  %2637 = vmatprep.subr.bf16.mxu0 0
  %2638 = vmatpush1.bf16.msra.mxu0 %v715
  %2639 = vmatprep.subr.bf16.mxu0 0
  %2640 = vmatpush1.bf16.msra.mxu0 %v716
  %2641 = vmatprep.subr.bf16.mxu0 0
  %2642 = vmatpush1.bf16.msra.mxu0 %v717
  %2643 = vmatprep.subr.bf16.mxu0 0
  %2644 = vmatpush1.bf16.msra.mxu0 %v718
  %2645 = vmatprep.mubr.bf16.mxu0 %v2550
  %2646 = vmatmul.mubr.bf16.gmra.mrb[0].mxu0 %v2549
  %v2647 = vpop.f32.mrb[0].mxu0
  %v2648 = vadd.f32 0.0, %v2647
  %v2649 = vpop.f32.mrb[0].mxu0
  %v2650 = vpop.f32.mrb[0].mxu0
  %v2651 = vadd.f32 0.0, %v2650
  %v2652 = vpop.f32.mrb[0].mxu0
  %2653 = vmatprep.mubr.bf16.mxu0 %v2554
  %2654 = vmatmul.mubr.bf16.gmra.mrb[0].mxu0 %v2553
  %v2655 = vpop.f32.mrb[0].mxu0
  %v2656 = vadd.f32 0.0, %v2655
  %v2657 = vpop.f32.mrb[0].mxu0
  %v2658 = vpop.f32.mrb[0].mxu0
  %v2659 = vadd.f32 0.0, %v2658
  %v2660 = vpop.f32.mrb[0].mxu0
  %2661 = vmatprep.mubr.bf16.mxu0 %v2558
  %2662 = vmatmul.mubr.bf16.gmra.mrb[0].mxu0 %v2557
  %v2663 = vpop.f32.mrb[0].mxu0
  %v2664 = vadd.f32 0.0, %v2663
  %v2665 = vpop.f32.mrb[0].mxu0
  %v2666 = vpop.f32.mrb[0].mxu0
  %v2667 = vadd.f32 0.0, %v2666
  %v2668 = vpop.f32.mrb[0].mxu0
  %2669 = vmatprep.mubr.bf16.mxu0 %v2562
  %2670 = vmatmul.mubr.bf16.gmra.mrb[0].mxu0 %v2561
  %v2671 = vpop.f32.mrb[0].mxu0
  %v2672 = vadd.f32 0.0, %v2671
  %v2673 = vpop.f32.mrb[0].mxu0
  %v2674 = vpop.f32.mrb[0].mxu0
  %v2675 = vadd.f32 0.0, %v2674
  %v2676 = vpop.f32.mrb[0].mxu0
  %2677 = vmatprep.mubr.bf16.mxu0 %v2566
  %2678 = vmatmul.mubr.bf16.gmra.mrb[0].mxu0 %v2565
  %v2679 = vpop.f32.mrb[0].mxu0
  %v2680 = vadd.f32 0.0, %v2679
  %v2681 = vpop.f32.mrb[0].mxu0
  %v2682 = vpop.f32.mrb[0].mxu0
  %v2683 = vadd.f32 0.0, %v2682
  %v2684 = vpop.f32.mrb[0].mxu0
  %2685 = vmatprep.mubr.bf16.mxu0 %v2570
  %2686 = vmatmul.mubr.bf16.gmra.mrb[0].mxu0 %v2569
  %v2687 = vpop.f32.mrb[0].mxu0
  %v2688 = vadd.f32 0.0, %v2687
  %v2689 = vpop.f32.mrb[0].mxu0
  %v2690 = vpop.f32.mrb[0].mxu0
  %v2691 = vadd.f32 0.0, %v2690
  %v2692 = vpop.f32.mrb[0].mxu0
  %2693 = vmatprep.mubr.bf16.mxu0 %v2574
  %2694 = vmatmul.mubr.bf16.gmra.mrb[0].mxu0 %v2573
  %v2695 = vpop.f32.mrb[0].mxu0
  %v2696 = vadd.f32 0.0, %v2695
  %v2697 = vpop.f32.mrb[0].mxu0
  %v2698 = vpop.f32.mrb[0].mxu0
  %v2699 = vadd.f32 0.0, %v2698
  %v2700 = vpop.f32.mrb[0].mxu0
  %2701 = vmatprep.mubr.bf16.mxu0 %v2578
  %2702 = vmatmul.mubr.bf16.gmra.mrb[0].mxu0 %v2577
  %v2703 = vpop.f32.mrb[0].mxu0
  %v2704 = vadd.f32 0.0, %v2703
  %v2705 = vpop.f32.mrb[0].mxu0
  %v2706 = vpop.f32.mrb[0].mxu0
  %v2707 = vadd.f32 0.0, %v2706
  %v2708 = vpop.f32.mrb[0].mxu0
  %2709 = vdwg.mxu0
  %2710 = vmatprep.subr.bf16.mxu0 0
  %2711 = vmatpush1.bf16.msra.mxu0 %v719
  %2712 = vmatprep.subr.bf16.mxu0 0
  %2713 = vmatpush1.bf16.msra.mxu0 %v720
  %2714 = vmatprep.subr.bf16.mxu0 0
  %2715 = vmatpush1.bf16.msra.mxu0 %v721
  %2716 = vmatprep.subr.bf16.mxu0 0
  %2717 = vmatpush1.bf16.msra.mxu0 %v722
  %2718 = vmatprep.subr.bf16.mxu0 0
  %2719 = vmatpush1.bf16.msra.mxu0 %v723
  %2720 = vmatprep.subr.bf16.mxu0 0
  %2721 = vmatpush1.bf16.msra.mxu0 %v724
  %2722 = vmatprep.subr.bf16.mxu0 0
  %2723 = vmatpush1.bf16.msra.mxu0 %v725
  %2724 = vmatprep.subr.bf16.mxu0 0
  %2725 = vmatpush1.bf16.msra.mxu0 %v726
  %2726 = vmatprep.subr.bf16.mxu0 0
  %2727 = vmatpush1.bf16.msra.mxu0 %v727
  %2728 = vmatprep.subr.bf16.mxu0 0
  %2729 = vmatpush1.bf16.msra.mxu0 %v728
  %2730 = vmatprep.subr.bf16.mxu0 0
  %2731 = vmatpush1.bf16.msra.mxu0 %v729
  %2732 = vmatprep.subr.bf16.mxu0 0
  %2733 = vmatpush1.bf16.msra.mxu0 %v730
  %2734 = vmatprep.subr.bf16.mxu0 0
  %2735 = vmatpush1.bf16.msra.mxu0 %v731
  %2736 = vmatprep.subr.bf16.mxu0 0
  %2737 = vmatpush1.bf16.msra.mxu0 %v732
  %2738 = vmatprep.subr.bf16.mxu0 0
  %2739 = vmatpush1.bf16.msra.mxu0 %v733
  %2740 = vmatprep.subr.bf16.mxu0 0
  %2741 = vmatpush1.bf16.msra.mxu0 %v734
  %2742 = vmatprep.mubr.bf16.mxu0 %v2552
  %2743 = vmatmul.mubr.bf16.gmra.mrb[0].mxu0 %v2551
  %v2744 = vpop.f32.mrb[0].mxu0
  %v2745 = vadd.f32 %v2648, %v2744
  %v2746 = vpop.f32.mrb[0].mxu0
  %v2747 = vpop.f32.mrb[0].mxu0
  %v2748 = vadd.f32 %v2651, %v2747
  %v2749 = vpop.f32.mrb[0].mxu0
  %2750 = vmatprep.mubr.bf16.mxu0 %v2556
  %2751 = vmatmul.mubr.bf16.gmra.mrb[0].mxu0 %v2555
  %v2752 = vpop.f32.mrb[0].mxu0
  %v2753 = vadd.f32 %v2656, %v2752
  %v2754 = vpop.f32.mrb[0].mxu0
  %v2755 = vpop.f32.mrb[0].mxu0
  %v2756 = vadd.f32 %v2659, %v2755
  %v2757 = vpop.f32.mrb[0].mxu0
  %2758 = vmatprep.mubr.bf16.mxu0 %v2560
  %2759 = vmatmul.mubr.bf16.gmra.mrb[0].mxu0 %v2559
  %v2760 = vpop.f32.mrb[0].mxu0
  %v2761 = vadd.f32 %v2664, %v2760
  %v2762 = vpop.f32.mrb[0].mxu0
  %v2763 = vpop.f32.mrb[0].mxu0
  %v2764 = vadd.f32 %v2667, %v2763
  %v2765 = vpop.f32.mrb[0].mxu0
  %2766 = vmatprep.mubr.bf16.mxu0 %v2564
  %2767 = vmatmul.mubr.bf16.gmra.mrb[0].mxu0 %v2563
  %v2768 = vpop.f32.mrb[0].mxu0
  %v2769 = vadd.f32 %v2672, %v2768
  %v2770 = vpop.f32.mrb[0].mxu0
  %v2771 = vpop.f32.mrb[0].mxu0
  %v2772 = vadd.f32 %v2675, %v2771
  %v2773 = vpop.f32.mrb[0].mxu0
  %2774 = vmatprep.mubr.bf16.mxu0 %v2568
  %2775 = vmatmul.mubr.bf16.gmra.mrb[0].mxu0 %v2567
  %v2776 = vpop.f32.mrb[0].mxu0
  %v2777 = vadd.f32 %v2680, %v2776
  %v2778 = vpop.f32.mrb[0].mxu0
  %v2779 = vpop.f32.mrb[0].mxu0
  %v2780 = vadd.f32 %v2683, %v2779
  %v2781 = vpop.f32.mrb[0].mxu0
  %2782 = vmatprep.mubr.bf16.mxu0 %v2572
  %2783 = vmatmul.mubr.bf16.gmra.mrb[0].mxu0 %v2571
  %v2784 = vpop.f32.mrb[0].mxu0
  %v2785 = vadd.f32 %v2688, %v2784
  %v2786 = vpop.f32.mrb[0].mxu0
  %v2787 = vpop.f32.mrb[0].mxu0
  %v2788 = vadd.f32 %v2691, %v2787
  %v2789 = vpop.f32.mrb[0].mxu0
  %2790 = vmatprep.mubr.bf16.mxu0 %v2576
  %2791 = vmatmul.mubr.bf16.gmra.mrb[0].mxu0 %v2575
  %v2792 = vpop.f32.mrb[0].mxu0
  %v2793 = vadd.f32 %v2696, %v2792
  %v2794 = vpop.f32.mrb[0].mxu0
  %v2795 = vpop.f32.mrb[0].mxu0
  %v2796 = vadd.f32 %v2699, %v2795
  %v2797 = vpop.f32.mrb[0].mxu0
  %2798 = vmatprep.mubr.bf16.mxu0 %v2580
  %2799 = vmatmul.mubr.bf16.gmra.mrb[0].mxu0 %v2579
  %v2800 = vpop.f32.mrb[0].mxu0
  %v2801 = vadd.f32 %v2704, %v2800
  %v2802 = vpop.f32.mrb[0].mxu0
  %v2803 = vpop.f32.mrb[0].mxu0
  %v2804 = vadd.f32 %v2707, %v2803
  %v2805 = vpop.f32.mrb[0].mxu0
  %2806 = vdwg.mxu0
  %v2807 = vpack.c.bf16 %v2748, %v2745
  %v2808 = vpack.c.bf16 %v2756, %v2753
  %v2809 = vpack.c.bf16 %v2764, %v2761
  %v2810 = vpack.c.bf16 %v2772, %v2769
  %v2811 = vpack.c.bf16 %v2780, %v2777
  %v2812 = vpack.c.bf16 %v2788, %v2785
  %v2813 = vpack.c.bf16 %v2796, %v2793
  %v2814 = vpack.c.bf16 %v2804, %v2801
  %s2815 = scalar_lea.vmem %s3, 192
  %v2816 = vld [vmem:[%s2815] sm:$0xf]
  %v2817 = vld [vmem:[%s2815 + $0x4] sm:$0xf]
  %v2818 = vld [vmem:[%s2815 + $0x8] sm:$0xf]
  %v2819 = vld [vmem:[%s2815 + $0xc] sm:$0xf]
  %v2820 = vld [vmem:[%s2815 + $0x10] sm:$0xf]
  %v2821 = vld [vmem:[%s2815 + $0x14] sm:$0xf]
  %v2822 = vld [vmem:[%s2815 + $0x18] sm:$0xf]
  %v2823 = vld [vmem:[%s2815 + $0x1c] sm:$0xf]
  %v2824 = vld [vmem:[%s2815 + $0x20] sm:$0xf]
  %v2825 = vld [vmem:[%s2815 + $0x24] sm:$0xf]
  %v2826 = vld [vmem:[%s2815 + $0x28] sm:$0xf]
  %v2827 = vld [vmem:[%s2815 + $0x2c] sm:$0xf]
  %v2828 = vld [vmem:[%s2815 + $0x30] sm:$0xf]
  %v2829 = vld [vmem:[%s2815 + $0x34] sm:$0xf]
  %v2830 = vld [vmem:[%s2815 + $0x38] sm:$0xf]
  %v2831 = vld [vmem:[%s2815 + $0x3c] sm:$0xf]
  %v2848 = vunpack.c.l.b16 %v2816
  %v2849 = vunpack.c.l.b16 %v2817
  %v2850 = vunpack.c.l.b16 %v2818
  %v2851 = vunpack.c.l.b16 %v2819
  %v2852 = vunpack.c.l.b16 %v2820
  %v2853 = vunpack.c.l.b16 %v2821
  %v2854 = vunpack.c.l.b16 %v2822
  %v2855 = vunpack.c.l.b16 %v2823
  %v2856 = vunpack.c.l.b16 %v2824
  %v2857 = vunpack.c.l.b16 %v2825
  %v2858 = vunpack.c.l.b16 %v2826
  %v2859 = vunpack.c.l.b16 %v2827
  %v2860 = vunpack.c.l.b16 %v2828
  %v2861 = vunpack.c.l.b16 %v2829
  %v2862 = vunpack.c.l.b16 %v2830
  %v2863 = vunpack.c.l.b16 %v2831
  %v2864 = vpack.c.b16 %v2849, %v2848
  %v2865 = vpack.c.b16 %v2851, %v2850
  %v2866 = vpack.c.b16 %v2853, %v2852
  %v2867 = vpack.c.b16 %v2855, %v2854
  %v2868 = vpack.c.b16 %v2857, %v2856
  %v2869 = vpack.c.b16 %v2859, %v2858
  %v2870 = vpack.c.b16 %v2861, %v2860
  %v2871 = vpack.c.b16 %v2863, %v2862
  %2880 = vmatprep.subr.bf16.mxu0 0
  %2881 = vmatpush1.bf16.msra.mxu0 %v2864
  %2882 = vmatprep.subr.bf16.mxu0 0
  %2883 = vmatpush1.bf16.msra.mxu0 %v2865
  %2884 = vmatprep.subr.bf16.mxu0 0
  %2885 = vmatpush1.bf16.msra.mxu0 %v2866
  %2886 = vmatprep.subr.bf16.mxu0 0
  %2887 = vmatpush1.bf16.msra.mxu0 %v2867
  %2888 = vmatprep.subr.bf16.mxu0 0
  %2889 = vmatpush1.bf16.msra.mxu0 %v2868
  %2890 = vmatprep.subr.bf16.mxu0 0
  %2891 = vmatpush1.bf16.msra.mxu0 %v2869
  %2892 = vmatprep.subr.bf16.mxu0 0
  %2893 = vmatpush1.bf16.msra.mxu0 %v2870
  %2894 = vmatprep.subr.bf16.mxu0 0
  %2895 = vmatpush1.bf16.msra.mxu0 %v2871
  %2896 = vmatprep.subr.bf16.mxu0 0
  %2897 = vmatpush1.bf16.msra.mxu0 0
  %2898 = vmatprep.subr.bf16.mxu0 0
  %2899 = vmatpush1.bf16.msra.mxu0 0
  %2900 = vmatprep.subr.bf16.mxu0 0
  %2901 = vmatpush1.bf16.msra.mxu0 0
  %2902 = vmatprep.subr.bf16.mxu0 0
  %2903 = vmatpush1.bf16.msra.mxu0 0
  %2904 = vmatprep.subr.bf16.mxu0 0
  %2905 = vmatpush1.bf16.msra.mxu0 0
  %2906 = vmatprep.subr.bf16.mxu0 0
  %2907 = vmatpush1.bf16.msra.mxu0 0
  %2908 = vmatprep.subr.bf16.mxu0 0
  %2909 = vmatpush1.bf16.msra.mxu0 0
  %2910 = vmatprep.subr.bf16.mxu0 0
  %2911 = vmatpush1.bf16.msra.mxu0 0
  %2912 = vmatprep.mubr.bf16.mxu0 0
  %2913 = vmatmul.mubr.bf16.gmra.mrb[0].mxu0 %v2807
  %v2914 = vpop.f32.mrb[0].mxu0
  %v2915 = vadd.f32 0.0, %v2914
  %v2916 = vpop.f32.mrb[0].mxu0
  %v2917 = vpop.f32.mrb[0].mxu0
  %v2918 = vadd.f32 0.0, %v2917
  %v2919 = vpop.f32.mrb[0].mxu0
  %2920 = vmatprep.mubr.bf16.mxu0 0
  %2921 = vmatmul.mubr.bf16.gmra.mrb[0].mxu0 %v2808
  %v2922 = vpop.f32.mrb[0].mxu0
  %v2923 = vadd.f32 0.0, %v2922
  %v2924 = vpop.f32.mrb[0].mxu0
  %v2925 = vpop.f32.mrb[0].mxu0
  %v2926 = vadd.f32 0.0, %v2925
  %v2927 = vpop.f32.mrb[0].mxu0
  %2928 = vmatprep.mubr.bf16.mxu0 0
  %2929 = vmatmul.mubr.bf16.gmra.mrb[0].mxu0 %v2809
  %v2930 = vpop.f32.mrb[0].mxu0
  %v2931 = vadd.f32 0.0, %v2930
  %v2932 = vpop.f32.mrb[0].mxu0
  %v2933 = vpop.f32.mrb[0].mxu0
  %v2934 = vadd.f32 0.0, %v2933
  %v2935 = vpop.f32.mrb[0].mxu0
  %2936 = vmatprep.mubr.bf16.mxu0 0
  %2937 = vmatmul.mubr.bf16.gmra.mrb[0].mxu0 %v2810
  %v2938 = vpop.f32.mrb[0].mxu0
  %v2939 = vadd.f32 0.0, %v2938
  %v2940 = vpop.f32.mrb[0].mxu0
  %v2941 = vpop.f32.mrb[0].mxu0
  %v2942 = vadd.f32 0.0, %v2941
  %v2943 = vpop.f32.mrb[0].mxu0
  %2944 = vmatprep.mubr.bf16.mxu0 0
  %2945 = vmatmul.mubr.bf16.gmra.mrb[0].mxu0 %v2811
  %v2946 = vpop.f32.mrb[0].mxu0
  %v2947 = vadd.f32 0.0, %v2946
  %v2948 = vpop.f32.mrb[0].mxu0
  %v2949 = vpop.f32.mrb[0].mxu0
  %v2950 = vadd.f32 0.0, %v2949
  %v2951 = vpop.f32.mrb[0].mxu0
  %2952 = vmatprep.mubr.bf16.mxu0 0
  %2953 = vmatmul.mubr.bf16.gmra.mrb[0].mxu0 %v2812
  %v2954 = vpop.f32.mrb[0].mxu0
  %v2955 = vadd.f32 0.0, %v2954
  %v2956 = vpop.f32.mrb[0].mxu0
  %v2957 = vpop.f32.mrb[0].mxu0
  %v2958 = vadd.f32 0.0, %v2957
  %v2959 = vpop.f32.mrb[0].mxu0
  %2960 = vmatprep.mubr.bf16.mxu0 0
  %2961 = vmatmul.mubr.bf16.gmra.mrb[0].mxu0 %v2813
  %v2962 = vpop.f32.mrb[0].mxu0
  %v2963 = vadd.f32 0.0, %v2962
  %v2964 = vpop.f32.mrb[0].mxu0
  %v2965 = vpop.f32.mrb[0].mxu0
  %v2966 = vadd.f32 0.0, %v2965
  %v2967 = vpop.f32.mrb[0].mxu0
  %2968 = vmatprep.mubr.bf16.mxu0 0
  %2969 = vmatmul.mubr.bf16.gmra.mrb[0].mxu0 %v2814
  %v2970 = vpop.f32.mrb[0].mxu0
  %v2971 = vadd.f32 0.0, %v2970
  %v2972 = vpop.f32.mrb[0].mxu0
  %v2973 = vpop.f32.mrb[0].mxu0
  %v2974 = vadd.f32 0.0, %v2973
  %v2975 = vpop.f32.mrb[0].mxu0
  %2976 = vdwg.mxu0
  %v2977 = vadd.f32 %v2404, %v2915
  %v2978 = vadd.f32 %v2405, %v2918
  %v2979 = vadd.f32 %v2406, %v2923
  %v2980 = vadd.f32 %v2407, %v2926
  %v2981 = vadd.f32 %v2408, %v2931
  %v2982 = vadd.f32 %v2409, %v2934
  %v2983 = vadd.f32 %v2410, %v2939
  %v2984 = vadd.f32 %v2411, %v2942
  %v2985 = vadd.f32 %v2412, %v2947
  %v2986 = vadd.f32 %v2413, %v2950
  %v2987 = vadd.f32 %v2414, %v2955
  %v2988 = vadd.f32 %v2415, %v2958
  %v2989 = vadd.f32 %v2416, %v2963
  %v2990 = vadd.f32 %v2417, %v2966
  %v2991 = vadd.f32 %v2418, %v2971
  %v2992 = vadd.f32 %v2419, %v2974
  %s2993 = scalar_lea.vmem %s2, 1024
  %v2994 = vld [vmem:[%s2993] sm:$0xff]
  %v2995 = vld [vmem:[%s2993 + $0x8] sm:$0xff]
  %v2996 = vld [vmem:[%s2993 + $0x10] sm:$0xff]
  %v2997 = vld [vmem:[%s2993 + $0x18] sm:$0xff]
  %v2998 = vld [vmem:[%s2993 + $0x20] sm:$0xff]
  %v2999 = vld [vmem:[%s2993 + $0x28] sm:$0xff]
  %v3000 = vld [vmem:[%s2993 + $0x30] sm:$0xff]
  %v3001 = vld [vmem:[%s2993 + $0x38] sm:$0xff]
  %v3002 = vld [vmem:[%s2993 + $0x40] sm:$0xff]
  %v3003 = vld [vmem:[%s2993 + $0x48] sm:$0xff]
  %v3004 = vld [vmem:[%s2993 + $0x50] sm:$0xff]
  %v3005 = vld [vmem:[%s2993 + $0x58] sm:$0xff]
  %v3006 = vld [vmem:[%s2993 + $0x60] sm:$0xff]
  %v3007 = vld [vmem:[%s2993 + $0x68] sm:$0xff]
  %v3008 = vld [vmem:[%s2993 + $0x70] sm:$0xff]
  %v3009 = vld [vmem:[%s2993 + $0x78] sm:$0xff]
  %v3010 = vld [vmem:[%s2993 + $0x80] sm:$0xff]
  %v3011 = vld [vmem:[%s2993 + $0x88] sm:$0xff]
  %v3012 = vld [vmem:[%s2993 + $0x90] sm:$0xff]
  %v3013 = vld [vmem:[%s2993 + $0x98] sm:$0xff]
  %v3014 = vld [vmem:[%s2993 + $0xa0] sm:$0xff]
  %v3015 = vld [vmem:[%s2993 + $0xa8] sm:$0xff]
  %v3016 = vld [vmem:[%s2993 + $0xb0] sm:$0xff]
  %v3017 = vld [vmem:[%s2993 + $0xb8] sm:$0xff]
  %v3018 = vld [vmem:[%s2993 + $0xc0] sm:$0xff]
  %v3019 = vld [vmem:[%s2993 + $0xc8] sm:$0xff]
  %v3020 = vld [vmem:[%s2993 + $0xd0] sm:$0xff]
  %v3021 = vld [vmem:[%s2993 + $0xd8] sm:$0xff]
  %v3022 = vld [vmem:[%s2993 + $0xe0] sm:$0xff]
  %v3023 = vld [vmem:[%s2993 + $0xe8] sm:$0xff]
  %v3024 = vld [vmem:[%s2993 + $0xf0] sm:$0xff]
  %v3025 = vld [vmem:[%s2993 + $0xf8] sm:$0xff]
  %v3058 = vunpack.c.l.b16 %v2994
  %v3059 = vunpack.c.h.b16 %v2994
  %v3060 = vunpack.c.l.b16 %v2995
  %v3061 = vunpack.c.h.b16 %v2995
  %v3062 = vunpack.c.l.b16 %v2996
  %v3063 = vunpack.c.h.b16 %v2996
  %v3064 = vunpack.c.l.b16 %v2997
  %v3065 = vunpack.c.h.b16 %v2997
  %v3066 = vunpack.c.l.b16 %v2998
  %v3067 = vunpack.c.h.b16 %v2998
  %v3068 = vunpack.c.l.b16 %v2999
  %v3069 = vunpack.c.h.b16 %v2999
  %v3070 = vunpack.c.l.b16 %v3000
  %v3071 = vunpack.c.h.b16 %v3000
  %v3072 = vunpack.c.l.b16 %v3001
  %v3073 = vunpack.c.h.b16 %v3001
  %v3074 = vunpack.c.l.b16 %v3002
  %v3075 = vunpack.c.h.b16 %v3002
  %v3076 = vunpack.c.l.b16 %v3003
  %v3077 = vunpack.c.h.b16 %v3003
  %v3078 = vunpack.c.l.b16 %v3004
  %v3079 = vunpack.c.h.b16 %v3004
  %v3080 = vunpack.c.l.b16 %v3005
  %v3081 = vunpack.c.h.b16 %v3005
  %v3082 = vunpack.c.l.b16 %v3006
  %v3083 = vunpack.c.h.b16 %v3006
  %v3084 = vunpack.c.l.b16 %v3007
  %v3085 = vunpack.c.h.b16 %v3007
  %v3086 = vunpack.c.l.b16 %v3008
  %v3087 = vunpack.c.h.b16 %v3008
  %v3088 = vunpack.c.l.b16 %v3009
  %v3089 = vunpack.c.h.b16 %v3009
  %v3090 = vunpack.c.l.b16 %v3010
  %v3091 = vunpack.c.h.b16 %v3010
  %v3092 = vunpack.c.l.b16 %v3011
  %v3093 = vunpack.c.h.b16 %v3011
  %v3094 = vunpack.c.l.b16 %v3012
  %v3095 = vunpack.c.h.b16 %v3012
  %v3096 = vunpack.c.l.b16 %v3013
  %v3097 = vunpack.c.h.b16 %v3013
  %v3098 = vunpack.c.l.b16 %v3014
  %v3099 = vunpack.c.h.b16 %v3014
  %v3100 = vunpack.c.l.b16 %v3015
  %v3101 = vunpack.c.h.b16 %v3015
  %v3102 = vunpack.c.l.b16 %v3016
  %v3103 = vunpack.c.h.b16 %v3016
  %v3104 = vunpack.c.l.b16 %v3017
  %v3105 = vunpack.c.h.b16 %v3017
  %v3106 = vunpack.c.l.b16 %v3018
  %v3107 = vunpack.c.h.b16 %v3018
  %v3108 = vunpack.c.l.b16 %v3019
  %v3109 = vunpack.c.h.b16 %v3019
  %v3110 = vunpack.c.l.b16 %v3020
  %v3111 = vunpack.c.h.b16 %v3020
  %v3112 = vunpack.c.l.b16 %v3021
  %v3113 = vunpack.c.h.b16 %v3021
  %v3114 = vunpack.c.l.b16 %v3022
  %v3115 = vunpack.c.h.b16 %v3022
  %v3116 = vunpack.c.l.b16 %v3023
  %v3117 = vunpack.c.h.b16 %v3023
  %v3118 = vunpack.c.l.b16 %v3024
  %v3119 = vunpack.c.h.b16 %v3024
  %v3120 = vunpack.c.l.b16 %v3025
  %v3121 = vunpack.c.h.b16 %v3025
  %v3122 = vpack.c.b16 %v3062, %v3058
  %v3123 = vpack.c.b16 %v3063, %v3059
  %v3124 = vpack.c.b16 %v3064, %v3060
  %v3125 = vpack.c.b16 %v3065, %v3061
  %v3126 = vpack.c.b16 %v3070, %v3066
  %v3127 = vpack.c.b16 %v3071, %v3067
  %v3128 = vpack.c.b16 %v3072, %v3068
  %v3129 = vpack.c.b16 %v3073, %v3069
  %v3130 = vpack.c.b16 %v3078, %v3074
  %v3131 = vpack.c.b16 %v3079, %v3075
  %v3132 = vpack.c.b16 %v3080, %v3076
  %v3133 = vpack.c.b16 %v3081, %v3077
  %v3134 = vpack.c.b16 %v3086, %v3082
  %v3135 = vpack.c.b16 %v3087, %v3083
  %v3136 = vpack.c.b16 %v3088, %v3084
  %v3137 = vpack.c.b16 %v3089, %v3085
  %v3138 = vpack.c.b16 %v3094, %v3090
  %v3139 = vpack.c.b16 %v3095, %v3091
  %v3140 = vpack.c.b16 %v3096, %v3092
  %v3141 = vpack.c.b16 %v3097, %v3093
  %v3142 = vpack.c.b16 %v3102, %v3098
  %v3143 = vpack.c.b16 %v3103, %v3099
  %v3144 = vpack.c.b16 %v3104, %v3100
  %v3145 = vpack.c.b16 %v3105, %v3101
  %v3146 = vpack.c.b16 %v3110, %v3106
  %v3147 = vpack.c.b16 %v3111, %v3107
  %v3148 = vpack.c.b16 %v3112, %v3108
  %v3149 = vpack.c.b16 %v3113, %v3109
  %v3150 = vpack.c.b16 %v3118, %v3114
  %v3151 = vpack.c.b16 %v3119, %v3115
  %v3152 = vpack.c.b16 %v3120, %v3116
  %v3153 = vpack.c.b16 %v3121, %v3117
  %3186 = vmatprep.subr.bf16.mxu0 0
  %3187 = vmatpush1.bf16.msra.mxu0 %v703
  %3188 = vmatprep.subr.bf16.mxu0 0
  %3189 = vmatpush1.bf16.msra.mxu0 %v704
  %3190 = vmatprep.subr.bf16.mxu0 0
  %3191 = vmatpush1.bf16.msra.mxu0 %v705
  %3192 = vmatprep.subr.bf16.mxu0 0
  %3193 = vmatpush1.bf16.msra.mxu0 %v706
  %3194 = vmatprep.subr.bf16.mxu0 0
  %3195 = vmatpush1.bf16.msra.mxu0 %v707
  %3196 = vmatprep.subr.bf16.mxu0 0
  %3197 = vmatpush1.bf16.msra.mxu0 %v708
  %3198 = vmatprep.subr.bf16.mxu0 0
  %3199 = vmatpush1.bf16.msra.mxu0 %v709
  %3200 = vmatprep.subr.bf16.mxu0 0
  %3201 = vmatpush1.bf16.msra.mxu0 %v710
  %3202 = vmatprep.subr.bf16.mxu0 0
  %3203 = vmatpush1.bf16.msra.mxu0 %v711
  %3204 = vmatprep.subr.bf16.mxu0 0
  %3205 = vmatpush1.bf16.msra.mxu0 %v712
  %3206 = vmatprep.subr.bf16.mxu0 0
  %3207 = vmatpush1.bf16.msra.mxu0 %v713
  %3208 = vmatprep.subr.bf16.mxu0 0
  %3209 = vmatpush1.bf16.msra.mxu0 %v714
  %3210 = vmatprep.subr.bf16.mxu0 0
  %3211 = vmatpush1.bf16.msra.mxu0 %v715
  %3212 = vmatprep.subr.bf16.mxu0 0
  %3213 = vmatpush1.bf16.msra.mxu0 %v716
  %3214 = vmatprep.subr.bf16.mxu0 0
  %3215 = vmatpush1.bf16.msra.mxu0 %v717
  %3216 = vmatprep.subr.bf16.mxu0 0
  %3217 = vmatpush1.bf16.msra.mxu0 %v718
  %3218 = vmatprep.mubr.bf16.mxu0 %v3123
  %3219 = vmatmul.mubr.bf16.gmra.mrb[0].mxu0 %v3122
  %v3220 = vpop.f32.mrb[0].mxu0
  %v3221 = vadd.f32 0.0, %v3220
  %v3222 = vpop.f32.mrb[0].mxu0
  %v3223 = vpop.f32.mrb[0].mxu0
  %v3224 = vadd.f32 0.0, %v3223
  %v3225 = vpop.f32.mrb[0].mxu0
  %3226 = vmatprep.mubr.bf16.mxu0 %v3127
  %3227 = vmatmul.mubr.bf16.gmra.mrb[0].mxu0 %v3126
  %v3228 = vpop.f32.mrb[0].mxu0
  %v3229 = vadd.f32 0.0, %v3228
  %v3230 = vpop.f32.mrb[0].mxu0
  %v3231 = vpop.f32.mrb[0].mxu0
  %v3232 = vadd.f32 0.0, %v3231
  %v3233 = vpop.f32.mrb[0].mxu0
  %3234 = vmatprep.mubr.bf16.mxu0 %v3131
  %3235 = vmatmul.mubr.bf16.gmra.mrb[0].mxu0 %v3130
  %v3236 = vpop.f32.mrb[0].mxu0
  %v3237 = vadd.f32 0.0, %v3236
  %v3238 = vpop.f32.mrb[0].mxu0
  %v3239 = vpop.f32.mrb[0].mxu0
  %v3240 = vadd.f32 0.0, %v3239
  %v3241 = vpop.f32.mrb[0].mxu0
  %3242 = vmatprep.mubr.bf16.mxu0 %v3135
  %3243 = vmatmul.mubr.bf16.gmra.mrb[0].mxu0 %v3134
  %v3244 = vpop.f32.mrb[0].mxu0
  %v3245 = vadd.f32 0.0, %v3244
  %v3246 = vpop.f32.mrb[0].mxu0
  %v3247 = vpop.f32.mrb[0].mxu0
  %v3248 = vadd.f32 0.0, %v3247
  %v3249 = vpop.f32.mrb[0].mxu0
  %3250 = vmatprep.mubr.bf16.mxu0 %v3139
  %3251 = vmatmul.mubr.bf16.gmra.mrb[0].mxu0 %v3138
  %v3252 = vpop.f32.mrb[0].mxu0
  %v3253 = vadd.f32 0.0, %v3252
  %v3254 = vpop.f32.mrb[0].mxu0
  %v3255 = vpop.f32.mrb[0].mxu0
  %v3256 = vadd.f32 0.0, %v3255
  %v3257 = vpop.f32.mrb[0].mxu0
  %3258 = vmatprep.mubr.bf16.mxu0 %v3143
  %3259 = vmatmul.mubr.bf16.gmra.mrb[0].mxu0 %v3142
  %v3260 = vpop.f32.mrb[0].mxu0
  %v3261 = vadd.f32 0.0, %v3260
  %v3262 = vpop.f32.mrb[0].mxu0
  %v3263 = vpop.f32.mrb[0].mxu0
  %v3264 = vadd.f32 0.0, %v3263
  %v3265 = vpop.f32.mrb[0].mxu0
  %3266 = vmatprep.mubr.bf16.mxu0 %v3147
  %3267 = vmatmul.mubr.bf16.gmra.mrb[0].mxu0 %v3146
  %v3268 = vpop.f32.mrb[0].mxu0
  %v3269 = vadd.f32 0.0, %v3268
  %v3270 = vpop.f32.mrb[0].mxu0
  %v3271 = vpop.f32.mrb[0].mxu0
  %v3272 = vadd.f32 0.0, %v3271
  %v3273 = vpop.f32.mrb[0].mxu0
  %3274 = vmatprep.mubr.bf16.mxu0 %v3151
  %3275 = vmatmul.mubr.bf16.gmra.mrb[0].mxu0 %v3150
  %v3276 = vpop.f32.mrb[0].mxu0
  %v3277 = vadd.f32 0.0, %v3276
  %v3278 = vpop.f32.mrb[0].mxu0
  %v3279 = vpop.f32.mrb[0].mxu0
  %v3280 = vadd.f32 0.0, %v3279
  %v3281 = vpop.f32.mrb[0].mxu0
  %3282 = vdwg.mxu0
  %3283 = vmatprep.subr.bf16.mxu0 0
  %3284 = vmatpush1.bf16.msra.mxu0 %v719
  %3285 = vmatprep.subr.bf16.mxu0 0
  %3286 = vmatpush1.bf16.msra.mxu0 %v720
  %3287 = vmatprep.subr.bf16.mxu0 0
  %3288 = vmatpush1.bf16.msra.mxu0 %v721
  %3289 = vmatprep.subr.bf16.mxu0 0
  %3290 = vmatpush1.bf16.msra.mxu0 %v722
  %3291 = vmatprep.subr.bf16.mxu0 0
  %3292 = vmatpush1.bf16.msra.mxu0 %v723
  %3293 = vmatprep.subr.bf16.mxu0 0
  %3294 = vmatpush1.bf16.msra.mxu0 %v724
  %3295 = vmatprep.subr.bf16.mxu0 0
  %3296 = vmatpush1.bf16.msra.mxu0 %v725
  %3297 = vmatprep.subr.bf16.mxu0 0
  %3298 = vmatpush1.bf16.msra.mxu0 %v726
  %3299 = vmatprep.subr.bf16.mxu0 0
  %3300 = vmatpush1.bf16.msra.mxu0 %v727
  %3301 = vmatprep.subr.bf16.mxu0 0
  %3302 = vmatpush1.bf16.msra.mxu0 %v728
  %3303 = vmatprep.subr.bf16.mxu0 0
  %3304 = vmatpush1.bf16.msra.mxu0 %v729
  %3305 = vmatprep.subr.bf16.mxu0 0
  %3306 = vmatpush1.bf16.msra.mxu0 %v730
  %3307 = vmatprep.subr.bf16.mxu0 0
  %3308 = vmatpush1.bf16.msra.mxu0 %v731
  %3309 = vmatprep.subr.bf16.mxu0 0
  %3310 = vmatpush1.bf16.msra.mxu0 %v732
  %3311 = vmatprep.subr.bf16.mxu0 0
  %3312 = vmatpush1.bf16.msra.mxu0 %v733
  %3313 = vmatprep.subr.bf16.mxu0 0
  %3314 = vmatpush1.bf16.msra.mxu0 %v734
  %3315 = vmatprep.mubr.bf16.mxu0 %v3125
  %3316 = vmatmul.mubr.bf16.gmra.mrb[0].mxu0 %v3124
  %v3317 = vpop.f32.mrb[0].mxu0
  %v3318 = vadd.f32 %v3221, %v3317
  %v3319 = vpop.f32.mrb[0].mxu0
  %v3320 = vpop.f32.mrb[0].mxu0
  %v3321 = vadd.f32 %v3224, %v3320
  %v3322 = vpop.f32.mrb[0].mxu0
  %3323 = vmatprep.mubr.bf16.mxu0 %v3129
  %3324 = vmatmul.mubr.bf16.gmra.mrb[0].mxu0 %v3128
  %v3325 = vpop.f32.mrb[0].mxu0
  %v3326 = vadd.f32 %v3229, %v3325
  %v3327 = vpop.f32.mrb[0].mxu0
  %v3328 = vpop.f32.mrb[0].mxu0
  %v3329 = vadd.f32 %v3232, %v3328
  %v3330 = vpop.f32.mrb[0].mxu0
  %3331 = vmatprep.mubr.bf16.mxu0 %v3133
  %3332 = vmatmul.mubr.bf16.gmra.mrb[0].mxu0 %v3132
  %v3333 = vpop.f32.mrb[0].mxu0
  %v3334 = vadd.f32 %v3237, %v3333
  %v3335 = vpop.f32.mrb[0].mxu0
  %v3336 = vpop.f32.mrb[0].mxu0
  %v3337 = vadd.f32 %v3240, %v3336
  %v3338 = vpop.f32.mrb[0].mxu0
  %3339 = vmatprep.mubr.bf16.mxu0 %v3137
  %3340 = vmatmul.mubr.bf16.gmra.mrb[0].mxu0 %v3136
  %v3341 = vpop.f32.mrb[0].mxu0
  %v3342 = vadd.f32 %v3245, %v3341
  %v3343 = vpop.f32.mrb[0].mxu0
  %v3344 = vpop.f32.mrb[0].mxu0
  %v3345 = vadd.f32 %v3248, %v3344
  %v3346 = vpop.f32.mrb[0].mxu0
  %3347 = vmatprep.mubr.bf16.mxu0 %v3141
  %3348 = vmatmul.mubr.bf16.gmra.mrb[0].mxu0 %v3140
  %v3349 = vpop.f32.mrb[0].mxu0
  %v3350 = vadd.f32 %v3253, %v3349
  %v3351 = vpop.f32.mrb[0].mxu0
  %v3352 = vpop.f32.mrb[0].mxu0
  %v3353 = vadd.f32 %v3256, %v3352
  %v3354 = vpop.f32.mrb[0].mxu0
  %3355 = vmatprep.mubr.bf16.mxu0 %v3145
  %3356 = vmatmul.mubr.bf16.gmra.mrb[0].mxu0 %v3144
  %v3357 = vpop.f32.mrb[0].mxu0
  %v3358 = vadd.f32 %v3261, %v3357
  %v3359 = vpop.f32.mrb[0].mxu0
  %v3360 = vpop.f32.mrb[0].mxu0
  %v3361 = vadd.f32 %v3264, %v3360
  %v3362 = vpop.f32.mrb[0].mxu0
  %3363 = vmatprep.mubr.bf16.mxu0 %v3149
  %3364 = vmatmul.mubr.bf16.gmra.mrb[0].mxu0 %v3148
  %v3365 = vpop.f32.mrb[0].mxu0
  %v3366 = vadd.f32 %v3269, %v3365
  %v3367 = vpop.f32.mrb[0].mxu0
  %v3368 = vpop.f32.mrb[0].mxu0
  %v3369 = vadd.f32 %v3272, %v3368
  %v3370 = vpop.f32.mrb[0].mxu0
  %3371 = vmatprep.mubr.bf16.mxu0 %v3153
  %3372 = vmatmul.mubr.bf16.gmra.mrb[0].mxu0 %v3152
  %v3373 = vpop.f32.mrb[0].mxu0
  %v3374 = vadd.f32 %v3277, %v3373
  %v3375 = vpop.f32.mrb[0].mxu0
  %v3376 = vpop.f32.mrb[0].mxu0
  %v3377 = vadd.f32 %v3280, %v3376
  %v3378 = vpop.f32.mrb[0].mxu0
  %3379 = vdwg.mxu0
  %v3380 = vpack.c.bf16 %v3321, %v3318
  %v3381 = vpack.c.bf16 %v3329, %v3326
  %v3382 = vpack.c.bf16 %v3337, %v3334
  %v3383 = vpack.c.bf16 %v3345, %v3342
  %v3384 = vpack.c.bf16 %v3353, %v3350
  %v3385 = vpack.c.bf16 %v3361, %v3358
  %v3386 = vpack.c.bf16 %v3369, %v3366
  %v3387 = vpack.c.bf16 %v3377, %v3374
  %s3388 = scalar_lea.vmem %s3, 256
  %v3389 = vld [vmem:[%s3388] sm:$0xf]
  %v3390 = vld [vmem:[%s3388 + $0x4] sm:$0xf]
  %v3391 = vld [vmem:[%s3388 + $0x8] sm:$0xf]
  %v3392 = vld [vmem:[%s3388 + $0xc] sm:$0xf]
  %v3393 = vld [vmem:[%s3388 + $0x10] sm:$0xf]
  %v3394 = vld [vmem:[%s3388 + $0x14] sm:$0xf]
  %v3395 = vld [vmem:[%s3388 + $0x18] sm:$0xf]
  %v3396 = vld [vmem:[%s3388 + $0x1c] sm:$0xf]
  %v3397 = vld [vmem:[%s3388 + $0x20] sm:$0xf]
  %v3398 = vld [vmem:[%s3388 + $0x24] sm:$0xf]
  %v3399 = vld [vmem:[%s3388 + $0x28] sm:$0xf]
  %v3400 = vld [vmem:[%s3388 + $0x2c] sm:$0xf]
  %v3401 = vld [vmem:[%s3388 + $0x30] sm:$0xf]
  %v3402 = vld [vmem:[%s3388 + $0x34] sm:$0xf]
  %v3403 = vld [vmem:[%s3388 + $0x38] sm:$0xf]
  %v3404 = vld [vmem:[%s3388 + $0x3c] sm:$0xf]
  %v3421 = vunpack.c.l.b16 %v3389
  %v3422 = vunpack.c.l.b16 %v3390
  %v3423 = vunpack.c.l.b16 %v3391
  %v3424 = vunpack.c.l.b16 %v3392
  %v3425 = vunpack.c.l.b16 %v3393
  %v3426 = vunpack.c.l.b16 %v3394
  %v3427 = vunpack.c.l.b16 %v3395
  %v3428 = vunpack.c.l.b16 %v3396
  %v3429 = vunpack.c.l.b16 %v3397
  %v3430 = vunpack.c.l.b16 %v3398
  %v3431 = vunpack.c.l.b16 %v3399
  %v3432 = vunpack.c.l.b16 %v3400
  %v3433 = vunpack.c.l.b16 %v3401
  %v3434 = vunpack.c.l.b16 %v3402
  %v3435 = vunpack.c.l.b16 %v3403
  %v3436 = vunpack.c.l.b16 %v3404
  %v3437 = vpack.c.b16 %v3422, %v3421
  %v3438 = vpack.c.b16 %v3424, %v3423
  %v3439 = vpack.c.b16 %v3426, %v3425
  %v3440 = vpack.c.b16 %v3428, %v3427
  %v3441 = vpack.c.b16 %v3430, %v3429
  %v3442 = vpack.c.b16 %v3432, %v3431
  %v3443 = vpack.c.b16 %v3434, %v3433
  %v3444 = vpack.c.b16 %v3436, %v3435
  %3453 = vmatprep.subr.bf16.mxu0 0
  %3454 = vmatpush1.bf16.msra.mxu0 %v3437
  %3455 = vmatprep.subr.bf16.mxu0 0
  %3456 = vmatpush1.bf16.msra.mxu0 %v3438
  %3457 = vmatprep.subr.bf16.mxu0 0
  %3458 = vmatpush1.bf16.msra.mxu0 %v3439
  %3459 = vmatprep.subr.bf16.mxu0 0
  %3460 = vmatpush1.bf16.msra.mxu0 %v3440
  %3461 = vmatprep.subr.bf16.mxu0 0
  %3462 = vmatpush1.bf16.msra.mxu0 %v3441
  %3463 = vmatprep.subr.bf16.mxu0 0
  %3464 = vmatpush1.bf16.msra.mxu0 %v3442
  %3465 = vmatprep.subr.bf16.mxu0 0
  %3466 = vmatpush1.bf16.msra.mxu0 %v3443
  %3467 = vmatprep.subr.bf16.mxu0 0
  %3468 = vmatpush1.bf16.msra.mxu0 %v3444
  %3469 = vmatprep.subr.bf16.mxu0 0
  %3470 = vmatpush1.bf16.msra.mxu0 0
  %3471 = vmatprep.subr.bf16.mxu0 0
  %3472 = vmatpush1.bf16.msra.mxu0 0
  %3473 = vmatprep.subr.bf16.mxu0 0
  %3474 = vmatpush1.bf16.msra.mxu0 0
  %3475 = vmatprep.subr.bf16.mxu0 0
  %3476 = vmatpush1.bf16.msra.mxu0 0
  %3477 = vmatprep.subr.bf16.mxu0 0
  %3478 = vmatpush1.bf16.msra.mxu0 0
  %3479 = vmatprep.subr.bf16.mxu0 0
  %3480 = vmatpush1.bf16.msra.mxu0 0
  %3481 = vmatprep.subr.bf16.mxu0 0
  %3482 = vmatpush1.bf16.msra.mxu0 0
  %3483 = vmatprep.subr.bf16.mxu0 0
  %3484 = vmatpush1.bf16.msra.mxu0 0
  %3485 = vmatprep.mubr.bf16.mxu0 0
  %3486 = vmatmul.mubr.bf16.gmra.mrb[0].mxu0 %v3380
  %v3487 = vpop.f32.mrb[0].mxu0
  %v3488 = vadd.f32 0.0, %v3487
  %v3489 = vpop.f32.mrb[0].mxu0
  %v3490 = vpop.f32.mrb[0].mxu0
  %v3491 = vadd.f32 0.0, %v3490
  %v3492 = vpop.f32.mrb[0].mxu0
  %3493 = vmatprep.mubr.bf16.mxu0 0
  %3494 = vmatmul.mubr.bf16.gmra.mrb[0].mxu0 %v3381
  %v3495 = vpop.f32.mrb[0].mxu0
  %v3496 = vadd.f32 0.0, %v3495
  %v3497 = vpop.f32.mrb[0].mxu0
  %v3498 = vpop.f32.mrb[0].mxu0
  %v3499 = vadd.f32 0.0, %v3498
  %v3500 = vpop.f32.mrb[0].mxu0
  %3501 = vmatprep.mubr.bf16.mxu0 0
  %3502 = vmatmul.mubr.bf16.gmra.mrb[0].mxu0 %v3382
  %v3503 = vpop.f32.mrb[0].mxu0
  %v3504 = vadd.f32 0.0, %v3503
  %v3505 = vpop.f32.mrb[0].mxu0
  %v3506 = vpop.f32.mrb[0].mxu0
  %v3507 = vadd.f32 0.0, %v3506
  %v3508 = vpop.f32.mrb[0].mxu0
  %3509 = vmatprep.mubr.bf16.mxu0 0
  %3510 = vmatmul.mubr.bf16.gmra.mrb[0].mxu0 %v3383
  %v3511 = vpop.f32.mrb[0].mxu0
  %v3512 = vadd.f32 0.0, %v3511
  %v3513 = vpop.f32.mrb[0].mxu0
  %v3514 = vpop.f32.mrb[0].mxu0
  %v3515 = vadd.f32 0.0, %v3514
  %v3516 = vpop.f32.mrb[0].mxu0
  %3517 = vmatprep.mubr.bf16.mxu0 0
  %3518 = vmatmul.mubr.bf16.gmra.mrb[0].mxu0 %v3384
  %v3519 = vpop.f32.mrb[0].mxu0
  %v3520 = vadd.f32 0.0, %v3519
  %v3521 = vpop.f32.mrb[0].mxu0
  %v3522 = vpop.f32.mrb[0].mxu0
  %v3523 = vadd.f32 0.0, %v3522
  %v3524 = vpop.f32.mrb[0].mxu0
  %3525 = vmatprep.mubr.bf16.mxu0 0
  %3526 = vmatmul.mubr.bf16.gmra.mrb[0].mxu0 %v3385
  %v3527 = vpop.f32.mrb[0].mxu0
  %v3528 = vadd.f32 0.0, %v3527
  %v3529 = vpop.f32.mrb[0].mxu0
  %v3530 = vpop.f32.mrb[0].mxu0
  %v3531 = vadd.f32 0.0, %v3530
  %v3532 = vpop.f32.mrb[0].mxu0
  %3533 = vmatprep.mubr.bf16.mxu0 0
  %3534 = vmatmul.mubr.bf16.gmra.mrb[0].mxu0 %v3386
  %v3535 = vpop.f32.mrb[0].mxu0
  %v3536 = vadd.f32 0.0, %v3535
  %v3537 = vpop.f32.mrb[0].mxu0
  %v3538 = vpop.f32.mrb[0].mxu0
  %v3539 = vadd.f32 0.0, %v3538
  %v3540 = vpop.f32.mrb[0].mxu0
  %3541 = vmatprep.mubr.bf16.mxu0 0
  %3542 = vmatmul.mubr.bf16.gmra.mrb[0].mxu0 %v3387
  %v3543 = vpop.f32.mrb[0].mxu0
  %v3544 = vadd.f32 0.0, %v3543
  %v3545 = vpop.f32.mrb[0].mxu0
  %v3546 = vpop.f32.mrb[0].mxu0
  %v3547 = vadd.f32 0.0, %v3546
  %v3548 = vpop.f32.mrb[0].mxu0
  %3549 = vdwg.mxu0
  %v3550 = vadd.f32 %v2977, %v3488
  %v3551 = vadd.f32 %v2978, %v3491
  %v3552 = vadd.f32 %v2979, %v3496
  %v3553 = vadd.f32 %v2980, %v3499
  %v3554 = vadd.f32 %v2981, %v3504
  %v3555 = vadd.f32 %v2982, %v3507
  %v3556 = vadd.f32 %v2983, %v3512
  %v3557 = vadd.f32 %v2984, %v3515
  %v3558 = vadd.f32 %v2985, %v3520
  %v3559 = vadd.f32 %v2986, %v3523
  %v3560 = vadd.f32 %v2987, %v3528
  %v3561 = vadd.f32 %v2988, %v3531
  %v3562 = vadd.f32 %v2989, %v3536
  %v3563 = vadd.f32 %v2990, %v3539
  %v3564 = vadd.f32 %v2991, %v3544
  %v3565 = vadd.f32 %v2992, %v3547
  %s3566 = scalar_lea.vmem %s2, 1280
  %v3567 = vld [vmem:[%s3566] sm:$0xff]
  %v3568 = vld [vmem:[%s3566 + $0x8] sm:$0xff]
  %v3569 = vld [vmem:[%s3566 + $0x10] sm:$0xff]
  %v3570 = vld [vmem:[%s3566 + $0x18] sm:$0xff]
  %v3571 = vld [vmem:[%s3566 + $0x20] sm:$0xff]
  %v3572 = vld [vmem:[%s3566 + $0x28] sm:$0xff]
  %v3573 = vld [vmem:[%s3566 + $0x30] sm:$0xff]
  %v3574 = vld [vmem:[%s3566 + $0x38] sm:$0xff]
  %v3575 = vld [vmem:[%s3566 + $0x40] sm:$0xff]
  %v3576 = vld [vmem:[%s3566 + $0x48] sm:$0xff]
  %v3577 = vld [vmem:[%s3566 + $0x50] sm:$0xff]
  %v3578 = vld [vmem:[%s3566 + $0x58] sm:$0xff]
  %v3579 = vld [vmem:[%s3566 + $0x60] sm:$0xff]
  %v3580 = vld [vmem:[%s3566 + $0x68] sm:$0xff]
  %v3581 = vld [vmem:[%s3566 + $0x70] sm:$0xff]
  %v3582 = vld [vmem:[%s3566 + $0x78] sm:$0xff]
  %v3583 = vld [vmem:[%s3566 + $0x80] sm:$0xff]
  %v3584 = vld [vmem:[%s3566 + $0x88] sm:$0xff]
  %v3585 = vld [vmem:[%s3566 + $0x90] sm:$0xff]
  %v3586 = vld [vmem:[%s3566 + $0x98] sm:$0xff]
  %v3587 = vld [vmem:[%s3566 + $0xa0] sm:$0xff]
  %v3588 = vld [vmem:[%s3566 + $0xa8] sm:$0xff]
  %v3589 = vld [vmem:[%s3566 + $0xb0] sm:$0xff]
  %v3590 = vld [vmem:[%s3566 + $0xb8] sm:$0xff]
  %v3591 = vld [vmem:[%s3566 + $0xc0] sm:$0xff]
  %v3592 = vld [vmem:[%s3566 + $0xc8] sm:$0xff]
  %v3593 = vld [vmem:[%s3566 + $0xd0] sm:$0xff]
  %v3594 = vld [vmem:[%s3566 + $0xd8] sm:$0xff]
  %v3595 = vld [vmem:[%s3566 + $0xe0] sm:$0xff]
  %v3596 = vld [vmem:[%s3566 + $0xe8] sm:$0xff]
  %v3597 = vld [vmem:[%s3566 + $0xf0] sm:$0xff]
  %v3598 = vld [vmem:[%s3566 + $0xf8] sm:$0xff]
  %v3631 = vunpack.c.l.b16 %v3567
  %v3632 = vunpack.c.h.b16 %v3567
  %v3633 = vunpack.c.l.b16 %v3568
  %v3634 = vunpack.c.h.b16 %v3568
  %v3635 = vunpack.c.l.b16 %v3569
  %v3636 = vunpack.c.h.b16 %v3569
  %v3637 = vunpack.c.l.b16 %v3570
  %v3638 = vunpack.c.h.b16 %v3570
  %v3639 = vunpack.c.l.b16 %v3571
  %v3640 = vunpack.c.h.b16 %v3571
  %v3641 = vunpack.c.l.b16 %v3572
  %v3642 = vunpack.c.h.b16 %v3572
  %v3643 = vunpack.c.l.b16 %v3573
  %v3644 = vunpack.c.h.b16 %v3573
  %v3645 = vunpack.c.l.b16 %v3574
  %v3646 = vunpack.c.h.b16 %v3574
  %v3647 = vunpack.c.l.b16 %v3575
  %v3648 = vunpack.c.h.b16 %v3575
  %v3649 = vunpack.c.l.b16 %v3576
  %v3650 = vunpack.c.h.b16 %v3576
  %v3651 = vunpack.c.l.b16 %v3577
  %v3652 = vunpack.c.h.b16 %v3577
  %v3653 = vunpack.c.l.b16 %v3578
  %v3654 = vunpack.c.h.b16 %v3578
  %v3655 = vunpack.c.l.b16 %v3579
  %v3656 = vunpack.c.h.b16 %v3579
  %v3657 = vunpack.c.l.b16 %v3580
  %v3658 = vunpack.c.h.b16 %v3580
  %v3659 = vunpack.c.l.b16 %v3581
  %v3660 = vunpack.c.h.b16 %v3581
  %v3661 = vunpack.c.l.b16 %v3582
  %v3662 = vunpack.c.h.b16 %v3582
  %v3663 = vunpack.c.l.b16 %v3583
  %v3664 = vunpack.c.h.b16 %v3583
  %v3665 = vunpack.c.l.b16 %v3584
  %v3666 = vunpack.c.h.b16 %v3584
  %v3667 = vunpack.c.l.b16 %v3585
  %v3668 = vunpack.c.h.b16 %v3585
  %v3669 = vunpack.c.l.b16 %v3586
  %v3670 = vunpack.c.h.b16 %v3586
  %v3671 = vunpack.c.l.b16 %v3587
  %v3672 = vunpack.c.h.b16 %v3587
  %v3673 = vunpack.c.l.b16 %v3588
  %v3674 = vunpack.c.h.b16 %v3588
  %v3675 = vunpack.c.l.b16 %v3589
  %v3676 = vunpack.c.h.b16 %v3589
  %v3677 = vunpack.c.l.b16 %v3590
  %v3678 = vunpack.c.h.b16 %v3590
  %v3679 = vunpack.c.l.b16 %v3591
  %v3680 = vunpack.c.h.b16 %v3591
  %v3681 = vunpack.c.l.b16 %v3592
  %v3682 = vunpack.c.h.b16 %v3592
  %v3683 = vunpack.c.l.b16 %v3593
  %v3684 = vunpack.c.h.b16 %v3593
  %v3685 = vunpack.c.l.b16 %v3594
  %v3686 = vunpack.c.h.b16 %v3594
  %v3687 = vunpack.c.l.b16 %v3595
  %v3688 = vunpack.c.h.b16 %v3595
  %v3689 = vunpack.c.l.b16 %v3596
  %v3690 = vunpack.c.h.b16 %v3596
  %v3691 = vunpack.c.l.b16 %v3597
  %v3692 = vunpack.c.h.b16 %v3597
  %v3693 = vunpack.c.l.b16 %v3598
  %v3694 = vunpack.c.h.b16 %v3598
  %v3695 = vpack.c.b16 %v3635, %v3631
  %v3696 = vpack.c.b16 %v3636, %v3632
  %v3697 = vpack.c.b16 %v3637, %v3633
  %v3698 = vpack.c.b16 %v3638, %v3634
  %v3699 = vpack.c.b16 %v3643, %v3639
  %v3700 = vpack.c.b16 %v3644, %v3640
  %v3701 = vpack.c.b16 %v3645, %v3641
  %v3702 = vpack.c.b16 %v3646, %v3642
  %v3703 = vpack.c.b16 %v3651, %v3647
  %v3704 = vpack.c.b16 %v3652, %v3648
  %v3705 = vpack.c.b16 %v3653, %v3649
  %v3706 = vpack.c.b16 %v3654, %v3650
  %v3707 = vpack.c.b16 %v3659, %v3655
  %v3708 = vpack.c.b16 %v3660, %v3656
  %v3709 = vpack.c.b16 %v3661, %v3657
  %v3710 = vpack.c.b16 %v3662, %v3658
  %v3711 = vpack.c.b16 %v3667, %v3663
  %v3712 = vpack.c.b16 %v3668, %v3664
  %v3713 = vpack.c.b16 %v3669, %v3665
  %v3714 = vpack.c.b16 %v3670, %v3666
  %v3715 = vpack.c.b16 %v3675, %v3671
  %v3716 = vpack.c.b16 %v3676, %v3672
  %v3717 = vpack.c.b16 %v3677, %v3673
  %v3718 = vpack.c.b16 %v3678, %v3674
  %v3719 = vpack.c.b16 %v3683, %v3679
  %v3720 = vpack.c.b16 %v3684, %v3680
  %v3721 = vpack.c.b16 %v3685, %v3681
  %v3722 = vpack.c.b16 %v3686, %v3682
  %v3723 = vpack.c.b16 %v3691, %v3687
  %v3724 = vpack.c.b16 %v3692, %v3688
  %v3725 = vpack.c.b16 %v3693, %v3689
  %v3726 = vpack.c.b16 %v3694, %v3690
  %3759 = vmatprep.subr.bf16.mxu0 0
  %3760 = vmatpush1.bf16.msra.mxu0 %v703
  %3761 = vmatprep.subr.bf16.mxu0 0
  %3762 = vmatpush1.bf16.msra.mxu0 %v704
  %3763 = vmatprep.subr.bf16.mxu0 0
  %3764 = vmatpush1.bf16.msra.mxu0 %v705
  %3765 = vmatprep.subr.bf16.mxu0 0
  %3766 = vmatpush1.bf16.msra.mxu0 %v706
  %3767 = vmatprep.subr.bf16.mxu0 0
  %3768 = vmatpush1.bf16.msra.mxu0 %v707
  %3769 = vmatprep.subr.bf16.mxu0 0
  %3770 = vmatpush1.bf16.msra.mxu0 %v708
  %3771 = vmatprep.subr.bf16.mxu0 0
  %3772 = vmatpush1.bf16.msra.mxu0 %v709
  %3773 = vmatprep.subr.bf16.mxu0 0
  %3774 = vmatpush1.bf16.msra.mxu0 %v710
  %3775 = vmatprep.subr.bf16.mxu0 0
  %3776 = vmatpush1.bf16.msra.mxu0 %v711
  %3777 = vmatprep.subr.bf16.mxu0 0
  %3778 = vmatpush1.bf16.msra.mxu0 %v712
  %3779 = vmatprep.subr.bf16.mxu0 0
  %3780 = vmatpush1.bf16.msra.mxu0 %v713
  %3781 = vmatprep.subr.bf16.mxu0 0
  %3782 = vmatpush1.bf16.msra.mxu0 %v714
  %3783 = vmatprep.subr.bf16.mxu0 0
  %3784 = vmatpush1.bf16.msra.mxu0 %v715
  %3785 = vmatprep.subr.bf16.mxu0 0
  %3786 = vmatpush1.bf16.msra.mxu0 %v716
  %3787 = vmatprep.subr.bf16.mxu0 0
  %3788 = vmatpush1.bf16.msra.mxu0 %v717
  %3789 = vmatprep.subr.bf16.mxu0 0
  %3790 = vmatpush1.bf16.msra.mxu0 %v718
  %3791 = vmatprep.mubr.bf16.mxu0 %v3696
  %3792 = vmatmul.mubr.bf16.gmra.mrb[0].mxu0 %v3695
  %v3793 = vpop.f32.mrb[0].mxu0
  %v3794 = vadd.f32 0.0, %v3793
  %v3795 = vpop.f32.mrb[0].mxu0
  %v3796 = vpop.f32.mrb[0].mxu0
  %v3797 = vadd.f32 0.0, %v3796
  %v3798 = vpop.f32.mrb[0].mxu0
  %3799 = vmatprep.mubr.bf16.mxu0 %v3700
  %3800 = vmatmul.mubr.bf16.gmra.mrb[0].mxu0 %v3699
  %v3801 = vpop.f32.mrb[0].mxu0
  %v3802 = vadd.f32 0.0, %v3801
  %v3803 = vpop.f32.mrb[0].mxu0
  %v3804 = vpop.f32.mrb[0].mxu0
  %v3805 = vadd.f32 0.0, %v3804
  %v3806 = vpop.f32.mrb[0].mxu0
  %3807 = vmatprep.mubr.bf16.mxu0 %v3704
  %3808 = vmatmul.mubr.bf16.gmra.mrb[0].mxu0 %v3703
  %v3809 = vpop.f32.mrb[0].mxu0
  %v3810 = vadd.f32 0.0, %v3809
  %v3811 = vpop.f32.mrb[0].mxu0
  %v3812 = vpop.f32.mrb[0].mxu0
  %v3813 = vadd.f32 0.0, %v3812
  %v3814 = vpop.f32.mrb[0].mxu0
  %3815 = vmatprep.mubr.bf16.mxu0 %v3708
  %3816 = vmatmul.mubr.bf16.gmra.mrb[0].mxu0 %v3707
  %v3817 = vpop.f32.mrb[0].mxu0
  %v3818 = vadd.f32 0.0, %v3817
  %v3819 = vpop.f32.mrb[0].mxu0
  %v3820 = vpop.f32.mrb[0].mxu0
  %v3821 = vadd.f32 0.0, %v3820
  %v3822 = vpop.f32.mrb[0].mxu0
  %3823 = vmatprep.mubr.bf16.mxu0 %v3712
  %3824 = vmatmul.mubr.bf16.gmra.mrb[0].mxu0 %v3711
  %v3825 = vpop.f32.mrb[0].mxu0
  %v3826 = vadd.f32 0.0, %v3825
  %v3827 = vpop.f32.mrb[0].mxu0
  %v3828 = vpop.f32.mrb[0].mxu0
  %v3829 = vadd.f32 0.0, %v3828
  %v3830 = vpop.f32.mrb[0].mxu0
  %3831 = vmatprep.mubr.bf16.mxu0 %v3716
  %3832 = vmatmul.mubr.bf16.gmra.mrb[0].mxu0 %v3715
  %v3833 = vpop.f32.mrb[0].mxu0
  %v3834 = vadd.f32 0.0, %v3833
  %v3835 = vpop.f32.mrb[0].mxu0
  %v3836 = vpop.f32.mrb[0].mxu0
  %v3837 = vadd.f32 0.0, %v3836
  %v3838 = vpop.f32.mrb[0].mxu0
  %3839 = vmatprep.mubr.bf16.mxu0 %v3720
  %3840 = vmatmul.mubr.bf16.gmra.mrb[0].mxu0 %v3719
  %v3841 = vpop.f32.mrb[0].mxu0
  %v3842 = vadd.f32 0.0, %v3841
  %v3843 = vpop.f32.mrb[0].mxu0
  %v3844 = vpop.f32.mrb[0].mxu0
  %v3845 = vadd.f32 0.0, %v3844
  %v3846 = vpop.f32.mrb[0].mxu0
  %3847 = vmatprep.mubr.bf16.mxu0 %v3724
  %3848 = vmatmul.mubr.bf16.gmra.mrb[0].mxu0 %v3723
  %v3849 = vpop.f32.mrb[0].mxu0
  %v3850 = vadd.f32 0.0, %v3849
  %v3851 = vpop.f32.mrb[0].mxu0
  %v3852 = vpop.f32.mrb[0].mxu0
  %v3853 = vadd.f32 0.0, %v3852
  %v3854 = vpop.f32.mrb[0].mxu0
  %3855 = vdwg.mxu0
  %3856 = vmatprep.subr.bf16.mxu0 0
  %3857 = vmatpush1.bf16.msra.mxu0 %v719
  %3858 = vmatprep.subr.bf16.mxu0 0
  %3859 = vmatpush1.bf16.msra.mxu0 %v720
  %3860 = vmatprep.subr.bf16.mxu0 0
  %3861 = vmatpush1.bf16.msra.mxu0 %v721
  %3862 = vmatprep.subr.bf16.mxu0 0
  %3863 = vmatpush1.bf16.msra.mxu0 %v722
  %3864 = vmatprep.subr.bf16.mxu0 0
  %3865 = vmatpush1.bf16.msra.mxu0 %v723
  %3866 = vmatprep.subr.bf16.mxu0 0
  %3867 = vmatpush1.bf16.msra.mxu0 %v724
  %3868 = vmatprep.subr.bf16.mxu0 0
  %3869 = vmatpush1.bf16.msra.mxu0 %v725
  %3870 = vmatprep.subr.bf16.mxu0 0
  %3871 = vmatpush1.bf16.msra.mxu0 %v726
  %3872 = vmatprep.subr.bf16.mxu0 0
  %3873 = vmatpush1.bf16.msra.mxu0 %v727
  %3874 = vmatprep.subr.bf16.mxu0 0
  %3875 = vmatpush1.bf16.msra.mxu0 %v728
  %3876 = vmatprep.subr.bf16.mxu0 0
  %3877 = vmatpush1.bf16.msra.mxu0 %v729
  %3878 = vmatprep.subr.bf16.mxu0 0
  %3879 = vmatpush1.bf16.msra.mxu0 %v730
  %3880 = vmatprep.subr.bf16.mxu0 0
  %3881 = vmatpush1.bf16.msra.mxu0 %v731
  %3882 = vmatprep.subr.bf16.mxu0 0
  %3883 = vmatpush1.bf16.msra.mxu0 %v732
  %3884 = vmatprep.subr.bf16.mxu0 0
  %3885 = vmatpush1.bf16.msra.mxu0 %v733
  %3886 = vmatprep.subr.bf16.mxu0 0
  %3887 = vmatpush1.bf16.msra.mxu0 %v734
  %3888 = vmatprep.mubr.bf16.mxu0 %v3698
  %3889 = vmatmul.mubr.bf16.gmra.mrb[0].mxu0 %v3697
  %v3890 = vpop.f32.mrb[0].mxu0
  %v3891 = vadd.f32 %v3794, %v3890
  %v3892 = vpop.f32.mrb[0].mxu0
  %v3893 = vpop.f32.mrb[0].mxu0
  %v3894 = vadd.f32 %v3797, %v3893
  %v3895 = vpop.f32.mrb[0].mxu0
  %3896 = vmatprep.mubr.bf16.mxu0 %v3702
  %3897 = vmatmul.mubr.bf16.gmra.mrb[0].mxu0 %v3701
  %v3898 = vpop.f32.mrb[0].mxu0
  %v3899 = vadd.f32 %v3802, %v3898
  %v3900 = vpop.f32.mrb[0].mxu0
  %v3901 = vpop.f32.mrb[0].mxu0
  %v3902 = vadd.f32 %v3805, %v3901
  %v3903 = vpop.f32.mrb[0].mxu0
  %3904 = vmatprep.mubr.bf16.mxu0 %v3706
  %3905 = vmatmul.mubr.bf16.gmra.mrb[0].mxu0 %v3705
  %v3906 = vpop.f32.mrb[0].mxu0
  %v3907 = vadd.f32 %v3810, %v3906
  %v3908 = vpop.f32.mrb[0].mxu0
  %v3909 = vpop.f32.mrb[0].mxu0
  %v3910 = vadd.f32 %v3813, %v3909
  %v3911 = vpop.f32.mrb[0].mxu0
  %3912 = vmatprep.mubr.bf16.mxu0 %v3710
  %3913 = vmatmul.mubr.bf16.gmra.mrb[0].mxu0 %v3709
  %v3914 = vpop.f32.mrb[0].mxu0
  %v3915 = vadd.f32 %v3818, %v3914
  %v3916 = vpop.f32.mrb[0].mxu0
  %v3917 = vpop.f32.mrb[0].mxu0
  %v3918 = vadd.f32 %v3821, %v3917
  %v3919 = vpop.f32.mrb[0].mxu0
  %3920 = vmatprep.mubr.bf16.mxu0 %v3714
  %3921 = vmatmul.mubr.bf16.gmra.mrb[0].mxu0 %v3713
  %v3922 = vpop.f32.mrb[0].mxu0
  %v3923 = vadd.f32 %v3826, %v3922
  %v3924 = vpop.f32.mrb[0].mxu0
  %v3925 = vpop.f32.mrb[0].mxu0
  %v3926 = vadd.f32 %v3829, %v3925
  %v3927 = vpop.f32.mrb[0].mxu0
  %3928 = vmatprep.mubr.bf16.mxu0 %v3718
  %3929 = vmatmul.mubr.bf16.gmra.mrb[0].mxu0 %v3717
  %v3930 = vpop.f32.mrb[0].mxu0
  %v3931 = vadd.f32 %v3834, %v3930
  %v3932 = vpop.f32.mrb[0].mxu0
  %v3933 = vpop.f32.mrb[0].mxu0
  %v3934 = vadd.f32 %v3837, %v3933
  %v3935 = vpop.f32.mrb[0].mxu0
  %3936 = vmatprep.mubr.bf16.mxu0 %v3722
  %3937 = vmatmul.mubr.bf16.gmra.mrb[0].mxu0 %v3721
  %v3938 = vpop.f32.mrb[0].mxu0
  %v3939 = vadd.f32 %v3842, %v3938
  %v3940 = vpop.f32.mrb[0].mxu0
  %v3941 = vpop.f32.mrb[0].mxu0
  %v3942 = vadd.f32 %v3845, %v3941
  %v3943 = vpop.f32.mrb[0].mxu0
  %3944 = vmatprep.mubr.bf16.mxu0 %v3726
  %3945 = vmatmul.mubr.bf16.gmra.mrb[0].mxu0 %v3725
  %v3946 = vpop.f32.mrb[0].mxu0
  %v3947 = vadd.f32 %v3850, %v3946
  %v3948 = vpop.f32.mrb[0].mxu0
  %v3949 = vpop.f32.mrb[0].mxu0
  %v3950 = vadd.f32 %v3853, %v3949
  %v3951 = vpop.f32.mrb[0].mxu0
  %3952 = vdwg.mxu0
  %v3953 = vpack.c.bf16 %v3894, %v3891
  %v3954 = vpack.c.bf16 %v3902, %v3899
  %v3955 = vpack.c.bf16 %v3910, %v3907
  %v3956 = vpack.c.bf16 %v3918, %v3915
  %v3957 = vpack.c.bf16 %v3926, %v3923
  %v3958 = vpack.c.bf16 %v3934, %v3931
  %v3959 = vpack.c.bf16 %v3942, %v3939
  %v3960 = vpack.c.bf16 %v3950, %v3947
  %s3961 = scalar_lea.vmem %s3, 320
  %v3962 = vld [vmem:[%s3961] sm:$0xf]
  %v3963 = vld [vmem:[%s3961 + $0x4] sm:$0xf]
  %v3964 = vld [vmem:[%s3961 + $0x8] sm:$0xf]
  %v3965 = vld [vmem:[%s3961 + $0xc] sm:$0xf]
  %v3966 = vld [vmem:[%s3961 + $0x10] sm:$0xf]
  %v3967 = vld [vmem:[%s3961 + $0x14] sm:$0xf]
  %v3968 = vld [vmem:[%s3961 + $0x18] sm:$0xf]
  %v3969 = vld [vmem:[%s3961 + $0x1c] sm:$0xf]
  %v3970 = vld [vmem:[%s3961 + $0x20] sm:$0xf]
  %v3971 = vld [vmem:[%s3961 + $0x24] sm:$0xf]
  %v3972 = vld [vmem:[%s3961 + $0x28] sm:$0xf]
  %v3973 = vld [vmem:[%s3961 + $0x2c] sm:$0xf]
  %v3974 = vld [vmem:[%s3961 + $0x30] sm:$0xf]
  %v3975 = vld [vmem:[%s3961 + $0x34] sm:$0xf]
  %v3976 = vld [vmem:[%s3961 + $0x38] sm:$0xf]
  %v3977 = vld [vmem:[%s3961 + $0x3c] sm:$0xf]
  %v3994 = vunpack.c.l.b16 %v3962
  %v3995 = vunpack.c.l.b16 %v3963
  %v3996 = vunpack.c.l.b16 %v3964
  %v3997 = vunpack.c.l.b16 %v3965
  %v3998 = vunpack.c.l.b16 %v3966
  %v3999 = vunpack.c.l.b16 %v3967
  %v4000 = vunpack.c.l.b16 %v3968
  %v4001 = vunpack.c.l.b16 %v3969
  %v4002 = vunpack.c.l.b16 %v3970
  %v4003 = vunpack.c.l.b16 %v3971
  %v4004 = vunpack.c.l.b16 %v3972
  %v4005 = vunpack.c.l.b16 %v3973
  %v4006 = vunpack.c.l.b16 %v3974
  %v4007 = vunpack.c.l.b16 %v3975
  %v4008 = vunpack.c.l.b16 %v3976
  %v4009 = vunpack.c.l.b16 %v3977
  %v4010 = vpack.c.b16 %v3995, %v3994
  %v4011 = vpack.c.b16 %v3997, %v3996
  %v4012 = vpack.c.b16 %v3999, %v3998
  %v4013 = vpack.c.b16 %v4001, %v4000
  %v4014 = vpack.c.b16 %v4003, %v4002
  %v4015 = vpack.c.b16 %v4005, %v4004
  %v4016 = vpack.c.b16 %v4007, %v4006
  %v4017 = vpack.c.b16 %v4009, %v4008
  %4026 = vmatprep.subr.bf16.mxu0 0
  %4027 = vmatpush1.bf16.msra.mxu0 %v4010
  %4028 = vmatprep.subr.bf16.mxu0 0
  %4029 = vmatpush1.bf16.msra.mxu0 %v4011
  %4030 = vmatprep.subr.bf16.mxu0 0
  %4031 = vmatpush1.bf16.msra.mxu0 %v4012
  %4032 = vmatprep.subr.bf16.mxu0 0
  %4033 = vmatpush1.bf16.msra.mxu0 %v4013
  %4034 = vmatprep.subr.bf16.mxu0 0
  %4035 = vmatpush1.bf16.msra.mxu0 %v4014
  %4036 = vmatprep.subr.bf16.mxu0 0
  %4037 = vmatpush1.bf16.msra.mxu0 %v4015
  %4038 = vmatprep.subr.bf16.mxu0 0
  %4039 = vmatpush1.bf16.msra.mxu0 %v4016
  %4040 = vmatprep.subr.bf16.mxu0 0
  %4041 = vmatpush1.bf16.msra.mxu0 %v4017
  %4042 = vmatprep.subr.bf16.mxu0 0
  %4043 = vmatpush1.bf16.msra.mxu0 0
  %4044 = vmatprep.subr.bf16.mxu0 0
  %4045 = vmatpush1.bf16.msra.mxu0 0
  %4046 = vmatprep.subr.bf16.mxu0 0
  %4047 = vmatpush1.bf16.msra.mxu0 0
  %4048 = vmatprep.subr.bf16.mxu0 0
  %4049 = vmatpush1.bf16.msra.mxu0 0
  %4050 = vmatprep.subr.bf16.mxu0 0
  %4051 = vmatpush1.bf16.msra.mxu0 0
  %4052 = vmatprep.subr.bf16.mxu0 0
  %4053 = vmatpush1.bf16.msra.mxu0 0
  %4054 = vmatprep.subr.bf16.mxu0 0
  %4055 = vmatpush1.bf16.msra.mxu0 0
  %4056 = vmatprep.subr.bf16.mxu0 0
  %4057 = vmatpush1.bf16.msra.mxu0 0
  %4058 = vmatprep.mubr.bf16.mxu0 0
  %4059 = vmatmul.mubr.bf16.gmra.mrb[0].mxu0 %v3953
  %v4060 = vpop.f32.mrb[0].mxu0
  %v4061 = vadd.f32 0.0, %v4060
  %v4062 = vpop.f32.mrb[0].mxu0
  %v4063 = vpop.f32.mrb[0].mxu0
  %v4064 = vadd.f32 0.0, %v4063
  %v4065 = vpop.f32.mrb[0].mxu0
  %4066 = vmatprep.mubr.bf16.mxu0 0
  %4067 = vmatmul.mubr.bf16.gmra.mrb[0].mxu0 %v3954
  %v4068 = vpop.f32.mrb[0].mxu0
  %v4069 = vadd.f32 0.0, %v4068
  %v4070 = vpop.f32.mrb[0].mxu0
  %v4071 = vpop.f32.mrb[0].mxu0
  %v4072 = vadd.f32 0.0, %v4071
  %v4073 = vpop.f32.mrb[0].mxu0
  %4074 = vmatprep.mubr.bf16.mxu0 0
  %4075 = vmatmul.mubr.bf16.gmra.mrb[0].mxu0 %v3955
  %v4076 = vpop.f32.mrb[0].mxu0
  %v4077 = vadd.f32 0.0, %v4076
  %v4078 = vpop.f32.mrb[0].mxu0
  %v4079 = vpop.f32.mrb[0].mxu0
  %v4080 = vadd.f32 0.0, %v4079
  %v4081 = vpop.f32.mrb[0].mxu0
  %4082 = vmatprep.mubr.bf16.mxu0 0
  %4083 = vmatmul.mubr.bf16.gmra.mrb[0].mxu0 %v3956
  %v4084 = vpop.f32.mrb[0].mxu0
  %v4085 = vadd.f32 0.0, %v4084
  %v4086 = vpop.f32.mrb[0].mxu0
  %v4087 = vpop.f32.mrb[0].mxu0
  %v4088 = vadd.f32 0.0, %v4087
  %v4089 = vpop.f32.mrb[0].mxu0
  %4090 = vmatprep.mubr.bf16.mxu0 0
  %4091 = vmatmul.mubr.bf16.gmra.mrb[0].mxu0 %v3957
  %v4092 = vpop.f32.mrb[0].mxu0
  %v4093 = vadd.f32 0.0, %v4092
  %v4094 = vpop.f32.mrb[0].mxu0
  %v4095 = vpop.f32.mrb[0].mxu0
  %v4096 = vadd.f32 0.0, %v4095
  %v4097 = vpop.f32.mrb[0].mxu0
  %4098 = vmatprep.mubr.bf16.mxu0 0
  %4099 = vmatmul.mubr.bf16.gmra.mrb[0].mxu0 %v3958
  %v4100 = vpop.f32.mrb[0].mxu0
  %v4101 = vadd.f32 0.0, %v4100
  %v4102 = vpop.f32.mrb[0].mxu0
  %v4103 = vpop.f32.mrb[0].mxu0
  %v4104 = vadd.f32 0.0, %v4103
  %v4105 = vpop.f32.mrb[0].mxu0
  %4106 = vmatprep.mubr.bf16.mxu0 0
  %4107 = vmatmul.mubr.bf16.gmra.mrb[0].mxu0 %v3959
  %v4108 = vpop.f32.mrb[0].mxu0
  %v4109 = vadd.f32 0.0, %v4108
  %v4110 = vpop.f32.mrb[0].mxu0
  %v4111 = vpop.f32.mrb[0].mxu0
  %v4112 = vadd.f32 0.0, %v4111
  %v4113 = vpop.f32.mrb[0].mxu0
  %4114 = vmatprep.mubr.bf16.mxu0 0
  %4115 = vmatmul.mubr.bf16.gmra.mrb[0].mxu0 %v3960
  %v4116 = vpop.f32.mrb[0].mxu0
  %v4117 = vadd.f32 0.0, %v4116
  %v4118 = vpop.f32.mrb[0].mxu0
  %v4119 = vpop.f32.mrb[0].mxu0
  %v4120 = vadd.f32 0.0, %v4119
  %v4121 = vpop.f32.mrb[0].mxu0
  %4122 = vdwg.mxu0
  %v4123 = vadd.f32 %v3550, %v4061
  %v4124 = vadd.f32 %v3551, %v4064
  %v4125 = vadd.f32 %v3552, %v4069
  %v4126 = vadd.f32 %v3553, %v4072
  %v4127 = vadd.f32 %v3554, %v4077
  %v4128 = vadd.f32 %v3555, %v4080
  %v4129 = vadd.f32 %v3556, %v4085
  %v4130 = vadd.f32 %v3557, %v4088
  %v4131 = vadd.f32 %v3558, %v4093
  %v4132 = vadd.f32 %v3559, %v4096
  %v4133 = vadd.f32 %v3560, %v4101
  %v4134 = vadd.f32 %v3561, %v4104
  %v4135 = vadd.f32 %v3562, %v4109
  %v4136 = vadd.f32 %v3563, %v4112
  %v4137 = vadd.f32 %v3564, %v4117
  %v4138 = vadd.f32 %v3565, %v4120
  %s4139 = scalar_lea.vmem %s2, 1536
  %v4140 = vld [vmem:[%s4139] sm:$0xff]
  %v4141 = vld [vmem:[%s4139 + $0x8] sm:$0xff]
  %v4142 = vld [vmem:[%s4139 + $0x10] sm:$0xff]
  %v4143 = vld [vmem:[%s4139 + $0x18] sm:$0xff]
  %v4144 = vld [vmem:[%s4139 + $0x20] sm:$0xff]
  %v4145 = vld [vmem:[%s4139 + $0x28] sm:$0xff]
  %v4146 = vld [vmem:[%s4139 + $0x30] sm:$0xff]
  %v4147 = vld [vmem:[%s4139 + $0x38] sm:$0xff]
  %v4148 = vld [vmem:[%s4139 + $0x40] sm:$0xff]
  %v4149 = vld [vmem:[%s4139 + $0x48] sm:$0xff]
  %v4150 = vld [vmem:[%s4139 + $0x50] sm:$0xff]
  %v4151 = vld [vmem:[%s4139 + $0x58] sm:$0xff]
  %v4152 = vld [vmem:[%s4139 + $0x60] sm:$0xff]
  %v4153 = vld [vmem:[%s4139 + $0x68] sm:$0xff]
  %v4154 = vld [vmem:[%s4139 + $0x70] sm:$0xff]
  %v4155 = vld [vmem:[%s4139 + $0x78] sm:$0xff]
  %v4156 = vld [vmem:[%s4139 + $0x80] sm:$0xff]
  %v4157 = vld [vmem:[%s4139 + $0x88] sm:$0xff]
  %v4158 = vld [vmem:[%s4139 + $0x90] sm:$0xff]
  %v4159 = vld [vmem:[%s4139 + $0x98] sm:$0xff]
  %v4160 = vld [vmem:[%s4139 + $0xa0] sm:$0xff]
  %v4161 = vld [vmem:[%s4139 + $0xa8] sm:$0xff]
  %v4162 = vld [vmem:[%s4139 + $0xb0] sm:$0xff]
  %v4163 = vld [vmem:[%s4139 + $0xb8] sm:$0xff]
  %v4164 = vld [vmem:[%s4139 + $0xc0] sm:$0xff]
  %v4165 = vld [vmem:[%s4139 + $0xc8] sm:$0xff]
  %v4166 = vld [vmem:[%s4139 + $0xd0] sm:$0xff]
  %v4167 = vld [vmem:[%s4139 + $0xd8] sm:$0xff]
  %v4168 = vld [vmem:[%s4139 + $0xe0] sm:$0xff]
  %v4169 = vld [vmem:[%s4139 + $0xe8] sm:$0xff]
  %v4170 = vld [vmem:[%s4139 + $0xf0] sm:$0xff]
  %v4171 = vld [vmem:[%s4139 + $0xf8] sm:$0xff]
  %v4204 = vunpack.c.l.b16 %v4140
  %v4205 = vunpack.c.h.b16 %v4140
  %v4206 = vunpack.c.l.b16 %v4141
  %v4207 = vunpack.c.h.b16 %v4141
  %v4208 = vunpack.c.l.b16 %v4142
  %v4209 = vunpack.c.h.b16 %v4142
  %v4210 = vunpack.c.l.b16 %v4143
  %v4211 = vunpack.c.h.b16 %v4143
  %v4212 = vunpack.c.l.b16 %v4144
  %v4213 = vunpack.c.h.b16 %v4144
  %v4214 = vunpack.c.l.b16 %v4145
  %v4215 = vunpack.c.h.b16 %v4145
  %v4216 = vunpack.c.l.b16 %v4146
  %v4217 = vunpack.c.h.b16 %v4146
  %v4218 = vunpack.c.l.b16 %v4147
  %v4219 = vunpack.c.h.b16 %v4147
  %v4220 = vunpack.c.l.b16 %v4148
  %v4221 = vunpack.c.h.b16 %v4148
  %v4222 = vunpack.c.l.b16 %v4149
  %v4223 = vunpack.c.h.b16 %v4149
  %v4224 = vunpack.c.l.b16 %v4150
  %v4225 = vunpack.c.h.b16 %v4150
  %v4226 = vunpack.c.l.b16 %v4151
  %v4227 = vunpack.c.h.b16 %v4151
  %v4228 = vunpack.c.l.b16 %v4152
  %v4229 = vunpack.c.h.b16 %v4152
  %v4230 = vunpack.c.l.b16 %v4153
  %v4231 = vunpack.c.h.b16 %v4153
  %v4232 = vunpack.c.l.b16 %v4154
  %v4233 = vunpack.c.h.b16 %v4154
  %v4234 = vunpack.c.l.b16 %v4155
  %v4235 = vunpack.c.h.b16 %v4155
  %v4236 = vunpack.c.l.b16 %v4156
  %v4237 = vunpack.c.h.b16 %v4156
  %v4238 = vunpack.c.l.b16 %v4157
  %v4239 = vunpack.c.h.b16 %v4157
  %v4240 = vunpack.c.l.b16 %v4158
  %v4241 = vunpack.c.h.b16 %v4158
  %v4242 = vunpack.c.l.b16 %v4159
  %v4243 = vunpack.c.h.b16 %v4159
  %v4244 = vunpack.c.l.b16 %v4160
  %v4245 = vunpack.c.h.b16 %v4160
  %v4246 = vunpack.c.l.b16 %v4161
  %v4247 = vunpack.c.h.b16 %v4161
  %v4248 = vunpack.c.l.b16 %v4162
  %v4249 = vunpack.c.h.b16 %v4162
  %v4250 = vunpack.c.l.b16 %v4163
  %v4251 = vunpack.c.h.b16 %v4163
  %v4252 = vunpack.c.l.b16 %v4164
  %v4253 = vunpack.c.h.b16 %v4164
  %v4254 = vunpack.c.l.b16 %v4165
  %v4255 = vunpack.c.h.b16 %v4165
  %v4256 = vunpack.c.l.b16 %v4166
  %v4257 = vunpack.c.h.b16 %v4166
  %v4258 = vunpack.c.l.b16 %v4167
  %v4259 = vunpack.c.h.b16 %v4167
  %v4260 = vunpack.c.l.b16 %v4168
  %v4261 = vunpack.c.h.b16 %v4168
  %v4262 = vunpack.c.l.b16 %v4169
  %v4263 = vunpack.c.h.b16 %v4169
  %v4264 = vunpack.c.l.b16 %v4170
  %v4265 = vunpack.c.h.b16 %v4170
  %v4266 = vunpack.c.l.b16 %v4171
  %v4267 = vunpack.c.h.b16 %v4171
  %v4268 = vpack.c.b16 %v4208, %v4204
  %v4269 = vpack.c.b16 %v4209, %v4205
  %v4270 = vpack.c.b16 %v4210, %v4206
  %v4271 = vpack.c.b16 %v4211, %v4207
  %v4272 = vpack.c.b16 %v4216, %v4212
  %v4273 = vpack.c.b16 %v4217, %v4213
  %v4274 = vpack.c.b16 %v4218, %v4214
  %v4275 = vpack.c.b16 %v4219, %v4215
  %v4276 = vpack.c.b16 %v4224, %v4220
  %v4277 = vpack.c.b16 %v4225, %v4221
  %v4278 = vpack.c.b16 %v4226, %v4222
  %v4279 = vpack.c.b16 %v4227, %v4223
  %v4280 = vpack.c.b16 %v4232, %v4228
  %v4281 = vpack.c.b16 %v4233, %v4229
  %v4282 = vpack.c.b16 %v4234, %v4230
  %v4283 = vpack.c.b16 %v4235, %v4231
  %v4284 = vpack.c.b16 %v4240, %v4236
  %v4285 = vpack.c.b16 %v4241, %v4237
  %v4286 = vpack.c.b16 %v4242, %v4238
  %v4287 = vpack.c.b16 %v4243, %v4239
  %v4288 = vpack.c.b16 %v4248, %v4244
  %v4289 = vpack.c.b16 %v4249, %v4245
  %v4290 = vpack.c.b16 %v4250, %v4246
  %v4291 = vpack.c.b16 %v4251, %v4247
  %v4292 = vpack.c.b16 %v4256, %v4252
  %v4293 = vpack.c.b16 %v4257, %v4253
  %v4294 = vpack.c.b16 %v4258, %v4254
  %v4295 = vpack.c.b16 %v4259, %v4255
  %v4296 = vpack.c.b16 %v4264, %v4260
  %v4297 = vpack.c.b16 %v4265, %v4261
  %v4298 = vpack.c.b16 %v4266, %v4262
  %v4299 = vpack.c.b16 %v4267, %v4263
  %4332 = vmatprep.subr.bf16.mxu0 0
  %4333 = vmatpush1.bf16.msra.mxu0 %v703
  %4334 = vmatprep.subr.bf16.mxu0 0
  %4335 = vmatpush1.bf16.msra.mxu0 %v704
  %4336 = vmatprep.subr.bf16.mxu0 0
  %4337 = vmatpush1.bf16.msra.mxu0 %v705
  %4338 = vmatprep.subr.bf16.mxu0 0
  %4339 = vmatpush1.bf16.msra.mxu0 %v706
  %4340 = vmatprep.subr.bf16.mxu0 0
  %4341 = vmatpush1.bf16.msra.mxu0 %v707
  %4342 = vmatprep.subr.bf16.mxu0 0
  %4343 = vmatpush1.bf16.msra.mxu0 %v708
  %4344 = vmatprep.subr.bf16.mxu0 0
  %4345 = vmatpush1.bf16.msra.mxu0 %v709
  %4346 = vmatprep.subr.bf16.mxu0 0
  %4347 = vmatpush1.bf16.msra.mxu0 %v710
  %4348 = vmatprep.subr.bf16.mxu0 0
  %4349 = vmatpush1.bf16.msra.mxu0 %v711
  %4350 = vmatprep.subr.bf16.mxu0 0
  %4351 = vmatpush1.bf16.msra.mxu0 %v712
  %4352 = vmatprep.subr.bf16.mxu0 0
  %4353 = vmatpush1.bf16.msra.mxu0 %v713
  %4354 = vmatprep.subr.bf16.mxu0 0
  %4355 = vmatpush1.bf16.msra.mxu0 %v714
  %4356 = vmatprep.subr.bf16.mxu0 0
  %4357 = vmatpush1.bf16.msra.mxu0 %v715
  %4358 = vmatprep.subr.bf16.mxu0 0
  %4359 = vmatpush1.bf16.msra.mxu0 %v716
  %4360 = vmatprep.subr.bf16.mxu0 0
  %4361 = vmatpush1.bf16.msra.mxu0 %v717
  %4362 = vmatprep.subr.bf16.mxu0 0
  %4363 = vmatpush1.bf16.msra.mxu0 %v718
  %4364 = vmatprep.mubr.bf16.mxu0 %v4269
  %4365 = vmatmul.mubr.bf16.gmra.mrb[0].mxu0 %v4268
  %v4366 = vpop.f32.mrb[0].mxu0
  %v4367 = vadd.f32 0.0, %v4366
  %v4368 = vpop.f32.mrb[0].mxu0
  %v4369 = vpop.f32.mrb[0].mxu0
  %v4370 = vadd.f32 0.0, %v4369
  %v4371 = vpop.f32.mrb[0].mxu0
  %4372 = vmatprep.mubr.bf16.mxu0 %v4273
  %4373 = vmatmul.mubr.bf16.gmra.mrb[0].mxu0 %v4272
  %v4374 = vpop.f32.mrb[0].mxu0
  %v4375 = vadd.f32 0.0, %v4374
  %v4376 = vpop.f32.mrb[0].mxu0
  %v4377 = vpop.f32.mrb[0].mxu0
  %v4378 = vadd.f32 0.0, %v4377
  %v4379 = vpop.f32.mrb[0].mxu0
  %4380 = vmatprep.mubr.bf16.mxu0 %v4277
  %4381 = vmatmul.mubr.bf16.gmra.mrb[0].mxu0 %v4276
  %v4382 = vpop.f32.mrb[0].mxu0
  %v4383 = vadd.f32 0.0, %v4382
  %v4384 = vpop.f32.mrb[0].mxu0
  %v4385 = vpop.f32.mrb[0].mxu0
  %v4386 = vadd.f32 0.0, %v4385
  %v4387 = vpop.f32.mrb[0].mxu0
  %4388 = vmatprep.mubr.bf16.mxu0 %v4281
  %4389 = vmatmul.mubr.bf16.gmra.mrb[0].mxu0 %v4280
  %v4390 = vpop.f32.mrb[0].mxu0
  %v4391 = vadd.f32 0.0, %v4390
  %v4392 = vpop.f32.mrb[0].mxu0
  %v4393 = vpop.f32.mrb[0].mxu0
  %v4394 = vadd.f32 0.0, %v4393
  %v4395 = vpop.f32.mrb[0].mxu0
  %4396 = vmatprep.mubr.bf16.mxu0 %v4285
  %4397 = vmatmul.mubr.bf16.gmra.mrb[0].mxu0 %v4284
  %v4398 = vpop.f32.mrb[0].mxu0
  %v4399 = vadd.f32 0.0, %v4398
  %v4400 = vpop.f32.mrb[0].mxu0
  %v4401 = vpop.f32.mrb[0].mxu0
  %v4402 = vadd.f32 0.0, %v4401
  %v4403 = vpop.f32.mrb[0].mxu0
  %4404 = vmatprep.mubr.bf16.mxu0 %v4289
  %4405 = vmatmul.mubr.bf16.gmra.mrb[0].mxu0 %v4288
  %v4406 = vpop.f32.mrb[0].mxu0
  %v4407 = vadd.f32 0.0, %v4406
  %v4408 = vpop.f32.mrb[0].mxu0
  %v4409 = vpop.f32.mrb[0].mxu0
  %v4410 = vadd.f32 0.0, %v4409
  %v4411 = vpop.f32.mrb[0].mxu0
  %4412 = vmatprep.mubr.bf16.mxu0 %v4293
  %4413 = vmatmul.mubr.bf16.gmra.mrb[0].mxu0 %v4292
  %v4414 = vpop.f32.mrb[0].mxu0
  %v4415 = vadd.f32 0.0, %v4414
  %v4416 = vpop.f32.mrb[0].mxu0
  %v4417 = vpop.f32.mrb[0].mxu0
  %v4418 = vadd.f32 0.0, %v4417
  %v4419 = vpop.f32.mrb[0].mxu0
  %4420 = vmatprep.mubr.bf16.mxu0 %v4297
  %4421 = vmatmul.mubr.bf16.gmra.mrb[0].mxu0 %v4296
  %v4422 = vpop.f32.mrb[0].mxu0
  %v4423 = vadd.f32 0.0, %v4422
  %v4424 = vpop.f32.mrb[0].mxu0
  %v4425 = vpop.f32.mrb[0].mxu0
  %v4426 = vadd.f32 0.0, %v4425
  %v4427 = vpop.f32.mrb[0].mxu0
  %4428 = vdwg.mxu0
  %4429 = vmatprep.subr.bf16.mxu0 0
  %4430 = vmatpush1.bf16.msra.mxu0 %v719
  %4431 = vmatprep.subr.bf16.mxu0 0
  %4432 = vmatpush1.bf16.msra.mxu0 %v720
  %4433 = vmatprep.subr.bf16.mxu0 0
  %4434 = vmatpush1.bf16.msra.mxu0 %v721
  %4435 = vmatprep.subr.bf16.mxu0 0
  %4436 = vmatpush1.bf16.msra.mxu0 %v722
  %4437 = vmatprep.subr.bf16.mxu0 0
  %4438 = vmatpush1.bf16.msra.mxu0 %v723
  %4439 = vmatprep.subr.bf16.mxu0 0
  %4440 = vmatpush1.bf16.msra.mxu0 %v724
  %4441 = vmatprep.subr.bf16.mxu0 0
  %4442 = vmatpush1.bf16.msra.mxu0 %v725
  %4443 = vmatprep.subr.bf16.mxu0 0
  %4444 = vmatpush1.bf16.msra.mxu0 %v726
  %4445 = vmatprep.subr.bf16.mxu0 0
  %4446 = vmatpush1.bf16.msra.mxu0 %v727
  %4447 = vmatprep.subr.bf16.mxu0 0
  %4448 = vmatpush1.bf16.msra.mxu0 %v728
  %4449 = vmatprep.subr.bf16.mxu0 0
  %4450 = vmatpush1.bf16.msra.mxu0 %v729
  %4451 = vmatprep.subr.bf16.mxu0 0
  %4452 = vmatpush1.bf16.msra.mxu0 %v730
  %4453 = vmatprep.subr.bf16.mxu0 0
  %4454 = vmatpush1.bf16.msra.mxu0 %v731
  %4455 = vmatprep.subr.bf16.mxu0 0
  %4456 = vmatpush1.bf16.msra.mxu0 %v732
  %4457 = vmatprep.subr.bf16.mxu0 0
  %4458 = vmatpush1.bf16.msra.mxu0 %v733
  %4459 = vmatprep.subr.bf16.mxu0 0
  %4460 = vmatpush1.bf16.msra.mxu0 %v734
  %4461 = vmatprep.mubr.bf16.mxu0 %v4271
  %4462 = vmatmul.mubr.bf16.gmra.mrb[0].mxu0 %v4270
  %v4463 = vpop.f32.mrb[0].mxu0
  %v4464 = vadd.f32 %v4367, %v4463
  %v4465 = vpop.f32.mrb[0].mxu0
  %v4466 = vpop.f32.mrb[0].mxu0
  %v4467 = vadd.f32 %v4370, %v4466
  %v4468 = vpop.f32.mrb[0].mxu0
  %4469 = vmatprep.mubr.bf16.mxu0 %v4275
  %4470 = vmatmul.mubr.bf16.gmra.mrb[0].mxu0 %v4274
  %v4471 = vpop.f32.mrb[0].mxu0
  %v4472 = vadd.f32 %v4375, %v4471
  %v4473 = vpop.f32.mrb[0].mxu0
  %v4474 = vpop.f32.mrb[0].mxu0
  %v4475 = vadd.f32 %v4378, %v4474
  %v4476 = vpop.f32.mrb[0].mxu0
  %4477 = vmatprep.mubr.bf16.mxu0 %v4279
  %4478 = vmatmul.mubr.bf16.gmra.mrb[0].mxu0 %v4278
  %v4479 = vpop.f32.mrb[0].mxu0
  %v4480 = vadd.f32 %v4383, %v4479
  %v4481 = vpop.f32.mrb[0].mxu0
  %v4482 = vpop.f32.mrb[0].mxu0
  %v4483 = vadd.f32 %v4386, %v4482
  %v4484 = vpop.f32.mrb[0].mxu0
  %4485 = vmatprep.mubr.bf16.mxu0 %v4283
  %4486 = vmatmul.mubr.bf16.gmra.mrb[0].mxu0 %v4282
  %v4487 = vpop.f32.mrb[0].mxu0
  %v4488 = vadd.f32 %v4391, %v4487
  %v4489 = vpop.f32.mrb[0].mxu0
  %v4490 = vpop.f32.mrb[0].mxu0
  %v4491 = vadd.f32 %v4394, %v4490
  %v4492 = vpop.f32.mrb[0].mxu0
  %4493 = vmatprep.mubr.bf16.mxu0 %v4287
  %4494 = vmatmul.mubr.bf16.gmra.mrb[0].mxu0 %v4286
  %v4495 = vpop.f32.mrb[0].mxu0
  %v4496 = vadd.f32 %v4399, %v4495
  %v4497 = vpop.f32.mrb[0].mxu0
  %v4498 = vpop.f32.mrb[0].mxu0
  %v4499 = vadd.f32 %v4402, %v4498
  %v4500 = vpop.f32.mrb[0].mxu0
  %4501 = vmatprep.mubr.bf16.mxu0 %v4291
  %4502 = vmatmul.mubr.bf16.gmra.mrb[0].mxu0 %v4290
  %v4503 = vpop.f32.mrb[0].mxu0
  %v4504 = vadd.f32 %v4407, %v4503
  %v4505 = vpop.f32.mrb[0].mxu0
  %v4506 = vpop.f32.mrb[0].mxu0
  %v4507 = vadd.f32 %v4410, %v4506
  %v4508 = vpop.f32.mrb[0].mxu0
  %4509 = vmatprep.mubr.bf16.mxu0 %v4295
  %4510 = vmatmul.mubr.bf16.gmra.mrb[0].mxu0 %v4294
  %v4511 = vpop.f32.mrb[0].mxu0
  %v4512 = vadd.f32 %v4415, %v4511
  %v4513 = vpop.f32.mrb[0].mxu0
  %v4514 = vpop.f32.mrb[0].mxu0
  %v4515 = vadd.f32 %v4418, %v4514
  %v4516 = vpop.f32.mrb[0].mxu0
  %4517 = vmatprep.mubr.bf16.mxu0 %v4299
  %4518 = vmatmul.mubr.bf16.gmra.mrb[0].mxu0 %v4298
  %v4519 = vpop.f32.mrb[0].mxu0
  %v4520 = vadd.f32 %v4423, %v4519
  %v4521 = vpop.f32.mrb[0].mxu0
  %v4522 = vpop.f32.mrb[0].mxu0
  %v4523 = vadd.f32 %v4426, %v4522
  %v4524 = vpop.f32.mrb[0].mxu0
  %4525 = vdwg.mxu0
  %v4526 = vpack.c.bf16 %v4467, %v4464
  %v4527 = vpack.c.bf16 %v4475, %v4472
  %v4528 = vpack.c.bf16 %v4483, %v4480
  %v4529 = vpack.c.bf16 %v4491, %v4488
  %v4530 = vpack.c.bf16 %v4499, %v4496
  %v4531 = vpack.c.bf16 %v4507, %v4504
  %v4532 = vpack.c.bf16 %v4515, %v4512
  %v4533 = vpack.c.bf16 %v4523, %v4520
  %s4534 = scalar_lea.vmem %s3, 384
  %v4535 = vld [vmem:[%s4534] sm:$0xf]
  %v4536 = vld [vmem:[%s4534 + $0x4] sm:$0xf]
  %v4537 = vld [vmem:[%s4534 + $0x8] sm:$0xf]
  %v4538 = vld [vmem:[%s4534 + $0xc] sm:$0xf]
  %v4539 = vld [vmem:[%s4534 + $0x10] sm:$0xf]
  %v4540 = vld [vmem:[%s4534 + $0x14] sm:$0xf]
  %v4541 = vld [vmem:[%s4534 + $0x18] sm:$0xf]
  %v4542 = vld [vmem:[%s4534 + $0x1c] sm:$0xf]
  %v4543 = vld [vmem:[%s4534 + $0x20] sm:$0xf]
  %v4544 = vld [vmem:[%s4534 + $0x24] sm:$0xf]
  %v4545 = vld [vmem:[%s4534 + $0x28] sm:$0xf]
  %v4546 = vld [vmem:[%s4534 + $0x2c] sm:$0xf]
  %v4547 = vld [vmem:[%s4534 + $0x30] sm:$0xf]
  %v4548 = vld [vmem:[%s4534 + $0x34] sm:$0xf]
  %v4549 = vld [vmem:[%s4534 + $0x38] sm:$0xf]
  %v4550 = vld [vmem:[%s4534 + $0x3c] sm:$0xf]
  %v4567 = vunpack.c.l.b16 %v4535
  %v4568 = vunpack.c.l.b16 %v4536
  %v4569 = vunpack.c.l.b16 %v4537
  %v4570 = vunpack.c.l.b16 %v4538
  %v4571 = vunpack.c.l.b16 %v4539
  %v4572 = vunpack.c.l.b16 %v4540
  %v4573 = vunpack.c.l.b16 %v4541
  %v4574 = vunpack.c.l.b16 %v4542
  %v4575 = vunpack.c.l.b16 %v4543
  %v4576 = vunpack.c.l.b16 %v4544
  %v4577 = vunpack.c.l.b16 %v4545
  %v4578 = vunpack.c.l.b16 %v4546
  %v4579 = vunpack.c.l.b16 %v4547
  %v4580 = vunpack.c.l.b16 %v4548
  %v4581 = vunpack.c.l.b16 %v4549
  %v4582 = vunpack.c.l.b16 %v4550
  %v4583 = vpack.c.b16 %v4568, %v4567
  %v4584 = vpack.c.b16 %v4570, %v4569
  %v4585 = vpack.c.b16 %v4572, %v4571
  %v4586 = vpack.c.b16 %v4574, %v4573
  %v4587 = vpack.c.b16 %v4576, %v4575
  %v4588 = vpack.c.b16 %v4578, %v4577
  %v4589 = vpack.c.b16 %v4580, %v4579
  %v4590 = vpack.c.b16 %v4582, %v4581
  %4599 = vmatprep.subr.bf16.mxu0 0
  %4600 = vmatpush1.bf16.msra.mxu0 %v4583
  %4601 = vmatprep.subr.bf16.mxu0 0
  %4602 = vmatpush1.bf16.msra.mxu0 %v4584
  %4603 = vmatprep.subr.bf16.mxu0 0
  %4604 = vmatpush1.bf16.msra.mxu0 %v4585
  %4605 = vmatprep.subr.bf16.mxu0 0
  %4606 = vmatpush1.bf16.msra.mxu0 %v4586
  %4607 = vmatprep.subr.bf16.mxu0 0
  %4608 = vmatpush1.bf16.msra.mxu0 %v4587
  %4609 = vmatprep.subr.bf16.mxu0 0
  %4610 = vmatpush1.bf16.msra.mxu0 %v4588
  %4611 = vmatprep.subr.bf16.mxu0 0
  %4612 = vmatpush1.bf16.msra.mxu0 %v4589
  %4613 = vmatprep.subr.bf16.mxu0 0
  %4614 = vmatpush1.bf16.msra.mxu0 %v4590
  %4615 = vmatprep.subr.bf16.mxu0 0
  %4616 = vmatpush1.bf16.msra.mxu0 0
  %4617 = vmatprep.subr.bf16.mxu0 0
  %4618 = vmatpush1.bf16.msra.mxu0 0
  %4619 = vmatprep.subr.bf16.mxu0 0
  %4620 = vmatpush1.bf16.msra.mxu0 0
  %4621 = vmatprep.subr.bf16.mxu0 0
  %4622 = vmatpush1.bf16.msra.mxu0 0
  %4623 = vmatprep.subr.bf16.mxu0 0
  %4624 = vmatpush1.bf16.msra.mxu0 0
  %4625 = vmatprep.subr.bf16.mxu0 0
  %4626 = vmatpush1.bf16.msra.mxu0 0
  %4627 = vmatprep.subr.bf16.mxu0 0
  %4628 = vmatpush1.bf16.msra.mxu0 0
  %4629 = vmatprep.subr.bf16.mxu0 0
  %4630 = vmatpush1.bf16.msra.mxu0 0
  %4631 = vmatprep.mubr.bf16.mxu0 0
  %4632 = vmatmul.mubr.bf16.gmra.mrb[0].mxu0 %v4526
  %v4633 = vpop.f32.mrb[0].mxu0
  %v4634 = vadd.f32 0.0, %v4633
  %v4635 = vpop.f32.mrb[0].mxu0
  %v4636 = vpop.f32.mrb[0].mxu0
  %v4637 = vadd.f32 0.0, %v4636
  %v4638 = vpop.f32.mrb[0].mxu0
  %4639 = vmatprep.mubr.bf16.mxu0 0
  %4640 = vmatmul.mubr.bf16.gmra.mrb[0].mxu0 %v4527
  %v4641 = vpop.f32.mrb[0].mxu0
  %v4642 = vadd.f32 0.0, %v4641
  %v4643 = vpop.f32.mrb[0].mxu0
  %v4644 = vpop.f32.mrb[0].mxu0
  %v4645 = vadd.f32 0.0, %v4644
  %v4646 = vpop.f32.mrb[0].mxu0
  %4647 = vmatprep.mubr.bf16.mxu0 0
  %4648 = vmatmul.mubr.bf16.gmra.mrb[0].mxu0 %v4528
  %v4649 = vpop.f32.mrb[0].mxu0
  %v4650 = vadd.f32 0.0, %v4649
  %v4651 = vpop.f32.mrb[0].mxu0
  %v4652 = vpop.f32.mrb[0].mxu0
  %v4653 = vadd.f32 0.0, %v4652
  %v4654 = vpop.f32.mrb[0].mxu0
  %4655 = vmatprep.mubr.bf16.mxu0 0
  %4656 = vmatmul.mubr.bf16.gmra.mrb[0].mxu0 %v4529
  %v4657 = vpop.f32.mrb[0].mxu0
  %v4658 = vadd.f32 0.0, %v4657
  %v4659 = vpop.f32.mrb[0].mxu0
  %v4660 = vpop.f32.mrb[0].mxu0
  %v4661 = vadd.f32 0.0, %v4660
  %v4662 = vpop.f32.mrb[0].mxu0
  %4663 = vmatprep.mubr.bf16.mxu0 0
  %4664 = vmatmul.mubr.bf16.gmra.mrb[0].mxu0 %v4530
  %v4665 = vpop.f32.mrb[0].mxu0
  %v4666 = vadd.f32 0.0, %v4665
  %v4667 = vpop.f32.mrb[0].mxu0
  %v4668 = vpop.f32.mrb[0].mxu0
  %v4669 = vadd.f32 0.0, %v4668
  %v4670 = vpop.f32.mrb[0].mxu0
  %4671 = vmatprep.mubr.bf16.mxu0 0
  %4672 = vmatmul.mubr.bf16.gmra.mrb[0].mxu0 %v4531
  %v4673 = vpop.f32.mrb[0].mxu0
  %v4674 = vadd.f32 0.0, %v4673
  %v4675 = vpop.f32.mrb[0].mxu0
  %v4676 = vpop.f32.mrb[0].mxu0
  %v4677 = vadd.f32 0.0, %v4676
  %v4678 = vpop.f32.mrb[0].mxu0
  %4679 = vmatprep.mubr.bf16.mxu0 0
  %4680 = vmatmul.mubr.bf16.gmra.mrb[0].mxu0 %v4532
  %v4681 = vpop.f32.mrb[0].mxu0
  %v4682 = vadd.f32 0.0, %v4681
  %v4683 = vpop.f32.mrb[0].mxu0
  %v4684 = vpop.f32.mrb[0].mxu0
  %v4685 = vadd.f32 0.0, %v4684
  %v4686 = vpop.f32.mrb[0].mxu0
  %4687 = vmatprep.mubr.bf16.mxu0 0
  %4688 = vmatmul.mubr.bf16.gmra.mrb[0].mxu0 %v4533
  %v4689 = vpop.f32.mrb[0].mxu0
  %v4690 = vadd.f32 0.0, %v4689
  %v4691 = vpop.f32.mrb[0].mxu0
  %v4692 = vpop.f32.mrb[0].mxu0
  %v4693 = vadd.f32 0.0, %v4692
  %v4694 = vpop.f32.mrb[0].mxu0
  %4695 = vdwg.mxu0
  %v4696 = vadd.f32 %v4123, %v4634
  %v4697 = vadd.f32 %v4124, %v4637
  %v4698 = vadd.f32 %v4125, %v4642
  %v4699 = vadd.f32 %v4126, %v4645
  %v4700 = vadd.f32 %v4127, %v4650
  %v4701 = vadd.f32 %v4128, %v4653
  %v4702 = vadd.f32 %v4129, %v4658
  %v4703 = vadd.f32 %v4130, %v4661
  %v4704 = vadd.f32 %v4131, %v4666
  %v4705 = vadd.f32 %v4132, %v4669
  %v4706 = vadd.f32 %v4133, %v4674
  %v4707 = vadd.f32 %v4134, %v4677
  %v4708 = vadd.f32 %v4135, %v4682
  %v4709 = vadd.f32 %v4136, %v4685
  %v4710 = vadd.f32 %v4137, %v4690
  %v4711 = vadd.f32 %v4138, %v4693
  %s4712 = scalar_lea.vmem %s2, 1792
  %v4713 = vld [vmem:[%s4712] sm:$0xff]
  %v4714 = vld [vmem:[%s4712 + $0x8] sm:$0xff]
  %v4715 = vld [vmem:[%s4712 + $0x10] sm:$0xff]
  %v4716 = vld [vmem:[%s4712 + $0x18] sm:$0xff]
  %v4717 = vld [vmem:[%s4712 + $0x20] sm:$0xff]
  %v4718 = vld [vmem:[%s4712 + $0x28] sm:$0xff]
  %v4719 = vld [vmem:[%s4712 + $0x30] sm:$0xff]
  %v4720 = vld [vmem:[%s4712 + $0x38] sm:$0xff]
  %v4721 = vld [vmem:[%s4712 + $0x40] sm:$0xff]
  %v4722 = vld [vmem:[%s4712 + $0x48] sm:$0xff]
  %v4723 = vld [vmem:[%s4712 + $0x50] sm:$0xff]
  %v4724 = vld [vmem:[%s4712 + $0x58] sm:$0xff]
  %v4725 = vld [vmem:[%s4712 + $0x60] sm:$0xff]
  %v4726 = vld [vmem:[%s4712 + $0x68] sm:$0xff]
  %v4727 = vld [vmem:[%s4712 + $0x70] sm:$0xff]
  %v4728 = vld [vmem:[%s4712 + $0x78] sm:$0xff]
  %v4729 = vld [vmem:[%s4712 + $0x80] sm:$0xff]
  %v4730 = vld [vmem:[%s4712 + $0x88] sm:$0xff]
  %v4731 = vld [vmem:[%s4712 + $0x90] sm:$0xff]
  %v4732 = vld [vmem:[%s4712 + $0x98] sm:$0xff]
  %v4733 = vld [vmem:[%s4712 + $0xa0] sm:$0xff]
  %v4734 = vld [vmem:[%s4712 + $0xa8] sm:$0xff]
  %v4735 = vld [vmem:[%s4712 + $0xb0] sm:$0xff]
  %v4736 = vld [vmem:[%s4712 + $0xb8] sm:$0xff]
  %v4737 = vld [vmem:[%s4712 + $0xc0] sm:$0xff]
  %v4738 = vld [vmem:[%s4712 + $0xc8] sm:$0xff]
  %v4739 = vld [vmem:[%s4712 + $0xd0] sm:$0xff]
  %v4740 = vld [vmem:[%s4712 + $0xd8] sm:$0xff]
  %v4741 = vld [vmem:[%s4712 + $0xe0] sm:$0xff]
  %v4742 = vld [vmem:[%s4712 + $0xe8] sm:$0xff]
  %v4743 = vld [vmem:[%s4712 + $0xf0] sm:$0xff]
  %v4744 = vld [vmem:[%s4712 + $0xf8] sm:$0xff]
  %v4777 = vunpack.c.l.b16 %v4713
  %v4778 = vunpack.c.h.b16 %v4713
  %v4779 = vunpack.c.l.b16 %v4714
  %v4780 = vunpack.c.h.b16 %v4714
  %v4781 = vunpack.c.l.b16 %v4715
  %v4782 = vunpack.c.h.b16 %v4715
  %v4783 = vunpack.c.l.b16 %v4716
  %v4784 = vunpack.c.h.b16 %v4716
  %v4785 = vunpack.c.l.b16 %v4717
  %v4786 = vunpack.c.h.b16 %v4717
  %v4787 = vunpack.c.l.b16 %v4718
  %v4788 = vunpack.c.h.b16 %v4718
  %v4789 = vunpack.c.l.b16 %v4719
  %v4790 = vunpack.c.h.b16 %v4719
  %v4791 = vunpack.c.l.b16 %v4720
  %v4792 = vunpack.c.h.b16 %v4720
  %v4793 = vunpack.c.l.b16 %v4721
  %v4794 = vunpack.c.h.b16 %v4721
  %v4795 = vunpack.c.l.b16 %v4722
  %v4796 = vunpack.c.h.b16 %v4722
  %v4797 = vunpack.c.l.b16 %v4723
  %v4798 = vunpack.c.h.b16 %v4723
  %v4799 = vunpack.c.l.b16 %v4724
  %v4800 = vunpack.c.h.b16 %v4724
  %v4801 = vunpack.c.l.b16 %v4725
  %v4802 = vunpack.c.h.b16 %v4725
  %v4803 = vunpack.c.l.b16 %v4726
  %v4804 = vunpack.c.h.b16 %v4726
  %v4805 = vunpack.c.l.b16 %v4727
  %v4806 = vunpack.c.h.b16 %v4727
  %v4807 = vunpack.c.l.b16 %v4728
  %v4808 = vunpack.c.h.b16 %v4728
  %v4809 = vunpack.c.l.b16 %v4729
  %v4810 = vunpack.c.h.b16 %v4729
  %v4811 = vunpack.c.l.b16 %v4730
  %v4812 = vunpack.c.h.b16 %v4730
  %v4813 = vunpack.c.l.b16 %v4731
  %v4814 = vunpack.c.h.b16 %v4731
  %v4815 = vunpack.c.l.b16 %v4732
  %v4816 = vunpack.c.h.b16 %v4732
  %v4817 = vunpack.c.l.b16 %v4733
  %v4818 = vunpack.c.h.b16 %v4733
  %v4819 = vunpack.c.l.b16 %v4734
  %v4820 = vunpack.c.h.b16 %v4734
  %v4821 = vunpack.c.l.b16 %v4735
  %v4822 = vunpack.c.h.b16 %v4735
  %v4823 = vunpack.c.l.b16 %v4736
  %v4824 = vunpack.c.h.b16 %v4736
  %v4825 = vunpack.c.l.b16 %v4737
  %v4826 = vunpack.c.h.b16 %v4737
  %v4827 = vunpack.c.l.b16 %v4738
  %v4828 = vunpack.c.h.b16 %v4738
  %v4829 = vunpack.c.l.b16 %v4739
  %v4830 = vunpack.c.h.b16 %v4739
  %v4831 = vunpack.c.l.b16 %v4740
  %v4832 = vunpack.c.h.b16 %v4740
  %v4833 = vunpack.c.l.b16 %v4741
  %v4834 = vunpack.c.h.b16 %v4741
  %v4835 = vunpack.c.l.b16 %v4742
  %v4836 = vunpack.c.h.b16 %v4742
  %v4837 = vunpack.c.l.b16 %v4743
  %v4838 = vunpack.c.h.b16 %v4743
  %v4839 = vunpack.c.l.b16 %v4744
  %v4840 = vunpack.c.h.b16 %v4744
  %v4841 = vpack.c.b16 %v4781, %v4777
  %v4842 = vpack.c.b16 %v4782, %v4778
  %v4843 = vpack.c.b16 %v4783, %v4779
  %v4844 = vpack.c.b16 %v4784, %v4780
  %v4845 = vpack.c.b16 %v4789, %v4785
  %v4846 = vpack.c.b16 %v4790, %v4786
  %v4847 = vpack.c.b16 %v4791, %v4787
  %v4848 = vpack.c.b16 %v4792, %v4788
  %v4849 = vpack.c.b16 %v4797, %v4793
  %v4850 = vpack.c.b16 %v4798, %v4794
  %v4851 = vpack.c.b16 %v4799, %v4795
  %v4852 = vpack.c.b16 %v4800, %v4796
  %v4853 = vpack.c.b16 %v4805, %v4801
  %v4854 = vpack.c.b16 %v4806, %v4802
  %v4855 = vpack.c.b16 %v4807, %v4803
  %v4856 = vpack.c.b16 %v4808, %v4804
  %v4857 = vpack.c.b16 %v4813, %v4809
  %v4858 = vpack.c.b16 %v4814, %v4810
  %v4859 = vpack.c.b16 %v4815, %v4811
  %v4860 = vpack.c.b16 %v4816, %v4812
  %v4861 = vpack.c.b16 %v4821, %v4817
  %v4862 = vpack.c.b16 %v4822, %v4818
  %v4863 = vpack.c.b16 %v4823, %v4819
  %v4864 = vpack.c.b16 %v4824, %v4820
  %v4865 = vpack.c.b16 %v4829, %v4825
  %v4866 = vpack.c.b16 %v4830, %v4826
  %v4867 = vpack.c.b16 %v4831, %v4827
  %v4868 = vpack.c.b16 %v4832, %v4828
  %v4869 = vpack.c.b16 %v4837, %v4833
  %v4870 = vpack.c.b16 %v4838, %v4834
  %v4871 = vpack.c.b16 %v4839, %v4835
  %v4872 = vpack.c.b16 %v4840, %v4836
  %4905 = vmatprep.subr.bf16.mxu0 0
  %4906 = vmatpush1.bf16.msra.mxu0 %v703
  %4907 = vmatprep.subr.bf16.mxu0 0
  %4908 = vmatpush1.bf16.msra.mxu0 %v704
  %4909 = vmatprep.subr.bf16.mxu0 0
  %4910 = vmatpush1.bf16.msra.mxu0 %v705
  %4911 = vmatprep.subr.bf16.mxu0 0
  %4912 = vmatpush1.bf16.msra.mxu0 %v706
  %4913 = vmatprep.subr.bf16.mxu0 0
  %4914 = vmatpush1.bf16.msra.mxu0 %v707
  %4915 = vmatprep.subr.bf16.mxu0 0
  %4916 = vmatpush1.bf16.msra.mxu0 %v708
  %4917 = vmatprep.subr.bf16.mxu0 0
  %4918 = vmatpush1.bf16.msra.mxu0 %v709
  %4919 = vmatprep.subr.bf16.mxu0 0
  %4920 = vmatpush1.bf16.msra.mxu0 %v710
  %4921 = vmatprep.subr.bf16.mxu0 0
  %4922 = vmatpush1.bf16.msra.mxu0 %v711
  %4923 = vmatprep.subr.bf16.mxu0 0
  %4924 = vmatpush1.bf16.msra.mxu0 %v712
  %4925 = vmatprep.subr.bf16.mxu0 0
  %4926 = vmatpush1.bf16.msra.mxu0 %v713
  %4927 = vmatprep.subr.bf16.mxu0 0
  %4928 = vmatpush1.bf16.msra.mxu0 %v714
  %4929 = vmatprep.subr.bf16.mxu0 0
  %4930 = vmatpush1.bf16.msra.mxu0 %v715
  %4931 = vmatprep.subr.bf16.mxu0 0
  %4932 = vmatpush1.bf16.msra.mxu0 %v716
  %4933 = vmatprep.subr.bf16.mxu0 0
  %4934 = vmatpush1.bf16.msra.mxu0 %v717
  %4935 = vmatprep.subr.bf16.mxu0 0
  %4936 = vmatpush1.bf16.msra.mxu0 %v718
  %4937 = vmatprep.mubr.bf16.mxu0 %v4842
  %4938 = vmatmul.mubr.bf16.gmra.mrb[0].mxu0 %v4841
  %v4939 = vpop.f32.mrb[0].mxu0
  %v4940 = vadd.f32 0.0, %v4939
  %v4941 = vpop.f32.mrb[0].mxu0
  %v4942 = vpop.f32.mrb[0].mxu0
  %v4943 = vadd.f32 0.0, %v4942
  %v4944 = vpop.f32.mrb[0].mxu0
  %4945 = vmatprep.mubr.bf16.mxu0 %v4846
  %4946 = vmatmul.mubr.bf16.gmra.mrb[0].mxu0 %v4845
  %v4947 = vpop.f32.mrb[0].mxu0
  %v4948 = vadd.f32 0.0, %v4947
  %v4949 = vpop.f32.mrb[0].mxu0
  %v4950 = vpop.f32.mrb[0].mxu0
  %v4951 = vadd.f32 0.0, %v4950
  %v4952 = vpop.f32.mrb[0].mxu0
  %4953 = vmatprep.mubr.bf16.mxu0 %v4850
  %4954 = vmatmul.mubr.bf16.gmra.mrb[0].mxu0 %v4849
  %v4955 = vpop.f32.mrb[0].mxu0
  %v4956 = vadd.f32 0.0, %v4955
  %v4957 = vpop.f32.mrb[0].mxu0
  %v4958 = vpop.f32.mrb[0].mxu0
  %v4959 = vadd.f32 0.0, %v4958
  %v4960 = vpop.f32.mrb[0].mxu0
  %4961 = vmatprep.mubr.bf16.mxu0 %v4854
  %4962 = vmatmul.mubr.bf16.gmra.mrb[0].mxu0 %v4853
  %v4963 = vpop.f32.mrb[0].mxu0
  %v4964 = vadd.f32 0.0, %v4963
  %v4965 = vpop.f32.mrb[0].mxu0
  %v4966 = vpop.f32.mrb[0].mxu0
  %v4967 = vadd.f32 0.0, %v4966
  %v4968 = vpop.f32.mrb[0].mxu0
  %4969 = vmatprep.mubr.bf16.mxu0 %v4858
  %4970 = vmatmul.mubr.bf16.gmra.mrb[0].mxu0 %v4857
  %v4971 = vpop.f32.mrb[0].mxu0
  %v4972 = vadd.f32 0.0, %v4971
  %v4973 = vpop.f32.mrb[0].mxu0
  %v4974 = vpop.f32.mrb[0].mxu0
  %v4975 = vadd.f32 0.0, %v4974
  %v4976 = vpop.f32.mrb[0].mxu0
  %4977 = vmatprep.mubr.bf16.mxu0 %v4862
  %4978 = vmatmul.mubr.bf16.gmra.mrb[0].mxu0 %v4861
  %v4979 = vpop.f32.mrb[0].mxu0
  %v4980 = vadd.f32 0.0, %v4979
  %v4981 = vpop.f32.mrb[0].mxu0
  %v4982 = vpop.f32.mrb[0].mxu0
  %v4983 = vadd.f32 0.0, %v4982
  %v4984 = vpop.f32.mrb[0].mxu0
  %4985 = vmatprep.mubr.bf16.mxu0 %v4866
  %4986 = vmatmul.mubr.bf16.gmra.mrb[0].mxu0 %v4865
  %v4987 = vpop.f32.mrb[0].mxu0
  %v4988 = vadd.f32 0.0, %v4987
  %v4989 = vpop.f32.mrb[0].mxu0
  %v4990 = vpop.f32.mrb[0].mxu0
  %v4991 = vadd.f32 0.0, %v4990
  %v4992 = vpop.f32.mrb[0].mxu0
  %4993 = vmatprep.mubr.bf16.mxu0 %v4870
  %4994 = vmatmul.mubr.bf16.gmra.mrb[0].mxu0 %v4869
  %v4995 = vpop.f32.mrb[0].mxu0
  %v4996 = vadd.f32 0.0, %v4995
  %v4997 = vpop.f32.mrb[0].mxu0
  %v4998 = vpop.f32.mrb[0].mxu0
  %v4999 = vadd.f32 0.0, %v4998
  %v5000 = vpop.f32.mrb[0].mxu0
  %5001 = vdwg.mxu0
  %5002 = vmatprep.subr.bf16.mxu0 0
  %5003 = vmatpush1.bf16.msra.mxu0 %v719
  %5004 = vmatprep.subr.bf16.mxu0 0
  %5005 = vmatpush1.bf16.msra.mxu0 %v720
  %5006 = vmatprep.subr.bf16.mxu0 0
  %5007 = vmatpush1.bf16.msra.mxu0 %v721
  %5008 = vmatprep.subr.bf16.mxu0 0
  %5009 = vmatpush1.bf16.msra.mxu0 %v722
  %5010 = vmatprep.subr.bf16.mxu0 0
  %5011 = vmatpush1.bf16.msra.mxu0 %v723
  %5012 = vmatprep.subr.bf16.mxu0 0
  %5013 = vmatpush1.bf16.msra.mxu0 %v724
  %5014 = vmatprep.subr.bf16.mxu0 0
  %5015 = vmatpush1.bf16.msra.mxu0 %v725
  %5016 = vmatprep.subr.bf16.mxu0 0
  %5017 = vmatpush1.bf16.msra.mxu0 %v726
  %5018 = vmatprep.subr.bf16.mxu0 0
  %5019 = vmatpush1.bf16.msra.mxu0 %v727
  %5020 = vmatprep.subr.bf16.mxu0 0
  %5021 = vmatpush1.bf16.msra.mxu0 %v728
  %5022 = vmatprep.subr.bf16.mxu0 0
  %5023 = vmatpush1.bf16.msra.mxu0 %v729
  %5024 = vmatprep.subr.bf16.mxu0 0
  %5025 = vmatpush1.bf16.msra.mxu0 %v730
  %5026 = vmatprep.subr.bf16.mxu0 0
  %5027 = vmatpush1.bf16.msra.mxu0 %v731
  %5028 = vmatprep.subr.bf16.mxu0 0
  %5029 = vmatpush1.bf16.msra.mxu0 %v732
  %5030 = vmatprep.subr.bf16.mxu0 0
  %5031 = vmatpush1.bf16.msra.mxu0 %v733
  %5032 = vmatprep.subr.bf16.mxu0 0
  %5033 = vmatpush1.bf16.msra.mxu0 %v734
  %5034 = vmatprep.mubr.bf16.mxu0 %v4844
  %5035 = vmatmul.mubr.bf16.gmra.mrb[0].mxu0 %v4843
  %v5036 = vpop.f32.mrb[0].mxu0
  %v5037 = vadd.f32 %v4940, %v5036
  %v5038 = vpop.f32.mrb[0].mxu0
  %v5039 = vpop.f32.mrb[0].mxu0
  %v5040 = vadd.f32 %v4943, %v5039
  %v5041 = vpop.f32.mrb[0].mxu0
  %5042 = vmatprep.mubr.bf16.mxu0 %v4848
  %5043 = vmatmul.mubr.bf16.gmra.mrb[0].mxu0 %v4847
  %v5044 = vpop.f32.mrb[0].mxu0
  %v5045 = vadd.f32 %v4948, %v5044
  %v5046 = vpop.f32.mrb[0].mxu0
  %v5047 = vpop.f32.mrb[0].mxu0
  %v5048 = vadd.f32 %v4951, %v5047
  %v5049 = vpop.f32.mrb[0].mxu0
  %5050 = vmatprep.mubr.bf16.mxu0 %v4852
  %5051 = vmatmul.mubr.bf16.gmra.mrb[0].mxu0 %v4851
  %v5052 = vpop.f32.mrb[0].mxu0
  %v5053 = vadd.f32 %v4956, %v5052
  %v5054 = vpop.f32.mrb[0].mxu0
  %v5055 = vpop.f32.mrb[0].mxu0
  %v5056 = vadd.f32 %v4959, %v5055
  %v5057 = vpop.f32.mrb[0].mxu0
  %5058 = vmatprep.mubr.bf16.mxu0 %v4856
  %5059 = vmatmul.mubr.bf16.gmra.mrb[0].mxu0 %v4855
  %v5060 = vpop.f32.mrb[0].mxu0
  %v5061 = vadd.f32 %v4964, %v5060
  %v5062 = vpop.f32.mrb[0].mxu0
  %v5063 = vpop.f32.mrb[0].mxu0
  %v5064 = vadd.f32 %v4967, %v5063
  %v5065 = vpop.f32.mrb[0].mxu0
  %5066 = vmatprep.mubr.bf16.mxu0 %v4860
  %5067 = vmatmul.mubr.bf16.gmra.mrb[0].mxu0 %v4859
  %v5068 = vpop.f32.mrb[0].mxu0
  %v5069 = vadd.f32 %v4972, %v5068
  %v5070 = vpop.f32.mrb[0].mxu0
  %v5071 = vpop.f32.mrb[0].mxu0
  %v5072 = vadd.f32 %v4975, %v5071
  %v5073 = vpop.f32.mrb[0].mxu0
  %5074 = vmatprep.mubr.bf16.mxu0 %v4864
  %5075 = vmatmul.mubr.bf16.gmra.mrb[0].mxu0 %v4863
  %v5076 = vpop.f32.mrb[0].mxu0
  %v5077 = vadd.f32 %v4980, %v5076
  %v5078 = vpop.f32.mrb[0].mxu0
  %v5079 = vpop.f32.mrb[0].mxu0
  %v5080 = vadd.f32 %v4983, %v5079
  %v5081 = vpop.f32.mrb[0].mxu0
  %5082 = vmatprep.mubr.bf16.mxu0 %v4868
  %5083 = vmatmul.mubr.bf16.gmra.mrb[0].mxu0 %v4867
  %v5084 = vpop.f32.mrb[0].mxu0
  %v5085 = vadd.f32 %v4988, %v5084
  %v5086 = vpop.f32.mrb[0].mxu0
  %v5087 = vpop.f32.mrb[0].mxu0
  %v5088 = vadd.f32 %v4991, %v5087
  %v5089 = vpop.f32.mrb[0].mxu0
  %5090 = vmatprep.mubr.bf16.mxu0 %v4872
  %5091 = vmatmul.mubr.bf16.gmra.mrb[0].mxu0 %v4871
  %v5092 = vpop.f32.mrb[0].mxu0
  %v5093 = vadd.f32 %v4996, %v5092
  %v5094 = vpop.f32.mrb[0].mxu0
  %v5095 = vpop.f32.mrb[0].mxu0
  %v5096 = vadd.f32 %v4999, %v5095
  %v5097 = vpop.f32.mrb[0].mxu0
  %5098 = vdwg.mxu0
  %v5099 = vpack.c.bf16 %v5040, %v5037
  %v5100 = vpack.c.bf16 %v5048, %v5045
  %v5101 = vpack.c.bf16 %v5056, %v5053
  %v5102 = vpack.c.bf16 %v5064, %v5061
  %v5103 = vpack.c.bf16 %v5072, %v5069
  %v5104 = vpack.c.bf16 %v5080, %v5077
  %v5105 = vpack.c.bf16 %v5088, %v5085
  %v5106 = vpack.c.bf16 %v5096, %v5093
  %s5107 = scalar_lea.vmem %s3, 448
  %v5108 = vld [vmem:[%s5107] sm:$0xf]
  %v5109 = vld [vmem:[%s5107 + $0x4] sm:$0xf]
  %v5110 = vld [vmem:[%s5107 + $0x8] sm:$0xf]
  %v5111 = vld [vmem:[%s5107 + $0xc] sm:$0xf]
  %v5112 = vld [vmem:[%s5107 + $0x10] sm:$0xf]
  %v5113 = vld [vmem:[%s5107 + $0x14] sm:$0xf]
  %v5114 = vld [vmem:[%s5107 + $0x18] sm:$0xf]
  %v5115 = vld [vmem:[%s5107 + $0x1c] sm:$0xf]
  %v5116 = vld [vmem:[%s5107 + $0x20] sm:$0xf]
  %v5117 = vld [vmem:[%s5107 + $0x24] sm:$0xf]
  %v5118 = vld [vmem:[%s5107 + $0x28] sm:$0xf]
  %v5119 = vld [vmem:[%s5107 + $0x2c] sm:$0xf]
  %v5120 = vld [vmem:[%s5107 + $0x30] sm:$0xf]
  %v5121 = vld [vmem:[%s5107 + $0x34] sm:$0xf]
  %v5122 = vld [vmem:[%s5107 + $0x38] sm:$0xf]
  %v5123 = vld [vmem:[%s5107 + $0x3c] sm:$0xf]
  %v5140 = vunpack.c.l.b16 %v5108
  %v5141 = vunpack.c.l.b16 %v5109
  %v5142 = vunpack.c.l.b16 %v5110
  %v5143 = vunpack.c.l.b16 %v5111
  %v5144 = vunpack.c.l.b16 %v5112
  %v5145 = vunpack.c.l.b16 %v5113
  %v5146 = vunpack.c.l.b16 %v5114
  %v5147 = vunpack.c.l.b16 %v5115
  %v5148 = vunpack.c.l.b16 %v5116
  %v5149 = vunpack.c.l.b16 %v5117
  %v5150 = vunpack.c.l.b16 %v5118
  %v5151 = vunpack.c.l.b16 %v5119
  %v5152 = vunpack.c.l.b16 %v5120
  %v5153 = vunpack.c.l.b16 %v5121
  %v5154 = vunpack.c.l.b16 %v5122
  %v5155 = vunpack.c.l.b16 %v5123
  %v5156 = vpack.c.b16 %v5141, %v5140
  %v5157 = vpack.c.b16 %v5143, %v5142
  %v5158 = vpack.c.b16 %v5145, %v5144
  %v5159 = vpack.c.b16 %v5147, %v5146
  %v5160 = vpack.c.b16 %v5149, %v5148
  %v5161 = vpack.c.b16 %v5151, %v5150
  %v5162 = vpack.c.b16 %v5153, %v5152
  %v5163 = vpack.c.b16 %v5155, %v5154
  %5172 = vmatprep.subr.bf16.mxu0 0
  %5173 = vmatpush1.bf16.msra.mxu0 %v5156
  %5174 = vmatprep.subr.bf16.mxu0 0
  %5175 = vmatpush1.bf16.msra.mxu0 %v5157
  %5176 = vmatprep.subr.bf16.mxu0 0
  %5177 = vmatpush1.bf16.msra.mxu0 %v5158
  %5178 = vmatprep.subr.bf16.mxu0 0
  %5179 = vmatpush1.bf16.msra.mxu0 %v5159
  %5180 = vmatprep.subr.bf16.mxu0 0
  %5181 = vmatpush1.bf16.msra.mxu0 %v5160
  %5182 = vmatprep.subr.bf16.mxu0 0
  %5183 = vmatpush1.bf16.msra.mxu0 %v5161
  %5184 = vmatprep.subr.bf16.mxu0 0
  %5185 = vmatpush1.bf16.msra.mxu0 %v5162
  %5186 = vmatprep.subr.bf16.mxu0 0
  %5187 = vmatpush1.bf16.msra.mxu0 %v5163
  %5188 = vmatprep.subr.bf16.mxu0 0
  %5189 = vmatpush1.bf16.msra.mxu0 0
  %5190 = vmatprep.subr.bf16.mxu0 0
  %5191 = vmatpush1.bf16.msra.mxu0 0
  %5192 = vmatprep.subr.bf16.mxu0 0
  %5193 = vmatpush1.bf16.msra.mxu0 0
  %5194 = vmatprep.subr.bf16.mxu0 0
  %5195 = vmatpush1.bf16.msra.mxu0 0
  %5196 = vmatprep.subr.bf16.mxu0 0
  %5197 = vmatpush1.bf16.msra.mxu0 0
  %5198 = vmatprep.subr.bf16.mxu0 0
  %5199 = vmatpush1.bf16.msra.mxu0 0
  %5200 = vmatprep.subr.bf16.mxu0 0
  %5201 = vmatpush1.bf16.msra.mxu0 0
  %5202 = vmatprep.subr.bf16.mxu0 0
  %5203 = vmatpush1.bf16.msra.mxu0 0
  %5204 = vmatprep.mubr.bf16.mxu0 0
  %5205 = vmatmul.mubr.bf16.gmra.mrb[0].mxu0 %v5099
  %v5206 = vpop.f32.mrb[0].mxu0
  %v5207 = vadd.f32 0.0, %v5206
  %v5208 = vpop.f32.mrb[0].mxu0
  %v5209 = vpop.f32.mrb[0].mxu0
  %v5210 = vadd.f32 0.0, %v5209
  %v5211 = vpop.f32.mrb[0].mxu0
  %5212 = vmatprep.mubr.bf16.mxu0 0
  %5213 = vmatmul.mubr.bf16.gmra.mrb[0].mxu0 %v5100
  %v5214 = vpop.f32.mrb[0].mxu0
  %v5215 = vadd.f32 0.0, %v5214
  %v5216 = vpop.f32.mrb[0].mxu0
  %v5217 = vpop.f32.mrb[0].mxu0
  %v5218 = vadd.f32 0.0, %v5217
  %v5219 = vpop.f32.mrb[0].mxu0
  %5220 = vmatprep.mubr.bf16.mxu0 0
  %5221 = vmatmul.mubr.bf16.gmra.mrb[0].mxu0 %v5101
  %v5222 = vpop.f32.mrb[0].mxu0
  %v5223 = vadd.f32 0.0, %v5222
  %v5224 = vpop.f32.mrb[0].mxu0
  %v5225 = vpop.f32.mrb[0].mxu0
  %v5226 = vadd.f32 0.0, %v5225
  %v5227 = vpop.f32.mrb[0].mxu0
  %5228 = vmatprep.mubr.bf16.mxu0 0
  %5229 = vmatmul.mubr.bf16.gmra.mrb[0].mxu0 %v5102
  %v5230 = vpop.f32.mrb[0].mxu0
  %v5231 = vadd.f32 0.0, %v5230
  %v5232 = vpop.f32.mrb[0].mxu0
  %v5233 = vpop.f32.mrb[0].mxu0
  %v5234 = vadd.f32 0.0, %v5233
  %v5235 = vpop.f32.mrb[0].mxu0
  %5236 = vmatprep.mubr.bf16.mxu0 0
  %5237 = vmatmul.mubr.bf16.gmra.mrb[0].mxu0 %v5103
  %v5238 = vpop.f32.mrb[0].mxu0
  %v5239 = vadd.f32 0.0, %v5238
  %v5240 = vpop.f32.mrb[0].mxu0
  %v5241 = vpop.f32.mrb[0].mxu0
  %v5242 = vadd.f32 0.0, %v5241
  %v5243 = vpop.f32.mrb[0].mxu0
  %5244 = vmatprep.mubr.bf16.mxu0 0
  %5245 = vmatmul.mubr.bf16.gmra.mrb[0].mxu0 %v5104
  %v5246 = vpop.f32.mrb[0].mxu0
  %v5247 = vadd.f32 0.0, %v5246
  %v5248 = vpop.f32.mrb[0].mxu0
  %v5249 = vpop.f32.mrb[0].mxu0
  %v5250 = vadd.f32 0.0, %v5249
  %v5251 = vpop.f32.mrb[0].mxu0
  %5252 = vmatprep.mubr.bf16.mxu0 0
  %5253 = vmatmul.mubr.bf16.gmra.mrb[0].mxu0 %v5105
  %v5254 = vpop.f32.mrb[0].mxu0
  %v5255 = vadd.f32 0.0, %v5254
  %v5256 = vpop.f32.mrb[0].mxu0
  %v5257 = vpop.f32.mrb[0].mxu0
  %v5258 = vadd.f32 0.0, %v5257
  %v5259 = vpop.f32.mrb[0].mxu0
  %5260 = vmatprep.mubr.bf16.mxu0 0
  %5261 = vmatmul.mubr.bf16.gmra.mrb[0].mxu0 %v5106
  %v5262 = vpop.f32.mrb[0].mxu0
  %v5263 = vadd.f32 0.0, %v5262
  %v5264 = vpop.f32.mrb[0].mxu0
  %v5265 = vpop.f32.mrb[0].mxu0
  %v5266 = vadd.f32 0.0, %v5265
  %v5267 = vpop.f32.mrb[0].mxu0
  %5268 = vdwg.mxu0
  %v5269 = vadd.f32 %v4696, %v5207
  %v5270 = vadd.f32 %v4697, %v5210
  %v5271 = vadd.f32 %v4698, %v5215
  %v5272 = vadd.f32 %v4699, %v5218
  %v5273 = vadd.f32 %v4700, %v5223
  %v5274 = vadd.f32 %v4701, %v5226
  %v5275 = vadd.f32 %v4702, %v5231
  %v5276 = vadd.f32 %v4703, %v5234
  %v5277 = vadd.f32 %v4704, %v5239
  %v5278 = vadd.f32 %v4705, %v5242
  %v5279 = vadd.f32 %v4706, %v5247
  %v5280 = vadd.f32 %v4707, %v5250
  %v5281 = vadd.f32 %v4708, %v5255
  %v5282 = vadd.f32 %v4709, %v5258
  %v5283 = vadd.f32 %v4710, %v5263
  %v5284 = vadd.f32 %v4711, %v5266
  %s5285 = scalar_lea.vmem %s2, 2048
  %v5286 = vld [vmem:[%s5285] sm:$0xff]
  %v5287 = vld [vmem:[%s5285 + $0x8] sm:$0xff]
  %v5288 = vld [vmem:[%s5285 + $0x10] sm:$0xff]
  %v5289 = vld [vmem:[%s5285 + $0x18] sm:$0xff]
  %v5290 = vld [vmem:[%s5285 + $0x20] sm:$0xff]
  %v5291 = vld [vmem:[%s5285 + $0x28] sm:$0xff]
  %v5292 = vld [vmem:[%s5285 + $0x30] sm:$0xff]
  %v5293 = vld [vmem:[%s5285 + $0x38] sm:$0xff]
  %v5294 = vld [vmem:[%s5285 + $0x40] sm:$0xff]
  %v5295 = vld [vmem:[%s5285 + $0x48] sm:$0xff]
  %v5296 = vld [vmem:[%s5285 + $0x50] sm:$0xff]
  %v5297 = vld [vmem:[%s5285 + $0x58] sm:$0xff]
  %v5298 = vld [vmem:[%s5285 + $0x60] sm:$0xff]
  %v5299 = vld [vmem:[%s5285 + $0x68] sm:$0xff]
  %v5300 = vld [vmem:[%s5285 + $0x70] sm:$0xff]
  %v5301 = vld [vmem:[%s5285 + $0x78] sm:$0xff]
  %v5302 = vld [vmem:[%s5285 + $0x80] sm:$0xff]
  %v5303 = vld [vmem:[%s5285 + $0x88] sm:$0xff]
  %v5304 = vld [vmem:[%s5285 + $0x90] sm:$0xff]
  %v5305 = vld [vmem:[%s5285 + $0x98] sm:$0xff]
  %v5306 = vld [vmem:[%s5285 + $0xa0] sm:$0xff]
  %v5307 = vld [vmem:[%s5285 + $0xa8] sm:$0xff]
  %v5308 = vld [vmem:[%s5285 + $0xb0] sm:$0xff]
  %v5309 = vld [vmem:[%s5285 + $0xb8] sm:$0xff]
  %v5310 = vld [vmem:[%s5285 + $0xc0] sm:$0xff]
  %v5311 = vld [vmem:[%s5285 + $0xc8] sm:$0xff]
  %v5312 = vld [vmem:[%s5285 + $0xd0] sm:$0xff]
  %v5313 = vld [vmem:[%s5285 + $0xd8] sm:$0xff]
  %v5314 = vld [vmem:[%s5285 + $0xe0] sm:$0xff]
  %v5315 = vld [vmem:[%s5285 + $0xe8] sm:$0xff]
  %v5316 = vld [vmem:[%s5285 + $0xf0] sm:$0xff]
  %v5317 = vld [vmem:[%s5285 + $0xf8] sm:$0xff]
  %v5350 = vunpack.c.l.b16 %v5286
  %v5351 = vunpack.c.h.b16 %v5286
  %v5352 = vunpack.c.l.b16 %v5287
  %v5353 = vunpack.c.h.b16 %v5287
  %v5354 = vunpack.c.l.b16 %v5288
  %v5355 = vunpack.c.h.b16 %v5288
  %v5356 = vunpack.c.l.b16 %v5289
  %v5357 = vunpack.c.h.b16 %v5289
  %v5358 = vunpack.c.l.b16 %v5290
  %v5359 = vunpack.c.h.b16 %v5290
  %v5360 = vunpack.c.l.b16 %v5291
  %v5361 = vunpack.c.h.b16 %v5291
  %v5362 = vunpack.c.l.b16 %v5292
  %v5363 = vunpack.c.h.b16 %v5292
  %v5364 = vunpack.c.l.b16 %v5293
  %v5365 = vunpack.c.h.b16 %v5293
  %v5366 = vunpack.c.l.b16 %v5294
  %v5367 = vunpack.c.h.b16 %v5294
  %v5368 = vunpack.c.l.b16 %v5295
  %v5369 = vunpack.c.h.b16 %v5295
  %v5370 = vunpack.c.l.b16 %v5296
  %v5371 = vunpack.c.h.b16 %v5296
  %v5372 = vunpack.c.l.b16 %v5297
  %v5373 = vunpack.c.h.b16 %v5297
  %v5374 = vunpack.c.l.b16 %v5298
  %v5375 = vunpack.c.h.b16 %v5298
  %v5376 = vunpack.c.l.b16 %v5299
  %v5377 = vunpack.c.h.b16 %v5299
  %v5378 = vunpack.c.l.b16 %v5300
  %v5379 = vunpack.c.h.b16 %v5300
  %v5380 = vunpack.c.l.b16 %v5301
  %v5381 = vunpack.c.h.b16 %v5301
  %v5382 = vunpack.c.l.b16 %v5302
  %v5383 = vunpack.c.h.b16 %v5302
  %v5384 = vunpack.c.l.b16 %v5303
  %v5385 = vunpack.c.h.b16 %v5303
  %v5386 = vunpack.c.l.b16 %v5304
  %v5387 = vunpack.c.h.b16 %v5304
  %v5388 = vunpack.c.l.b16 %v5305
  %v5389 = vunpack.c.h.b16 %v5305
  %v5390 = vunpack.c.l.b16 %v5306
  %v5391 = vunpack.c.h.b16 %v5306
  %v5392 = vunpack.c.l.b16 %v5307
  %v5393 = vunpack.c.h.b16 %v5307
  %v5394 = vunpack.c.l.b16 %v5308
  %v5395 = vunpack.c.h.b16 %v5308
  %v5396 = vunpack.c.l.b16 %v5309
  %v5397 = vunpack.c.h.b16 %v5309
  %v5398 = vunpack.c.l.b16 %v5310
  %v5399 = vunpack.c.h.b16 %v5310
  %v5400 = vunpack.c.l.b16 %v5311
  %v5401 = vunpack.c.h.b16 %v5311
  %v5402 = vunpack.c.l.b16 %v5312
  %v5403 = vunpack.c.h.b16 %v5312
  %v5404 = vunpack.c.l.b16 %v5313
  %v5405 = vunpack.c.h.b16 %v5313
  %v5406 = vunpack.c.l.b16 %v5314
  %v5407 = vunpack.c.h.b16 %v5314
  %v5408 = vunpack.c.l.b16 %v5315
  %v5409 = vunpack.c.h.b16 %v5315
  %v5410 = vunpack.c.l.b16 %v5316
  %v5411 = vunpack.c.h.b16 %v5316
  %v5412 = vunpack.c.l.b16 %v5317
  %v5413 = vunpack.c.h.b16 %v5317
  %v5414 = vpack.c.b16 %v5354, %v5350
  %v5415 = vpack.c.b16 %v5355, %v5351
  %v5416 = vpack.c.b16 %v5356, %v5352
  %v5417 = vpack.c.b16 %v5357, %v5353
  %v5418 = vpack.c.b16 %v5362, %v5358
  %v5419 = vpack.c.b16 %v5363, %v5359
  %v5420 = vpack.c.b16 %v5364, %v5360
  %v5421 = vpack.c.b16 %v5365, %v5361
  %v5422 = vpack.c.b16 %v5370, %v5366
  %v5423 = vpack.c.b16 %v5371, %v5367
  %v5424 = vpack.c.b16 %v5372, %v5368
  %v5425 = vpack.c.b16 %v5373, %v5369
  %v5426 = vpack.c.b16 %v5378, %v5374
  %v5427 = vpack.c.b16 %v5379, %v5375
  %v5428 = vpack.c.b16 %v5380, %v5376
  %v5429 = vpack.c.b16 %v5381, %v5377
  %v5430 = vpack.c.b16 %v5386, %v5382
  %v5431 = vpack.c.b16 %v5387, %v5383
  %v5432 = vpack.c.b16 %v5388, %v5384
  %v5433 = vpack.c.b16 %v5389, %v5385
  %v5434 = vpack.c.b16 %v5394, %v5390
  %v5435 = vpack.c.b16 %v5395, %v5391
  %v5436 = vpack.c.b16 %v5396, %v5392
  %v5437 = vpack.c.b16 %v5397, %v5393
  %v5438 = vpack.c.b16 %v5402, %v5398
  %v5439 = vpack.c.b16 %v5403, %v5399
  %v5440 = vpack.c.b16 %v5404, %v5400
  %v5441 = vpack.c.b16 %v5405, %v5401
  %v5442 = vpack.c.b16 %v5410, %v5406
  %v5443 = vpack.c.b16 %v5411, %v5407
  %v5444 = vpack.c.b16 %v5412, %v5408
  %v5445 = vpack.c.b16 %v5413, %v5409
  %5478 = vmatprep.subr.bf16.mxu0 0
  %5479 = vmatpush1.bf16.msra.mxu0 %v703
  %5480 = vmatprep.subr.bf16.mxu0 0
  %5481 = vmatpush1.bf16.msra.mxu0 %v704
  %5482 = vmatprep.subr.bf16.mxu0 0
  %5483 = vmatpush1.bf16.msra.mxu0 %v705
  %5484 = vmatprep.subr.bf16.mxu0 0
  %5485 = vmatpush1.bf16.msra.mxu0 %v706
  %5486 = vmatprep.subr.bf16.mxu0 0
  %5487 = vmatpush1.bf16.msra.mxu0 %v707
  %5488 = vmatprep.subr.bf16.mxu0 0
  %5489 = vmatpush1.bf16.msra.mxu0 %v708
  %5490 = vmatprep.subr.bf16.mxu0 0
  %5491 = vmatpush1.bf16.msra.mxu0 %v709
  %5492 = vmatprep.subr.bf16.mxu0 0
  %5493 = vmatpush1.bf16.msra.mxu0 %v710
  %5494 = vmatprep.subr.bf16.mxu0 0
  %5495 = vmatpush1.bf16.msra.mxu0 %v711
  %5496 = vmatprep.subr.bf16.mxu0 0
  %5497 = vmatpush1.bf16.msra.mxu0 %v712
  %5498 = vmatprep.subr.bf16.mxu0 0
  %5499 = vmatpush1.bf16.msra.mxu0 %v713
  %5500 = vmatprep.subr.bf16.mxu0 0
  %5501 = vmatpush1.bf16.msra.mxu0 %v714
  %5502 = vmatprep.subr.bf16.mxu0 0
  %5503 = vmatpush1.bf16.msra.mxu0 %v715
  %5504 = vmatprep.subr.bf16.mxu0 0
  %5505 = vmatpush1.bf16.msra.mxu0 %v716
  %5506 = vmatprep.subr.bf16.mxu0 0
  %5507 = vmatpush1.bf16.msra.mxu0 %v717
  %5508 = vmatprep.subr.bf16.mxu0 0
  %5509 = vmatpush1.bf16.msra.mxu0 %v718
  %5510 = vmatprep.mubr.bf16.mxu0 %v5415
  %5511 = vmatmul.mubr.bf16.gmra.mrb[0].mxu0 %v5414
  %v5512 = vpop.f32.mrb[0].mxu0
  %v5513 = vadd.f32 0.0, %v5512
  %v5514 = vpop.f32.mrb[0].mxu0
  %v5515 = vpop.f32.mrb[0].mxu0
  %v5516 = vadd.f32 0.0, %v5515
  %v5517 = vpop.f32.mrb[0].mxu0
  %5518 = vmatprep.mubr.bf16.mxu0 %v5419
  %5519 = vmatmul.mubr.bf16.gmra.mrb[0].mxu0 %v5418
  %v5520 = vpop.f32.mrb[0].mxu0
  %v5521 = vadd.f32 0.0, %v5520
  %v5522 = vpop.f32.mrb[0].mxu0
  %v5523 = vpop.f32.mrb[0].mxu0
  %v5524 = vadd.f32 0.0, %v5523
  %v5525 = vpop.f32.mrb[0].mxu0
  %5526 = vmatprep.mubr.bf16.mxu0 %v5423
  %5527 = vmatmul.mubr.bf16.gmra.mrb[0].mxu0 %v5422
  %v5528 = vpop.f32.mrb[0].mxu0
  %v5529 = vadd.f32 0.0, %v5528
  %v5530 = vpop.f32.mrb[0].mxu0
  %v5531 = vpop.f32.mrb[0].mxu0
  %v5532 = vadd.f32 0.0, %v5531
  %v5533 = vpop.f32.mrb[0].mxu0
  %5534 = vmatprep.mubr.bf16.mxu0 %v5427
  %5535 = vmatmul.mubr.bf16.gmra.mrb[0].mxu0 %v5426
  %v5536 = vpop.f32.mrb[0].mxu0
  %v5537 = vadd.f32 0.0, %v5536
  %v5538 = vpop.f32.mrb[0].mxu0
  %v5539 = vpop.f32.mrb[0].mxu0
  %v5540 = vadd.f32 0.0, %v5539
  %v5541 = vpop.f32.mrb[0].mxu0
  %5542 = vmatprep.mubr.bf16.mxu0 %v5431
  %5543 = vmatmul.mubr.bf16.gmra.mrb[0].mxu0 %v5430
  %v5544 = vpop.f32.mrb[0].mxu0
  %v5545 = vadd.f32 0.0, %v5544
  %v5546 = vpop.f32.mrb[0].mxu0
  %v5547 = vpop.f32.mrb[0].mxu0
  %v5548 = vadd.f32 0.0, %v5547
  %v5549 = vpop.f32.mrb[0].mxu0
  %5550 = vmatprep.mubr.bf16.mxu0 %v5435
  %5551 = vmatmul.mubr.bf16.gmra.mrb[0].mxu0 %v5434
  %v5552 = vpop.f32.mrb[0].mxu0
  %v5553 = vadd.f32 0.0, %v5552
  %v5554 = vpop.f32.mrb[0].mxu0
  %v5555 = vpop.f32.mrb[0].mxu0
  %v5556 = vadd.f32 0.0, %v5555
  %v5557 = vpop.f32.mrb[0].mxu0
  %5558 = vmatprep.mubr.bf16.mxu0 %v5439
  %5559 = vmatmul.mubr.bf16.gmra.mrb[0].mxu0 %v5438
  %v5560 = vpop.f32.mrb[0].mxu0
  %v5561 = vadd.f32 0.0, %v5560
  %v5562 = vpop.f32.mrb[0].mxu0
  %v5563 = vpop.f32.mrb[0].mxu0
  %v5564 = vadd.f32 0.0, %v5563
  %v5565 = vpop.f32.mrb[0].mxu0
  %5566 = vmatprep.mubr.bf16.mxu0 %v5443
  %5567 = vmatmul.mubr.bf16.gmra.mrb[0].mxu0 %v5442
  %v5568 = vpop.f32.mrb[0].mxu0
  %v5569 = vadd.f32 0.0, %v5568
  %v5570 = vpop.f32.mrb[0].mxu0
  %v5571 = vpop.f32.mrb[0].mxu0
  %v5572 = vadd.f32 0.0, %v5571
  %v5573 = vpop.f32.mrb[0].mxu0
  %5574 = vdwg.mxu0
  %5575 = vmatprep.subr.bf16.mxu0 0
  %5576 = vmatpush1.bf16.msra.mxu0 %v719
  %5577 = vmatprep.subr.bf16.mxu0 0
  %5578 = vmatpush1.bf16.msra.mxu0 %v720
  %5579 = vmatprep.subr.bf16.mxu0 0
  %5580 = vmatpush1.bf16.msra.mxu0 %v721
  %5581 = vmatprep.subr.bf16.mxu0 0
  %5582 = vmatpush1.bf16.msra.mxu0 %v722
  %5583 = vmatprep.subr.bf16.mxu0 0
  %5584 = vmatpush1.bf16.msra.mxu0 %v723
  %5585 = vmatprep.subr.bf16.mxu0 0
  %5586 = vmatpush1.bf16.msra.mxu0 %v724
  %5587 = vmatprep.subr.bf16.mxu0 0
  %5588 = vmatpush1.bf16.msra.mxu0 %v725
  %5589 = vmatprep.subr.bf16.mxu0 0
  %5590 = vmatpush1.bf16.msra.mxu0 %v726
  %5591 = vmatprep.subr.bf16.mxu0 0
  %5592 = vmatpush1.bf16.msra.mxu0 %v727
  %5593 = vmatprep.subr.bf16.mxu0 0
  %5594 = vmatpush1.bf16.msra.mxu0 %v728
  %5595 = vmatprep.subr.bf16.mxu0 0
  %5596 = vmatpush1.bf16.msra.mxu0 %v729
  %5597 = vmatprep.subr.bf16.mxu0 0
  %5598 = vmatpush1.bf16.msra.mxu0 %v730
  %5599 = vmatprep.subr.bf16.mxu0 0
  %5600 = vmatpush1.bf16.msra.mxu0 %v731
  %5601 = vmatprep.subr.bf16.mxu0 0
  %5602 = vmatpush1.bf16.msra.mxu0 %v732
  %5603 = vmatprep.subr.bf16.mxu0 0
  %5604 = vmatpush1.bf16.msra.mxu0 %v733
  %5605 = vmatprep.subr.bf16.mxu0 0
  %5606 = vmatpush1.bf16.msra.mxu0 %v734
  %5607 = vmatprep.mubr.bf16.mxu0 %v5417
  %5608 = vmatmul.mubr.bf16.gmra.mrb[0].mxu0 %v5416
  %v5609 = vpop.f32.mrb[0].mxu0
  %v5610 = vadd.f32 %v5513, %v5609
  %v5611 = vpop.f32.mrb[0].mxu0
  %v5612 = vpop.f32.mrb[0].mxu0
  %v5613 = vadd.f32 %v5516, %v5612
  %v5614 = vpop.f32.mrb[0].mxu0
  %5615 = vmatprep.mubr.bf16.mxu0 %v5421
  %5616 = vmatmul.mubr.bf16.gmra.mrb[0].mxu0 %v5420
  %v5617 = vpop.f32.mrb[0].mxu0
  %v5618 = vadd.f32 %v5521, %v5617
  %v5619 = vpop.f32.mrb[0].mxu0
  %v5620 = vpop.f32.mrb[0].mxu0
  %v5621 = vadd.f32 %v5524, %v5620
  %v5622 = vpop.f32.mrb[0].mxu0
  %5623 = vmatprep.mubr.bf16.mxu0 %v5425
  %5624 = vmatmul.mubr.bf16.gmra.mrb[0].mxu0 %v5424
  %v5625 = vpop.f32.mrb[0].mxu0
  %v5626 = vadd.f32 %v5529, %v5625
  %v5627 = vpop.f32.mrb[0].mxu0
  %v5628 = vpop.f32.mrb[0].mxu0
  %v5629 = vadd.f32 %v5532, %v5628
  %v5630 = vpop.f32.mrb[0].mxu0
  %5631 = vmatprep.mubr.bf16.mxu0 %v5429
  %5632 = vmatmul.mubr.bf16.gmra.mrb[0].mxu0 %v5428
  %v5633 = vpop.f32.mrb[0].mxu0
  %v5634 = vadd.f32 %v5537, %v5633
  %v5635 = vpop.f32.mrb[0].mxu0
  %v5636 = vpop.f32.mrb[0].mxu0
  %v5637 = vadd.f32 %v5540, %v5636
  %v5638 = vpop.f32.mrb[0].mxu0
  %5639 = vmatprep.mubr.bf16.mxu0 %v5433
  %5640 = vmatmul.mubr.bf16.gmra.mrb[0].mxu0 %v5432
  %v5641 = vpop.f32.mrb[0].mxu0
  %v5642 = vadd.f32 %v5545, %v5641
  %v5643 = vpop.f32.mrb[0].mxu0
  %v5644 = vpop.f32.mrb[0].mxu0
  %v5645 = vadd.f32 %v5548, %v5644
  %v5646 = vpop.f32.mrb[0].mxu0
  %5647 = vmatprep.mubr.bf16.mxu0 %v5437
  %5648 = vmatmul.mubr.bf16.gmra.mrb[0].mxu0 %v5436
  %v5649 = vpop.f32.mrb[0].mxu0
  %v5650 = vadd.f32 %v5553, %v5649
  %v5651 = vpop.f32.mrb[0].mxu0
  %v5652 = vpop.f32.mrb[0].mxu0
  %v5653 = vadd.f32 %v5556, %v5652
  %v5654 = vpop.f32.mrb[0].mxu0
  %5655 = vmatprep.mubr.bf16.mxu0 %v5441
  %5656 = vmatmul.mubr.bf16.gmra.mrb[0].mxu0 %v5440
  %v5657 = vpop.f32.mrb[0].mxu0
  %v5658 = vadd.f32 %v5561, %v5657
  %v5659 = vpop.f32.mrb[0].mxu0
  %v5660 = vpop.f32.mrb[0].mxu0
  %v5661 = vadd.f32 %v5564, %v5660
  %v5662 = vpop.f32.mrb[0].mxu0
  %5663 = vmatprep.mubr.bf16.mxu0 %v5445
  %5664 = vmatmul.mubr.bf16.gmra.mrb[0].mxu0 %v5444
  %v5665 = vpop.f32.mrb[0].mxu0
  %v5666 = vadd.f32 %v5569, %v5665
  %v5667 = vpop.f32.mrb[0].mxu0
  %v5668 = vpop.f32.mrb[0].mxu0
  %v5669 = vadd.f32 %v5572, %v5668
  %v5670 = vpop.f32.mrb[0].mxu0
  %5671 = vdwg.mxu0
  %v5672 = vpack.c.bf16 %v5613, %v5610
  %v5673 = vpack.c.bf16 %v5621, %v5618
  %v5674 = vpack.c.bf16 %v5629, %v5626
  %v5675 = vpack.c.bf16 %v5637, %v5634
  %v5676 = vpack.c.bf16 %v5645, %v5642
  %v5677 = vpack.c.bf16 %v5653, %v5650
  %v5678 = vpack.c.bf16 %v5661, %v5658
  %v5679 = vpack.c.bf16 %v5669, %v5666
  %s5680 = scalar_lea.vmem %s3, 512
  %v5681 = vld [vmem:[%s5680] sm:$0xf]
  %v5682 = vld [vmem:[%s5680 + $0x4] sm:$0xf]
  %v5683 = vld [vmem:[%s5680 + $0x8] sm:$0xf]
  %v5684 = vld [vmem:[%s5680 + $0xc] sm:$0xf]
  %v5685 = vld [vmem:[%s5680 + $0x10] sm:$0xf]
  %v5686 = vld [vmem:[%s5680 + $0x14] sm:$0xf]
  %v5687 = vld [vmem:[%s5680 + $0x18] sm:$0xf]
  %v5688 = vld [vmem:[%s5680 + $0x1c] sm:$0xf]
  %v5689 = vld [vmem:[%s5680 + $0x20] sm:$0xf]
  %v5690 = vld [vmem:[%s5680 + $0x24] sm:$0xf]
  %v5691 = vld [vmem:[%s5680 + $0x28] sm:$0xf]
  %v5692 = vld [vmem:[%s5680 + $0x2c] sm:$0xf]
  %v5693 = vld [vmem:[%s5680 + $0x30] sm:$0xf]
  %v5694 = vld [vmem:[%s5680 + $0x34] sm:$0xf]
  %v5695 = vld [vmem:[%s5680 + $0x38] sm:$0xf]
  %v5696 = vld [vmem:[%s5680 + $0x3c] sm:$0xf]
  %v5713 = vunpack.c.l.b16 %v5681
  %v5714 = vunpack.c.l.b16 %v5682
  %v5715 = vunpack.c.l.b16 %v5683
  %v5716 = vunpack.c.l.b16 %v5684
  %v5717 = vunpack.c.l.b16 %v5685
  %v5718 = vunpack.c.l.b16 %v5686
  %v5719 = vunpack.c.l.b16 %v5687
  %v5720 = vunpack.c.l.b16 %v5688
  %v5721 = vunpack.c.l.b16 %v5689
  %v5722 = vunpack.c.l.b16 %v5690
  %v5723 = vunpack.c.l.b16 %v5691
  %v5724 = vunpack.c.l.b16 %v5692
  %v5725 = vunpack.c.l.b16 %v5693
  %v5726 = vunpack.c.l.b16 %v5694
  %v5727 = vunpack.c.l.b16 %v5695
  %v5728 = vunpack.c.l.b16 %v5696
  %v5729 = vpack.c.b16 %v5714, %v5713
  %v5730 = vpack.c.b16 %v5716, %v5715
  %v5731 = vpack.c.b16 %v5718, %v5717
  %v5732 = vpack.c.b16 %v5720, %v5719
  %v5733 = vpack.c.b16 %v5722, %v5721
  %v5734 = vpack.c.b16 %v5724, %v5723
  %v5735 = vpack.c.b16 %v5726, %v5725
  %v5736 = vpack.c.b16 %v5728, %v5727
  %5745 = vmatprep.subr.bf16.mxu0 0
  %5746 = vmatpush1.bf16.msra.mxu0 %v5729
  %5747 = vmatprep.subr.bf16.mxu0 0
  %5748 = vmatpush1.bf16.msra.mxu0 %v5730
  %5749 = vmatprep.subr.bf16.mxu0 0
  %5750 = vmatpush1.bf16.msra.mxu0 %v5731
  %5751 = vmatprep.subr.bf16.mxu0 0
  %5752 = vmatpush1.bf16.msra.mxu0 %v5732
  %5753 = vmatprep.subr.bf16.mxu0 0
  %5754 = vmatpush1.bf16.msra.mxu0 %v5733
  %5755 = vmatprep.subr.bf16.mxu0 0
  %5756 = vmatpush1.bf16.msra.mxu0 %v5734
  %5757 = vmatprep.subr.bf16.mxu0 0
  %5758 = vmatpush1.bf16.msra.mxu0 %v5735
  %5759 = vmatprep.subr.bf16.mxu0 0
  %5760 = vmatpush1.bf16.msra.mxu0 %v5736
  %5761 = vmatprep.subr.bf16.mxu0 0
  %5762 = vmatpush1.bf16.msra.mxu0 0
  %5763 = vmatprep.subr.bf16.mxu0 0
  %5764 = vmatpush1.bf16.msra.mxu0 0
  %5765 = vmatprep.subr.bf16.mxu0 0
  %5766 = vmatpush1.bf16.msra.mxu0 0
  %5767 = vmatprep.subr.bf16.mxu0 0
  %5768 = vmatpush1.bf16.msra.mxu0 0
  %5769 = vmatprep.subr.bf16.mxu0 0
  %5770 = vmatpush1.bf16.msra.mxu0 0
  %5771 = vmatprep.subr.bf16.mxu0 0
  %5772 = vmatpush1.bf16.msra.mxu0 0
  %5773 = vmatprep.subr.bf16.mxu0 0
  %5774 = vmatpush1.bf16.msra.mxu0 0
  %5775 = vmatprep.subr.bf16.mxu0 0
  %5776 = vmatpush1.bf16.msra.mxu0 0
  %5777 = vmatprep.mubr.bf16.mxu0 0
  %5778 = vmatmul.mubr.bf16.gmra.mrb[0].mxu0 %v5672
  %v5779 = vpop.f32.mrb[0].mxu0
  %v5780 = vadd.f32 0.0, %v5779
  %v5781 = vpop.f32.mrb[0].mxu0
  %v5782 = vpop.f32.mrb[0].mxu0
  %v5783 = vadd.f32 0.0, %v5782
  %v5784 = vpop.f32.mrb[0].mxu0
  %5785 = vmatprep.mubr.bf16.mxu0 0
  %5786 = vmatmul.mubr.bf16.gmra.mrb[0].mxu0 %v5673
  %v5787 = vpop.f32.mrb[0].mxu0
  %v5788 = vadd.f32 0.0, %v5787
  %v5789 = vpop.f32.mrb[0].mxu0
  %v5790 = vpop.f32.mrb[0].mxu0
  %v5791 = vadd.f32 0.0, %v5790
  %v5792 = vpop.f32.mrb[0].mxu0
  %5793 = vmatprep.mubr.bf16.mxu0 0
  %5794 = vmatmul.mubr.bf16.gmra.mrb[0].mxu0 %v5674
  %v5795 = vpop.f32.mrb[0].mxu0
  %v5796 = vadd.f32 0.0, %v5795
  %v5797 = vpop.f32.mrb[0].mxu0
  %v5798 = vpop.f32.mrb[0].mxu0
  %v5799 = vadd.f32 0.0, %v5798
  %v5800 = vpop.f32.mrb[0].mxu0
  %5801 = vmatprep.mubr.bf16.mxu0 0
  %5802 = vmatmul.mubr.bf16.gmra.mrb[0].mxu0 %v5675
  %v5803 = vpop.f32.mrb[0].mxu0
  %v5804 = vadd.f32 0.0, %v5803
  %v5805 = vpop.f32.mrb[0].mxu0
  %v5806 = vpop.f32.mrb[0].mxu0
  %v5807 = vadd.f32 0.0, %v5806
  %v5808 = vpop.f32.mrb[0].mxu0
  %5809 = vmatprep.mubr.bf16.mxu0 0
  %5810 = vmatmul.mubr.bf16.gmra.mrb[0].mxu0 %v5676
  %v5811 = vpop.f32.mrb[0].mxu0
  %v5812 = vadd.f32 0.0, %v5811
  %v5813 = vpop.f32.mrb[0].mxu0
  %v5814 = vpop.f32.mrb[0].mxu0
  %v5815 = vadd.f32 0.0, %v5814
  %v5816 = vpop.f32.mrb[0].mxu0
  %5817 = vmatprep.mubr.bf16.mxu0 0
  %5818 = vmatmul.mubr.bf16.gmra.mrb[0].mxu0 %v5677
  %v5819 = vpop.f32.mrb[0].mxu0
  %v5820 = vadd.f32 0.0, %v5819
  %v5821 = vpop.f32.mrb[0].mxu0
  %v5822 = vpop.f32.mrb[0].mxu0
  %v5823 = vadd.f32 0.0, %v5822
  %v5824 = vpop.f32.mrb[0].mxu0
  %5825 = vmatprep.mubr.bf16.mxu0 0
  %5826 = vmatmul.mubr.bf16.gmra.mrb[0].mxu0 %v5678
  %v5827 = vpop.f32.mrb[0].mxu0
  %v5828 = vadd.f32 0.0, %v5827
  %v5829 = vpop.f32.mrb[0].mxu0
  %v5830 = vpop.f32.mrb[0].mxu0
  %v5831 = vadd.f32 0.0, %v5830
  %v5832 = vpop.f32.mrb[0].mxu0
  %5833 = vmatprep.mubr.bf16.mxu0 0
  %5834 = vmatmul.mubr.bf16.gmra.mrb[0].mxu0 %v5679
  %v5835 = vpop.f32.mrb[0].mxu0
  %v5836 = vadd.f32 0.0, %v5835
  %v5837 = vpop.f32.mrb[0].mxu0
  %v5838 = vpop.f32.mrb[0].mxu0
  %v5839 = vadd.f32 0.0, %v5838
  %v5840 = vpop.f32.mrb[0].mxu0
  %5841 = vdwg.mxu0
  %v5842 = vadd.f32 %v5269, %v5780
  %v5843 = vadd.f32 %v5270, %v5783
  %v5844 = vadd.f32 %v5271, %v5788
  %v5845 = vadd.f32 %v5272, %v5791
  %v5846 = vadd.f32 %v5273, %v5796
  %v5847 = vadd.f32 %v5274, %v5799
  %v5848 = vadd.f32 %v5275, %v5804
  %v5849 = vadd.f32 %v5276, %v5807
  %v5850 = vadd.f32 %v5277, %v5812
  %v5851 = vadd.f32 %v5278, %v5815
  %v5852 = vadd.f32 %v5279, %v5820
  %v5853 = vadd.f32 %v5280, %v5823
  %v5854 = vadd.f32 %v5281, %v5828
  %v5855 = vadd.f32 %v5282, %v5831
  %v5856 = vadd.f32 %v5283, %v5836
  %v5857 = vadd.f32 %v5284, %v5839
  %s5858 = scalar_lea.vmem %s2, 2304
  %v5859 = vld [vmem:[%s5858] sm:$0xff]
  %v5860 = vld [vmem:[%s5858 + $0x8] sm:$0xff]
  %v5861 = vld [vmem:[%s5858 + $0x10] sm:$0xff]
  %v5862 = vld [vmem:[%s5858 + $0x18] sm:$0xff]
  %v5863 = vld [vmem:[%s5858 + $0x20] sm:$0xff]
  %v5864 = vld [vmem:[%s5858 + $0x28] sm:$0xff]
  %v5865 = vld [vmem:[%s5858 + $0x30] sm:$0xff]
  %v5866 = vld [vmem:[%s5858 + $0x38] sm:$0xff]
  %v5867 = vld [vmem:[%s5858 + $0x40] sm:$0xff]
  %v5868 = vld [vmem:[%s5858 + $0x48] sm:$0xff]
  %v5869 = vld [vmem:[%s5858 + $0x50] sm:$0xff]
  %v5870 = vld [vmem:[%s5858 + $0x58] sm:$0xff]
  %v5871 = vld [vmem:[%s5858 + $0x60] sm:$0xff]
  %v5872 = vld [vmem:[%s5858 + $0x68] sm:$0xff]
  %v5873 = vld [vmem:[%s5858 + $0x70] sm:$0xff]
  %v5874 = vld [vmem:[%s5858 + $0x78] sm:$0xff]
  %v5875 = vld [vmem:[%s5858 + $0x80] sm:$0xff]
  %v5876 = vld [vmem:[%s5858 + $0x88] sm:$0xff]
  %v5877 = vld [vmem:[%s5858 + $0x90] sm:$0xff]
  %v5878 = vld [vmem:[%s5858 + $0x98] sm:$0xff]
  %v5879 = vld [vmem:[%s5858 + $0xa0] sm:$0xff]
  %v5880 = vld [vmem:[%s5858 + $0xa8] sm:$0xff]
  %v5881 = vld [vmem:[%s5858 + $0xb0] sm:$0xff]
  %v5882 = vld [vmem:[%s5858 + $0xb8] sm:$0xff]
  %v5883 = vld [vmem:[%s5858 + $0xc0] sm:$0xff]
  %v5884 = vld [vmem:[%s5858 + $0xc8] sm:$0xff]
  %v5885 = vld [vmem:[%s5858 + $0xd0] sm:$0xff]
  %v5886 = vld [vmem:[%s5858 + $0xd8] sm:$0xff]
  %v5887 = vld [vmem:[%s5858 + $0xe0] sm:$0xff]
  %v5888 = vld [vmem:[%s5858 + $0xe8] sm:$0xff]
  %v5889 = vld [vmem:[%s5858 + $0xf0] sm:$0xff]
  %v5890 = vld [vmem:[%s5858 + $0xf8] sm:$0xff]
  %v5923 = vunpack.c.l.b16 %v5859
  %v5924 = vunpack.c.h.b16 %v5859
  %v5925 = vunpack.c.l.b16 %v5860
  %v5926 = vunpack.c.h.b16 %v5860
  %v5927 = vunpack.c.l.b16 %v5861
  %v5928 = vunpack.c.h.b16 %v5861
  %v5929 = vunpack.c.l.b16 %v5862
  %v5930 = vunpack.c.h.b16 %v5862
  %v5931 = vunpack.c.l.b16 %v5863
  %v5932 = vunpack.c.h.b16 %v5863
  %v5933 = vunpack.c.l.b16 %v5864
  %v5934 = vunpack.c.h.b16 %v5864
  %v5935 = vunpack.c.l.b16 %v5865
  %v5936 = vunpack.c.h.b16 %v5865
  %v5937 = vunpack.c.l.b16 %v5866
  %v5938 = vunpack.c.h.b16 %v5866
  %v5939 = vunpack.c.l.b16 %v5867
  %v5940 = vunpack.c.h.b16 %v5867
  %v5941 = vunpack.c.l.b16 %v5868
  %v5942 = vunpack.c.h.b16 %v5868
  %v5943 = vunpack.c.l.b16 %v5869
  %v5944 = vunpack.c.h.b16 %v5869
  %v5945 = vunpack.c.l.b16 %v5870
  %v5946 = vunpack.c.h.b16 %v5870
  %v5947 = vunpack.c.l.b16 %v5871
  %v5948 = vunpack.c.h.b16 %v5871
  %v5949 = vunpack.c.l.b16 %v5872
  %v5950 = vunpack.c.h.b16 %v5872
  %v5951 = vunpack.c.l.b16 %v5873
  %v5952 = vunpack.c.h.b16 %v5873
  %v5953 = vunpack.c.l.b16 %v5874
  %v5954 = vunpack.c.h.b16 %v5874
  %v5955 = vunpack.c.l.b16 %v5875
  %v5956 = vunpack.c.h.b16 %v5875
  %v5957 = vunpack.c.l.b16 %v5876
  %v5958 = vunpack.c.h.b16 %v5876
  %v5959 = vunpack.c.l.b16 %v5877
  %v5960 = vunpack.c.h.b16 %v5877
  %v5961 = vunpack.c.l.b16 %v5878
  %v5962 = vunpack.c.h.b16 %v5878
  %v5963 = vunpack.c.l.b16 %v5879
  %v5964 = vunpack.c.h.b16 %v5879
  %v5965 = vunpack.c.l.b16 %v5880
  %v5966 = vunpack.c.h.b16 %v5880
  %v5967 = vunpack.c.l.b16 %v5881
  %v5968 = vunpack.c.h.b16 %v5881
  %v5969 = vunpack.c.l.b16 %v5882
  %v5970 = vunpack.c.h.b16 %v5882
  %v5971 = vunpack.c.l.b16 %v5883
  %v5972 = vunpack.c.h.b16 %v5883
  %v5973 = vunpack.c.l.b16 %v5884
  %v5974 = vunpack.c.h.b16 %v5884
  %v5975 = vunpack.c.l.b16 %v5885
  %v5976 = vunpack.c.h.b16 %v5885
  %v5977 = vunpack.c.l.b16 %v5886
  %v5978 = vunpack.c.h.b16 %v5886
  %v5979 = vunpack.c.l.b16 %v5887
  %v5980 = vunpack.c.h.b16 %v5887
  %v5981 = vunpack.c.l.b16 %v5888
  %v5982 = vunpack.c.h.b16 %v5888
  %v5983 = vunpack.c.l.b16 %v5889
  %v5984 = vunpack.c.h.b16 %v5889
  %v5985 = vunpack.c.l.b16 %v5890
  %v5986 = vunpack.c.h.b16 %v5890
  %v5987 = vpack.c.b16 %v5927, %v5923
  %v5988 = vpack.c.b16 %v5928, %v5924
  %v5989 = vpack.c.b16 %v5929, %v5925
  %v5990 = vpack.c.b16 %v5930, %v5926
  %v5991 = vpack.c.b16 %v5935, %v5931
  %v5992 = vpack.c.b16 %v5936, %v5932
  %v5993 = vpack.c.b16 %v5937, %v5933
  %v5994 = vpack.c.b16 %v5938, %v5934
  %v5995 = vpack.c.b16 %v5943, %v5939
  %v5996 = vpack.c.b16 %v5944, %v5940
  %v5997 = vpack.c.b16 %v5945, %v5941
  %v5998 = vpack.c.b16 %v5946, %v5942
  %v5999 = vpack.c.b16 %v5951, %v5947
  %v6000 = vpack.c.b16 %v5952, %v5948
  %v6001 = vpack.c.b16 %v5953, %v5949
  %v6002 = vpack.c.b16 %v5954, %v5950
  %v6003 = vpack.c.b16 %v5959, %v5955
  %v6004 = vpack.c.b16 %v5960, %v5956
  %v6005 = vpack.c.b16 %v5961, %v5957
  %v6006 = vpack.c.b16 %v5962, %v5958
  %v6007 = vpack.c.b16 %v5967, %v5963
  %v6008 = vpack.c.b16 %v5968, %v5964
  %v6009 = vpack.c.b16 %v5969, %v5965
  %v6010 = vpack.c.b16 %v5970, %v5966
  %v6011 = vpack.c.b16 %v5975, %v5971
  %v6012 = vpack.c.b16 %v5976, %v5972
  %v6013 = vpack.c.b16 %v5977, %v5973
  %v6014 = vpack.c.b16 %v5978, %v5974
  %v6015 = vpack.c.b16 %v5983, %v5979
  %v6016 = vpack.c.b16 %v5984, %v5980
  %v6017 = vpack.c.b16 %v5985, %v5981
  %v6018 = vpack.c.b16 %v5986, %v5982
  %6051 = vmatprep.subr.bf16.mxu0 0
  %6052 = vmatpush1.bf16.msra.mxu0 %v703
  %6053 = vmatprep.subr.bf16.mxu0 0
  %6054 = vmatpush1.bf16.msra.mxu0 %v704
  %6055 = vmatprep.subr.bf16.mxu0 0
  %6056 = vmatpush1.bf16.msra.mxu0 %v705
  %6057 = vmatprep.subr.bf16.mxu0 0
  %6058 = vmatpush1.bf16.msra.mxu0 %v706
  %6059 = vmatprep.subr.bf16.mxu0 0
  %6060 = vmatpush1.bf16.msra.mxu0 %v707
  %6061 = vmatprep.subr.bf16.mxu0 0
  %6062 = vmatpush1.bf16.msra.mxu0 %v708
  %6063 = vmatprep.subr.bf16.mxu0 0
  %6064 = vmatpush1.bf16.msra.mxu0 %v709
  %6065 = vmatprep.subr.bf16.mxu0 0
  %6066 = vmatpush1.bf16.msra.mxu0 %v710
  %6067 = vmatprep.subr.bf16.mxu0 0
  %6068 = vmatpush1.bf16.msra.mxu0 %v711
  %6069 = vmatprep.subr.bf16.mxu0 0
  %6070 = vmatpush1.bf16.msra.mxu0 %v712
  %6071 = vmatprep.subr.bf16.mxu0 0
  %6072 = vmatpush1.bf16.msra.mxu0 %v713
  %6073 = vmatprep.subr.bf16.mxu0 0
  %6074 = vmatpush1.bf16.msra.mxu0 %v714
  %6075 = vmatprep.subr.bf16.mxu0 0
  %6076 = vmatpush1.bf16.msra.mxu0 %v715
  %6077 = vmatprep.subr.bf16.mxu0 0
  %6078 = vmatpush1.bf16.msra.mxu0 %v716
  %6079 = vmatprep.subr.bf16.mxu0 0
  %6080 = vmatpush1.bf16.msra.mxu0 %v717
  %6081 = vmatprep.subr.bf16.mxu0 0
  %6082 = vmatpush1.bf16.msra.mxu0 %v718
  %6083 = vmatprep.mubr.bf16.mxu0 %v5988
  %6084 = vmatmul.mubr.bf16.gmra.mrb[0].mxu0 %v5987
  %v6085 = vpop.f32.mrb[0].mxu0
  %v6086 = vadd.f32 0.0, %v6085
  %v6087 = vpop.f32.mrb[0].mxu0
  %v6088 = vpop.f32.mrb[0].mxu0
  %v6089 = vadd.f32 0.0, %v6088
  %v6090 = vpop.f32.mrb[0].mxu0
  %6091 = vmatprep.mubr.bf16.mxu0 %v5992
  %6092 = vmatmul.mubr.bf16.gmra.mrb[0].mxu0 %v5991
  %v6093 = vpop.f32.mrb[0].mxu0
  %v6094 = vadd.f32 0.0, %v6093
  %v6095 = vpop.f32.mrb[0].mxu0
  %v6096 = vpop.f32.mrb[0].mxu0
  %v6097 = vadd.f32 0.0, %v6096
  %v6098 = vpop.f32.mrb[0].mxu0
  %6099 = vmatprep.mubr.bf16.mxu0 %v5996
  %6100 = vmatmul.mubr.bf16.gmra.mrb[0].mxu0 %v5995
  %v6101 = vpop.f32.mrb[0].mxu0
  %v6102 = vadd.f32 0.0, %v6101
  %v6103 = vpop.f32.mrb[0].mxu0
  %v6104 = vpop.f32.mrb[0].mxu0
  %v6105 = vadd.f32 0.0, %v6104
  %v6106 = vpop.f32.mrb[0].mxu0
  %6107 = vmatprep.mubr.bf16.mxu0 %v6000
  %6108 = vmatmul.mubr.bf16.gmra.mrb[0].mxu0 %v5999
  %v6109 = vpop.f32.mrb[0].mxu0
  %v6110 = vadd.f32 0.0, %v6109
  %v6111 = vpop.f32.mrb[0].mxu0
  %v6112 = vpop.f32.mrb[0].mxu0
  %v6113 = vadd.f32 0.0, %v6112
  %v6114 = vpop.f32.mrb[0].mxu0
  %6115 = vmatprep.mubr.bf16.mxu0 %v6004
  %6116 = vmatmul.mubr.bf16.gmra.mrb[0].mxu0 %v6003
  %v6117 = vpop.f32.mrb[0].mxu0
  %v6118 = vadd.f32 0.0, %v6117
  %v6119 = vpop.f32.mrb[0].mxu0
  %v6120 = vpop.f32.mrb[0].mxu0
  %v6121 = vadd.f32 0.0, %v6120
  %v6122 = vpop.f32.mrb[0].mxu0
  %6123 = vmatprep.mubr.bf16.mxu0 %v6008
  %6124 = vmatmul.mubr.bf16.gmra.mrb[0].mxu0 %v6007
  %v6125 = vpop.f32.mrb[0].mxu0
  %v6126 = vadd.f32 0.0, %v6125
  %v6127 = vpop.f32.mrb[0].mxu0
  %v6128 = vpop.f32.mrb[0].mxu0
  %v6129 = vadd.f32 0.0, %v6128
  %v6130 = vpop.f32.mrb[0].mxu0
  %6131 = vmatprep.mubr.bf16.mxu0 %v6012
  %6132 = vmatmul.mubr.bf16.gmra.mrb[0].mxu0 %v6011
  %v6133 = vpop.f32.mrb[0].mxu0
  %v6134 = vadd.f32 0.0, %v6133
  %v6135 = vpop.f32.mrb[0].mxu0
  %v6136 = vpop.f32.mrb[0].mxu0
  %v6137 = vadd.f32 0.0, %v6136
  %v6138 = vpop.f32.mrb[0].mxu0
  %6139 = vmatprep.mubr.bf16.mxu0 %v6016
  %6140 = vmatmul.mubr.bf16.gmra.mrb[0].mxu0 %v6015
  %v6141 = vpop.f32.mrb[0].mxu0
  %v6142 = vadd.f32 0.0, %v6141
  %v6143 = vpop.f32.mrb[0].mxu0
  %v6144 = vpop.f32.mrb[0].mxu0
  %v6145 = vadd.f32 0.0, %v6144
  %v6146 = vpop.f32.mrb[0].mxu0
  %6147 = vdwg.mxu0
  %6148 = vmatprep.subr.bf16.mxu0 0
  %6149 = vmatpush1.bf16.msra.mxu0 %v719
  %6150 = vmatprep.subr.bf16.mxu0 0
  %6151 = vmatpush1.bf16.msra.mxu0 %v720
  %6152 = vmatprep.subr.bf16.mxu0 0
  %6153 = vmatpush1.bf16.msra.mxu0 %v721
  %6154 = vmatprep.subr.bf16.mxu0 0
  %6155 = vmatpush1.bf16.msra.mxu0 %v722
  %6156 = vmatprep.subr.bf16.mxu0 0
  %6157 = vmatpush1.bf16.msra.mxu0 %v723
  %6158 = vmatprep.subr.bf16.mxu0 0
  %6159 = vmatpush1.bf16.msra.mxu0 %v724
  %6160 = vmatprep.subr.bf16.mxu0 0
  %6161 = vmatpush1.bf16.msra.mxu0 %v725
  %6162 = vmatprep.subr.bf16.mxu0 0
  %6163 = vmatpush1.bf16.msra.mxu0 %v726
  %6164 = vmatprep.subr.bf16.mxu0 0
  %6165 = vmatpush1.bf16.msra.mxu0 %v727
  %6166 = vmatprep.subr.bf16.mxu0 0
  %6167 = vmatpush1.bf16.msra.mxu0 %v728
  %6168 = vmatprep.subr.bf16.mxu0 0
  %6169 = vmatpush1.bf16.msra.mxu0 %v729
  %6170 = vmatprep.subr.bf16.mxu0 0
  %6171 = vmatpush1.bf16.msra.mxu0 %v730
  %6172 = vmatprep.subr.bf16.mxu0 0
  %6173 = vmatpush1.bf16.msra.mxu0 %v731
  %6174 = vmatprep.subr.bf16.mxu0 0
  %6175 = vmatpush1.bf16.msra.mxu0 %v732
  %6176 = vmatprep.subr.bf16.mxu0 0
  %6177 = vmatpush1.bf16.msra.mxu0 %v733
  %6178 = vmatprep.subr.bf16.mxu0 0
  %6179 = vmatpush1.bf16.msra.mxu0 %v734
  %6180 = vmatprep.mubr.bf16.mxu0 %v5990
  %6181 = vmatmul.mubr.bf16.gmra.mrb[0].mxu0 %v5989
  %v6182 = vpop.f32.mrb[0].mxu0
  %v6183 = vadd.f32 %v6086, %v6182
  %v6184 = vpop.f32.mrb[0].mxu0
  %v6185 = vpop.f32.mrb[0].mxu0
  %v6186 = vadd.f32 %v6089, %v6185
  %v6187 = vpop.f32.mrb[0].mxu0
  %6188 = vmatprep.mubr.bf16.mxu0 %v5994
  %6189 = vmatmul.mubr.bf16.gmra.mrb[0].mxu0 %v5993
  %v6190 = vpop.f32.mrb[0].mxu0
  %v6191 = vadd.f32 %v6094, %v6190
  %v6192 = vpop.f32.mrb[0].mxu0
  %v6193 = vpop.f32.mrb[0].mxu0
  %v6194 = vadd.f32 %v6097, %v6193
  %v6195 = vpop.f32.mrb[0].mxu0
  %6196 = vmatprep.mubr.bf16.mxu0 %v5998
  %6197 = vmatmul.mubr.bf16.gmra.mrb[0].mxu0 %v5997
  %v6198 = vpop.f32.mrb[0].mxu0
  %v6199 = vadd.f32 %v6102, %v6198
  %v6200 = vpop.f32.mrb[0].mxu0
  %v6201 = vpop.f32.mrb[0].mxu0
  %v6202 = vadd.f32 %v6105, %v6201
  %v6203 = vpop.f32.mrb[0].mxu0
  %6204 = vmatprep.mubr.bf16.mxu0 %v6002
  %6205 = vmatmul.mubr.bf16.gmra.mrb[0].mxu0 %v6001
  %v6206 = vpop.f32.mrb[0].mxu0
  %v6207 = vadd.f32 %v6110, %v6206
  %v6208 = vpop.f32.mrb[0].mxu0
  %v6209 = vpop.f32.mrb[0].mxu0
  %v6210 = vadd.f32 %v6113, %v6209
  %v6211 = vpop.f32.mrb[0].mxu0
  %6212 = vmatprep.mubr.bf16.mxu0 %v6006
  %6213 = vmatmul.mubr.bf16.gmra.mrb[0].mxu0 %v6005
  %v6214 = vpop.f32.mrb[0].mxu0
  %v6215 = vadd.f32 %v6118, %v6214
  %v6216 = vpop.f32.mrb[0].mxu0
  %v6217 = vpop.f32.mrb[0].mxu0
  %v6218 = vadd.f32 %v6121, %v6217
  %v6219 = vpop.f32.mrb[0].mxu0
  %6220 = vmatprep.mubr.bf16.mxu0 %v6010
  %6221 = vmatmul.mubr.bf16.gmra.mrb[0].mxu0 %v6009
  %v6222 = vpop.f32.mrb[0].mxu0
  %v6223 = vadd.f32 %v6126, %v6222
  %v6224 = vpop.f32.mrb[0].mxu0
  %v6225 = vpop.f32.mrb[0].mxu0
  %v6226 = vadd.f32 %v6129, %v6225
  %v6227 = vpop.f32.mrb[0].mxu0
  %6228 = vmatprep.mubr.bf16.mxu0 %v6014
  %6229 = vmatmul.mubr.bf16.gmra.mrb[0].mxu0 %v6013
  %v6230 = vpop.f32.mrb[0].mxu0
  %v6231 = vadd.f32 %v6134, %v6230
  %v6232 = vpop.f32.mrb[0].mxu0
  %v6233 = vpop.f32.mrb[0].mxu0
  %v6234 = vadd.f32 %v6137, %v6233
  %v6235 = vpop.f32.mrb[0].mxu0
  %6236 = vmatprep.mubr.bf16.mxu0 %v6018
  %6237 = vmatmul.mubr.bf16.gmra.mrb[0].mxu0 %v6017
  %v6238 = vpop.f32.mrb[0].mxu0
  %v6239 = vadd.f32 %v6142, %v6238
  %v6240 = vpop.f32.mrb[0].mxu0
  %v6241 = vpop.f32.mrb[0].mxu0
  %v6242 = vadd.f32 %v6145, %v6241
  %v6243 = vpop.f32.mrb[0].mxu0
  %6244 = vdwg.mxu0
  %v6245 = vpack.c.bf16 %v6186, %v6183
  %v6246 = vpack.c.bf16 %v6194, %v6191
  %v6247 = vpack.c.bf16 %v6202, %v6199
  %v6248 = vpack.c.bf16 %v6210, %v6207
  %v6249 = vpack.c.bf16 %v6218, %v6215
  %v6250 = vpack.c.bf16 %v6226, %v6223
  %v6251 = vpack.c.bf16 %v6234, %v6231
  %v6252 = vpack.c.bf16 %v6242, %v6239
  %s6253 = scalar_lea.vmem %s3, 576
  %v6254 = vld [vmem:[%s6253] sm:$0xf]
  %v6255 = vld [vmem:[%s6253 + $0x4] sm:$0xf]
  %v6256 = vld [vmem:[%s6253 + $0x8] sm:$0xf]
  %v6257 = vld [vmem:[%s6253 + $0xc] sm:$0xf]
  %v6258 = vld [vmem:[%s6253 + $0x10] sm:$0xf]
  %v6259 = vld [vmem:[%s6253 + $0x14] sm:$0xf]
  %v6260 = vld [vmem:[%s6253 + $0x18] sm:$0xf]
  %v6261 = vld [vmem:[%s6253 + $0x1c] sm:$0xf]
  %v6262 = vld [vmem:[%s6253 + $0x20] sm:$0xf]
  %v6263 = vld [vmem:[%s6253 + $0x24] sm:$0xf]
  %v6264 = vld [vmem:[%s6253 + $0x28] sm:$0xf]
  %v6265 = vld [vmem:[%s6253 + $0x2c] sm:$0xf]
  %v6266 = vld [vmem:[%s6253 + $0x30] sm:$0xf]
  %v6267 = vld [vmem:[%s6253 + $0x34] sm:$0xf]
  %v6268 = vld [vmem:[%s6253 + $0x38] sm:$0xf]
  %v6269 = vld [vmem:[%s6253 + $0x3c] sm:$0xf]
  %v6286 = vunpack.c.l.b16 %v6254
  %v6287 = vunpack.c.l.b16 %v6255
  %v6288 = vunpack.c.l.b16 %v6256
  %v6289 = vunpack.c.l.b16 %v6257
  %v6290 = vunpack.c.l.b16 %v6258
  %v6291 = vunpack.c.l.b16 %v6259
  %v6292 = vunpack.c.l.b16 %v6260
  %v6293 = vunpack.c.l.b16 %v6261
  %v6294 = vunpack.c.l.b16 %v6262
  %v6295 = vunpack.c.l.b16 %v6263
  %v6296 = vunpack.c.l.b16 %v6264
  %v6297 = vunpack.c.l.b16 %v6265
  %v6298 = vunpack.c.l.b16 %v6266
  %v6299 = vunpack.c.l.b16 %v6267
  %v6300 = vunpack.c.l.b16 %v6268
  %v6301 = vunpack.c.l.b16 %v6269
  %v6302 = vpack.c.b16 %v6287, %v6286
  %v6303 = vpack.c.b16 %v6289, %v6288
  %v6304 = vpack.c.b16 %v6291, %v6290
  %v6305 = vpack.c.b16 %v6293, %v6292
  %v6306 = vpack.c.b16 %v6295, %v6294
  %v6307 = vpack.c.b16 %v6297, %v6296
  %v6308 = vpack.c.b16 %v6299, %v6298
  %v6309 = vpack.c.b16 %v6301, %v6300
  %6318 = vmatprep.subr.bf16.mxu0 0
  %6319 = vmatpush1.bf16.msra.mxu0 %v6302
  %6320 = vmatprep.subr.bf16.mxu0 0
  %6321 = vmatpush1.bf16.msra.mxu0 %v6303
  %6322 = vmatprep.subr.bf16.mxu0 0
  %6323 = vmatpush1.bf16.msra.mxu0 %v6304
  %6324 = vmatprep.subr.bf16.mxu0 0
  %6325 = vmatpush1.bf16.msra.mxu0 %v6305
  %6326 = vmatprep.subr.bf16.mxu0 0
  %6327 = vmatpush1.bf16.msra.mxu0 %v6306
  %6328 = vmatprep.subr.bf16.mxu0 0
  %6329 = vmatpush1.bf16.msra.mxu0 %v6307
  %6330 = vmatprep.subr.bf16.mxu0 0
  %6331 = vmatpush1.bf16.msra.mxu0 %v6308
  %6332 = vmatprep.subr.bf16.mxu0 0
  %6333 = vmatpush1.bf16.msra.mxu0 %v6309
  %6334 = vmatprep.subr.bf16.mxu0 0
  %6335 = vmatpush1.bf16.msra.mxu0 0
  %6336 = vmatprep.subr.bf16.mxu0 0
  %6337 = vmatpush1.bf16.msra.mxu0 0
  %6338 = vmatprep.subr.bf16.mxu0 0
  %6339 = vmatpush1.bf16.msra.mxu0 0
  %6340 = vmatprep.subr.bf16.mxu0 0
  %6341 = vmatpush1.bf16.msra.mxu0 0
  %6342 = vmatprep.subr.bf16.mxu0 0
  %6343 = vmatpush1.bf16.msra.mxu0 0
  %6344 = vmatprep.subr.bf16.mxu0 0
  %6345 = vmatpush1.bf16.msra.mxu0 0
  %6346 = vmatprep.subr.bf16.mxu0 0
  %6347 = vmatpush1.bf16.msra.mxu0 0
  %6348 = vmatprep.subr.bf16.mxu0 0
  %6349 = vmatpush1.bf16.msra.mxu0 0
  %6350 = vmatprep.mubr.bf16.mxu0 0
  %6351 = vmatmul.mubr.bf16.gmra.mrb[0].mxu0 %v6245
  %v6352 = vpop.f32.mrb[0].mxu0
  %v6353 = vadd.f32 0.0, %v6352
  %v6354 = vpop.f32.mrb[0].mxu0
  %v6355 = vpop.f32.mrb[0].mxu0
  %v6356 = vadd.f32 0.0, %v6355
  %v6357 = vpop.f32.mrb[0].mxu0
  %6358 = vmatprep.mubr.bf16.mxu0 0
  %6359 = vmatmul.mubr.bf16.gmra.mrb[0].mxu0 %v6246
  %v6360 = vpop.f32.mrb[0].mxu0
  %v6361 = vadd.f32 0.0, %v6360
  %v6362 = vpop.f32.mrb[0].mxu0
  %v6363 = vpop.f32.mrb[0].mxu0
  %v6364 = vadd.f32 0.0, %v6363
  %v6365 = vpop.f32.mrb[0].mxu0
  %6366 = vmatprep.mubr.bf16.mxu0 0
  %6367 = vmatmul.mubr.bf16.gmra.mrb[0].mxu0 %v6247
  %v6368 = vpop.f32.mrb[0].mxu0
  %v6369 = vadd.f32 0.0, %v6368
  %v6370 = vpop.f32.mrb[0].mxu0
  %v6371 = vpop.f32.mrb[0].mxu0
  %v6372 = vadd.f32 0.0, %v6371
  %v6373 = vpop.f32.mrb[0].mxu0
  %6374 = vmatprep.mubr.bf16.mxu0 0
  %6375 = vmatmul.mubr.bf16.gmra.mrb[0].mxu0 %v6248
  %v6376 = vpop.f32.mrb[0].mxu0
  %v6377 = vadd.f32 0.0, %v6376
  %v6378 = vpop.f32.mrb[0].mxu0
  %v6379 = vpop.f32.mrb[0].mxu0
  %v6380 = vadd.f32 0.0, %v6379
  %v6381 = vpop.f32.mrb[0].mxu0
  %6382 = vmatprep.mubr.bf16.mxu0 0
  %6383 = vmatmul.mubr.bf16.gmra.mrb[0].mxu0 %v6249
  %v6384 = vpop.f32.mrb[0].mxu0
  %v6385 = vadd.f32 0.0, %v6384
  %v6386 = vpop.f32.mrb[0].mxu0
  %v6387 = vpop.f32.mrb[0].mxu0
  %v6388 = vadd.f32 0.0, %v6387
  %v6389 = vpop.f32.mrb[0].mxu0
  %6390 = vmatprep.mubr.bf16.mxu0 0
  %6391 = vmatmul.mubr.bf16.gmra.mrb[0].mxu0 %v6250
  %v6392 = vpop.f32.mrb[0].mxu0
  %v6393 = vadd.f32 0.0, %v6392
  %v6394 = vpop.f32.mrb[0].mxu0
  %v6395 = vpop.f32.mrb[0].mxu0
  %v6396 = vadd.f32 0.0, %v6395
  %v6397 = vpop.f32.mrb[0].mxu0
  %6398 = vmatprep.mubr.bf16.mxu0 0
  %6399 = vmatmul.mubr.bf16.gmra.mrb[0].mxu0 %v6251
  %v6400 = vpop.f32.mrb[0].mxu0
  %v6401 = vadd.f32 0.0, %v6400
  %v6402 = vpop.f32.mrb[0].mxu0
  %v6403 = vpop.f32.mrb[0].mxu0
  %v6404 = vadd.f32 0.0, %v6403
  %v6405 = vpop.f32.mrb[0].mxu0
  %6406 = vmatprep.mubr.bf16.mxu0 0
  %6407 = vmatmul.mubr.bf16.gmra.mrb[0].mxu0 %v6252
  %v6408 = vpop.f32.mrb[0].mxu0
  %v6409 = vadd.f32 0.0, %v6408
  %v6410 = vpop.f32.mrb[0].mxu0
  %v6411 = vpop.f32.mrb[0].mxu0
  %v6412 = vadd.f32 0.0, %v6411
  %v6413 = vpop.f32.mrb[0].mxu0
  %6414 = vdwg.mxu0
  %v6415 = vadd.f32 %v5842, %v6353
  %v6416 = vadd.f32 %v5843, %v6356
  %v6417 = vadd.f32 %v5844, %v6361
  %v6418 = vadd.f32 %v5845, %v6364
  %v6419 = vadd.f32 %v5846, %v6369
  %v6420 = vadd.f32 %v5847, %v6372
  %v6421 = vadd.f32 %v5848, %v6377
  %v6422 = vadd.f32 %v5849, %v6380
  %v6423 = vadd.f32 %v5850, %v6385
  %v6424 = vadd.f32 %v5851, %v6388
  %v6425 = vadd.f32 %v5852, %v6393
  %v6426 = vadd.f32 %v5853, %v6396
  %v6427 = vadd.f32 %v5854, %v6401
  %v6428 = vadd.f32 %v5855, %v6404
  %v6429 = vadd.f32 %v5856, %v6409
  %v6430 = vadd.f32 %v5857, %v6412
  %s6431 = scalar_lea.vmem %s2, 2560
  %v6432 = vld [vmem:[%s6431] sm:$0xff]
  %v6433 = vld [vmem:[%s6431 + $0x8] sm:$0xff]
  %v6434 = vld [vmem:[%s6431 + $0x10] sm:$0xff]
  %v6435 = vld [vmem:[%s6431 + $0x18] sm:$0xff]
  %v6436 = vld [vmem:[%s6431 + $0x20] sm:$0xff]
  %v6437 = vld [vmem:[%s6431 + $0x28] sm:$0xff]
  %v6438 = vld [vmem:[%s6431 + $0x30] sm:$0xff]
  %v6439 = vld [vmem:[%s6431 + $0x38] sm:$0xff]
  %v6440 = vld [vmem:[%s6431 + $0x40] sm:$0xff]
  %v6441 = vld [vmem:[%s6431 + $0x48] sm:$0xff]
  %v6442 = vld [vmem:[%s6431 + $0x50] sm:$0xff]
  %v6443 = vld [vmem:[%s6431 + $0x58] sm:$0xff]
  %v6444 = vld [vmem:[%s6431 + $0x60] sm:$0xff]
  %v6445 = vld [vmem:[%s6431 + $0x68] sm:$0xff]
  %v6446 = vld [vmem:[%s6431 + $0x70] sm:$0xff]
  %v6447 = vld [vmem:[%s6431 + $0x78] sm:$0xff]
  %v6448 = vld [vmem:[%s6431 + $0x80] sm:$0xff]
  %v6449 = vld [vmem:[%s6431 + $0x88] sm:$0xff]
  %v6450 = vld [vmem:[%s6431 + $0x90] sm:$0xff]
  %v6451 = vld [vmem:[%s6431 + $0x98] sm:$0xff]
  %v6452 = vld [vmem:[%s6431 + $0xa0] sm:$0xff]
  %v6453 = vld [vmem:[%s6431 + $0xa8] sm:$0xff]
  %v6454 = vld [vmem:[%s6431 + $0xb0] sm:$0xff]
  %v6455 = vld [vmem:[%s6431 + $0xb8] sm:$0xff]
  %v6456 = vld [vmem:[%s6431 + $0xc0] sm:$0xff]
  %v6457 = vld [vmem:[%s6431 + $0xc8] sm:$0xff]
  %v6458 = vld [vmem:[%s6431 + $0xd0] sm:$0xff]
  %v6459 = vld [vmem:[%s6431 + $0xd8] sm:$0xff]
  %v6460 = vld [vmem:[%s6431 + $0xe0] sm:$0xff]
  %v6461 = vld [vmem:[%s6431 + $0xe8] sm:$0xff]
  %v6462 = vld [vmem:[%s6431 + $0xf0] sm:$0xff]
  %v6463 = vld [vmem:[%s6431 + $0xf8] sm:$0xff]
  %v6496 = vunpack.c.l.b16 %v6432
  %v6497 = vunpack.c.h.b16 %v6432
  %v6498 = vunpack.c.l.b16 %v6433
  %v6499 = vunpack.c.h.b16 %v6433
  %v6500 = vunpack.c.l.b16 %v6434
  %v6501 = vunpack.c.h.b16 %v6434
  %v6502 = vunpack.c.l.b16 %v6435
  %v6503 = vunpack.c.h.b16 %v6435
  %v6504 = vunpack.c.l.b16 %v6436
  %v6505 = vunpack.c.h.b16 %v6436
  %v6506 = vunpack.c.l.b16 %v6437
  %v6507 = vunpack.c.h.b16 %v6437
  %v6508 = vunpack.c.l.b16 %v6438
  %v6509 = vunpack.c.h.b16 %v6438
  %v6510 = vunpack.c.l.b16 %v6439
  %v6511 = vunpack.c.h.b16 %v6439
  %v6512 = vunpack.c.l.b16 %v6440
  %v6513 = vunpack.c.h.b16 %v6440
  %v6514 = vunpack.c.l.b16 %v6441
  %v6515 = vunpack.c.h.b16 %v6441
  %v6516 = vunpack.c.l.b16 %v6442
  %v6517 = vunpack.c.h.b16 %v6442
  %v6518 = vunpack.c.l.b16 %v6443
  %v6519 = vunpack.c.h.b16 %v6443
  %v6520 = vunpack.c.l.b16 %v6444
  %v6521 = vunpack.c.h.b16 %v6444
  %v6522 = vunpack.c.l.b16 %v6445
  %v6523 = vunpack.c.h.b16 %v6445
  %v6524 = vunpack.c.l.b16 %v6446
  %v6525 = vunpack.c.h.b16 %v6446
  %v6526 = vunpack.c.l.b16 %v6447
  %v6527 = vunpack.c.h.b16 %v6447
  %v6528 = vunpack.c.l.b16 %v6448
  %v6529 = vunpack.c.h.b16 %v6448
  %v6530 = vunpack.c.l.b16 %v6449
  %v6531 = vunpack.c.h.b16 %v6449
  %v6532 = vunpack.c.l.b16 %v6450
  %v6533 = vunpack.c.h.b16 %v6450
  %v6534 = vunpack.c.l.b16 %v6451
  %v6535 = vunpack.c.h.b16 %v6451
  %v6536 = vunpack.c.l.b16 %v6452
  %v6537 = vunpack.c.h.b16 %v6452
  %v6538 = vunpack.c.l.b16 %v6453
  %v6539 = vunpack.c.h.b16 %v6453
  %v6540 = vunpack.c.l.b16 %v6454
  %v6541 = vunpack.c.h.b16 %v6454
  %v6542 = vunpack.c.l.b16 %v6455
  %v6543 = vunpack.c.h.b16 %v6455
  %v6544 = vunpack.c.l.b16 %v6456
  %v6545 = vunpack.c.h.b16 %v6456
  %v6546 = vunpack.c.l.b16 %v6457
  %v6547 = vunpack.c.h.b16 %v6457
  %v6548 = vunpack.c.l.b16 %v6458
  %v6549 = vunpack.c.h.b16 %v6458
  %v6550 = vunpack.c.l.b16 %v6459
  %v6551 = vunpack.c.h.b16 %v6459
  %v6552 = vunpack.c.l.b16 %v6460
  %v6553 = vunpack.c.h.b16 %v6460
  %v6554 = vunpack.c.l.b16 %v6461
  %v6555 = vunpack.c.h.b16 %v6461
  %v6556 = vunpack.c.l.b16 %v6462
  %v6557 = vunpack.c.h.b16 %v6462
  %v6558 = vunpack.c.l.b16 %v6463
  %v6559 = vunpack.c.h.b16 %v6463
  %v6560 = vpack.c.b16 %v6500, %v6496
  %v6561 = vpack.c.b16 %v6501, %v6497
  %v6562 = vpack.c.b16 %v6502, %v6498
  %v6563 = vpack.c.b16 %v6503, %v6499
  %v6564 = vpack.c.b16 %v6508, %v6504
  %v6565 = vpack.c.b16 %v6509, %v6505
  %v6566 = vpack.c.b16 %v6510, %v6506
  %v6567 = vpack.c.b16 %v6511, %v6507
  %v6568 = vpack.c.b16 %v6516, %v6512
  %v6569 = vpack.c.b16 %v6517, %v6513
  %v6570 = vpack.c.b16 %v6518, %v6514
  %v6571 = vpack.c.b16 %v6519, %v6515
  %v6572 = vpack.c.b16 %v6524, %v6520
  %v6573 = vpack.c.b16 %v6525, %v6521
  %v6574 = vpack.c.b16 %v6526, %v6522
  %v6575 = vpack.c.b16 %v6527, %v6523
  %v6576 = vpack.c.b16 %v6532, %v6528
  %v6577 = vpack.c.b16 %v6533, %v6529
  %v6578 = vpack.c.b16 %v6534, %v6530
  %v6579 = vpack.c.b16 %v6535, %v6531
  %v6580 = vpack.c.b16 %v6540, %v6536
  %v6581 = vpack.c.b16 %v6541, %v6537
  %v6582 = vpack.c.b16 %v6542, %v6538
  %v6583 = vpack.c.b16 %v6543, %v6539
  %v6584 = vpack.c.b16 %v6548, %v6544
  %v6585 = vpack.c.b16 %v6549, %v6545
  %v6586 = vpack.c.b16 %v6550, %v6546
  %v6587 = vpack.c.b16 %v6551, %v6547
  %v6588 = vpack.c.b16 %v6556, %v6552
  %v6589 = vpack.c.b16 %v6557, %v6553
  %v6590 = vpack.c.b16 %v6558, %v6554
  %v6591 = vpack.c.b16 %v6559, %v6555
  %6624 = vmatprep.subr.bf16.mxu0 0
  %6625 = vmatpush1.bf16.msra.mxu0 %v703
  %6626 = vmatprep.subr.bf16.mxu0 0
  %6627 = vmatpush1.bf16.msra.mxu0 %v704
  %6628 = vmatprep.subr.bf16.mxu0 0
  %6629 = vmatpush1.bf16.msra.mxu0 %v705
  %6630 = vmatprep.subr.bf16.mxu0 0
  %6631 = vmatpush1.bf16.msra.mxu0 %v706
  %6632 = vmatprep.subr.bf16.mxu0 0
  %6633 = vmatpush1.bf16.msra.mxu0 %v707
  %6634 = vmatprep.subr.bf16.mxu0 0
  %6635 = vmatpush1.bf16.msra.mxu0 %v708
  %6636 = vmatprep.subr.bf16.mxu0 0
  %6637 = vmatpush1.bf16.msra.mxu0 %v709
  %6638 = vmatprep.subr.bf16.mxu0 0
  %6639 = vmatpush1.bf16.msra.mxu0 %v710
  %6640 = vmatprep.subr.bf16.mxu0 0
  %6641 = vmatpush1.bf16.msra.mxu0 %v711
  %6642 = vmatprep.subr.bf16.mxu0 0
  %6643 = vmatpush1.bf16.msra.mxu0 %v712
  %6644 = vmatprep.subr.bf16.mxu0 0
  %6645 = vmatpush1.bf16.msra.mxu0 %v713
  %6646 = vmatprep.subr.bf16.mxu0 0
  %6647 = vmatpush1.bf16.msra.mxu0 %v714
  %6648 = vmatprep.subr.bf16.mxu0 0
  %6649 = vmatpush1.bf16.msra.mxu0 %v715
  %6650 = vmatprep.subr.bf16.mxu0 0
  %6651 = vmatpush1.bf16.msra.mxu0 %v716
  %6652 = vmatprep.subr.bf16.mxu0 0
  %6653 = vmatpush1.bf16.msra.mxu0 %v717
  %6654 = vmatprep.subr.bf16.mxu0 0
  %6655 = vmatpush1.bf16.msra.mxu0 %v718
  %6656 = vmatprep.mubr.bf16.mxu0 %v6561
  %6657 = vmatmul.mubr.bf16.gmra.mrb[0].mxu0 %v6560
  %v6658 = vpop.f32.mrb[0].mxu0
  %v6659 = vadd.f32 0.0, %v6658
  %v6660 = vpop.f32.mrb[0].mxu0
  %v6661 = vpop.f32.mrb[0].mxu0
  %v6662 = vadd.f32 0.0, %v6661
  %v6663 = vpop.f32.mrb[0].mxu0
  %6664 = vmatprep.mubr.bf16.mxu0 %v6565
  %6665 = vmatmul.mubr.bf16.gmra.mrb[0].mxu0 %v6564
  %v6666 = vpop.f32.mrb[0].mxu0
  %v6667 = vadd.f32 0.0, %v6666
  %v6668 = vpop.f32.mrb[0].mxu0
  %v6669 = vpop.f32.mrb[0].mxu0
  %v6670 = vadd.f32 0.0, %v6669
  %v6671 = vpop.f32.mrb[0].mxu0
  %6672 = vmatprep.mubr.bf16.mxu0 %v6569
  %6673 = vmatmul.mubr.bf16.gmra.mrb[0].mxu0 %v6568
  %v6674 = vpop.f32.mrb[0].mxu0
  %v6675 = vadd.f32 0.0, %v6674
  %v6676 = vpop.f32.mrb[0].mxu0
  %v6677 = vpop.f32.mrb[0].mxu0
  %v6678 = vadd.f32 0.0, %v6677
  %v6679 = vpop.f32.mrb[0].mxu0
  %6680 = vmatprep.mubr.bf16.mxu0 %v6573
  %6681 = vmatmul.mubr.bf16.gmra.mrb[0].mxu0 %v6572
  %v6682 = vpop.f32.mrb[0].mxu0
  %v6683 = vadd.f32 0.0, %v6682
  %v6684 = vpop.f32.mrb[0].mxu0
  %v6685 = vpop.f32.mrb[0].mxu0
  %v6686 = vadd.f32 0.0, %v6685
  %v6687 = vpop.f32.mrb[0].mxu0
  %6688 = vmatprep.mubr.bf16.mxu0 %v6577
  %6689 = vmatmul.mubr.bf16.gmra.mrb[0].mxu0 %v6576
  %v6690 = vpop.f32.mrb[0].mxu0
  %v6691 = vadd.f32 0.0, %v6690
  %v6692 = vpop.f32.mrb[0].mxu0
  %v6693 = vpop.f32.mrb[0].mxu0
  %v6694 = vadd.f32 0.0, %v6693
  %v6695 = vpop.f32.mrb[0].mxu0
  %6696 = vmatprep.mubr.bf16.mxu0 %v6581
  %6697 = vmatmul.mubr.bf16.gmra.mrb[0].mxu0 %v6580
  %v6698 = vpop.f32.mrb[0].mxu0
  %v6699 = vadd.f32 0.0, %v6698
  %v6700 = vpop.f32.mrb[0].mxu0
  %v6701 = vpop.f32.mrb[0].mxu0
  %v6702 = vadd.f32 0.0, %v6701
  %v6703 = vpop.f32.mrb[0].mxu0
  %6704 = vmatprep.mubr.bf16.mxu0 %v6585
  %6705 = vmatmul.mubr.bf16.gmra.mrb[0].mxu0 %v6584
  %v6706 = vpop.f32.mrb[0].mxu0
  %v6707 = vadd.f32 0.0, %v6706
  %v6708 = vpop.f32.mrb[0].mxu0
  %v6709 = vpop.f32.mrb[0].mxu0
  %v6710 = vadd.f32 0.0, %v6709
  %v6711 = vpop.f32.mrb[0].mxu0
  %6712 = vmatprep.mubr.bf16.mxu0 %v6589
  %6713 = vmatmul.mubr.bf16.gmra.mrb[0].mxu0 %v6588
  %v6714 = vpop.f32.mrb[0].mxu0
  %v6715 = vadd.f32 0.0, %v6714
  %v6716 = vpop.f32.mrb[0].mxu0
  %v6717 = vpop.f32.mrb[0].mxu0
  %v6718 = vadd.f32 0.0, %v6717
  %v6719 = vpop.f32.mrb[0].mxu0
  %6720 = vdwg.mxu0
  %6721 = vmatprep.subr.bf16.mxu0 0
  %6722 = vmatpush1.bf16.msra.mxu0 %v719
  %6723 = vmatprep.subr.bf16.mxu0 0
  %6724 = vmatpush1.bf16.msra.mxu0 %v720
  %6725 = vmatprep.subr.bf16.mxu0 0
  %6726 = vmatpush1.bf16.msra.mxu0 %v721
  %6727 = vmatprep.subr.bf16.mxu0 0
  %6728 = vmatpush1.bf16.msra.mxu0 %v722
  %6729 = vmatprep.subr.bf16.mxu0 0
  %6730 = vmatpush1.bf16.msra.mxu0 %v723
  %6731 = vmatprep.subr.bf16.mxu0 0
  %6732 = vmatpush1.bf16.msra.mxu0 %v724
  %6733 = vmatprep.subr.bf16.mxu0 0
  %6734 = vmatpush1.bf16.msra.mxu0 %v725
  %6735 = vmatprep.subr.bf16.mxu0 0
  %6736 = vmatpush1.bf16.msra.mxu0 %v726
  %6737 = vmatprep.subr.bf16.mxu0 0
  %6738 = vmatpush1.bf16.msra.mxu0 %v727
  %6739 = vmatprep.subr.bf16.mxu0 0
  %6740 = vmatpush1.bf16.msra.mxu0 %v728
  %6741 = vmatprep.subr.bf16.mxu0 0
  %6742 = vmatpush1.bf16.msra.mxu0 %v729
  %6743 = vmatprep.subr.bf16.mxu0 0
  %6744 = vmatpush1.bf16.msra.mxu0 %v730
  %6745 = vmatprep.subr.bf16.mxu0 0
  %6746 = vmatpush1.bf16.msra.mxu0 %v731
  %6747 = vmatprep.subr.bf16.mxu0 0
  %6748 = vmatpush1.bf16.msra.mxu0 %v732
  %6749 = vmatprep.subr.bf16.mxu0 0
  %6750 = vmatpush1.bf16.msra.mxu0 %v733
  %6751 = vmatprep.subr.bf16.mxu0 0
  %6752 = vmatpush1.bf16.msra.mxu0 %v734
  %6753 = vmatprep.mubr.bf16.mxu0 %v6563
  %6754 = vmatmul.mubr.bf16.gmra.mrb[0].mxu0 %v6562
  %v6755 = vpop.f32.mrb[0].mxu0
  %v6756 = vadd.f32 %v6659, %v6755
  %v6757 = vpop.f32.mrb[0].mxu0
  %v6758 = vpop.f32.mrb[0].mxu0
  %v6759 = vadd.f32 %v6662, %v6758
  %v6760 = vpop.f32.mrb[0].mxu0
  %6761 = vmatprep.mubr.bf16.mxu0 %v6567
  %6762 = vmatmul.mubr.bf16.gmra.mrb[0].mxu0 %v6566
  %v6763 = vpop.f32.mrb[0].mxu0
  %v6764 = vadd.f32 %v6667, %v6763
  %v6765 = vpop.f32.mrb[0].mxu0
  %v6766 = vpop.f32.mrb[0].mxu0
  %v6767 = vadd.f32 %v6670, %v6766
  %v6768 = vpop.f32.mrb[0].mxu0
  %6769 = vmatprep.mubr.bf16.mxu0 %v6571
  %6770 = vmatmul.mubr.bf16.gmra.mrb[0].mxu0 %v6570
  %v6771 = vpop.f32.mrb[0].mxu0
  %v6772 = vadd.f32 %v6675, %v6771
  %v6773 = vpop.f32.mrb[0].mxu0
  %v6774 = vpop.f32.mrb[0].mxu0
  %v6775 = vadd.f32 %v6678, %v6774
  %v6776 = vpop.f32.mrb[0].mxu0
  %6777 = vmatprep.mubr.bf16.mxu0 %v6575
  %6778 = vmatmul.mubr.bf16.gmra.mrb[0].mxu0 %v6574
  %v6779 = vpop.f32.mrb[0].mxu0
  %v6780 = vadd.f32 %v6683, %v6779
  %v6781 = vpop.f32.mrb[0].mxu0
  %v6782 = vpop.f32.mrb[0].mxu0
  %v6783 = vadd.f32 %v6686, %v6782
  %v6784 = vpop.f32.mrb[0].mxu0
  %6785 = vmatprep.mubr.bf16.mxu0 %v6579
  %6786 = vmatmul.mubr.bf16.gmra.mrb[0].mxu0 %v6578
  %v6787 = vpop.f32.mrb[0].mxu0
  %v6788 = vadd.f32 %v6691, %v6787
  %v6789 = vpop.f32.mrb[0].mxu0
  %v6790 = vpop.f32.mrb[0].mxu0
  %v6791 = vadd.f32 %v6694, %v6790
  %v6792 = vpop.f32.mrb[0].mxu0
  %6793 = vmatprep.mubr.bf16.mxu0 %v6583
  %6794 = vmatmul.mubr.bf16.gmra.mrb[0].mxu0 %v6582
  %v6795 = vpop.f32.mrb[0].mxu0
  %v6796 = vadd.f32 %v6699, %v6795
  %v6797 = vpop.f32.mrb[0].mxu0
  %v6798 = vpop.f32.mrb[0].mxu0
  %v6799 = vadd.f32 %v6702, %v6798
  %v6800 = vpop.f32.mrb[0].mxu0
  %6801 = vmatprep.mubr.bf16.mxu0 %v6587
  %6802 = vmatmul.mubr.bf16.gmra.mrb[0].mxu0 %v6586
  %v6803 = vpop.f32.mrb[0].mxu0
  %v6804 = vadd.f32 %v6707, %v6803
  %v6805 = vpop.f32.mrb[0].mxu0
  %v6806 = vpop.f32.mrb[0].mxu0
  %v6807 = vadd.f32 %v6710, %v6806
  %v6808 = vpop.f32.mrb[0].mxu0
  %6809 = vmatprep.mubr.bf16.mxu0 %v6591
  %6810 = vmatmul.mubr.bf16.gmra.mrb[0].mxu0 %v6590
  %v6811 = vpop.f32.mrb[0].mxu0
  %v6812 = vadd.f32 %v6715, %v6811
  %v6813 = vpop.f32.mrb[0].mxu0
  %v6814 = vpop.f32.mrb[0].mxu0
  %v6815 = vadd.f32 %v6718, %v6814
  %v6816 = vpop.f32.mrb[0].mxu0
  %6817 = vdwg.mxu0
  %v6818 = vpack.c.bf16 %v6759, %v6756
  %v6819 = vpack.c.bf16 %v6767, %v6764
  %v6820 = vpack.c.bf16 %v6775, %v6772
  %v6821 = vpack.c.bf16 %v6783, %v6780
  %v6822 = vpack.c.bf16 %v6791, %v6788
  %v6823 = vpack.c.bf16 %v6799, %v6796
  %v6824 = vpack.c.bf16 %v6807, %v6804
  %v6825 = vpack.c.bf16 %v6815, %v6812
  %s6826 = scalar_lea.vmem %s3, 640
  %v6827 = vld [vmem:[%s6826] sm:$0xf]
  %v6828 = vld [vmem:[%s6826 + $0x4] sm:$0xf]
  %v6829 = vld [vmem:[%s6826 + $0x8] sm:$0xf]
  %v6830 = vld [vmem:[%s6826 + $0xc] sm:$0xf]
  %v6831 = vld [vmem:[%s6826 + $0x10] sm:$0xf]
  %v6832 = vld [vmem:[%s6826 + $0x14] sm:$0xf]
  %v6833 = vld [vmem:[%s6826 + $0x18] sm:$0xf]
  %v6834 = vld [vmem:[%s6826 + $0x1c] sm:$0xf]
  %v6835 = vld [vmem:[%s6826 + $0x20] sm:$0xf]
  %v6836 = vld [vmem:[%s6826 + $0x24] sm:$0xf]
  %v6837 = vld [vmem:[%s6826 + $0x28] sm:$0xf]
  %v6838 = vld [vmem:[%s6826 + $0x2c] sm:$0xf]
  %v6839 = vld [vmem:[%s6826 + $0x30] sm:$0xf]
  %v6840 = vld [vmem:[%s6826 + $0x34] sm:$0xf]
  %v6841 = vld [vmem:[%s6826 + $0x38] sm:$0xf]
  %v6842 = vld [vmem:[%s6826 + $0x3c] sm:$0xf]
  %v6859 = vunpack.c.l.b16 %v6827
  %v6860 = vunpack.c.l.b16 %v6828
  %v6861 = vunpack.c.l.b16 %v6829
  %v6862 = vunpack.c.l.b16 %v6830
  %v6863 = vunpack.c.l.b16 %v6831
  %v6864 = vunpack.c.l.b16 %v6832
  %v6865 = vunpack.c.l.b16 %v6833
  %v6866 = vunpack.c.l.b16 %v6834
  %v6867 = vunpack.c.l.b16 %v6835
  %v6868 = vunpack.c.l.b16 %v6836
  %v6869 = vunpack.c.l.b16 %v6837
  %v6870 = vunpack.c.l.b16 %v6838
  %v6871 = vunpack.c.l.b16 %v6839
  %v6872 = vunpack.c.l.b16 %v6840
  %v6873 = vunpack.c.l.b16 %v6841
  %v6874 = vunpack.c.l.b16 %v6842
  %v6875 = vpack.c.b16 %v6860, %v6859
  %v6876 = vpack.c.b16 %v6862, %v6861
  %v6877 = vpack.c.b16 %v6864, %v6863
  %v6878 = vpack.c.b16 %v6866, %v6865
  %v6879 = vpack.c.b16 %v6868, %v6867
  %v6880 = vpack.c.b16 %v6870, %v6869
  %v6881 = vpack.c.b16 %v6872, %v6871
  %v6882 = vpack.c.b16 %v6874, %v6873
  %6891 = vmatprep.subr.bf16.mxu0 0
  %6892 = vmatpush1.bf16.msra.mxu0 %v6875
  %6893 = vmatprep.subr.bf16.mxu0 0
  %6894 = vmatpush1.bf16.msra.mxu0 %v6876
  %6895 = vmatprep.subr.bf16.mxu0 0
  %6896 = vmatpush1.bf16.msra.mxu0 %v6877
  %6897 = vmatprep.subr.bf16.mxu0 0
  %6898 = vmatpush1.bf16.msra.mxu0 %v6878
  %6899 = vmatprep.subr.bf16.mxu0 0
  %6900 = vmatpush1.bf16.msra.mxu0 %v6879
  %6901 = vmatprep.subr.bf16.mxu0 0
  %6902 = vmatpush1.bf16.msra.mxu0 %v6880
  %6903 = vmatprep.subr.bf16.mxu0 0
  %6904 = vmatpush1.bf16.msra.mxu0 %v6881
  %6905 = vmatprep.subr.bf16.mxu0 0
  %6906 = vmatpush1.bf16.msra.mxu0 %v6882
  %6907 = vmatprep.subr.bf16.mxu0 0
  %6908 = vmatpush1.bf16.msra.mxu0 0
  %6909 = vmatprep.subr.bf16.mxu0 0
  %6910 = vmatpush1.bf16.msra.mxu0 0
  %6911 = vmatprep.subr.bf16.mxu0 0
  %6912 = vmatpush1.bf16.msra.mxu0 0
  %6913 = vmatprep.subr.bf16.mxu0 0
  %6914 = vmatpush1.bf16.msra.mxu0 0
  %6915 = vmatprep.subr.bf16.mxu0 0
  %6916 = vmatpush1.bf16.msra.mxu0 0
  %6917 = vmatprep.subr.bf16.mxu0 0
  %6918 = vmatpush1.bf16.msra.mxu0 0
  %6919 = vmatprep.subr.bf16.mxu0 0
  %6920 = vmatpush1.bf16.msra.mxu0 0
  %6921 = vmatprep.subr.bf16.mxu0 0
  %6922 = vmatpush1.bf16.msra.mxu0 0
  %6923 = vmatprep.mubr.bf16.mxu0 0
  %6924 = vmatmul.mubr.bf16.gmra.mrb[0].mxu0 %v6818
  %v6925 = vpop.f32.mrb[0].mxu0
  %v6926 = vadd.f32 0.0, %v6925
  %v6927 = vpop.f32.mrb[0].mxu0
  %v6928 = vpop.f32.mrb[0].mxu0
  %v6929 = vadd.f32 0.0, %v6928
  %v6930 = vpop.f32.mrb[0].mxu0
  %6931 = vmatprep.mubr.bf16.mxu0 0
  %6932 = vmatmul.mubr.bf16.gmra.mrb[0].mxu0 %v6819
  %v6933 = vpop.f32.mrb[0].mxu0
  %v6934 = vadd.f32 0.0, %v6933
  %v6935 = vpop.f32.mrb[0].mxu0
  %v6936 = vpop.f32.mrb[0].mxu0
  %v6937 = vadd.f32 0.0, %v6936
  %v6938 = vpop.f32.mrb[0].mxu0
  %6939 = vmatprep.mubr.bf16.mxu0 0
  %6940 = vmatmul.mubr.bf16.gmra.mrb[0].mxu0 %v6820
  %v6941 = vpop.f32.mrb[0].mxu0
  %v6942 = vadd.f32 0.0, %v6941
  %v6943 = vpop.f32.mrb[0].mxu0
  %v6944 = vpop.f32.mrb[0].mxu0
  %v6945 = vadd.f32 0.0, %v6944
  %v6946 = vpop.f32.mrb[0].mxu0
  %6947 = vmatprep.mubr.bf16.mxu0 0
  %6948 = vmatmul.mubr.bf16.gmra.mrb[0].mxu0 %v6821
  %v6949 = vpop.f32.mrb[0].mxu0
  %v6950 = vadd.f32 0.0, %v6949
  %v6951 = vpop.f32.mrb[0].mxu0
  %v6952 = vpop.f32.mrb[0].mxu0
  %v6953 = vadd.f32 0.0, %v6952
  %v6954 = vpop.f32.mrb[0].mxu0
  %6955 = vmatprep.mubr.bf16.mxu0 0
  %6956 = vmatmul.mubr.bf16.gmra.mrb[0].mxu0 %v6822
  %v6957 = vpop.f32.mrb[0].mxu0
  %v6958 = vadd.f32 0.0, %v6957
  %v6959 = vpop.f32.mrb[0].mxu0
  %v6960 = vpop.f32.mrb[0].mxu0
  %v6961 = vadd.f32 0.0, %v6960
  %v6962 = vpop.f32.mrb[0].mxu0
  %6963 = vmatprep.mubr.bf16.mxu0 0
  %6964 = vmatmul.mubr.bf16.gmra.mrb[0].mxu0 %v6823
  %v6965 = vpop.f32.mrb[0].mxu0
  %v6966 = vadd.f32 0.0, %v6965
  %v6967 = vpop.f32.mrb[0].mxu0
  %v6968 = vpop.f32.mrb[0].mxu0
  %v6969 = vadd.f32 0.0, %v6968
  %v6970 = vpop.f32.mrb[0].mxu0
  %6971 = vmatprep.mubr.bf16.mxu0 0
  %6972 = vmatmul.mubr.bf16.gmra.mrb[0].mxu0 %v6824
  %v6973 = vpop.f32.mrb[0].mxu0
  %v6974 = vadd.f32 0.0, %v6973
  %v6975 = vpop.f32.mrb[0].mxu0
  %v6976 = vpop.f32.mrb[0].mxu0
  %v6977 = vadd.f32 0.0, %v6976
  %v6978 = vpop.f32.mrb[0].mxu0
  %6979 = vmatprep.mubr.bf16.mxu0 0
  %6980 = vmatmul.mubr.bf16.gmra.mrb[0].mxu0 %v6825
  %v6981 = vpop.f32.mrb[0].mxu0
  %v6982 = vadd.f32 0.0, %v6981
  %v6983 = vpop.f32.mrb[0].mxu0
  %v6984 = vpop.f32.mrb[0].mxu0
  %v6985 = vadd.f32 0.0, %v6984
  %v6986 = vpop.f32.mrb[0].mxu0
  %6987 = vdwg.mxu0
  %v6988 = vadd.f32 %v6415, %v6926
  %v6989 = vadd.f32 %v6416, %v6929
  %v6990 = vadd.f32 %v6417, %v6934
  %v6991 = vadd.f32 %v6418, %v6937
  %v6992 = vadd.f32 %v6419, %v6942
  %v6993 = vadd.f32 %v6420, %v6945
  %v6994 = vadd.f32 %v6421, %v6950
  %v6995 = vadd.f32 %v6422, %v6953
  %v6996 = vadd.f32 %v6423, %v6958
  %v6997 = vadd.f32 %v6424, %v6961
  %v6998 = vadd.f32 %v6425, %v6966
  %v6999 = vadd.f32 %v6426, %v6969
  %v7000 = vadd.f32 %v6427, %v6974
  %v7001 = vadd.f32 %v6428, %v6977
  %v7002 = vadd.f32 %v6429, %v6982
  %v7003 = vadd.f32 %v6430, %v6985
  %s7004 = scalar_lea.vmem %s2, 2816
  %v7005 = vld [vmem:[%s7004] sm:$0xff]
  %v7006 = vld [vmem:[%s7004 + $0x8] sm:$0xff]
  %v7007 = vld [vmem:[%s7004 + $0x10] sm:$0xff]
  %v7008 = vld [vmem:[%s7004 + $0x18] sm:$0xff]
  %v7009 = vld [vmem:[%s7004 + $0x20] sm:$0xff]
  %v7010 = vld [vmem:[%s7004 + $0x28] sm:$0xff]
  %v7011 = vld [vmem:[%s7004 + $0x30] sm:$0xff]
  %v7012 = vld [vmem:[%s7004 + $0x38] sm:$0xff]
  %v7013 = vld [vmem:[%s7004 + $0x40] sm:$0xff]
  %v7014 = vld [vmem:[%s7004 + $0x48] sm:$0xff]
  %v7015 = vld [vmem:[%s7004 + $0x50] sm:$0xff]
  %v7016 = vld [vmem:[%s7004 + $0x58] sm:$0xff]
  %v7017 = vld [vmem:[%s7004 + $0x60] sm:$0xff]
  %v7018 = vld [vmem:[%s7004 + $0x68] sm:$0xff]
  %v7019 = vld [vmem:[%s7004 + $0x70] sm:$0xff]
  %v7020 = vld [vmem:[%s7004 + $0x78] sm:$0xff]
  %v7021 = vld [vmem:[%s7004 + $0x80] sm:$0xff]
  %v7022 = vld [vmem:[%s7004 + $0x88] sm:$0xff]
  %v7023 = vld [vmem:[%s7004 + $0x90] sm:$0xff]
  %v7024 = vld [vmem:[%s7004 + $0x98] sm:$0xff]
  %v7025 = vld [vmem:[%s7004 + $0xa0] sm:$0xff]
  %v7026 = vld [vmem:[%s7004 + $0xa8] sm:$0xff]
  %v7027 = vld [vmem:[%s7004 + $0xb0] sm:$0xff]
  %v7028 = vld [vmem:[%s7004 + $0xb8] sm:$0xff]
  %v7029 = vld [vmem:[%s7004 + $0xc0] sm:$0xff]
  %v7030 = vld [vmem:[%s7004 + $0xc8] sm:$0xff]
  %v7031 = vld [vmem:[%s7004 + $0xd0] sm:$0xff]
  %v7032 = vld [vmem:[%s7004 + $0xd8] sm:$0xff]
  %v7033 = vld [vmem:[%s7004 + $0xe0] sm:$0xff]
  %v7034 = vld [vmem:[%s7004 + $0xe8] sm:$0xff]
  %v7035 = vld [vmem:[%s7004 + $0xf0] sm:$0xff]
  %v7036 = vld [vmem:[%s7004 + $0xf8] sm:$0xff]
  %v7069 = vunpack.c.l.b16 %v7005
  %v7070 = vunpack.c.h.b16 %v7005
  %v7071 = vunpack.c.l.b16 %v7006
  %v7072 = vunpack.c.h.b16 %v7006
  %v7073 = vunpack.c.l.b16 %v7007
  %v7074 = vunpack.c.h.b16 %v7007
  %v7075 = vunpack.c.l.b16 %v7008
  %v7076 = vunpack.c.h.b16 %v7008
  %v7077 = vunpack.c.l.b16 %v7009
  %v7078 = vunpack.c.h.b16 %v7009
  %v7079 = vunpack.c.l.b16 %v7010
  %v7080 = vunpack.c.h.b16 %v7010
  %v7081 = vunpack.c.l.b16 %v7011
  %v7082 = vunpack.c.h.b16 %v7011
  %v7083 = vunpack.c.l.b16 %v7012
  %v7084 = vunpack.c.h.b16 %v7012
  %v7085 = vunpack.c.l.b16 %v7013
  %v7086 = vunpack.c.h.b16 %v7013
  %v7087 = vunpack.c.l.b16 %v7014
  %v7088 = vunpack.c.h.b16 %v7014
  %v7089 = vunpack.c.l.b16 %v7015
  %v7090 = vunpack.c.h.b16 %v7015
  %v7091 = vunpack.c.l.b16 %v7016
  %v7092 = vunpack.c.h.b16 %v7016
  %v7093 = vunpack.c.l.b16 %v7017
  %v7094 = vunpack.c.h.b16 %v7017
  %v7095 = vunpack.c.l.b16 %v7018
  %v7096 = vunpack.c.h.b16 %v7018
  %v7097 = vunpack.c.l.b16 %v7019
  %v7098 = vunpack.c.h.b16 %v7019
  %v7099 = vunpack.c.l.b16 %v7020
  %v7100 = vunpack.c.h.b16 %v7020
  %v7101 = vunpack.c.l.b16 %v7021
  %v7102 = vunpack.c.h.b16 %v7021
  %v7103 = vunpack.c.l.b16 %v7022
  %v7104 = vunpack.c.h.b16 %v7022
  %v7105 = vunpack.c.l.b16 %v7023
  %v7106 = vunpack.c.h.b16 %v7023
  %v7107 = vunpack.c.l.b16 %v7024
  %v7108 = vunpack.c.h.b16 %v7024
  %v7109 = vunpack.c.l.b16 %v7025
  %v7110 = vunpack.c.h.b16 %v7025
  %v7111 = vunpack.c.l.b16 %v7026
  %v7112 = vunpack.c.h.b16 %v7026
  %v7113 = vunpack.c.l.b16 %v7027
  %v7114 = vunpack.c.h.b16 %v7027
  %v7115 = vunpack.c.l.b16 %v7028
  %v7116 = vunpack.c.h.b16 %v7028
  %v7117 = vunpack.c.l.b16 %v7029
  %v7118 = vunpack.c.h.b16 %v7029
  %v7119 = vunpack.c.l.b16 %v7030
  %v7120 = vunpack.c.h.b16 %v7030
  %v7121 = vunpack.c.l.b16 %v7031
  %v7122 = vunpack.c.h.b16 %v7031
  %v7123 = vunpack.c.l.b16 %v7032
  %v7124 = vunpack.c.h.b16 %v7032
  %v7125 = vunpack.c.l.b16 %v7033
  %v7126 = vunpack.c.h.b16 %v7033
  %v7127 = vunpack.c.l.b16 %v7034
  %v7128 = vunpack.c.h.b16 %v7034
  %v7129 = vunpack.c.l.b16 %v7035
  %v7130 = vunpack.c.h.b16 %v7035
  %v7131 = vunpack.c.l.b16 %v7036
  %v7132 = vunpack.c.h.b16 %v7036
  %v7133 = vpack.c.b16 %v7073, %v7069
  %v7134 = vpack.c.b16 %v7074, %v7070
  %v7135 = vpack.c.b16 %v7075, %v7071
  %v7136 = vpack.c.b16 %v7076, %v7072
  %v7137 = vpack.c.b16 %v7081, %v7077
  %v7138 = vpack.c.b16 %v7082, %v7078
  %v7139 = vpack.c.b16 %v7083, %v7079
  %v7140 = vpack.c.b16 %v7084, %v7080
  %v7141 = vpack.c.b16 %v7089, %v7085
  %v7142 = vpack.c.b16 %v7090, %v7086
  %v7143 = vpack.c.b16 %v7091, %v7087
  %v7144 = vpack.c.b16 %v7092, %v7088
  %v7145 = vpack.c.b16 %v7097, %v7093
  %v7146 = vpack.c.b16 %v7098, %v7094
  %v7147 = vpack.c.b16 %v7099, %v7095
  %v7148 = vpack.c.b16 %v7100, %v7096
  %v7149 = vpack.c.b16 %v7105, %v7101
  %v7150 = vpack.c.b16 %v7106, %v7102
  %v7151 = vpack.c.b16 %v7107, %v7103
  %v7152 = vpack.c.b16 %v7108, %v7104
  %v7153 = vpack.c.b16 %v7113, %v7109
  %v7154 = vpack.c.b16 %v7114, %v7110
  %v7155 = vpack.c.b16 %v7115, %v7111
  %v7156 = vpack.c.b16 %v7116, %v7112
  %v7157 = vpack.c.b16 %v7121, %v7117
  %v7158 = vpack.c.b16 %v7122, %v7118
  %v7159 = vpack.c.b16 %v7123, %v7119
  %v7160 = vpack.c.b16 %v7124, %v7120
  %v7161 = vpack.c.b16 %v7129, %v7125
  %v7162 = vpack.c.b16 %v7130, %v7126
  %v7163 = vpack.c.b16 %v7131, %v7127
  %v7164 = vpack.c.b16 %v7132, %v7128
  %7197 = vmatprep.subr.bf16.mxu0 0
  %7198 = vmatpush1.bf16.msra.mxu0 %v703
  %7199 = vmatprep.subr.bf16.mxu0 0
  %7200 = vmatpush1.bf16.msra.mxu0 %v704
  %7201 = vmatprep.subr.bf16.mxu0 0
  %7202 = vmatpush1.bf16.msra.mxu0 %v705
  %7203 = vmatprep.subr.bf16.mxu0 0
  %7204 = vmatpush1.bf16.msra.mxu0 %v706
  %7205 = vmatprep.subr.bf16.mxu0 0
  %7206 = vmatpush1.bf16.msra.mxu0 %v707
  %7207 = vmatprep.subr.bf16.mxu0 0
  %7208 = vmatpush1.bf16.msra.mxu0 %v708
  %7209 = vmatprep.subr.bf16.mxu0 0
  %7210 = vmatpush1.bf16.msra.mxu0 %v709
  %7211 = vmatprep.subr.bf16.mxu0 0
  %7212 = vmatpush1.bf16.msra.mxu0 %v710
  %7213 = vmatprep.subr.bf16.mxu0 0
  %7214 = vmatpush1.bf16.msra.mxu0 %v711
  %7215 = vmatprep.subr.bf16.mxu0 0
  %7216 = vmatpush1.bf16.msra.mxu0 %v712
  %7217 = vmatprep.subr.bf16.mxu0 0
  %7218 = vmatpush1.bf16.msra.mxu0 %v713
  %7219 = vmatprep.subr.bf16.mxu0 0
  %7220 = vmatpush1.bf16.msra.mxu0 %v714
  %7221 = vmatprep.subr.bf16.mxu0 0
  %7222 = vmatpush1.bf16.msra.mxu0 %v715
  %7223 = vmatprep.subr.bf16.mxu0 0
  %7224 = vmatpush1.bf16.msra.mxu0 %v716
  %7225 = vmatprep.subr.bf16.mxu0 0
  %7226 = vmatpush1.bf16.msra.mxu0 %v717
  %7227 = vmatprep.subr.bf16.mxu0 0
  %7228 = vmatpush1.bf16.msra.mxu0 %v718
  %7229 = vmatprep.mubr.bf16.mxu0 %v7134
  %7230 = vmatmul.mubr.bf16.gmra.mrb[0].mxu0 %v7133
  %v7231 = vpop.f32.mrb[0].mxu0
  %v7232 = vadd.f32 0.0, %v7231
  %v7233 = vpop.f32.mrb[0].mxu0
  %v7234 = vpop.f32.mrb[0].mxu0
  %v7235 = vadd.f32 0.0, %v7234
  %v7236 = vpop.f32.mrb[0].mxu0
  %7237 = vmatprep.mubr.bf16.mxu0 %v7138
  %7238 = vmatmul.mubr.bf16.gmra.mrb[0].mxu0 %v7137
  %v7239 = vpop.f32.mrb[0].mxu0
  %v7240 = vadd.f32 0.0, %v7239
  %v7241 = vpop.f32.mrb[0].mxu0
  %v7242 = vpop.f32.mrb[0].mxu0
  %v7243 = vadd.f32 0.0, %v7242
  %v7244 = vpop.f32.mrb[0].mxu0
  %7245 = vmatprep.mubr.bf16.mxu0 %v7142
  %7246 = vmatmul.mubr.bf16.gmra.mrb[0].mxu0 %v7141
  %v7247 = vpop.f32.mrb[0].mxu0
  %v7248 = vadd.f32 0.0, %v7247
  %v7249 = vpop.f32.mrb[0].mxu0
  %v7250 = vpop.f32.mrb[0].mxu0
  %v7251 = vadd.f32 0.0, %v7250
  %v7252 = vpop.f32.mrb[0].mxu0
  %7253 = vmatprep.mubr.bf16.mxu0 %v7146
  %7254 = vmatmul.mubr.bf16.gmra.mrb[0].mxu0 %v7145
  %v7255 = vpop.f32.mrb[0].mxu0
  %v7256 = vadd.f32 0.0, %v7255
  %v7257 = vpop.f32.mrb[0].mxu0
  %v7258 = vpop.f32.mrb[0].mxu0
  %v7259 = vadd.f32 0.0, %v7258
  %v7260 = vpop.f32.mrb[0].mxu0
  %7261 = vmatprep.mubr.bf16.mxu0 %v7150
  %7262 = vmatmul.mubr.bf16.gmra.mrb[0].mxu0 %v7149
  %v7263 = vpop.f32.mrb[0].mxu0
  %v7264 = vadd.f32 0.0, %v7263
  %v7265 = vpop.f32.mrb[0].mxu0
  %v7266 = vpop.f32.mrb[0].mxu0
  %v7267 = vadd.f32 0.0, %v7266
  %v7268 = vpop.f32.mrb[0].mxu0
  %7269 = vmatprep.mubr.bf16.mxu0 %v7154
  %7270 = vmatmul.mubr.bf16.gmra.mrb[0].mxu0 %v7153
  %v7271 = vpop.f32.mrb[0].mxu0
  %v7272 = vadd.f32 0.0, %v7271
  %v7273 = vpop.f32.mrb[0].mxu0
  %v7274 = vpop.f32.mrb[0].mxu0
  %v7275 = vadd.f32 0.0, %v7274
  %v7276 = vpop.f32.mrb[0].mxu0
  %7277 = vmatprep.mubr.bf16.mxu0 %v7158
  %7278 = vmatmul.mubr.bf16.gmra.mrb[0].mxu0 %v7157
  %v7279 = vpop.f32.mrb[0].mxu0
  %v7280 = vadd.f32 0.0, %v7279
  %v7281 = vpop.f32.mrb[0].mxu0
  %v7282 = vpop.f32.mrb[0].mxu0
  %v7283 = vadd.f32 0.0, %v7282
  %v7284 = vpop.f32.mrb[0].mxu0
  %7285 = vmatprep.mubr.bf16.mxu0 %v7162
  %7286 = vmatmul.mubr.bf16.gmra.mrb[0].mxu0 %v7161
  %v7287 = vpop.f32.mrb[0].mxu0
  %v7288 = vadd.f32 0.0, %v7287
  %v7289 = vpop.f32.mrb[0].mxu0
  %v7290 = vpop.f32.mrb[0].mxu0
  %v7291 = vadd.f32 0.0, %v7290
  %v7292 = vpop.f32.mrb[0].mxu0
  %7293 = vdwg.mxu0
  %7294 = vmatprep.subr.bf16.mxu0 0
  %7295 = vmatpush1.bf16.msra.mxu0 %v719
  %7296 = vmatprep.subr.bf16.mxu0 0
  %7297 = vmatpush1.bf16.msra.mxu0 %v720
  %7298 = vmatprep.subr.bf16.mxu0 0
  %7299 = vmatpush1.bf16.msra.mxu0 %v721
  %7300 = vmatprep.subr.bf16.mxu0 0
  %7301 = vmatpush1.bf16.msra.mxu0 %v722
  %7302 = vmatprep.subr.bf16.mxu0 0
  %7303 = vmatpush1.bf16.msra.mxu0 %v723
  %7304 = vmatprep.subr.bf16.mxu0 0
  %7305 = vmatpush1.bf16.msra.mxu0 %v724
  %7306 = vmatprep.subr.bf16.mxu0 0
  %7307 = vmatpush1.bf16.msra.mxu0 %v725
  %7308 = vmatprep.subr.bf16.mxu0 0
  %7309 = vmatpush1.bf16.msra.mxu0 %v726
  %7310 = vmatprep.subr.bf16.mxu0 0
  %7311 = vmatpush1.bf16.msra.mxu0 %v727
  %7312 = vmatprep.subr.bf16.mxu0 0
  %7313 = vmatpush1.bf16.msra.mxu0 %v728
  %7314 = vmatprep.subr.bf16.mxu0 0
  %7315 = vmatpush1.bf16.msra.mxu0 %v729
  %7316 = vmatprep.subr.bf16.mxu0 0
  %7317 = vmatpush1.bf16.msra.mxu0 %v730
  %7318 = vmatprep.subr.bf16.mxu0 0
  %7319 = vmatpush1.bf16.msra.mxu0 %v731
  %7320 = vmatprep.subr.bf16.mxu0 0
  %7321 = vmatpush1.bf16.msra.mxu0 %v732
  %7322 = vmatprep.subr.bf16.mxu0 0
  %7323 = vmatpush1.bf16.msra.mxu0 %v733
  %7324 = vmatprep.subr.bf16.mxu0 0
  %7325 = vmatpush1.bf16.msra.mxu0 %v734
  %7326 = vmatprep.mubr.bf16.mxu0 %v7136
  %7327 = vmatmul.mubr.bf16.gmra.mrb[0].mxu0 %v7135
  %v7328 = vpop.f32.mrb[0].mxu0
  %v7329 = vadd.f32 %v7232, %v7328
  %v7330 = vpop.f32.mrb[0].mxu0
  %v7331 = vpop.f32.mrb[0].mxu0
  %v7332 = vadd.f32 %v7235, %v7331
  %v7333 = vpop.f32.mrb[0].mxu0
  %7334 = vmatprep.mubr.bf16.mxu0 %v7140
  %7335 = vmatmul.mubr.bf16.gmra.mrb[0].mxu0 %v7139
  %v7336 = vpop.f32.mrb[0].mxu0
  %v7337 = vadd.f32 %v7240, %v7336
  %v7338 = vpop.f32.mrb[0].mxu0
  %v7339 = vpop.f32.mrb[0].mxu0
  %v7340 = vadd.f32 %v7243, %v7339
  %v7341 = vpop.f32.mrb[0].mxu0
  %7342 = vmatprep.mubr.bf16.mxu0 %v7144
  %7343 = vmatmul.mubr.bf16.gmra.mrb[0].mxu0 %v7143
  %v7344 = vpop.f32.mrb[0].mxu0
  %v7345 = vadd.f32 %v7248, %v7344
  %v7346 = vpop.f32.mrb[0].mxu0
  %v7347 = vpop.f32.mrb[0].mxu0
  %v7348 = vadd.f32 %v7251, %v7347
  %v7349 = vpop.f32.mrb[0].mxu0
  %7350 = vmatprep.mubr.bf16.mxu0 %v7148
  %7351 = vmatmul.mubr.bf16.gmra.mrb[0].mxu0 %v7147
  %v7352 = vpop.f32.mrb[0].mxu0
  %v7353 = vadd.f32 %v7256, %v7352
  %v7354 = vpop.f32.mrb[0].mxu0
  %v7355 = vpop.f32.mrb[0].mxu0
  %v7356 = vadd.f32 %v7259, %v7355
  %v7357 = vpop.f32.mrb[0].mxu0
  %7358 = vmatprep.mubr.bf16.mxu0 %v7152
  %7359 = vmatmul.mubr.bf16.gmra.mrb[0].mxu0 %v7151
  %v7360 = vpop.f32.mrb[0].mxu0
  %v7361 = vadd.f32 %v7264, %v7360
  %v7362 = vpop.f32.mrb[0].mxu0
  %v7363 = vpop.f32.mrb[0].mxu0
  %v7364 = vadd.f32 %v7267, %v7363
  %v7365 = vpop.f32.mrb[0].mxu0
  %7366 = vmatprep.mubr.bf16.mxu0 %v7156
  %7367 = vmatmul.mubr.bf16.gmra.mrb[0].mxu0 %v7155
  %v7368 = vpop.f32.mrb[0].mxu0
  %v7369 = vadd.f32 %v7272, %v7368
  %v7370 = vpop.f32.mrb[0].mxu0
  %v7371 = vpop.f32.mrb[0].mxu0
  %v7372 = vadd.f32 %v7275, %v7371
  %v7373 = vpop.f32.mrb[0].mxu0
  %7374 = vmatprep.mubr.bf16.mxu0 %v7160
  %7375 = vmatmul.mubr.bf16.gmra.mrb[0].mxu0 %v7159
  %v7376 = vpop.f32.mrb[0].mxu0
  %v7377 = vadd.f32 %v7280, %v7376
  %v7378 = vpop.f32.mrb[0].mxu0
  %v7379 = vpop.f32.mrb[0].mxu0
  %v7380 = vadd.f32 %v7283, %v7379
  %v7381 = vpop.f32.mrb[0].mxu0
  %7382 = vmatprep.mubr.bf16.mxu0 %v7164
  %7383 = vmatmul.mubr.bf16.gmra.mrb[0].mxu0 %v7163
  %v7384 = vpop.f32.mrb[0].mxu0
  %v7385 = vadd.f32 %v7288, %v7384
  %v7386 = vpop.f32.mrb[0].mxu0
  %v7387 = vpop.f32.mrb[0].mxu0
  %v7388 = vadd.f32 %v7291, %v7387
  %v7389 = vpop.f32.mrb[0].mxu0
  %7390 = vdwg.mxu0
  %v7391 = vpack.c.bf16 %v7332, %v7329
  %v7392 = vpack.c.bf16 %v7340, %v7337
  %v7393 = vpack.c.bf16 %v7348, %v7345
  %v7394 = vpack.c.bf16 %v7356, %v7353
  %v7395 = vpack.c.bf16 %v7364, %v7361
  %v7396 = vpack.c.bf16 %v7372, %v7369
  %v7397 = vpack.c.bf16 %v7380, %v7377
  %v7398 = vpack.c.bf16 %v7388, %v7385
  %s7399 = scalar_lea.vmem %s3, 704
  %v7400 = vld [vmem:[%s7399] sm:$0xf]
  %v7401 = vld [vmem:[%s7399 + $0x4] sm:$0xf]
  %v7402 = vld [vmem:[%s7399 + $0x8] sm:$0xf]
  %v7403 = vld [vmem:[%s7399 + $0xc] sm:$0xf]
  %v7404 = vld [vmem:[%s7399 + $0x10] sm:$0xf]
  %v7405 = vld [vmem:[%s7399 + $0x14] sm:$0xf]
  %v7406 = vld [vmem:[%s7399 + $0x18] sm:$0xf]
  %v7407 = vld [vmem:[%s7399 + $0x1c] sm:$0xf]
  %v7408 = vld [vmem:[%s7399 + $0x20] sm:$0xf]
  %v7409 = vld [vmem:[%s7399 + $0x24] sm:$0xf]
  %v7410 = vld [vmem:[%s7399 + $0x28] sm:$0xf]
  %v7411 = vld [vmem:[%s7399 + $0x2c] sm:$0xf]
  %v7412 = vld [vmem:[%s7399 + $0x30] sm:$0xf]
  %v7413 = vld [vmem:[%s7399 + $0x34] sm:$0xf]
  %v7414 = vld [vmem:[%s7399 + $0x38] sm:$0xf]
  %v7415 = vld [vmem:[%s7399 + $0x3c] sm:$0xf]
  %v7432 = vunpack.c.l.b16 %v7400
  %v7433 = vunpack.c.l.b16 %v7401
  %v7434 = vunpack.c.l.b16 %v7402
  %v7435 = vunpack.c.l.b16 %v7403
  %v7436 = vunpack.c.l.b16 %v7404
  %v7437 = vunpack.c.l.b16 %v7405
  %v7438 = vunpack.c.l.b16 %v7406
  %v7439 = vunpack.c.l.b16 %v7407
  %v7440 = vunpack.c.l.b16 %v7408
  %v7441 = vunpack.c.l.b16 %v7409
  %v7442 = vunpack.c.l.b16 %v7410
  %v7443 = vunpack.c.l.b16 %v7411
  %v7444 = vunpack.c.l.b16 %v7412
  %v7445 = vunpack.c.l.b16 %v7413
  %v7446 = vunpack.c.l.b16 %v7414
  %v7447 = vunpack.c.l.b16 %v7415
  %v7448 = vpack.c.b16 %v7433, %v7432
  %v7449 = vpack.c.b16 %v7435, %v7434
  %v7450 = vpack.c.b16 %v7437, %v7436
  %v7451 = vpack.c.b16 %v7439, %v7438
  %v7452 = vpack.c.b16 %v7441, %v7440
  %v7453 = vpack.c.b16 %v7443, %v7442
  %v7454 = vpack.c.b16 %v7445, %v7444
  %v7455 = vpack.c.b16 %v7447, %v7446
  %7464 = vmatprep.subr.bf16.mxu0 0
  %7465 = vmatpush1.bf16.msra.mxu0 %v7448
  %7466 = vmatprep.subr.bf16.mxu0 0
  %7467 = vmatpush1.bf16.msra.mxu0 %v7449
  %7468 = vmatprep.subr.bf16.mxu0 0
  %7469 = vmatpush1.bf16.msra.mxu0 %v7450
  %7470 = vmatprep.subr.bf16.mxu0 0
  %7471 = vmatpush1.bf16.msra.mxu0 %v7451
  %7472 = vmatprep.subr.bf16.mxu0 0
  %7473 = vmatpush1.bf16.msra.mxu0 %v7452
  %7474 = vmatprep.subr.bf16.mxu0 0
  %7475 = vmatpush1.bf16.msra.mxu0 %v7453
  %7476 = vmatprep.subr.bf16.mxu0 0
  %7477 = vmatpush1.bf16.msra.mxu0 %v7454
  %7478 = vmatprep.subr.bf16.mxu0 0
  %7479 = vmatpush1.bf16.msra.mxu0 %v7455
  %7480 = vmatprep.subr.bf16.mxu0 0
  %7481 = vmatpush1.bf16.msra.mxu0 0
  %7482 = vmatprep.subr.bf16.mxu0 0
  %7483 = vmatpush1.bf16.msra.mxu0 0
  %7484 = vmatprep.subr.bf16.mxu0 0
  %7485 = vmatpush1.bf16.msra.mxu0 0
  %7486 = vmatprep.subr.bf16.mxu0 0
  %7487 = vmatpush1.bf16.msra.mxu0 0
  %7488 = vmatprep.subr.bf16.mxu0 0
  %7489 = vmatpush1.bf16.msra.mxu0 0
  %7490 = vmatprep.subr.bf16.mxu0 0
  %7491 = vmatpush1.bf16.msra.mxu0 0
  %7492 = vmatprep.subr.bf16.mxu0 0
  %7493 = vmatpush1.bf16.msra.mxu0 0
  %7494 = vmatprep.subr.bf16.mxu0 0
  %7495 = vmatpush1.bf16.msra.mxu0 0
  %7496 = vmatprep.mubr.bf16.mxu0 0
  %7497 = vmatmul.mubr.bf16.gmra.mrb[0].mxu0 %v7391
  %v7498 = vpop.f32.mrb[0].mxu0
  %v7499 = vadd.f32 0.0, %v7498
  %v7500 = vpop.f32.mrb[0].mxu0
  %v7501 = vpop.f32.mrb[0].mxu0
  %v7502 = vadd.f32 0.0, %v7501
  %v7503 = vpop.f32.mrb[0].mxu0
  %7504 = vmatprep.mubr.bf16.mxu0 0
  %7505 = vmatmul.mubr.bf16.gmra.mrb[0].mxu0 %v7392
  %v7506 = vpop.f32.mrb[0].mxu0
  %v7507 = vadd.f32 0.0, %v7506
  %v7508 = vpop.f32.mrb[0].mxu0
  %v7509 = vpop.f32.mrb[0].mxu0
  %v7510 = vadd.f32 0.0, %v7509
  %v7511 = vpop.f32.mrb[0].mxu0
  %7512 = vmatprep.mubr.bf16.mxu0 0
  %7513 = vmatmul.mubr.bf16.gmra.mrb[0].mxu0 %v7393
  %v7514 = vpop.f32.mrb[0].mxu0
  %v7515 = vadd.f32 0.0, %v7514
  %v7516 = vpop.f32.mrb[0].mxu0
  %v7517 = vpop.f32.mrb[0].mxu0
  %v7518 = vadd.f32 0.0, %v7517
  %v7519 = vpop.f32.mrb[0].mxu0
  %7520 = vmatprep.mubr.bf16.mxu0 0
  %7521 = vmatmul.mubr.bf16.gmra.mrb[0].mxu0 %v7394
  %v7522 = vpop.f32.mrb[0].mxu0
  %v7523 = vadd.f32 0.0, %v7522
  %v7524 = vpop.f32.mrb[0].mxu0
  %v7525 = vpop.f32.mrb[0].mxu0
  %v7526 = vadd.f32 0.0, %v7525
  %v7527 = vpop.f32.mrb[0].mxu0
  %7528 = vmatprep.mubr.bf16.mxu0 0
  %7529 = vmatmul.mubr.bf16.gmra.mrb[0].mxu0 %v7395
  %v7530 = vpop.f32.mrb[0].mxu0
  %v7531 = vadd.f32 0.0, %v7530
  %v7532 = vpop.f32.mrb[0].mxu0
  %v7533 = vpop.f32.mrb[0].mxu0
  %v7534 = vadd.f32 0.0, %v7533
  %v7535 = vpop.f32.mrb[0].mxu0
  %7536 = vmatprep.mubr.bf16.mxu0 0
  %7537 = vmatmul.mubr.bf16.gmra.mrb[0].mxu0 %v7396
  %v7538 = vpop.f32.mrb[0].mxu0
  %v7539 = vadd.f32 0.0, %v7538
  %v7540 = vpop.f32.mrb[0].mxu0
  %v7541 = vpop.f32.mrb[0].mxu0
  %v7542 = vadd.f32 0.0, %v7541
  %v7543 = vpop.f32.mrb[0].mxu0
  %7544 = vmatprep.mubr.bf16.mxu0 0
  %7545 = vmatmul.mubr.bf16.gmra.mrb[0].mxu0 %v7397
  %v7546 = vpop.f32.mrb[0].mxu0
  %v7547 = vadd.f32 0.0, %v7546
  %v7548 = vpop.f32.mrb[0].mxu0
  %v7549 = vpop.f32.mrb[0].mxu0
  %v7550 = vadd.f32 0.0, %v7549
  %v7551 = vpop.f32.mrb[0].mxu0
  %7552 = vmatprep.mubr.bf16.mxu0 0
  %7553 = vmatmul.mubr.bf16.gmra.mrb[0].mxu0 %v7398
  %v7554 = vpop.f32.mrb[0].mxu0
  %v7555 = vadd.f32 0.0, %v7554
  %v7556 = vpop.f32.mrb[0].mxu0
  %v7557 = vpop.f32.mrb[0].mxu0
  %v7558 = vadd.f32 0.0, %v7557
  %v7559 = vpop.f32.mrb[0].mxu0
  %7560 = vdwg.mxu0
  %v7561 = vadd.f32 %v6988, %v7499
  %v7562 = vadd.f32 %v6989, %v7502
  %v7563 = vadd.f32 %v6990, %v7507
  %v7564 = vadd.f32 %v6991, %v7510
  %v7565 = vadd.f32 %v6992, %v7515
  %v7566 = vadd.f32 %v6993, %v7518
  %v7567 = vadd.f32 %v6994, %v7523
  %v7568 = vadd.f32 %v6995, %v7526
  %v7569 = vadd.f32 %v6996, %v7531
  %v7570 = vadd.f32 %v6997, %v7534
  %v7571 = vadd.f32 %v6998, %v7539
  %v7572 = vadd.f32 %v6999, %v7542
  %v7573 = vadd.f32 %v7000, %v7547
  %v7574 = vadd.f32 %v7001, %v7550
  %v7575 = vadd.f32 %v7002, %v7555
  %v7576 = vadd.f32 %v7003, %v7558
  %s7577 = scalar_lea.vmem %s2, 3072
  %v7578 = vld [vmem:[%s7577] sm:$0xff]
  %v7579 = vld [vmem:[%s7577 + $0x8] sm:$0xff]
  %v7580 = vld [vmem:[%s7577 + $0x10] sm:$0xff]
  %v7581 = vld [vmem:[%s7577 + $0x18] sm:$0xff]
  %v7582 = vld [vmem:[%s7577 + $0x20] sm:$0xff]
  %v7583 = vld [vmem:[%s7577 + $0x28] sm:$0xff]
  %v7584 = vld [vmem:[%s7577 + $0x30] sm:$0xff]
  %v7585 = vld [vmem:[%s7577 + $0x38] sm:$0xff]
  %v7586 = vld [vmem:[%s7577 + $0x40] sm:$0xff]
  %v7587 = vld [vmem:[%s7577 + $0x48] sm:$0xff]
  %v7588 = vld [vmem:[%s7577 + $0x50] sm:$0xff]
  %v7589 = vld [vmem:[%s7577 + $0x58] sm:$0xff]
  %v7590 = vld [vmem:[%s7577 + $0x60] sm:$0xff]
  %v7591 = vld [vmem:[%s7577 + $0x68] sm:$0xff]
  %v7592 = vld [vmem:[%s7577 + $0x70] sm:$0xff]
  %v7593 = vld [vmem:[%s7577 + $0x78] sm:$0xff]
  %v7594 = vld [vmem:[%s7577 + $0x80] sm:$0xff]
  %v7595 = vld [vmem:[%s7577 + $0x88] sm:$0xff]
  %v7596 = vld [vmem:[%s7577 + $0x90] sm:$0xff]
  %v7597 = vld [vmem:[%s7577 + $0x98] sm:$0xff]
  %v7598 = vld [vmem:[%s7577 + $0xa0] sm:$0xff]
  %v7599 = vld [vmem:[%s7577 + $0xa8] sm:$0xff]
  %v7600 = vld [vmem:[%s7577 + $0xb0] sm:$0xff]
  %v7601 = vld [vmem:[%s7577 + $0xb8] sm:$0xff]
  %v7602 = vld [vmem:[%s7577 + $0xc0] sm:$0xff]
  %v7603 = vld [vmem:[%s7577 + $0xc8] sm:$0xff]
  %v7604 = vld [vmem:[%s7577 + $0xd0] sm:$0xff]
  %v7605 = vld [vmem:[%s7577 + $0xd8] sm:$0xff]
  %v7606 = vld [vmem:[%s7577 + $0xe0] sm:$0xff]
  %v7607 = vld [vmem:[%s7577 + $0xe8] sm:$0xff]
  %v7608 = vld [vmem:[%s7577 + $0xf0] sm:$0xff]
  %v7609 = vld [vmem:[%s7577 + $0xf8] sm:$0xff]
  %v7642 = vunpack.c.l.b16 %v7578
  %v7643 = vunpack.c.h.b16 %v7578
  %v7644 = vunpack.c.l.b16 %v7579
  %v7645 = vunpack.c.h.b16 %v7579
  %v7646 = vunpack.c.l.b16 %v7580
  %v7647 = vunpack.c.h.b16 %v7580
  %v7648 = vunpack.c.l.b16 %v7581
  %v7649 = vunpack.c.h.b16 %v7581
  %v7650 = vunpack.c.l.b16 %v7582
  %v7651 = vunpack.c.h.b16 %v7582
  %v7652 = vunpack.c.l.b16 %v7583
  %v7653 = vunpack.c.h.b16 %v7583
  %v7654 = vunpack.c.l.b16 %v7584
  %v7655 = vunpack.c.h.b16 %v7584
  %v7656 = vunpack.c.l.b16 %v7585
  %v7657 = vunpack.c.h.b16 %v7585
  %v7658 = vunpack.c.l.b16 %v7586
  %v7659 = vunpack.c.h.b16 %v7586
  %v7660 = vunpack.c.l.b16 %v7587
  %v7661 = vunpack.c.h.b16 %v7587
  %v7662 = vunpack.c.l.b16 %v7588
  %v7663 = vunpack.c.h.b16 %v7588
  %v7664 = vunpack.c.l.b16 %v7589
  %v7665 = vunpack.c.h.b16 %v7589
  %v7666 = vunpack.c.l.b16 %v7590
  %v7667 = vunpack.c.h.b16 %v7590
  %v7668 = vunpack.c.l.b16 %v7591
  %v7669 = vunpack.c.h.b16 %v7591
  %v7670 = vunpack.c.l.b16 %v7592
  %v7671 = vunpack.c.h.b16 %v7592
  %v7672 = vunpack.c.l.b16 %v7593
  %v7673 = vunpack.c.h.b16 %v7593
  %v7674 = vunpack.c.l.b16 %v7594
  %v7675 = vunpack.c.h.b16 %v7594
  %v7676 = vunpack.c.l.b16 %v7595
  %v7677 = vunpack.c.h.b16 %v7595
  %v7678 = vunpack.c.l.b16 %v7596
  %v7679 = vunpack.c.h.b16 %v7596
  %v7680 = vunpack.c.l.b16 %v7597
  %v7681 = vunpack.c.h.b16 %v7597
  %v7682 = vunpack.c.l.b16 %v7598
  %v7683 = vunpack.c.h.b16 %v7598
  %v7684 = vunpack.c.l.b16 %v7599
  %v7685 = vunpack.c.h.b16 %v7599
  %v7686 = vunpack.c.l.b16 %v7600
  %v7687 = vunpack.c.h.b16 %v7600
  %v7688 = vunpack.c.l.b16 %v7601
  %v7689 = vunpack.c.h.b16 %v7601
  %v7690 = vunpack.c.l.b16 %v7602
  %v7691 = vunpack.c.h.b16 %v7602
  %v7692 = vunpack.c.l.b16 %v7603
  %v7693 = vunpack.c.h.b16 %v7603
  %v7694 = vunpack.c.l.b16 %v7604
  %v7695 = vunpack.c.h.b16 %v7604
  %v7696 = vunpack.c.l.b16 %v7605
  %v7697 = vunpack.c.h.b16 %v7605
  %v7698 = vunpack.c.l.b16 %v7606
  %v7699 = vunpack.c.h.b16 %v7606
  %v7700 = vunpack.c.l.b16 %v7607
  %v7701 = vunpack.c.h.b16 %v7607
  %v7702 = vunpack.c.l.b16 %v7608
  %v7703 = vunpack.c.h.b16 %v7608
  %v7704 = vunpack.c.l.b16 %v7609
  %v7705 = vunpack.c.h.b16 %v7609
  %v7706 = vpack.c.b16 %v7646, %v7642
  %v7707 = vpack.c.b16 %v7647, %v7643
  %v7708 = vpack.c.b16 %v7648, %v7644
  %v7709 = vpack.c.b16 %v7649, %v7645
  %v7710 = vpack.c.b16 %v7654, %v7650
  %v7711 = vpack.c.b16 %v7655, %v7651
  %v7712 = vpack.c.b16 %v7656, %v7652
  %v7713 = vpack.c.b16 %v7657, %v7653
  %v7714 = vpack.c.b16 %v7662, %v7658
  %v7715 = vpack.c.b16 %v7663, %v7659
  %v7716 = vpack.c.b16 %v7664, %v7660
  %v7717 = vpack.c.b16 %v7665, %v7661
  %v7718 = vpack.c.b16 %v7670, %v7666
  %v7719 = vpack.c.b16 %v7671, %v7667
  %v7720 = vpack.c.b16 %v7672, %v7668
  %v7721 = vpack.c.b16 %v7673, %v7669
  %v7722 = vpack.c.b16 %v7678, %v7674
  %v7723 = vpack.c.b16 %v7679, %v7675
  %v7724 = vpack.c.b16 %v7680, %v7676
  %v7725 = vpack.c.b16 %v7681, %v7677
  %v7726 = vpack.c.b16 %v7686, %v7682
  %v7727 = vpack.c.b16 %v7687, %v7683
  %v7728 = vpack.c.b16 %v7688, %v7684
  %v7729 = vpack.c.b16 %v7689, %v7685
  %v7730 = vpack.c.b16 %v7694, %v7690
  %v7731 = vpack.c.b16 %v7695, %v7691
  %v7732 = vpack.c.b16 %v7696, %v7692
  %v7733 = vpack.c.b16 %v7697, %v7693
  %v7734 = vpack.c.b16 %v7702, %v7698
  %v7735 = vpack.c.b16 %v7703, %v7699
  %v7736 = vpack.c.b16 %v7704, %v7700
  %v7737 = vpack.c.b16 %v7705, %v7701
  %7770 = vmatprep.subr.bf16.mxu0 0
  %7771 = vmatpush1.bf16.msra.mxu0 %v703
  %7772 = vmatprep.subr.bf16.mxu0 0
  %7773 = vmatpush1.bf16.msra.mxu0 %v704
  %7774 = vmatprep.subr.bf16.mxu0 0
  %7775 = vmatpush1.bf16.msra.mxu0 %v705
  %7776 = vmatprep.subr.bf16.mxu0 0
  %7777 = vmatpush1.bf16.msra.mxu0 %v706
  %7778 = vmatprep.subr.bf16.mxu0 0
  %7779 = vmatpush1.bf16.msra.mxu0 %v707
  %7780 = vmatprep.subr.bf16.mxu0 0
  %7781 = vmatpush1.bf16.msra.mxu0 %v708
  %7782 = vmatprep.subr.bf16.mxu0 0
  %7783 = vmatpush1.bf16.msra.mxu0 %v709
  %7784 = vmatprep.subr.bf16.mxu0 0
  %7785 = vmatpush1.bf16.msra.mxu0 %v710
  %7786 = vmatprep.subr.bf16.mxu0 0
  %7787 = vmatpush1.bf16.msra.mxu0 %v711
  %7788 = vmatprep.subr.bf16.mxu0 0
  %7789 = vmatpush1.bf16.msra.mxu0 %v712
  %7790 = vmatprep.subr.bf16.mxu0 0
  %7791 = vmatpush1.bf16.msra.mxu0 %v713
  %7792 = vmatprep.subr.bf16.mxu0 0
  %7793 = vmatpush1.bf16.msra.mxu0 %v714
  %7794 = vmatprep.subr.bf16.mxu0 0
  %7795 = vmatpush1.bf16.msra.mxu0 %v715
  %7796 = vmatprep.subr.bf16.mxu0 0
  %7797 = vmatpush1.bf16.msra.mxu0 %v716
  %7798 = vmatprep.subr.bf16.mxu0 0
  %7799 = vmatpush1.bf16.msra.mxu0 %v717
  %7800 = vmatprep.subr.bf16.mxu0 0
  %7801 = vmatpush1.bf16.msra.mxu0 %v718
  %7802 = vmatprep.mubr.bf16.mxu0 %v7707
  %7803 = vmatmul.mubr.bf16.gmra.mrb[0].mxu0 %v7706
  %v7804 = vpop.f32.mrb[0].mxu0
  %v7805 = vadd.f32 0.0, %v7804
  %v7806 = vpop.f32.mrb[0].mxu0
  %v7807 = vpop.f32.mrb[0].mxu0
  %v7808 = vadd.f32 0.0, %v7807
  %v7809 = vpop.f32.mrb[0].mxu0
  %7810 = vmatprep.mubr.bf16.mxu0 %v7711
  %7811 = vmatmul.mubr.bf16.gmra.mrb[0].mxu0 %v7710
  %v7812 = vpop.f32.mrb[0].mxu0
  %v7813 = vadd.f32 0.0, %v7812
  %v7814 = vpop.f32.mrb[0].mxu0
  %v7815 = vpop.f32.mrb[0].mxu0
  %v7816 = vadd.f32 0.0, %v7815
  %v7817 = vpop.f32.mrb[0].mxu0
  %7818 = vmatprep.mubr.bf16.mxu0 %v7715
  %7819 = vmatmul.mubr.bf16.gmra.mrb[0].mxu0 %v7714
  %v7820 = vpop.f32.mrb[0].mxu0
  %v7821 = vadd.f32 0.0, %v7820
  %v7822 = vpop.f32.mrb[0].mxu0
  %v7823 = vpop.f32.mrb[0].mxu0
  %v7824 = vadd.f32 0.0, %v7823
  %v7825 = vpop.f32.mrb[0].mxu0
  %7826 = vmatprep.mubr.bf16.mxu0 %v7719
  %7827 = vmatmul.mubr.bf16.gmra.mrb[0].mxu0 %v7718
  %v7828 = vpop.f32.mrb[0].mxu0
  %v7829 = vadd.f32 0.0, %v7828
  %v7830 = vpop.f32.mrb[0].mxu0
  %v7831 = vpop.f32.mrb[0].mxu0
  %v7832 = vadd.f32 0.0, %v7831
  %v7833 = vpop.f32.mrb[0].mxu0
  %7834 = vmatprep.mubr.bf16.mxu0 %v7723
  %7835 = vmatmul.mubr.bf16.gmra.mrb[0].mxu0 %v7722
  %v7836 = vpop.f32.mrb[0].mxu0
  %v7837 = vadd.f32 0.0, %v7836
  %v7838 = vpop.f32.mrb[0].mxu0
  %v7839 = vpop.f32.mrb[0].mxu0
  %v7840 = vadd.f32 0.0, %v7839
  %v7841 = vpop.f32.mrb[0].mxu0
  %7842 = vmatprep.mubr.bf16.mxu0 %v7727
  %7843 = vmatmul.mubr.bf16.gmra.mrb[0].mxu0 %v7726
  %v7844 = vpop.f32.mrb[0].mxu0
  %v7845 = vadd.f32 0.0, %v7844
  %v7846 = vpop.f32.mrb[0].mxu0
  %v7847 = vpop.f32.mrb[0].mxu0
  %v7848 = vadd.f32 0.0, %v7847
  %v7849 = vpop.f32.mrb[0].mxu0
  %7850 = vmatprep.mubr.bf16.mxu0 %v7731
  %7851 = vmatmul.mubr.bf16.gmra.mrb[0].mxu0 %v7730
  %v7852 = vpop.f32.mrb[0].mxu0
  %v7853 = vadd.f32 0.0, %v7852
  %v7854 = vpop.f32.mrb[0].mxu0
  %v7855 = vpop.f32.mrb[0].mxu0
  %v7856 = vadd.f32 0.0, %v7855
  %v7857 = vpop.f32.mrb[0].mxu0
  %7858 = vmatprep.mubr.bf16.mxu0 %v7735
  %7859 = vmatmul.mubr.bf16.gmra.mrb[0].mxu0 %v7734
  %v7860 = vpop.f32.mrb[0].mxu0
  %v7861 = vadd.f32 0.0, %v7860
  %v7862 = vpop.f32.mrb[0].mxu0
  %v7863 = vpop.f32.mrb[0].mxu0
  %v7864 = vadd.f32 0.0, %v7863
  %v7865 = vpop.f32.mrb[0].mxu0
  %7866 = vdwg.mxu0
  %7867 = vmatprep.subr.bf16.mxu0 0
  %7868 = vmatpush1.bf16.msra.mxu0 %v719
  %7869 = vmatprep.subr.bf16.mxu0 0
  %7870 = vmatpush1.bf16.msra.mxu0 %v720
  %7871 = vmatprep.subr.bf16.mxu0 0
  %7872 = vmatpush1.bf16.msra.mxu0 %v721
  %7873 = vmatprep.subr.bf16.mxu0 0
  %7874 = vmatpush1.bf16.msra.mxu0 %v722
  %7875 = vmatprep.subr.bf16.mxu0 0
  %7876 = vmatpush1.bf16.msra.mxu0 %v723
  %7877 = vmatprep.subr.bf16.mxu0 0
  %7878 = vmatpush1.bf16.msra.mxu0 %v724
  %7879 = vmatprep.subr.bf16.mxu0 0
  %7880 = vmatpush1.bf16.msra.mxu0 %v725
  %7881 = vmatprep.subr.bf16.mxu0 0
  %7882 = vmatpush1.bf16.msra.mxu0 %v726
  %7883 = vmatprep.subr.bf16.mxu0 0
  %7884 = vmatpush1.bf16.msra.mxu0 %v727
  %7885 = vmatprep.subr.bf16.mxu0 0
  %7886 = vmatpush1.bf16.msra.mxu0 %v728
  %7887 = vmatprep.subr.bf16.mxu0 0
  %7888 = vmatpush1.bf16.msra.mxu0 %v729
  %7889 = vmatprep.subr.bf16.mxu0 0
  %7890 = vmatpush1.bf16.msra.mxu0 %v730
  %7891 = vmatprep.subr.bf16.mxu0 0
  %7892 = vmatpush1.bf16.msra.mxu0 %v731
  %7893 = vmatprep.subr.bf16.mxu0 0
  %7894 = vmatpush1.bf16.msra.mxu0 %v732
  %7895 = vmatprep.subr.bf16.mxu0 0
  %7896 = vmatpush1.bf16.msra.mxu0 %v733
  %7897 = vmatprep.subr.bf16.mxu0 0
  %7898 = vmatpush1.bf16.msra.mxu0 %v734
  %7899 = vmatprep.mubr.bf16.mxu0 %v7709
  %7900 = vmatmul.mubr.bf16.gmra.mrb[0].mxu0 %v7708
  %v7901 = vpop.f32.mrb[0].mxu0
  %v7902 = vadd.f32 %v7805, %v7901
  %v7903 = vpop.f32.mrb[0].mxu0
  %v7904 = vpop.f32.mrb[0].mxu0
  %v7905 = vadd.f32 %v7808, %v7904
  %v7906 = vpop.f32.mrb[0].mxu0
  %7907 = vmatprep.mubr.bf16.mxu0 %v7713
  %7908 = vmatmul.mubr.bf16.gmra.mrb[0].mxu0 %v7712
  %v7909 = vpop.f32.mrb[0].mxu0
  %v7910 = vadd.f32 %v7813, %v7909
  %v7911 = vpop.f32.mrb[0].mxu0
  %v7912 = vpop.f32.mrb[0].mxu0
  %v7913 = vadd.f32 %v7816, %v7912
  %v7914 = vpop.f32.mrb[0].mxu0
  %7915 = vmatprep.mubr.bf16.mxu0 %v7717
  %7916 = vmatmul.mubr.bf16.gmra.mrb[0].mxu0 %v7716
  %v7917 = vpop.f32.mrb[0].mxu0
  %v7918 = vadd.f32 %v7821, %v7917
  %v7919 = vpop.f32.mrb[0].mxu0
  %v7920 = vpop.f32.mrb[0].mxu0
  %v7921 = vadd.f32 %v7824, %v7920
  %v7922 = vpop.f32.mrb[0].mxu0
  %7923 = vmatprep.mubr.bf16.mxu0 %v7721
  %7924 = vmatmul.mubr.bf16.gmra.mrb[0].mxu0 %v7720
  %v7925 = vpop.f32.mrb[0].mxu0
  %v7926 = vadd.f32 %v7829, %v7925
  %v7927 = vpop.f32.mrb[0].mxu0
  %v7928 = vpop.f32.mrb[0].mxu0
  %v7929 = vadd.f32 %v7832, %v7928
  %v7930 = vpop.f32.mrb[0].mxu0
  %7931 = vmatprep.mubr.bf16.mxu0 %v7725
  %7932 = vmatmul.mubr.bf16.gmra.mrb[0].mxu0 %v7724
  %v7933 = vpop.f32.mrb[0].mxu0
  %v7934 = vadd.f32 %v7837, %v7933
  %v7935 = vpop.f32.mrb[0].mxu0
  %v7936 = vpop.f32.mrb[0].mxu0
  %v7937 = vadd.f32 %v7840, %v7936
  %v7938 = vpop.f32.mrb[0].mxu0
  %7939 = vmatprep.mubr.bf16.mxu0 %v7729
  %7940 = vmatmul.mubr.bf16.gmra.mrb[0].mxu0 %v7728
  %v7941 = vpop.f32.mrb[0].mxu0
  %v7942 = vadd.f32 %v7845, %v7941
  %v7943 = vpop.f32.mrb[0].mxu0
  %v7944 = vpop.f32.mrb[0].mxu0
  %v7945 = vadd.f32 %v7848, %v7944
  %v7946 = vpop.f32.mrb[0].mxu0
  %7947 = vmatprep.mubr.bf16.mxu0 %v7733
  %7948 = vmatmul.mubr.bf16.gmra.mrb[0].mxu0 %v7732
  %v7949 = vpop.f32.mrb[0].mxu0
  %v7950 = vadd.f32 %v7853, %v7949
  %v7951 = vpop.f32.mrb[0].mxu0
  %v7952 = vpop.f32.mrb[0].mxu0
  %v7953 = vadd.f32 %v7856, %v7952
  %v7954 = vpop.f32.mrb[0].mxu0
  %7955 = vmatprep.mubr.bf16.mxu0 %v7737
  %7956 = vmatmul.mubr.bf16.gmra.mrb[0].mxu0 %v7736
  %v7957 = vpop.f32.mrb[0].mxu0
  %v7958 = vadd.f32 %v7861, %v7957
  %v7959 = vpop.f32.mrb[0].mxu0
  %v7960 = vpop.f32.mrb[0].mxu0
  %v7961 = vadd.f32 %v7864, %v7960
  %v7962 = vpop.f32.mrb[0].mxu0
  %7963 = vdwg.mxu0
  %v7964 = vpack.c.bf16 %v7905, %v7902
  %v7965 = vpack.c.bf16 %v7913, %v7910
  %v7966 = vpack.c.bf16 %v7921, %v7918
  %v7967 = vpack.c.bf16 %v7929, %v7926
  %v7968 = vpack.c.bf16 %v7937, %v7934
  %v7969 = vpack.c.bf16 %v7945, %v7942
  %v7970 = vpack.c.bf16 %v7953, %v7950
  %v7971 = vpack.c.bf16 %v7961, %v7958
  %s7972 = scalar_lea.vmem %s3, 768
  %v7973 = vld [vmem:[%s7972] sm:$0xf]
  %v7974 = vld [vmem:[%s7972 + $0x4] sm:$0xf]
  %v7975 = vld [vmem:[%s7972 + $0x8] sm:$0xf]
  %v7976 = vld [vmem:[%s7972 + $0xc] sm:$0xf]
  %v7977 = vld [vmem:[%s7972 + $0x10] sm:$0xf]
  %v7978 = vld [vmem:[%s7972 + $0x14] sm:$0xf]
  %v7979 = vld [vmem:[%s7972 + $0x18] sm:$0xf]
  %v7980 = vld [vmem:[%s7972 + $0x1c] sm:$0xf]
  %v7981 = vld [vmem:[%s7972 + $0x20] sm:$0xf]
  %v7982 = vld [vmem:[%s7972 + $0x24] sm:$0xf]
  %v7983 = vld [vmem:[%s7972 + $0x28] sm:$0xf]
  %v7984 = vld [vmem:[%s7972 + $0x2c] sm:$0xf]
  %v7985 = vld [vmem:[%s7972 + $0x30] sm:$0xf]
  %v7986 = vld [vmem:[%s7972 + $0x34] sm:$0xf]
  %v7987 = vld [vmem:[%s7972 + $0x38] sm:$0xf]
  %v7988 = vld [vmem:[%s7972 + $0x3c] sm:$0xf]
  %v8005 = vunpack.c.l.b16 %v7973
  %v8006 = vunpack.c.l.b16 %v7974
  %v8007 = vunpack.c.l.b16 %v7975
  %v8008 = vunpack.c.l.b16 %v7976
  %v8009 = vunpack.c.l.b16 %v7977
  %v8010 = vunpack.c.l.b16 %v7978
  %v8011 = vunpack.c.l.b16 %v7979
  %v8012 = vunpack.c.l.b16 %v7980
  %v8013 = vunpack.c.l.b16 %v7981
  %v8014 = vunpack.c.l.b16 %v7982
  %v8015 = vunpack.c.l.b16 %v7983
  %v8016 = vunpack.c.l.b16 %v7984
  %v8017 = vunpack.c.l.b16 %v7985
  %v8018 = vunpack.c.l.b16 %v7986
  %v8019 = vunpack.c.l.b16 %v7987
  %v8020 = vunpack.c.l.b16 %v7988
  %v8021 = vpack.c.b16 %v8006, %v8005
  %v8022 = vpack.c.b16 %v8008, %v8007
  %v8023 = vpack.c.b16 %v8010, %v8009
  %v8024 = vpack.c.b16 %v8012, %v8011
  %v8025 = vpack.c.b16 %v8014, %v8013
  %v8026 = vpack.c.b16 %v8016, %v8015
  %v8027 = vpack.c.b16 %v8018, %v8017
  %v8028 = vpack.c.b16 %v8020, %v8019
  %8037 = vmatprep.subr.bf16.mxu0 0
  %8038 = vmatpush1.bf16.msra.mxu0 %v8021
  %8039 = vmatprep.subr.bf16.mxu0 0
  %8040 = vmatpush1.bf16.msra.mxu0 %v8022
  %8041 = vmatprep.subr.bf16.mxu0 0
  %8042 = vmatpush1.bf16.msra.mxu0 %v8023
  %8043 = vmatprep.subr.bf16.mxu0 0
  %8044 = vmatpush1.bf16.msra.mxu0 %v8024
  %8045 = vmatprep.subr.bf16.mxu0 0
  %8046 = vmatpush1.bf16.msra.mxu0 %v8025
  %8047 = vmatprep.subr.bf16.mxu0 0
  %8048 = vmatpush1.bf16.msra.mxu0 %v8026
  %8049 = vmatprep.subr.bf16.mxu0 0
  %8050 = vmatpush1.bf16.msra.mxu0 %v8027
  %8051 = vmatprep.subr.bf16.mxu0 0
  %8052 = vmatpush1.bf16.msra.mxu0 %v8028
  %8053 = vmatprep.subr.bf16.mxu0 0
  %8054 = vmatpush1.bf16.msra.mxu0 0
  %8055 = vmatprep.subr.bf16.mxu0 0
  %8056 = vmatpush1.bf16.msra.mxu0 0
  %8057 = vmatprep.subr.bf16.mxu0 0
  %8058 = vmatpush1.bf16.msra.mxu0 0
  %8059 = vmatprep.subr.bf16.mxu0 0
  %8060 = vmatpush1.bf16.msra.mxu0 0
  %8061 = vmatprep.subr.bf16.mxu0 0
  %8062 = vmatpush1.bf16.msra.mxu0 0
  %8063 = vmatprep.subr.bf16.mxu0 0
  %8064 = vmatpush1.bf16.msra.mxu0 0
  %8065 = vmatprep.subr.bf16.mxu0 0
  %8066 = vmatpush1.bf16.msra.mxu0 0
  %8067 = vmatprep.subr.bf16.mxu0 0
  %8068 = vmatpush1.bf16.msra.mxu0 0
  %8069 = vmatprep.mubr.bf16.mxu0 0
  %8070 = vmatmul.mubr.bf16.gmra.mrb[0].mxu0 %v7964
  %v8071 = vpop.f32.mrb[0].mxu0
  %v8072 = vadd.f32 0.0, %v8071
  %v8073 = vpop.f32.mrb[0].mxu0
  %v8074 = vpop.f32.mrb[0].mxu0
  %v8075 = vadd.f32 0.0, %v8074
  %v8076 = vpop.f32.mrb[0].mxu0
  %8077 = vmatprep.mubr.bf16.mxu0 0
  %8078 = vmatmul.mubr.bf16.gmra.mrb[0].mxu0 %v7965
  %v8079 = vpop.f32.mrb[0].mxu0
  %v8080 = vadd.f32 0.0, %v8079
  %v8081 = vpop.f32.mrb[0].mxu0
  %v8082 = vpop.f32.mrb[0].mxu0
  %v8083 = vadd.f32 0.0, %v8082
  %v8084 = vpop.f32.mrb[0].mxu0
  %8085 = vmatprep.mubr.bf16.mxu0 0
  %8086 = vmatmul.mubr.bf16.gmra.mrb[0].mxu0 %v7966
  %v8087 = vpop.f32.mrb[0].mxu0
  %v8088 = vadd.f32 0.0, %v8087
  %v8089 = vpop.f32.mrb[0].mxu0
  %v8090 = vpop.f32.mrb[0].mxu0
  %v8091 = vadd.f32 0.0, %v8090
  %v8092 = vpop.f32.mrb[0].mxu0
  %8093 = vmatprep.mubr.bf16.mxu0 0
  %8094 = vmatmul.mubr.bf16.gmra.mrb[0].mxu0 %v7967
  %v8095 = vpop.f32.mrb[0].mxu0
  %v8096 = vadd.f32 0.0, %v8095
  %v8097 = vpop.f32.mrb[0].mxu0
  %v8098 = vpop.f32.mrb[0].mxu0
  %v8099 = vadd.f32 0.0, %v8098
  %v8100 = vpop.f32.mrb[0].mxu0
  %8101 = vmatprep.mubr.bf16.mxu0 0
  %8102 = vmatmul.mubr.bf16.gmra.mrb[0].mxu0 %v7968
  %v8103 = vpop.f32.mrb[0].mxu0
  %v8104 = vadd.f32 0.0, %v8103
  %v8105 = vpop.f32.mrb[0].mxu0
  %v8106 = vpop.f32.mrb[0].mxu0
  %v8107 = vadd.f32 0.0, %v8106
  %v8108 = vpop.f32.mrb[0].mxu0
  %8109 = vmatprep.mubr.bf16.mxu0 0
  %8110 = vmatmul.mubr.bf16.gmra.mrb[0].mxu0 %v7969
  %v8111 = vpop.f32.mrb[0].mxu0
  %v8112 = vadd.f32 0.0, %v8111
  %v8113 = vpop.f32.mrb[0].mxu0
  %v8114 = vpop.f32.mrb[0].mxu0
  %v8115 = vadd.f32 0.0, %v8114
  %v8116 = vpop.f32.mrb[0].mxu0
  %8117 = vmatprep.mubr.bf16.mxu0 0
  %8118 = vmatmul.mubr.bf16.gmra.mrb[0].mxu0 %v7970
  %v8119 = vpop.f32.mrb[0].mxu0
  %v8120 = vadd.f32 0.0, %v8119
  %v8121 = vpop.f32.mrb[0].mxu0
  %v8122 = vpop.f32.mrb[0].mxu0
  %v8123 = vadd.f32 0.0, %v8122
  %v8124 = vpop.f32.mrb[0].mxu0
  %8125 = vmatprep.mubr.bf16.mxu0 0
  %8126 = vmatmul.mubr.bf16.gmra.mrb[0].mxu0 %v7971
  %v8127 = vpop.f32.mrb[0].mxu0
  %v8128 = vadd.f32 0.0, %v8127
  %v8129 = vpop.f32.mrb[0].mxu0
  %v8130 = vpop.f32.mrb[0].mxu0
  %v8131 = vadd.f32 0.0, %v8130
  %v8132 = vpop.f32.mrb[0].mxu0
  %8133 = vdwg.mxu0
  %v8134 = vadd.f32 %v7561, %v8072
  %v8135 = vadd.f32 %v7562, %v8075
  %v8136 = vadd.f32 %v7563, %v8080
  %v8137 = vadd.f32 %v7564, %v8083
  %v8138 = vadd.f32 %v7565, %v8088
  %v8139 = vadd.f32 %v7566, %v8091
  %v8140 = vadd.f32 %v7567, %v8096
  %v8141 = vadd.f32 %v7568, %v8099
  %v8142 = vadd.f32 %v7569, %v8104
  %v8143 = vadd.f32 %v7570, %v8107
  %v8144 = vadd.f32 %v7571, %v8112
  %v8145 = vadd.f32 %v7572, %v8115
  %v8146 = vadd.f32 %v7573, %v8120
  %v8147 = vadd.f32 %v7574, %v8123
  %v8148 = vadd.f32 %v7575, %v8128
  %v8149 = vadd.f32 %v7576, %v8131
  %s8150 = scalar_lea.vmem %s2, 3328
  %v8151 = vld [vmem:[%s8150] sm:$0xff]
  %v8152 = vld [vmem:[%s8150 + $0x8] sm:$0xff]
  %v8153 = vld [vmem:[%s8150 + $0x10] sm:$0xff]
  %v8154 = vld [vmem:[%s8150 + $0x18] sm:$0xff]
  %v8155 = vld [vmem:[%s8150 + $0x20] sm:$0xff]
  %v8156 = vld [vmem:[%s8150 + $0x28] sm:$0xff]
  %v8157 = vld [vmem:[%s8150 + $0x30] sm:$0xff]
  %v8158 = vld [vmem:[%s8150 + $0x38] sm:$0xff]
  %v8159 = vld [vmem:[%s8150 + $0x40] sm:$0xff]
  %v8160 = vld [vmem:[%s8150 + $0x48] sm:$0xff]
  %v8161 = vld [vmem:[%s8150 + $0x50] sm:$0xff]
  %v8162 = vld [vmem:[%s8150 + $0x58] sm:$0xff]
  %v8163 = vld [vmem:[%s8150 + $0x60] sm:$0xff]
  %v8164 = vld [vmem:[%s8150 + $0x68] sm:$0xff]
  %v8165 = vld [vmem:[%s8150 + $0x70] sm:$0xff]
  %v8166 = vld [vmem:[%s8150 + $0x78] sm:$0xff]
  %v8167 = vld [vmem:[%s8150 + $0x80] sm:$0xff]
  %v8168 = vld [vmem:[%s8150 + $0x88] sm:$0xff]
  %v8169 = vld [vmem:[%s8150 + $0x90] sm:$0xff]
  %v8170 = vld [vmem:[%s8150 + $0x98] sm:$0xff]
  %v8171 = vld [vmem:[%s8150 + $0xa0] sm:$0xff]
  %v8172 = vld [vmem:[%s8150 + $0xa8] sm:$0xff]
  %v8173 = vld [vmem:[%s8150 + $0xb0] sm:$0xff]
  %v8174 = vld [vmem:[%s8150 + $0xb8] sm:$0xff]
  %v8175 = vld [vmem:[%s8150 + $0xc0] sm:$0xff]
  %v8176 = vld [vmem:[%s8150 + $0xc8] sm:$0xff]
  %v8177 = vld [vmem:[%s8150 + $0xd0] sm:$0xff]
  %v8178 = vld [vmem:[%s8150 + $0xd8] sm:$0xff]
  %v8179 = vld [vmem:[%s8150 + $0xe0] sm:$0xff]
  %v8180 = vld [vmem:[%s8150 + $0xe8] sm:$0xff]
  %v8181 = vld [vmem:[%s8150 + $0xf0] sm:$0xff]
  %v8182 = vld [vmem:[%s8150 + $0xf8] sm:$0xff]
  %v8215 = vunpack.c.l.b16 %v8151
  %v8216 = vunpack.c.h.b16 %v8151
  %v8217 = vunpack.c.l.b16 %v8152
  %v8218 = vunpack.c.h.b16 %v8152
  %v8219 = vunpack.c.l.b16 %v8153
  %v8220 = vunpack.c.h.b16 %v8153
  %v8221 = vunpack.c.l.b16 %v8154
  %v8222 = vunpack.c.h.b16 %v8154
  %v8223 = vunpack.c.l.b16 %v8155
  %v8224 = vunpack.c.h.b16 %v8155
  %v8225 = vunpack.c.l.b16 %v8156
  %v8226 = vunpack.c.h.b16 %v8156
  %v8227 = vunpack.c.l.b16 %v8157
  %v8228 = vunpack.c.h.b16 %v8157
  %v8229 = vunpack.c.l.b16 %v8158
  %v8230 = vunpack.c.h.b16 %v8158
  %v8231 = vunpack.c.l.b16 %v8159
  %v8232 = vunpack.c.h.b16 %v8159
  %v8233 = vunpack.c.l.b16 %v8160
  %v8234 = vunpack.c.h.b16 %v8160
  %v8235 = vunpack.c.l.b16 %v8161
  %v8236 = vunpack.c.h.b16 %v8161
  %v8237 = vunpack.c.l.b16 %v8162
  %v8238 = vunpack.c.h.b16 %v8162
  %v8239 = vunpack.c.l.b16 %v8163
  %v8240 = vunpack.c.h.b16 %v8163
  %v8241 = vunpack.c.l.b16 %v8164
  %v8242 = vunpack.c.h.b16 %v8164
  %v8243 = vunpack.c.l.b16 %v8165
  %v8244 = vunpack.c.h.b16 %v8165
  %v8245 = vunpack.c.l.b16 %v8166
  %v8246 = vunpack.c.h.b16 %v8166
  %v8247 = vunpack.c.l.b16 %v8167
  %v8248 = vunpack.c.h.b16 %v8167
  %v8249 = vunpack.c.l.b16 %v8168
  %v8250 = vunpack.c.h.b16 %v8168
  %v8251 = vunpack.c.l.b16 %v8169
  %v8252 = vunpack.c.h.b16 %v8169
  %v8253 = vunpack.c.l.b16 %v8170
  %v8254 = vunpack.c.h.b16 %v8170
  %v8255 = vunpack.c.l.b16 %v8171
  %v8256 = vunpack.c.h.b16 %v8171
  %v8257 = vunpack.c.l.b16 %v8172
  %v8258 = vunpack.c.h.b16 %v8172
  %v8259 = vunpack.c.l.b16 %v8173
  %v8260 = vunpack.c.h.b16 %v8173
  %v8261 = vunpack.c.l.b16 %v8174
  %v8262 = vunpack.c.h.b16 %v8174
  %v8263 = vunpack.c.l.b16 %v8175
  %v8264 = vunpack.c.h.b16 %v8175
  %v8265 = vunpack.c.l.b16 %v8176
  %v8266 = vunpack.c.h.b16 %v8176
  %v8267 = vunpack.c.l.b16 %v8177
  %v8268 = vunpack.c.h.b16 %v8177
  %v8269 = vunpack.c.l.b16 %v8178
  %v8270 = vunpack.c.h.b16 %v8178
  %v8271 = vunpack.c.l.b16 %v8179
  %v8272 = vunpack.c.h.b16 %v8179
  %v8273 = vunpack.c.l.b16 %v8180
  %v8274 = vunpack.c.h.b16 %v8180
  %v8275 = vunpack.c.l.b16 %v8181
  %v8276 = vunpack.c.h.b16 %v8181
  %v8277 = vunpack.c.l.b16 %v8182
  %v8278 = vunpack.c.h.b16 %v8182
  %v8279 = vpack.c.b16 %v8219, %v8215
  %v8280 = vpack.c.b16 %v8220, %v8216
  %v8281 = vpack.c.b16 %v8221, %v8217
  %v8282 = vpack.c.b16 %v8222, %v8218
  %v8283 = vpack.c.b16 %v8227, %v8223
  %v8284 = vpack.c.b16 %v8228, %v8224
  %v8285 = vpack.c.b16 %v8229, %v8225
  %v8286 = vpack.c.b16 %v8230, %v8226
  %v8287 = vpack.c.b16 %v8235, %v8231
  %v8288 = vpack.c.b16 %v8236, %v8232
  %v8289 = vpack.c.b16 %v8237, %v8233
  %v8290 = vpack.c.b16 %v8238, %v8234
  %v8291 = vpack.c.b16 %v8243, %v8239
  %v8292 = vpack.c.b16 %v8244, %v8240
  %v8293 = vpack.c.b16 %v8245, %v8241
  %v8294 = vpack.c.b16 %v8246, %v8242
  %v8295 = vpack.c.b16 %v8251, %v8247
  %v8296 = vpack.c.b16 %v8252, %v8248
  %v8297 = vpack.c.b16 %v8253, %v8249
  %v8298 = vpack.c.b16 %v8254, %v8250
  %v8299 = vpack.c.b16 %v8259, %v8255
  %v8300 = vpack.c.b16 %v8260, %v8256
  %v8301 = vpack.c.b16 %v8261, %v8257
  %v8302 = vpack.c.b16 %v8262, %v8258
  %v8303 = vpack.c.b16 %v8267, %v8263
  %v8304 = vpack.c.b16 %v8268, %v8264
  %v8305 = vpack.c.b16 %v8269, %v8265
  %v8306 = vpack.c.b16 %v8270, %v8266
  %v8307 = vpack.c.b16 %v8275, %v8271
  %v8308 = vpack.c.b16 %v8276, %v8272
  %v8309 = vpack.c.b16 %v8277, %v8273
  %v8310 = vpack.c.b16 %v8278, %v8274
  %8343 = vmatprep.subr.bf16.mxu0 0
  %8344 = vmatpush1.bf16.msra.mxu0 %v703
  %8345 = vmatprep.subr.bf16.mxu0 0
  %8346 = vmatpush1.bf16.msra.mxu0 %v704
  %8347 = vmatprep.subr.bf16.mxu0 0
  %8348 = vmatpush1.bf16.msra.mxu0 %v705
  %8349 = vmatprep.subr.bf16.mxu0 0
  %8350 = vmatpush1.bf16.msra.mxu0 %v706
  %8351 = vmatprep.subr.bf16.mxu0 0
  %8352 = vmatpush1.bf16.msra.mxu0 %v707
  %8353 = vmatprep.subr.bf16.mxu0 0
  %8354 = vmatpush1.bf16.msra.mxu0 %v708
  %8355 = vmatprep.subr.bf16.mxu0 0
  %8356 = vmatpush1.bf16.msra.mxu0 %v709
  %8357 = vmatprep.subr.bf16.mxu0 0
  %8358 = vmatpush1.bf16.msra.mxu0 %v710
  %8359 = vmatprep.subr.bf16.mxu0 0
  %8360 = vmatpush1.bf16.msra.mxu0 %v711
  %8361 = vmatprep.subr.bf16.mxu0 0
  %8362 = vmatpush1.bf16.msra.mxu0 %v712
  %8363 = vmatprep.subr.bf16.mxu0 0
  %8364 = vmatpush1.bf16.msra.mxu0 %v713
  %8365 = vmatprep.subr.bf16.mxu0 0
  %8366 = vmatpush1.bf16.msra.mxu0 %v714
  %8367 = vmatprep.subr.bf16.mxu0 0
  %8368 = vmatpush1.bf16.msra.mxu0 %v715
  %8369 = vmatprep.subr.bf16.mxu0 0
  %8370 = vmatpush1.bf16.msra.mxu0 %v716
  %8371 = vmatprep.subr.bf16.mxu0 0
  %8372 = vmatpush1.bf16.msra.mxu0 %v717
  %8373 = vmatprep.subr.bf16.mxu0 0
  %8374 = vmatpush1.bf16.msra.mxu0 %v718
  %8375 = vmatprep.mubr.bf16.mxu0 %v8280
  %8376 = vmatmul.mubr.bf16.gmra.mrb[0].mxu0 %v8279
  %v8377 = vpop.f32.mrb[0].mxu0
  %v8378 = vadd.f32 0.0, %v8377
  %v8379 = vpop.f32.mrb[0].mxu0
  %v8380 = vpop.f32.mrb[0].mxu0
  %v8381 = vadd.f32 0.0, %v8380
  %v8382 = vpop.f32.mrb[0].mxu0
  %8383 = vmatprep.mubr.bf16.mxu0 %v8284
  %8384 = vmatmul.mubr.bf16.gmra.mrb[0].mxu0 %v8283
  %v8385 = vpop.f32.mrb[0].mxu0
  %v8386 = vadd.f32 0.0, %v8385
  %v8387 = vpop.f32.mrb[0].mxu0
  %v8388 = vpop.f32.mrb[0].mxu0
  %v8389 = vadd.f32 0.0, %v8388
  %v8390 = vpop.f32.mrb[0].mxu0
  %8391 = vmatprep.mubr.bf16.mxu0 %v8288
  %8392 = vmatmul.mubr.bf16.gmra.mrb[0].mxu0 %v8287
  %v8393 = vpop.f32.mrb[0].mxu0
  %v8394 = vadd.f32 0.0, %v8393
  %v8395 = vpop.f32.mrb[0].mxu0
  %v8396 = vpop.f32.mrb[0].mxu0
  %v8397 = vadd.f32 0.0, %v8396
  %v8398 = vpop.f32.mrb[0].mxu0
  %8399 = vmatprep.mubr.bf16.mxu0 %v8292
  %8400 = vmatmul.mubr.bf16.gmra.mrb[0].mxu0 %v8291
  %v8401 = vpop.f32.mrb[0].mxu0
  %v8402 = vadd.f32 0.0, %v8401
  %v8403 = vpop.f32.mrb[0].mxu0
  %v8404 = vpop.f32.mrb[0].mxu0
  %v8405 = vadd.f32 0.0, %v8404
  %v8406 = vpop.f32.mrb[0].mxu0
  %8407 = vmatprep.mubr.bf16.mxu0 %v8296
  %8408 = vmatmul.mubr.bf16.gmra.mrb[0].mxu0 %v8295
  %v8409 = vpop.f32.mrb[0].mxu0
  %v8410 = vadd.f32 0.0, %v8409
  %v8411 = vpop.f32.mrb[0].mxu0
  %v8412 = vpop.f32.mrb[0].mxu0
  %v8413 = vadd.f32 0.0, %v8412
  %v8414 = vpop.f32.mrb[0].mxu0
  %8415 = vmatprep.mubr.bf16.mxu0 %v8300
  %8416 = vmatmul.mubr.bf16.gmra.mrb[0].mxu0 %v8299
  %v8417 = vpop.f32.mrb[0].mxu0
  %v8418 = vadd.f32 0.0, %v8417
  %v8419 = vpop.f32.mrb[0].mxu0
  %v8420 = vpop.f32.mrb[0].mxu0
  %v8421 = vadd.f32 0.0, %v8420
  %v8422 = vpop.f32.mrb[0].mxu0
  %8423 = vmatprep.mubr.bf16.mxu0 %v8304
  %8424 = vmatmul.mubr.bf16.gmra.mrb[0].mxu0 %v8303
  %v8425 = vpop.f32.mrb[0].mxu0
  %v8426 = vadd.f32 0.0, %v8425
  %v8427 = vpop.f32.mrb[0].mxu0
  %v8428 = vpop.f32.mrb[0].mxu0
  %v8429 = vadd.f32 0.0, %v8428
  %v8430 = vpop.f32.mrb[0].mxu0
  %8431 = vmatprep.mubr.bf16.mxu0 %v8308
  %8432 = vmatmul.mubr.bf16.gmra.mrb[0].mxu0 %v8307
  %v8433 = vpop.f32.mrb[0].mxu0
  %v8434 = vadd.f32 0.0, %v8433
  %v8435 = vpop.f32.mrb[0].mxu0
  %v8436 = vpop.f32.mrb[0].mxu0
  %v8437 = vadd.f32 0.0, %v8436
  %v8438 = vpop.f32.mrb[0].mxu0
  %8439 = vdwg.mxu0
  %8440 = vmatprep.subr.bf16.mxu0 0
  %8441 = vmatpush1.bf16.msra.mxu0 %v719
  %8442 = vmatprep.subr.bf16.mxu0 0
  %8443 = vmatpush1.bf16.msra.mxu0 %v720
  %8444 = vmatprep.subr.bf16.mxu0 0
  %8445 = vmatpush1.bf16.msra.mxu0 %v721
  %8446 = vmatprep.subr.bf16.mxu0 0
  %8447 = vmatpush1.bf16.msra.mxu0 %v722
  %8448 = vmatprep.subr.bf16.mxu0 0
  %8449 = vmatpush1.bf16.msra.mxu0 %v723
  %8450 = vmatprep.subr.bf16.mxu0 0
  %8451 = vmatpush1.bf16.msra.mxu0 %v724
  %8452 = vmatprep.subr.bf16.mxu0 0
  %8453 = vmatpush1.bf16.msra.mxu0 %v725
  %8454 = vmatprep.subr.bf16.mxu0 0
  %8455 = vmatpush1.bf16.msra.mxu0 %v726
  %8456 = vmatprep.subr.bf16.mxu0 0
  %8457 = vmatpush1.bf16.msra.mxu0 %v727
  %8458 = vmatprep.subr.bf16.mxu0 0
  %8459 = vmatpush1.bf16.msra.mxu0 %v728
  %8460 = vmatprep.subr.bf16.mxu0 0
  %8461 = vmatpush1.bf16.msra.mxu0 %v729
  %8462 = vmatprep.subr.bf16.mxu0 0
  %8463 = vmatpush1.bf16.msra.mxu0 %v730
  %8464 = vmatprep.subr.bf16.mxu0 0
  %8465 = vmatpush1.bf16.msra.mxu0 %v731
  %8466 = vmatprep.subr.bf16.mxu0 0
  %8467 = vmatpush1.bf16.msra.mxu0 %v732
  %8468 = vmatprep.subr.bf16.mxu0 0
  %8469 = vmatpush1.bf16.msra.mxu0 %v733
  %8470 = vmatprep.subr.bf16.mxu0 0
  %8471 = vmatpush1.bf16.msra.mxu0 %v734
  %8472 = vmatprep.mubr.bf16.mxu0 %v8282
  %8473 = vmatmul.mubr.bf16.gmra.mrb[0].mxu0 %v8281
  %v8474 = vpop.f32.mrb[0].mxu0
  %v8475 = vadd.f32 %v8378, %v8474
  %v8476 = vpop.f32.mrb[0].mxu0
  %v8477 = vpop.f32.mrb[0].mxu0
  %v8478 = vadd.f32 %v8381, %v8477
  %v8479 = vpop.f32.mrb[0].mxu0
  %8480 = vmatprep.mubr.bf16.mxu0 %v8286
  %8481 = vmatmul.mubr.bf16.gmra.mrb[0].mxu0 %v8285
  %v8482 = vpop.f32.mrb[0].mxu0
  %v8483 = vadd.f32 %v8386, %v8482
  %v8484 = vpop.f32.mrb[0].mxu0
  %v8485 = vpop.f32.mrb[0].mxu0
  %v8486 = vadd.f32 %v8389, %v8485
  %v8487 = vpop.f32.mrb[0].mxu0
  %8488 = vmatprep.mubr.bf16.mxu0 %v8290
  %8489 = vmatmul.mubr.bf16.gmra.mrb[0].mxu0 %v8289
  %v8490 = vpop.f32.mrb[0].mxu0
  %v8491 = vadd.f32 %v8394, %v8490
  %v8492 = vpop.f32.mrb[0].mxu0
  %v8493 = vpop.f32.mrb[0].mxu0
  %v8494 = vadd.f32 %v8397, %v8493
  %v8495 = vpop.f32.mrb[0].mxu0
  %8496 = vmatprep.mubr.bf16.mxu0 %v8294
  %8497 = vmatmul.mubr.bf16.gmra.mrb[0].mxu0 %v8293
  %v8498 = vpop.f32.mrb[0].mxu0
  %v8499 = vadd.f32 %v8402, %v8498
  %v8500 = vpop.f32.mrb[0].mxu0
  %v8501 = vpop.f32.mrb[0].mxu0
  %v8502 = vadd.f32 %v8405, %v8501
  %v8503 = vpop.f32.mrb[0].mxu0
  %8504 = vmatprep.mubr.bf16.mxu0 %v8298
  %8505 = vmatmul.mubr.bf16.gmra.mrb[0].mxu0 %v8297
  %v8506 = vpop.f32.mrb[0].mxu0
  %v8507 = vadd.f32 %v8410, %v8506
  %v8508 = vpop.f32.mrb[0].mxu0
  %v8509 = vpop.f32.mrb[0].mxu0
  %v8510 = vadd.f32 %v8413, %v8509
  %v8511 = vpop.f32.mrb[0].mxu0
  %8512 = vmatprep.mubr.bf16.mxu0 %v8302
  %8513 = vmatmul.mubr.bf16.gmra.mrb[0].mxu0 %v8301
  %v8514 = vpop.f32.mrb[0].mxu0
  %v8515 = vadd.f32 %v8418, %v8514
  %v8516 = vpop.f32.mrb[0].mxu0
  %v8517 = vpop.f32.mrb[0].mxu0
  %v8518 = vadd.f32 %v8421, %v8517
  %v8519 = vpop.f32.mrb[0].mxu0
  %8520 = vmatprep.mubr.bf16.mxu0 %v8306
  %8521 = vmatmul.mubr.bf16.gmra.mrb[0].mxu0 %v8305
  %v8522 = vpop.f32.mrb[0].mxu0
  %v8523 = vadd.f32 %v8426, %v8522
  %v8524 = vpop.f32.mrb[0].mxu0
  %v8525 = vpop.f32.mrb[0].mxu0
  %v8526 = vadd.f32 %v8429, %v8525
  %v8527 = vpop.f32.mrb[0].mxu0
  %8528 = vmatprep.mubr.bf16.mxu0 %v8310
  %8529 = vmatmul.mubr.bf16.gmra.mrb[0].mxu0 %v8309
  %v8530 = vpop.f32.mrb[0].mxu0
  %v8531 = vadd.f32 %v8434, %v8530
  %v8532 = vpop.f32.mrb[0].mxu0
  %v8533 = vpop.f32.mrb[0].mxu0
  %v8534 = vadd.f32 %v8437, %v8533
  %v8535 = vpop.f32.mrb[0].mxu0
  %8536 = vdwg.mxu0
  %v8537 = vpack.c.bf16 %v8478, %v8475
  %v8538 = vpack.c.bf16 %v8486, %v8483
  %v8539 = vpack.c.bf16 %v8494, %v8491
  %v8540 = vpack.c.bf16 %v8502, %v8499
  %v8541 = vpack.c.bf16 %v8510, %v8507
  %v8542 = vpack.c.bf16 %v8518, %v8515
  %v8543 = vpack.c.bf16 %v8526, %v8523
  %v8544 = vpack.c.bf16 %v8534, %v8531
  %s8545 = scalar_lea.vmem %s3, 832
  %v8546 = vld [vmem:[%s8545] sm:$0xf]
  %v8547 = vld [vmem:[%s8545 + $0x4] sm:$0xf]
  %v8548 = vld [vmem:[%s8545 + $0x8] sm:$0xf]
  %v8549 = vld [vmem:[%s8545 + $0xc] sm:$0xf]
  %v8550 = vld [vmem:[%s8545 + $0x10] sm:$0xf]
  %v8551 = vld [vmem:[%s8545 + $0x14] sm:$0xf]
  %v8552 = vld [vmem:[%s8545 + $0x18] sm:$0xf]
  %v8553 = vld [vmem:[%s8545 + $0x1c] sm:$0xf]
  %v8554 = vld [vmem:[%s8545 + $0x20] sm:$0xf]
  %v8555 = vld [vmem:[%s8545 + $0x24] sm:$0xf]
  %v8556 = vld [vmem:[%s8545 + $0x28] sm:$0xf]
  %v8557 = vld [vmem:[%s8545 + $0x2c] sm:$0xf]
  %v8558 = vld [vmem:[%s8545 + $0x30] sm:$0xf]
  %v8559 = vld [vmem:[%s8545 + $0x34] sm:$0xf]
  %v8560 = vld [vmem:[%s8545 + $0x38] sm:$0xf]
  %v8561 = vld [vmem:[%s8545 + $0x3c] sm:$0xf]
  %v8578 = vunpack.c.l.b16 %v8546
  %v8579 = vunpack.c.l.b16 %v8547
  %v8580 = vunpack.c.l.b16 %v8548
  %v8581 = vunpack.c.l.b16 %v8549
  %v8582 = vunpack.c.l.b16 %v8550
  %v8583 = vunpack.c.l.b16 %v8551
  %v8584 = vunpack.c.l.b16 %v8552
  %v8585 = vunpack.c.l.b16 %v8553
  %v8586 = vunpack.c.l.b16 %v8554
  %v8587 = vunpack.c.l.b16 %v8555
  %v8588 = vunpack.c.l.b16 %v8556
  %v8589 = vunpack.c.l.b16 %v8557
  %v8590 = vunpack.c.l.b16 %v8558
  %v8591 = vunpack.c.l.b16 %v8559
  %v8592 = vunpack.c.l.b16 %v8560
  %v8593 = vunpack.c.l.b16 %v8561
  %v8594 = vpack.c.b16 %v8579, %v8578
  %v8595 = vpack.c.b16 %v8581, %v8580
  %v8596 = vpack.c.b16 %v8583, %v8582
  %v8597 = vpack.c.b16 %v8585, %v8584
  %v8598 = vpack.c.b16 %v8587, %v8586
  %v8599 = vpack.c.b16 %v8589, %v8588
  %v8600 = vpack.c.b16 %v8591, %v8590
  %v8601 = vpack.c.b16 %v8593, %v8592
  %8610 = vmatprep.subr.bf16.mxu0 0
  %8611 = vmatpush1.bf16.msra.mxu0 %v8594
  %8612 = vmatprep.subr.bf16.mxu0 0
  %8613 = vmatpush1.bf16.msra.mxu0 %v8595
  %8614 = vmatprep.subr.bf16.mxu0 0
  %8615 = vmatpush1.bf16.msra.mxu0 %v8596
  %8616 = vmatprep.subr.bf16.mxu0 0
  %8617 = vmatpush1.bf16.msra.mxu0 %v8597
  %8618 = vmatprep.subr.bf16.mxu0 0
  %8619 = vmatpush1.bf16.msra.mxu0 %v8598
  %8620 = vmatprep.subr.bf16.mxu0 0
  %8621 = vmatpush1.bf16.msra.mxu0 %v8599
  %8622 = vmatprep.subr.bf16.mxu0 0
  %8623 = vmatpush1.bf16.msra.mxu0 %v8600
  %8624 = vmatprep.subr.bf16.mxu0 0
  %8625 = vmatpush1.bf16.msra.mxu0 %v8601
  %8626 = vmatprep.subr.bf16.mxu0 0
  %8627 = vmatpush1.bf16.msra.mxu0 0
  %8628 = vmatprep.subr.bf16.mxu0 0
  %8629 = vmatpush1.bf16.msra.mxu0 0
  %8630 = vmatprep.subr.bf16.mxu0 0
  %8631 = vmatpush1.bf16.msra.mxu0 0
  %8632 = vmatprep.subr.bf16.mxu0 0
  %8633 = vmatpush1.bf16.msra.mxu0 0
  %8634 = vmatprep.subr.bf16.mxu0 0
  %8635 = vmatpush1.bf16.msra.mxu0 0
  %8636 = vmatprep.subr.bf16.mxu0 0
  %8637 = vmatpush1.bf16.msra.mxu0 0
  %8638 = vmatprep.subr.bf16.mxu0 0
  %8639 = vmatpush1.bf16.msra.mxu0 0
  %8640 = vmatprep.subr.bf16.mxu0 0
  %8641 = vmatpush1.bf16.msra.mxu0 0
  %8642 = vmatprep.mubr.bf16.mxu0 0
  %8643 = vmatmul.mubr.bf16.gmra.mrb[0].mxu0 %v8537
  %v8644 = vpop.f32.mrb[0].mxu0
  %v8645 = vadd.f32 0.0, %v8644
  %v8646 = vpop.f32.mrb[0].mxu0
  %v8647 = vpop.f32.mrb[0].mxu0
  %v8648 = vadd.f32 0.0, %v8647
  %v8649 = vpop.f32.mrb[0].mxu0
  %8650 = vmatprep.mubr.bf16.mxu0 0
  %8651 = vmatmul.mubr.bf16.gmra.mrb[0].mxu0 %v8538
  %v8652 = vpop.f32.mrb[0].mxu0
  %v8653 = vadd.f32 0.0, %v8652
  %v8654 = vpop.f32.mrb[0].mxu0
  %v8655 = vpop.f32.mrb[0].mxu0
  %v8656 = vadd.f32 0.0, %v8655
  %v8657 = vpop.f32.mrb[0].mxu0
  %8658 = vmatprep.mubr.bf16.mxu0 0
  %8659 = vmatmul.mubr.bf16.gmra.mrb[0].mxu0 %v8539
  %v8660 = vpop.f32.mrb[0].mxu0
  %v8661 = vadd.f32 0.0, %v8660
  %v8662 = vpop.f32.mrb[0].mxu0
  %v8663 = vpop.f32.mrb[0].mxu0
  %v8664 = vadd.f32 0.0, %v8663
  %v8665 = vpop.f32.mrb[0].mxu0
  %8666 = vmatprep.mubr.bf16.mxu0 0
  %8667 = vmatmul.mubr.bf16.gmra.mrb[0].mxu0 %v8540
  %v8668 = vpop.f32.mrb[0].mxu0
  %v8669 = vadd.f32 0.0, %v8668
  %v8670 = vpop.f32.mrb[0].mxu0
  %v8671 = vpop.f32.mrb[0].mxu0
  %v8672 = vadd.f32 0.0, %v8671
  %v8673 = vpop.f32.mrb[0].mxu0
  %8674 = vmatprep.mubr.bf16.mxu0 0
  %8675 = vmatmul.mubr.bf16.gmra.mrb[0].mxu0 %v8541
  %v8676 = vpop.f32.mrb[0].mxu0
  %v8677 = vadd.f32 0.0, %v8676
  %v8678 = vpop.f32.mrb[0].mxu0
  %v8679 = vpop.f32.mrb[0].mxu0
  %v8680 = vadd.f32 0.0, %v8679
  %v8681 = vpop.f32.mrb[0].mxu0
  %8682 = vmatprep.mubr.bf16.mxu0 0
  %8683 = vmatmul.mubr.bf16.gmra.mrb[0].mxu0 %v8542
  %v8684 = vpop.f32.mrb[0].mxu0
  %v8685 = vadd.f32 0.0, %v8684
  %v8686 = vpop.f32.mrb[0].mxu0
  %v8687 = vpop.f32.mrb[0].mxu0
  %v8688 = vadd.f32 0.0, %v8687
  %v8689 = vpop.f32.mrb[0].mxu0
  %8690 = vmatprep.mubr.bf16.mxu0 0
  %8691 = vmatmul.mubr.bf16.gmra.mrb[0].mxu0 %v8543
  %v8692 = vpop.f32.mrb[0].mxu0
  %v8693 = vadd.f32 0.0, %v8692
  %v8694 = vpop.f32.mrb[0].mxu0
  %v8695 = vpop.f32.mrb[0].mxu0
  %v8696 = vadd.f32 0.0, %v8695
  %v8697 = vpop.f32.mrb[0].mxu0
  %8698 = vmatprep.mubr.bf16.mxu0 0
  %8699 = vmatmul.mubr.bf16.gmra.mrb[0].mxu0 %v8544
  %v8700 = vpop.f32.mrb[0].mxu0
  %v8701 = vadd.f32 0.0, %v8700
  %v8702 = vpop.f32.mrb[0].mxu0
  %v8703 = vpop.f32.mrb[0].mxu0
  %v8704 = vadd.f32 0.0, %v8703
  %v8705 = vpop.f32.mrb[0].mxu0
  %8706 = vdwg.mxu0
  %v8707 = vadd.f32 %v8134, %v8645
  %v8708 = vadd.f32 %v8135, %v8648
  %v8709 = vadd.f32 %v8136, %v8653
  %v8710 = vadd.f32 %v8137, %v8656
  %v8711 = vadd.f32 %v8138, %v8661
  %v8712 = vadd.f32 %v8139, %v8664
  %v8713 = vadd.f32 %v8140, %v8669
  %v8714 = vadd.f32 %v8141, %v8672
  %v8715 = vadd.f32 %v8142, %v8677
  %v8716 = vadd.f32 %v8143, %v8680
  %v8717 = vadd.f32 %v8144, %v8685
  %v8718 = vadd.f32 %v8145, %v8688
  %v8719 = vadd.f32 %v8146, %v8693
  %v8720 = vadd.f32 %v8147, %v8696
  %v8721 = vadd.f32 %v8148, %v8701
  %v8722 = vadd.f32 %v8149, %v8704
  %s8723 = scalar_lea.vmem %s2, 3584
  %v8724 = vld [vmem:[%s8723] sm:$0xff]
  %v8725 = vld [vmem:[%s8723 + $0x8] sm:$0xff]
  %v8726 = vld [vmem:[%s8723 + $0x10] sm:$0xff]
  %v8727 = vld [vmem:[%s8723 + $0x18] sm:$0xff]
  %v8728 = vld [vmem:[%s8723 + $0x20] sm:$0xff]
  %v8729 = vld [vmem:[%s8723 + $0x28] sm:$0xff]
  %v8730 = vld [vmem:[%s8723 + $0x30] sm:$0xff]
  %v8731 = vld [vmem:[%s8723 + $0x38] sm:$0xff]
  %v8732 = vld [vmem:[%s8723 + $0x40] sm:$0xff]
  %v8733 = vld [vmem:[%s8723 + $0x48] sm:$0xff]
  %v8734 = vld [vmem:[%s8723 + $0x50] sm:$0xff]
  %v8735 = vld [vmem:[%s8723 + $0x58] sm:$0xff]
  %v8736 = vld [vmem:[%s8723 + $0x60] sm:$0xff]
  %v8737 = vld [vmem:[%s8723 + $0x68] sm:$0xff]
  %v8738 = vld [vmem:[%s8723 + $0x70] sm:$0xff]
  %v8739 = vld [vmem:[%s8723 + $0x78] sm:$0xff]
  %v8740 = vld [vmem:[%s8723 + $0x80] sm:$0xff]
  %v8741 = vld [vmem:[%s8723 + $0x88] sm:$0xff]
  %v8742 = vld [vmem:[%s8723 + $0x90] sm:$0xff]
  %v8743 = vld [vmem:[%s8723 + $0x98] sm:$0xff]
  %v8744 = vld [vmem:[%s8723 + $0xa0] sm:$0xff]
  %v8745 = vld [vmem:[%s8723 + $0xa8] sm:$0xff]
  %v8746 = vld [vmem:[%s8723 + $0xb0] sm:$0xff]
  %v8747 = vld [vmem:[%s8723 + $0xb8] sm:$0xff]
  %v8748 = vld [vmem:[%s8723 + $0xc0] sm:$0xff]
  %v8749 = vld [vmem:[%s8723 + $0xc8] sm:$0xff]
  %v8750 = vld [vmem:[%s8723 + $0xd0] sm:$0xff]
  %v8751 = vld [vmem:[%s8723 + $0xd8] sm:$0xff]
  %v8752 = vld [vmem:[%s8723 + $0xe0] sm:$0xff]
  %v8753 = vld [vmem:[%s8723 + $0xe8] sm:$0xff]
  %v8754 = vld [vmem:[%s8723 + $0xf0] sm:$0xff]
  %v8755 = vld [vmem:[%s8723 + $0xf8] sm:$0xff]
  %v8788 = vunpack.c.l.b16 %v8724
  %v8789 = vunpack.c.h.b16 %v8724
  %v8790 = vunpack.c.l.b16 %v8725
  %v8791 = vunpack.c.h.b16 %v8725
  %v8792 = vunpack.c.l.b16 %v8726
  %v8793 = vunpack.c.h.b16 %v8726
  %v8794 = vunpack.c.l.b16 %v8727
  %v8795 = vunpack.c.h.b16 %v8727
  %v8796 = vunpack.c.l.b16 %v8728
  %v8797 = vunpack.c.h.b16 %v8728
  %v8798 = vunpack.c.l.b16 %v8729
  %v8799 = vunpack.c.h.b16 %v8729
  %v8800 = vunpack.c.l.b16 %v8730
  %v8801 = vunpack.c.h.b16 %v8730
  %v8802 = vunpack.c.l.b16 %v8731
  %v8803 = vunpack.c.h.b16 %v8731
  %v8804 = vunpack.c.l.b16 %v8732
  %v8805 = vunpack.c.h.b16 %v8732
  %v8806 = vunpack.c.l.b16 %v8733
  %v8807 = vunpack.c.h.b16 %v8733
  %v8808 = vunpack.c.l.b16 %v8734
  %v8809 = vunpack.c.h.b16 %v8734
  %v8810 = vunpack.c.l.b16 %v8735
  %v8811 = vunpack.c.h.b16 %v8735
  %v8812 = vunpack.c.l.b16 %v8736
  %v8813 = vunpack.c.h.b16 %v8736
  %v8814 = vunpack.c.l.b16 %v8737
  %v8815 = vunpack.c.h.b16 %v8737
  %v8816 = vunpack.c.l.b16 %v8738
  %v8817 = vunpack.c.h.b16 %v8738
  %v8818 = vunpack.c.l.b16 %v8739
  %v8819 = vunpack.c.h.b16 %v8739
  %v8820 = vunpack.c.l.b16 %v8740
  %v8821 = vunpack.c.h.b16 %v8740
  %v8822 = vunpack.c.l.b16 %v8741
  %v8823 = vunpack.c.h.b16 %v8741
  %v8824 = vunpack.c.l.b16 %v8742
  %v8825 = vunpack.c.h.b16 %v8742
  %v8826 = vunpack.c.l.b16 %v8743
  %v8827 = vunpack.c.h.b16 %v8743
  %v8828 = vunpack.c.l.b16 %v8744
  %v8829 = vunpack.c.h.b16 %v8744
  %v8830 = vunpack.c.l.b16 %v8745
  %v8831 = vunpack.c.h.b16 %v8745
  %v8832 = vunpack.c.l.b16 %v8746
  %v8833 = vunpack.c.h.b16 %v8746
  %v8834 = vunpack.c.l.b16 %v8747
  %v8835 = vunpack.c.h.b16 %v8747
  %v8836 = vunpack.c.l.b16 %v8748
  %v8837 = vunpack.c.h.b16 %v8748
  %v8838 = vunpack.c.l.b16 %v8749
  %v8839 = vunpack.c.h.b16 %v8749
  %v8840 = vunpack.c.l.b16 %v8750
  %v8841 = vunpack.c.h.b16 %v8750
  %v8842 = vunpack.c.l.b16 %v8751
  %v8843 = vunpack.c.h.b16 %v8751
  %v8844 = vunpack.c.l.b16 %v8752
  %v8845 = vunpack.c.h.b16 %v8752
  %v8846 = vunpack.c.l.b16 %v8753
  %v8847 = vunpack.c.h.b16 %v8753
  %v8848 = vunpack.c.l.b16 %v8754
  %v8849 = vunpack.c.h.b16 %v8754
  %v8850 = vunpack.c.l.b16 %v8755
  %v8851 = vunpack.c.h.b16 %v8755
  %v8852 = vpack.c.b16 %v8792, %v8788
  %v8853 = vpack.c.b16 %v8793, %v8789
  %v8854 = vpack.c.b16 %v8794, %v8790
  %v8855 = vpack.c.b16 %v8795, %v8791
  %v8856 = vpack.c.b16 %v8800, %v8796
  %v8857 = vpack.c.b16 %v8801, %v8797
  %v8858 = vpack.c.b16 %v8802, %v8798
  %v8859 = vpack.c.b16 %v8803, %v8799
  %v8860 = vpack.c.b16 %v8808, %v8804
  %v8861 = vpack.c.b16 %v8809, %v8805
  %v8862 = vpack.c.b16 %v8810, %v8806
  %v8863 = vpack.c.b16 %v8811, %v8807
  %v8864 = vpack.c.b16 %v8816, %v8812
  %v8865 = vpack.c.b16 %v8817, %v8813
  %v8866 = vpack.c.b16 %v8818, %v8814
  %v8867 = vpack.c.b16 %v8819, %v8815
  %v8868 = vpack.c.b16 %v8824, %v8820
  %v8869 = vpack.c.b16 %v8825, %v8821
  %v8870 = vpack.c.b16 %v8826, %v8822
  %v8871 = vpack.c.b16 %v8827, %v8823
  %v8872 = vpack.c.b16 %v8832, %v8828
  %v8873 = vpack.c.b16 %v8833, %v8829
  %v8874 = vpack.c.b16 %v8834, %v8830
  %v8875 = vpack.c.b16 %v8835, %v8831
  %v8876 = vpack.c.b16 %v8840, %v8836
  %v8877 = vpack.c.b16 %v8841, %v8837
  %v8878 = vpack.c.b16 %v8842, %v8838
  %v8879 = vpack.c.b16 %v8843, %v8839
  %v8880 = vpack.c.b16 %v8848, %v8844
  %v8881 = vpack.c.b16 %v8849, %v8845
  %v8882 = vpack.c.b16 %v8850, %v8846
  %v8883 = vpack.c.b16 %v8851, %v8847
  %8916 = vmatprep.subr.bf16.mxu0 0
  %8917 = vmatpush1.bf16.msra.mxu0 %v703
  %8918 = vmatprep.subr.bf16.mxu0 0
  %8919 = vmatpush1.bf16.msra.mxu0 %v704
  %8920 = vmatprep.subr.bf16.mxu0 0
  %8921 = vmatpush1.bf16.msra.mxu0 %v705
  %8922 = vmatprep.subr.bf16.mxu0 0
  %8923 = vmatpush1.bf16.msra.mxu0 %v706
  %8924 = vmatprep.subr.bf16.mxu0 0
  %8925 = vmatpush1.bf16.msra.mxu0 %v707
  %8926 = vmatprep.subr.bf16.mxu0 0
  %8927 = vmatpush1.bf16.msra.mxu0 %v708
  %8928 = vmatprep.subr.bf16.mxu0 0
  %8929 = vmatpush1.bf16.msra.mxu0 %v709
  %8930 = vmatprep.subr.bf16.mxu0 0
  %8931 = vmatpush1.bf16.msra.mxu0 %v710
  %8932 = vmatprep.subr.bf16.mxu0 0
  %8933 = vmatpush1.bf16.msra.mxu0 %v711
  %8934 = vmatprep.subr.bf16.mxu0 0
  %8935 = vmatpush1.bf16.msra.mxu0 %v712
  %8936 = vmatprep.subr.bf16.mxu0 0
  %8937 = vmatpush1.bf16.msra.mxu0 %v713
  %8938 = vmatprep.subr.bf16.mxu0 0
  %8939 = vmatpush1.bf16.msra.mxu0 %v714
  %8940 = vmatprep.subr.bf16.mxu0 0
  %8941 = vmatpush1.bf16.msra.mxu0 %v715
  %8942 = vmatprep.subr.bf16.mxu0 0
  %8943 = vmatpush1.bf16.msra.mxu0 %v716
  %8944 = vmatprep.subr.bf16.mxu0 0
  %8945 = vmatpush1.bf16.msra.mxu0 %v717
  %8946 = vmatprep.subr.bf16.mxu0 0
  %8947 = vmatpush1.bf16.msra.mxu0 %v718
  %8948 = vmatprep.mubr.bf16.mxu0 %v8853
  %8949 = vmatmul.mubr.bf16.gmra.mrb[0].mxu0 %v8852
  %v8950 = vpop.f32.mrb[0].mxu0
  %v8951 = vadd.f32 0.0, %v8950
  %v8952 = vpop.f32.mrb[0].mxu0
  %v8953 = vpop.f32.mrb[0].mxu0
  %v8954 = vadd.f32 0.0, %v8953
  %v8955 = vpop.f32.mrb[0].mxu0
  %8956 = vmatprep.mubr.bf16.mxu0 %v8857
  %8957 = vmatmul.mubr.bf16.gmra.mrb[0].mxu0 %v8856
  %v8958 = vpop.f32.mrb[0].mxu0
  %v8959 = vadd.f32 0.0, %v8958
  %v8960 = vpop.f32.mrb[0].mxu0
  %v8961 = vpop.f32.mrb[0].mxu0
  %v8962 = vadd.f32 0.0, %v8961
  %v8963 = vpop.f32.mrb[0].mxu0
  %8964 = vmatprep.mubr.bf16.mxu0 %v8861
  %8965 = vmatmul.mubr.bf16.gmra.mrb[0].mxu0 %v8860
  %v8966 = vpop.f32.mrb[0].mxu0
  %v8967 = vadd.f32 0.0, %v8966
  %v8968 = vpop.f32.mrb[0].mxu0
  %v8969 = vpop.f32.mrb[0].mxu0
  %v8970 = vadd.f32 0.0, %v8969
  %v8971 = vpop.f32.mrb[0].mxu0
  %8972 = vmatprep.mubr.bf16.mxu0 %v8865
  %8973 = vmatmul.mubr.bf16.gmra.mrb[0].mxu0 %v8864
  %v8974 = vpop.f32.mrb[0].mxu0
  %v8975 = vadd.f32 0.0, %v8974
  %v8976 = vpop.f32.mrb[0].mxu0
  %v8977 = vpop.f32.mrb[0].mxu0
  %v8978 = vadd.f32 0.0, %v8977
  %v8979 = vpop.f32.mrb[0].mxu0
  %8980 = vmatprep.mubr.bf16.mxu0 %v8869
  %8981 = vmatmul.mubr.bf16.gmra.mrb[0].mxu0 %v8868
  %v8982 = vpop.f32.mrb[0].mxu0
  %v8983 = vadd.f32 0.0, %v8982
  %v8984 = vpop.f32.mrb[0].mxu0
  %v8985 = vpop.f32.mrb[0].mxu0
  %v8986 = vadd.f32 0.0, %v8985
  %v8987 = vpop.f32.mrb[0].mxu0
  %8988 = vmatprep.mubr.bf16.mxu0 %v8873
  %8989 = vmatmul.mubr.bf16.gmra.mrb[0].mxu0 %v8872
  %v8990 = vpop.f32.mrb[0].mxu0
  %v8991 = vadd.f32 0.0, %v8990
  %v8992 = vpop.f32.mrb[0].mxu0
  %v8993 = vpop.f32.mrb[0].mxu0
  %v8994 = vadd.f32 0.0, %v8993
  %v8995 = vpop.f32.mrb[0].mxu0
  %8996 = vmatprep.mubr.bf16.mxu0 %v8877
  %8997 = vmatmul.mubr.bf16.gmra.mrb[0].mxu0 %v8876
  %v8998 = vpop.f32.mrb[0].mxu0
  %v8999 = vadd.f32 0.0, %v8998
  %v9000 = vpop.f32.mrb[0].mxu0
  %v9001 = vpop.f32.mrb[0].mxu0
  %v9002 = vadd.f32 0.0, %v9001
  %v9003 = vpop.f32.mrb[0].mxu0
  %9004 = vmatprep.mubr.bf16.mxu0 %v8881
  %9005 = vmatmul.mubr.bf16.gmra.mrb[0].mxu0 %v8880
  %v9006 = vpop.f32.mrb[0].mxu0
  %v9007 = vadd.f32 0.0, %v9006
  %v9008 = vpop.f32.mrb[0].mxu0
  %v9009 = vpop.f32.mrb[0].mxu0
  %v9010 = vadd.f32 0.0, %v9009
  %v9011 = vpop.f32.mrb[0].mxu0
  %9012 = vdwg.mxu0
  %9013 = vmatprep.subr.bf16.mxu0 0
  %9014 = vmatpush1.bf16.msra.mxu0 %v719
  %9015 = vmatprep.subr.bf16.mxu0 0
  %9016 = vmatpush1.bf16.msra.mxu0 %v720
  %9017 = vmatprep.subr.bf16.mxu0 0
  %9018 = vmatpush1.bf16.msra.mxu0 %v721
  %9019 = vmatprep.subr.bf16.mxu0 0
  %9020 = vmatpush1.bf16.msra.mxu0 %v722
  %9021 = vmatprep.subr.bf16.mxu0 0
  %9022 = vmatpush1.bf16.msra.mxu0 %v723
  %9023 = vmatprep.subr.bf16.mxu0 0
  %9024 = vmatpush1.bf16.msra.mxu0 %v724
  %9025 = vmatprep.subr.bf16.mxu0 0
  %9026 = vmatpush1.bf16.msra.mxu0 %v725
  %9027 = vmatprep.subr.bf16.mxu0 0
  %9028 = vmatpush1.bf16.msra.mxu0 %v726
  %9029 = vmatprep.subr.bf16.mxu0 0
  %9030 = vmatpush1.bf16.msra.mxu0 %v727
  %9031 = vmatprep.subr.bf16.mxu0 0
  %9032 = vmatpush1.bf16.msra.mxu0 %v728
  %9033 = vmatprep.subr.bf16.mxu0 0
  %9034 = vmatpush1.bf16.msra.mxu0 %v729
  %9035 = vmatprep.subr.bf16.mxu0 0
  %9036 = vmatpush1.bf16.msra.mxu0 %v730
  %9037 = vmatprep.subr.bf16.mxu0 0
  %9038 = vmatpush1.bf16.msra.mxu0 %v731
  %9039 = vmatprep.subr.bf16.mxu0 0
  %9040 = vmatpush1.bf16.msra.mxu0 %v732
  %9041 = vmatprep.subr.bf16.mxu0 0
  %9042 = vmatpush1.bf16.msra.mxu0 %v733
  %9043 = vmatprep.subr.bf16.mxu0 0
  %9044 = vmatpush1.bf16.msra.mxu0 %v734
  %9045 = vmatprep.mubr.bf16.mxu0 %v8855
  %9046 = vmatmul.mubr.bf16.gmra.mrb[0].mxu0 %v8854
  %v9047 = vpop.f32.mrb[0].mxu0
  %v9048 = vadd.f32 %v8951, %v9047
  %v9049 = vpop.f32.mrb[0].mxu0
  %v9050 = vpop.f32.mrb[0].mxu0
  %v9051 = vadd.f32 %v8954, %v9050
  %v9052 = vpop.f32.mrb[0].mxu0
  %9053 = vmatprep.mubr.bf16.mxu0 %v8859
  %9054 = vmatmul.mubr.bf16.gmra.mrb[0].mxu0 %v8858
  %v9055 = vpop.f32.mrb[0].mxu0
  %v9056 = vadd.f32 %v8959, %v9055
  %v9057 = vpop.f32.mrb[0].mxu0
  %v9058 = vpop.f32.mrb[0].mxu0
  %v9059 = vadd.f32 %v8962, %v9058
  %v9060 = vpop.f32.mrb[0].mxu0
  %9061 = vmatprep.mubr.bf16.mxu0 %v8863
  %9062 = vmatmul.mubr.bf16.gmra.mrb[0].mxu0 %v8862
  %v9063 = vpop.f32.mrb[0].mxu0
  %v9064 = vadd.f32 %v8967, %v9063
  %v9065 = vpop.f32.mrb[0].mxu0
  %v9066 = vpop.f32.mrb[0].mxu0
  %v9067 = vadd.f32 %v8970, %v9066
  %v9068 = vpop.f32.mrb[0].mxu0
  %9069 = vmatprep.mubr.bf16.mxu0 %v8867
  %9070 = vmatmul.mubr.bf16.gmra.mrb[0].mxu0 %v8866
  %v9071 = vpop.f32.mrb[0].mxu0
  %v9072 = vadd.f32 %v8975, %v9071
  %v9073 = vpop.f32.mrb[0].mxu0
  %v9074 = vpop.f32.mrb[0].mxu0
  %v9075 = vadd.f32 %v8978, %v9074
  %v9076 = vpop.f32.mrb[0].mxu0
  %9077 = vmatprep.mubr.bf16.mxu0 %v8871
  %9078 = vmatmul.mubr.bf16.gmra.mrb[0].mxu0 %v8870
  %v9079 = vpop.f32.mrb[0].mxu0
  %v9080 = vadd.f32 %v8983, %v9079
  %v9081 = vpop.f32.mrb[0].mxu0
  %v9082 = vpop.f32.mrb[0].mxu0
  %v9083 = vadd.f32 %v8986, %v9082
  %v9084 = vpop.f32.mrb[0].mxu0
  %9085 = vmatprep.mubr.bf16.mxu0 %v8875
  %9086 = vmatmul.mubr.bf16.gmra.mrb[0].mxu0 %v8874
  %v9087 = vpop.f32.mrb[0].mxu0
  %v9088 = vadd.f32 %v8991, %v9087
  %v9089 = vpop.f32.mrb[0].mxu0
  %v9090 = vpop.f32.mrb[0].mxu0
  %v9091 = vadd.f32 %v8994, %v9090
  %v9092 = vpop.f32.mrb[0].mxu0
  %9093 = vmatprep.mubr.bf16.mxu0 %v8879
  %9094 = vmatmul.mubr.bf16.gmra.mrb[0].mxu0 %v8878
  %v9095 = vpop.f32.mrb[0].mxu0
  %v9096 = vadd.f32 %v8999, %v9095
  %v9097 = vpop.f32.mrb[0].mxu0
  %v9098 = vpop.f32.mrb[0].mxu0
  %v9099 = vadd.f32 %v9002, %v9098
  %v9100 = vpop.f32.mrb[0].mxu0
  %9101 = vmatprep.mubr.bf16.mxu0 %v8883
  %9102 = vmatmul.mubr.bf16.gmra.mrb[0].mxu0 %v8882
  %v9103 = vpop.f32.mrb[0].mxu0
  %v9104 = vadd.f32 %v9007, %v9103
  %v9105 = vpop.f32.mrb[0].mxu0
  %v9106 = vpop.f32.mrb[0].mxu0
  %v9107 = vadd.f32 %v9010, %v9106
  %v9108 = vpop.f32.mrb[0].mxu0
  %9109 = vdwg.mxu0
  %v9110 = vpack.c.bf16 %v9051, %v9048
  %v9111 = vpack.c.bf16 %v9059, %v9056
  %v9112 = vpack.c.bf16 %v9067, %v9064
  %v9113 = vpack.c.bf16 %v9075, %v9072
  %v9114 = vpack.c.bf16 %v9083, %v9080
  %v9115 = vpack.c.bf16 %v9091, %v9088
  %v9116 = vpack.c.bf16 %v9099, %v9096
  %v9117 = vpack.c.bf16 %v9107, %v9104
  %s9118 = scalar_lea.vmem %s3, 896
  %v9119 = vld [vmem:[%s9118] sm:$0xf]
  %v9120 = vld [vmem:[%s9118 + $0x4] sm:$0xf]
  %v9121 = vld [vmem:[%s9118 + $0x8] sm:$0xf]
  %v9122 = vld [vmem:[%s9118 + $0xc] sm:$0xf]
  %v9123 = vld [vmem:[%s9118 + $0x10] sm:$0xf]
  %v9124 = vld [vmem:[%s9118 + $0x14] sm:$0xf]
  %v9125 = vld [vmem:[%s9118 + $0x18] sm:$0xf]
  %v9126 = vld [vmem:[%s9118 + $0x1c] sm:$0xf]
  %v9127 = vld [vmem:[%s9118 + $0x20] sm:$0xf]
  %v9128 = vld [vmem:[%s9118 + $0x24] sm:$0xf]
  %v9129 = vld [vmem:[%s9118 + $0x28] sm:$0xf]
  %v9130 = vld [vmem:[%s9118 + $0x2c] sm:$0xf]
  %v9131 = vld [vmem:[%s9118 + $0x30] sm:$0xf]
  %v9132 = vld [vmem:[%s9118 + $0x34] sm:$0xf]
  %v9133 = vld [vmem:[%s9118 + $0x38] sm:$0xf]
  %v9134 = vld [vmem:[%s9118 + $0x3c] sm:$0xf]
  %v9151 = vunpack.c.l.b16 %v9119
  %v9152 = vunpack.c.l.b16 %v9120
  %v9153 = vunpack.c.l.b16 %v9121
  %v9154 = vunpack.c.l.b16 %v9122
  %v9155 = vunpack.c.l.b16 %v9123
  %v9156 = vunpack.c.l.b16 %v9124
  %v9157 = vunpack.c.l.b16 %v9125
  %v9158 = vunpack.c.l.b16 %v9126
  %v9159 = vunpack.c.l.b16 %v9127
  %v9160 = vunpack.c.l.b16 %v9128
  %v9161 = vunpack.c.l.b16 %v9129
  %v9162 = vunpack.c.l.b16 %v9130
  %v9163 = vunpack.c.l.b16 %v9131
  %v9164 = vunpack.c.l.b16 %v9132
  %v9165 = vunpack.c.l.b16 %v9133
  %v9166 = vunpack.c.l.b16 %v9134
  %v9167 = vpack.c.b16 %v9152, %v9151
  %v9168 = vpack.c.b16 %v9154, %v9153
  %v9169 = vpack.c.b16 %v9156, %v9155
  %v9170 = vpack.c.b16 %v9158, %v9157
  %v9171 = vpack.c.b16 %v9160, %v9159
  %v9172 = vpack.c.b16 %v9162, %v9161
  %v9173 = vpack.c.b16 %v9164, %v9163
  %v9174 = vpack.c.b16 %v9166, %v9165
  %9183 = vmatprep.subr.bf16.mxu0 0
  %9184 = vmatpush1.bf16.msra.mxu0 %v9167
  %9185 = vmatprep.subr.bf16.mxu0 0
  %9186 = vmatpush1.bf16.msra.mxu0 %v9168
  %9187 = vmatprep.subr.bf16.mxu0 0
  %9188 = vmatpush1.bf16.msra.mxu0 %v9169
  %9189 = vmatprep.subr.bf16.mxu0 0
  %9190 = vmatpush1.bf16.msra.mxu0 %v9170
  %9191 = vmatprep.subr.bf16.mxu0 0
  %9192 = vmatpush1.bf16.msra.mxu0 %v9171
  %9193 = vmatprep.subr.bf16.mxu0 0
  %9194 = vmatpush1.bf16.msra.mxu0 %v9172
  %9195 = vmatprep.subr.bf16.mxu0 0
  %9196 = vmatpush1.bf16.msra.mxu0 %v9173
  %9197 = vmatprep.subr.bf16.mxu0 0
  %9198 = vmatpush1.bf16.msra.mxu0 %v9174
  %9199 = vmatprep.subr.bf16.mxu0 0
  %9200 = vmatpush1.bf16.msra.mxu0 0
  %9201 = vmatprep.subr.bf16.mxu0 0
  %9202 = vmatpush1.bf16.msra.mxu0 0
  %9203 = vmatprep.subr.bf16.mxu0 0
  %9204 = vmatpush1.bf16.msra.mxu0 0
  %9205 = vmatprep.subr.bf16.mxu0 0
  %9206 = vmatpush1.bf16.msra.mxu0 0
  %9207 = vmatprep.subr.bf16.mxu0 0
  %9208 = vmatpush1.bf16.msra.mxu0 0
  %9209 = vmatprep.subr.bf16.mxu0 0
  %9210 = vmatpush1.bf16.msra.mxu0 0
  %9211 = vmatprep.subr.bf16.mxu0 0
  %9212 = vmatpush1.bf16.msra.mxu0 0
  %9213 = vmatprep.subr.bf16.mxu0 0
  %9214 = vmatpush1.bf16.msra.mxu0 0
  %9215 = vmatprep.mubr.bf16.mxu0 0
  %9216 = vmatmul.mubr.bf16.gmra.mrb[0].mxu0 %v9110
  %v9217 = vpop.f32.mrb[0].mxu0
  %v9218 = vadd.f32 0.0, %v9217
  %v9219 = vpop.f32.mrb[0].mxu0
  %v9220 = vpop.f32.mrb[0].mxu0
  %v9221 = vadd.f32 0.0, %v9220
  %v9222 = vpop.f32.mrb[0].mxu0
  %9223 = vmatprep.mubr.bf16.mxu0 0
  %9224 = vmatmul.mubr.bf16.gmra.mrb[0].mxu0 %v9111
  %v9225 = vpop.f32.mrb[0].mxu0
  %v9226 = vadd.f32 0.0, %v9225
  %v9227 = vpop.f32.mrb[0].mxu0
  %v9228 = vpop.f32.mrb[0].mxu0
  %v9229 = vadd.f32 0.0, %v9228
  %v9230 = vpop.f32.mrb[0].mxu0
  %9231 = vmatprep.mubr.bf16.mxu0 0
  %9232 = vmatmul.mubr.bf16.gmra.mrb[0].mxu0 %v9112
  %v9233 = vpop.f32.mrb[0].mxu0
  %v9234 = vadd.f32 0.0, %v9233
  %v9235 = vpop.f32.mrb[0].mxu0
  %v9236 = vpop.f32.mrb[0].mxu0
  %v9237 = vadd.f32 0.0, %v9236
  %v9238 = vpop.f32.mrb[0].mxu0
  %9239 = vmatprep.mubr.bf16.mxu0 0
  %9240 = vmatmul.mubr.bf16.gmra.mrb[0].mxu0 %v9113
  %v9241 = vpop.f32.mrb[0].mxu0
  %v9242 = vadd.f32 0.0, %v9241
  %v9243 = vpop.f32.mrb[0].mxu0
  %v9244 = vpop.f32.mrb[0].mxu0
  %v9245 = vadd.f32 0.0, %v9244
  %v9246 = vpop.f32.mrb[0].mxu0
  %9247 = vmatprep.mubr.bf16.mxu0 0
  %9248 = vmatmul.mubr.bf16.gmra.mrb[0].mxu0 %v9114
  %v9249 = vpop.f32.mrb[0].mxu0
  %v9250 = vadd.f32 0.0, %v9249
  %v9251 = vpop.f32.mrb[0].mxu0
  %v9252 = vpop.f32.mrb[0].mxu0
  %v9253 = vadd.f32 0.0, %v9252
  %v9254 = vpop.f32.mrb[0].mxu0
  %9255 = vmatprep.mubr.bf16.mxu0 0
  %9256 = vmatmul.mubr.bf16.gmra.mrb[0].mxu0 %v9115
  %v9257 = vpop.f32.mrb[0].mxu0
  %v9258 = vadd.f32 0.0, %v9257
  %v9259 = vpop.f32.mrb[0].mxu0
  %v9260 = vpop.f32.mrb[0].mxu0
  %v9261 = vadd.f32 0.0, %v9260
  %v9262 = vpop.f32.mrb[0].mxu0
  %9263 = vmatprep.mubr.bf16.mxu0 0
  %9264 = vmatmul.mubr.bf16.gmra.mrb[0].mxu0 %v9116
  %v9265 = vpop.f32.mrb[0].mxu0
  %v9266 = vadd.f32 0.0, %v9265
  %v9267 = vpop.f32.mrb[0].mxu0
  %v9268 = vpop.f32.mrb[0].mxu0
  %v9269 = vadd.f32 0.0, %v9268
  %v9270 = vpop.f32.mrb[0].mxu0
  %9271 = vmatprep.mubr.bf16.mxu0 0
  %9272 = vmatmul.mubr.bf16.gmra.mrb[0].mxu0 %v9117
  %v9273 = vpop.f32.mrb[0].mxu0
  %v9274 = vadd.f32 0.0, %v9273
  %v9275 = vpop.f32.mrb[0].mxu0
  %v9276 = vpop.f32.mrb[0].mxu0
  %v9277 = vadd.f32 0.0, %v9276
  %v9278 = vpop.f32.mrb[0].mxu0
  %9279 = vdwg.mxu0
  %v9280 = vadd.f32 %v8707, %v9218
  %v9281 = vadd.f32 %v8708, %v9221
  %v9282 = vadd.f32 %v8709, %v9226
  %v9283 = vadd.f32 %v8710, %v9229
  %v9284 = vadd.f32 %v8711, %v9234
  %v9285 = vadd.f32 %v8712, %v9237
  %v9286 = vadd.f32 %v8713, %v9242
  %v9287 = vadd.f32 %v8714, %v9245
  %v9288 = vadd.f32 %v8715, %v9250
  %v9289 = vadd.f32 %v8716, %v9253
  %v9290 = vadd.f32 %v8717, %v9258
  %v9291 = vadd.f32 %v8718, %v9261
  %v9292 = vadd.f32 %v8719, %v9266
  %v9293 = vadd.f32 %v8720, %v9269
  %v9294 = vadd.f32 %v8721, %v9274
  %v9295 = vadd.f32 %v8722, %v9277
  %s9296 = scalar_lea.vmem %s2, 3840
  %v9297 = vld [vmem:[%s9296] sm:$0xff]
  %v9298 = vld [vmem:[%s9296 + $0x8] sm:$0xff]
  %v9299 = vld [vmem:[%s9296 + $0x10] sm:$0xff]
  %v9300 = vld [vmem:[%s9296 + $0x18] sm:$0xff]
  %v9301 = vld [vmem:[%s9296 + $0x20] sm:$0xff]
  %v9302 = vld [vmem:[%s9296 + $0x28] sm:$0xff]
  %v9303 = vld [vmem:[%s9296 + $0x30] sm:$0xff]
  %v9304 = vld [vmem:[%s9296 + $0x38] sm:$0xff]
  %v9305 = vld [vmem:[%s9296 + $0x40] sm:$0xff]
  %v9306 = vld [vmem:[%s9296 + $0x48] sm:$0xff]
  %v9307 = vld [vmem:[%s9296 + $0x50] sm:$0xff]
  %v9308 = vld [vmem:[%s9296 + $0x58] sm:$0xff]
  %v9309 = vld [vmem:[%s9296 + $0x60] sm:$0xff]
  %v9310 = vld [vmem:[%s9296 + $0x68] sm:$0xff]
  %v9311 = vld [vmem:[%s9296 + $0x70] sm:$0xff]
  %v9312 = vld [vmem:[%s9296 + $0x78] sm:$0xff]
  %v9313 = vld [vmem:[%s9296 + $0x80] sm:$0xff]
  %v9314 = vld [vmem:[%s9296 + $0x88] sm:$0xff]
  %v9315 = vld [vmem:[%s9296 + $0x90] sm:$0xff]
  %v9316 = vld [vmem:[%s9296 + $0x98] sm:$0xff]
  %v9317 = vld [vmem:[%s9296 + $0xa0] sm:$0xff]
  %v9318 = vld [vmem:[%s9296 + $0xa8] sm:$0xff]
  %v9319 = vld [vmem:[%s9296 + $0xb0] sm:$0xff]
  %v9320 = vld [vmem:[%s9296 + $0xb8] sm:$0xff]
  %v9321 = vld [vmem:[%s9296 + $0xc0] sm:$0xff]
  %v9322 = vld [vmem:[%s9296 + $0xc8] sm:$0xff]
  %v9323 = vld [vmem:[%s9296 + $0xd0] sm:$0xff]
  %v9324 = vld [vmem:[%s9296 + $0xd8] sm:$0xff]
  %v9325 = vld [vmem:[%s9296 + $0xe0] sm:$0xff]
  %v9326 = vld [vmem:[%s9296 + $0xe8] sm:$0xff]
  %v9327 = vld [vmem:[%s9296 + $0xf0] sm:$0xff]
  %v9328 = vld [vmem:[%s9296 + $0xf8] sm:$0xff]
  %v9361 = vunpack.c.l.b16 %v9297
  %v9362 = vunpack.c.h.b16 %v9297
  %v9363 = vunpack.c.l.b16 %v9298
  %v9364 = vunpack.c.h.b16 %v9298
  %v9365 = vunpack.c.l.b16 %v9299
  %v9366 = vunpack.c.h.b16 %v9299
  %v9367 = vunpack.c.l.b16 %v9300
  %v9368 = vunpack.c.h.b16 %v9300
  %v9369 = vunpack.c.l.b16 %v9301
  %v9370 = vunpack.c.h.b16 %v9301
  %v9371 = vunpack.c.l.b16 %v9302
  %v9372 = vunpack.c.h.b16 %v9302
  %v9373 = vunpack.c.l.b16 %v9303
  %v9374 = vunpack.c.h.b16 %v9303
  %v9375 = vunpack.c.l.b16 %v9304
  %v9376 = vunpack.c.h.b16 %v9304
  %v9377 = vunpack.c.l.b16 %v9305
  %v9378 = vunpack.c.h.b16 %v9305
  %v9379 = vunpack.c.l.b16 %v9306
  %v9380 = vunpack.c.h.b16 %v9306
  %v9381 = vunpack.c.l.b16 %v9307
  %v9382 = vunpack.c.h.b16 %v9307
  %v9383 = vunpack.c.l.b16 %v9308
  %v9384 = vunpack.c.h.b16 %v9308
  %v9385 = vunpack.c.l.b16 %v9309
  %v9386 = vunpack.c.h.b16 %v9309
  %v9387 = vunpack.c.l.b16 %v9310
  %v9388 = vunpack.c.h.b16 %v9310
  %v9389 = vunpack.c.l.b16 %v9311
  %v9390 = vunpack.c.h.b16 %v9311
  %v9391 = vunpack.c.l.b16 %v9312
  %v9392 = vunpack.c.h.b16 %v9312
  %v9393 = vunpack.c.l.b16 %v9313
  %v9394 = vunpack.c.h.b16 %v9313
  %v9395 = vunpack.c.l.b16 %v9314
  %v9396 = vunpack.c.h.b16 %v9314
  %v9397 = vunpack.c.l.b16 %v9315
  %v9398 = vunpack.c.h.b16 %v9315
  %v9399 = vunpack.c.l.b16 %v9316
  %v9400 = vunpack.c.h.b16 %v9316
  %v9401 = vunpack.c.l.b16 %v9317
  %v9402 = vunpack.c.h.b16 %v9317
  %v9403 = vunpack.c.l.b16 %v9318
  %v9404 = vunpack.c.h.b16 %v9318
  %v9405 = vunpack.c.l.b16 %v9319
  %v9406 = vunpack.c.h.b16 %v9319
  %v9407 = vunpack.c.l.b16 %v9320
  %v9408 = vunpack.c.h.b16 %v9320
  %v9409 = vunpack.c.l.b16 %v9321
  %v9410 = vunpack.c.h.b16 %v9321
  %v9411 = vunpack.c.l.b16 %v9322
  %v9412 = vunpack.c.h.b16 %v9322
  %v9413 = vunpack.c.l.b16 %v9323
  %v9414 = vunpack.c.h.b16 %v9323
  %v9415 = vunpack.c.l.b16 %v9324
  %v9416 = vunpack.c.h.b16 %v9324
  %v9417 = vunpack.c.l.b16 %v9325
  %v9418 = vunpack.c.h.b16 %v9325
  %v9419 = vunpack.c.l.b16 %v9326
  %v9420 = vunpack.c.h.b16 %v9326
  %v9421 = vunpack.c.l.b16 %v9327
  %v9422 = vunpack.c.h.b16 %v9327
  %v9423 = vunpack.c.l.b16 %v9328
  %v9424 = vunpack.c.h.b16 %v9328
  %v9425 = vpack.c.b16 %v9365, %v9361
  %v9426 = vpack.c.b16 %v9366, %v9362
  %v9427 = vpack.c.b16 %v9367, %v9363
  %v9428 = vpack.c.b16 %v9368, %v9364
  %v9429 = vpack.c.b16 %v9373, %v9369
  %v9430 = vpack.c.b16 %v9374, %v9370
  %v9431 = vpack.c.b16 %v9375, %v9371
  %v9432 = vpack.c.b16 %v9376, %v9372
  %v9433 = vpack.c.b16 %v9381, %v9377
  %v9434 = vpack.c.b16 %v9382, %v9378
  %v9435 = vpack.c.b16 %v9383, %v9379
  %v9436 = vpack.c.b16 %v9384, %v9380
  %v9437 = vpack.c.b16 %v9389, %v9385
  %v9438 = vpack.c.b16 %v9390, %v9386
  %v9439 = vpack.c.b16 %v9391, %v9387
  %v9440 = vpack.c.b16 %v9392, %v9388
  %v9441 = vpack.c.b16 %v9397, %v9393
  %v9442 = vpack.c.b16 %v9398, %v9394
  %v9443 = vpack.c.b16 %v9399, %v9395
  %v9444 = vpack.c.b16 %v9400, %v9396
  %v9445 = vpack.c.b16 %v9405, %v9401
  %v9446 = vpack.c.b16 %v9406, %v9402
  %v9447 = vpack.c.b16 %v9407, %v9403
  %v9448 = vpack.c.b16 %v9408, %v9404
  %v9449 = vpack.c.b16 %v9413, %v9409
  %v9450 = vpack.c.b16 %v9414, %v9410
  %v9451 = vpack.c.b16 %v9415, %v9411
  %v9452 = vpack.c.b16 %v9416, %v9412
  %v9453 = vpack.c.b16 %v9421, %v9417
  %v9454 = vpack.c.b16 %v9422, %v9418
  %v9455 = vpack.c.b16 %v9423, %v9419
  %v9456 = vpack.c.b16 %v9424, %v9420
  %9489 = vmatprep.subr.bf16.mxu0 0
  %9490 = vmatpush1.bf16.msra.mxu0 %v703
  %9491 = vmatprep.subr.bf16.mxu0 0
  %9492 = vmatpush1.bf16.msra.mxu0 %v704
  %9493 = vmatprep.subr.bf16.mxu0 0
  %9494 = vmatpush1.bf16.msra.mxu0 %v705
  %9495 = vmatprep.subr.bf16.mxu0 0
  %9496 = vmatpush1.bf16.msra.mxu0 %v706
  %9497 = vmatprep.subr.bf16.mxu0 0
  %9498 = vmatpush1.bf16.msra.mxu0 %v707
  %9499 = vmatprep.subr.bf16.mxu0 0
  %9500 = vmatpush1.bf16.msra.mxu0 %v708
  %9501 = vmatprep.subr.bf16.mxu0 0
  %9502 = vmatpush1.bf16.msra.mxu0 %v709
  %9503 = vmatprep.subr.bf16.mxu0 0
  %9504 = vmatpush1.bf16.msra.mxu0 %v710
  %9505 = vmatprep.subr.bf16.mxu0 0
  %9506 = vmatpush1.bf16.msra.mxu0 %v711
  %9507 = vmatprep.subr.bf16.mxu0 0
  %9508 = vmatpush1.bf16.msra.mxu0 %v712
  %9509 = vmatprep.subr.bf16.mxu0 0
  %9510 = vmatpush1.bf16.msra.mxu0 %v713
  %9511 = vmatprep.subr.bf16.mxu0 0
  %9512 = vmatpush1.bf16.msra.mxu0 %v714
  %9513 = vmatprep.subr.bf16.mxu0 0
  %9514 = vmatpush1.bf16.msra.mxu0 %v715
  %9515 = vmatprep.subr.bf16.mxu0 0
  %9516 = vmatpush1.bf16.msra.mxu0 %v716
  %9517 = vmatprep.subr.bf16.mxu0 0
  %9518 = vmatpush1.bf16.msra.mxu0 %v717
  %9519 = vmatprep.subr.bf16.mxu0 0
  %9520 = vmatpush1.bf16.msra.mxu0 %v718
  %9521 = vmatprep.mubr.bf16.mxu0 %v9426
  %9522 = vmatmul.mubr.bf16.gmra.mrb[0].mxu0 %v9425
  %v9523 = vpop.f32.mrb[0].mxu0
  %v9524 = vadd.f32 0.0, %v9523
  %v9525 = vpop.f32.mrb[0].mxu0
  %v9526 = vpop.f32.mrb[0].mxu0
  %v9527 = vadd.f32 0.0, %v9526
  %v9528 = vpop.f32.mrb[0].mxu0
  %9529 = vmatprep.mubr.bf16.mxu0 %v9430
  %9530 = vmatmul.mubr.bf16.gmra.mrb[0].mxu0 %v9429
  %v9531 = vpop.f32.mrb[0].mxu0
  %v9532 = vadd.f32 0.0, %v9531
  %v9533 = vpop.f32.mrb[0].mxu0
  %v9534 = vpop.f32.mrb[0].mxu0
  %v9535 = vadd.f32 0.0, %v9534
  %v9536 = vpop.f32.mrb[0].mxu0
  %9537 = vmatprep.mubr.bf16.mxu0 %v9434
  %9538 = vmatmul.mubr.bf16.gmra.mrb[0].mxu0 %v9433
  %v9539 = vpop.f32.mrb[0].mxu0
  %v9540 = vadd.f32 0.0, %v9539
  %v9541 = vpop.f32.mrb[0].mxu0
  %v9542 = vpop.f32.mrb[0].mxu0
  %v9543 = vadd.f32 0.0, %v9542
  %v9544 = vpop.f32.mrb[0].mxu0
  %9545 = vmatprep.mubr.bf16.mxu0 %v9438
  %9546 = vmatmul.mubr.bf16.gmra.mrb[0].mxu0 %v9437
  %v9547 = vpop.f32.mrb[0].mxu0
  %v9548 = vadd.f32 0.0, %v9547
  %v9549 = vpop.f32.mrb[0].mxu0
  %v9550 = vpop.f32.mrb[0].mxu0
  %v9551 = vadd.f32 0.0, %v9550
  %v9552 = vpop.f32.mrb[0].mxu0
  %9553 = vmatprep.mubr.bf16.mxu0 %v9442
  %9554 = vmatmul.mubr.bf16.gmra.mrb[0].mxu0 %v9441
  %v9555 = vpop.f32.mrb[0].mxu0
  %v9556 = vadd.f32 0.0, %v9555
  %v9557 = vpop.f32.mrb[0].mxu0
  %v9558 = vpop.f32.mrb[0].mxu0
  %v9559 = vadd.f32 0.0, %v9558
  %v9560 = vpop.f32.mrb[0].mxu0
  %9561 = vmatprep.mubr.bf16.mxu0 %v9446
  %9562 = vmatmul.mubr.bf16.gmra.mrb[0].mxu0 %v9445
  %v9563 = vpop.f32.mrb[0].mxu0
  %v9564 = vadd.f32 0.0, %v9563
  %v9565 = vpop.f32.mrb[0].mxu0
  %v9566 = vpop.f32.mrb[0].mxu0
  %v9567 = vadd.f32 0.0, %v9566
  %v9568 = vpop.f32.mrb[0].mxu0
  %9569 = vmatprep.mubr.bf16.mxu0 %v9450
  %9570 = vmatmul.mubr.bf16.gmra.mrb[0].mxu0 %v9449
  %v9571 = vpop.f32.mrb[0].mxu0
  %v9572 = vadd.f32 0.0, %v9571
  %v9573 = vpop.f32.mrb[0].mxu0
  %v9574 = vpop.f32.mrb[0].mxu0
  %v9575 = vadd.f32 0.0, %v9574
  %v9576 = vpop.f32.mrb[0].mxu0
  %9577 = vmatprep.mubr.bf16.mxu0 %v9454
  %9578 = vmatmul.mubr.bf16.gmra.mrb[0].mxu0 %v9453
  %v9579 = vpop.f32.mrb[0].mxu0
  %v9580 = vadd.f32 0.0, %v9579
  %v9581 = vpop.f32.mrb[0].mxu0
  %v9582 = vpop.f32.mrb[0].mxu0
  %v9583 = vadd.f32 0.0, %v9582
  %v9584 = vpop.f32.mrb[0].mxu0
  %9585 = vdwg.mxu0
  %9586 = vmatprep.subr.bf16.mxu0 0
  %9587 = vmatpush1.bf16.msra.mxu0 %v719
  %9588 = vmatprep.subr.bf16.mxu0 0
  %9589 = vmatpush1.bf16.msra.mxu0 %v720
  %9590 = vmatprep.subr.bf16.mxu0 0
  %9591 = vmatpush1.bf16.msra.mxu0 %v721
  %9592 = vmatprep.subr.bf16.mxu0 0
  %9593 = vmatpush1.bf16.msra.mxu0 %v722
  %9594 = vmatprep.subr.bf16.mxu0 0
  %9595 = vmatpush1.bf16.msra.mxu0 %v723
  %9596 = vmatprep.subr.bf16.mxu0 0
  %9597 = vmatpush1.bf16.msra.mxu0 %v724
  %9598 = vmatprep.subr.bf16.mxu0 0
  %9599 = vmatpush1.bf16.msra.mxu0 %v725
  %9600 = vmatprep.subr.bf16.mxu0 0
  %9601 = vmatpush1.bf16.msra.mxu0 %v726
  %9602 = vmatprep.subr.bf16.mxu0 0
  %9603 = vmatpush1.bf16.msra.mxu0 %v727
  %9604 = vmatprep.subr.bf16.mxu0 0
  %9605 = vmatpush1.bf16.msra.mxu0 %v728
  %9606 = vmatprep.subr.bf16.mxu0 0
  %9607 = vmatpush1.bf16.msra.mxu0 %v729
  %9608 = vmatprep.subr.bf16.mxu0 0
  %9609 = vmatpush1.bf16.msra.mxu0 %v730
  %9610 = vmatprep.subr.bf16.mxu0 0
  %9611 = vmatpush1.bf16.msra.mxu0 %v731
  %9612 = vmatprep.subr.bf16.mxu0 0
  %9613 = vmatpush1.bf16.msra.mxu0 %v732
  %9614 = vmatprep.subr.bf16.mxu0 0
  %9615 = vmatpush1.bf16.msra.mxu0 %v733
  %9616 = vmatprep.subr.bf16.mxu0 0
  %9617 = vmatpush1.bf16.msra.mxu0 %v734
  %9618 = vmatprep.mubr.bf16.mxu0 %v9428
  %9619 = vmatmul.mubr.bf16.gmra.mrb[0].mxu0 %v9427
  %v9620 = vpop.f32.mrb[0].mxu0
  %v9621 = vadd.f32 %v9524, %v9620
  %v9622 = vpop.f32.mrb[0].mxu0
  %v9623 = vpop.f32.mrb[0].mxu0
  %v9624 = vadd.f32 %v9527, %v9623
  %v9625 = vpop.f32.mrb[0].mxu0
  %9626 = vmatprep.mubr.bf16.mxu0 %v9432
  %9627 = vmatmul.mubr.bf16.gmra.mrb[0].mxu0 %v9431
  %v9628 = vpop.f32.mrb[0].mxu0
  %v9629 = vadd.f32 %v9532, %v9628
  %v9630 = vpop.f32.mrb[0].mxu0
  %v9631 = vpop.f32.mrb[0].mxu0
  %v9632 = vadd.f32 %v9535, %v9631
  %v9633 = vpop.f32.mrb[0].mxu0
  %9634 = vmatprep.mubr.bf16.mxu0 %v9436
  %9635 = vmatmul.mubr.bf16.gmra.mrb[0].mxu0 %v9435
  %v9636 = vpop.f32.mrb[0].mxu0
  %v9637 = vadd.f32 %v9540, %v9636
  %v9638 = vpop.f32.mrb[0].mxu0
  %v9639 = vpop.f32.mrb[0].mxu0
  %v9640 = vadd.f32 %v9543, %v9639
  %v9641 = vpop.f32.mrb[0].mxu0
  %9642 = vmatprep.mubr.bf16.mxu0 %v9440
  %9643 = vmatmul.mubr.bf16.gmra.mrb[0].mxu0 %v9439
  %v9644 = vpop.f32.mrb[0].mxu0
  %v9645 = vadd.f32 %v9548, %v9644
  %v9646 = vpop.f32.mrb[0].mxu0
  %v9647 = vpop.f32.mrb[0].mxu0
  %v9648 = vadd.f32 %v9551, %v9647
  %v9649 = vpop.f32.mrb[0].mxu0
  %9650 = vmatprep.mubr.bf16.mxu0 %v9444
  %9651 = vmatmul.mubr.bf16.gmra.mrb[0].mxu0 %v9443
  %v9652 = vpop.f32.mrb[0].mxu0
  %v9653 = vadd.f32 %v9556, %v9652
  %v9654 = vpop.f32.mrb[0].mxu0
  %v9655 = vpop.f32.mrb[0].mxu0
  %v9656 = vadd.f32 %v9559, %v9655
  %v9657 = vpop.f32.mrb[0].mxu0
  %9658 = vmatprep.mubr.bf16.mxu0 %v9448
  %9659 = vmatmul.mubr.bf16.gmra.mrb[0].mxu0 %v9447
  %v9660 = vpop.f32.mrb[0].mxu0
  %v9661 = vadd.f32 %v9564, %v9660
  %v9662 = vpop.f32.mrb[0].mxu0
  %v9663 = vpop.f32.mrb[0].mxu0
  %v9664 = vadd.f32 %v9567, %v9663
  %v9665 = vpop.f32.mrb[0].mxu0
  %9666 = vmatprep.mubr.bf16.mxu0 %v9452
  %9667 = vmatmul.mubr.bf16.gmra.mrb[0].mxu0 %v9451
  %v9668 = vpop.f32.mrb[0].mxu0
  %v9669 = vadd.f32 %v9572, %v9668
  %v9670 = vpop.f32.mrb[0].mxu0
  %v9671 = vpop.f32.mrb[0].mxu0
  %v9672 = vadd.f32 %v9575, %v9671
  %v9673 = vpop.f32.mrb[0].mxu0
  %9674 = vmatprep.mubr.bf16.mxu0 %v9456
  %9675 = vmatmul.mubr.bf16.gmra.mrb[0].mxu0 %v9455
  %v9676 = vpop.f32.mrb[0].mxu0
  %v9677 = vadd.f32 %v9580, %v9676
  %v9678 = vpop.f32.mrb[0].mxu0
  %v9679 = vpop.f32.mrb[0].mxu0
  %v9680 = vadd.f32 %v9583, %v9679
  %v9681 = vpop.f32.mrb[0].mxu0
  %9682 = vdwg.mxu0
  %v9683 = vpack.c.bf16 %v9624, %v9621
  %v9684 = vpack.c.bf16 %v9632, %v9629
  %v9685 = vpack.c.bf16 %v9640, %v9637
  %v9686 = vpack.c.bf16 %v9648, %v9645
  %v9687 = vpack.c.bf16 %v9656, %v9653
  %v9688 = vpack.c.bf16 %v9664, %v9661
  %v9689 = vpack.c.bf16 %v9672, %v9669
  %v9690 = vpack.c.bf16 %v9680, %v9677
  %s9691 = scalar_lea.vmem %s3, 960
  %v9692 = vld [vmem:[%s9691] sm:$0xf]
  %v9693 = vld [vmem:[%s9691 + $0x4] sm:$0xf]
  %v9694 = vld [vmem:[%s9691 + $0x8] sm:$0xf]
  %v9695 = vld [vmem:[%s9691 + $0xc] sm:$0xf]
  %v9696 = vld [vmem:[%s9691 + $0x10] sm:$0xf]
  %v9697 = vld [vmem:[%s9691 + $0x14] sm:$0xf]
  %v9698 = vld [vmem:[%s9691 + $0x18] sm:$0xf]
  %v9699 = vld [vmem:[%s9691 + $0x1c] sm:$0xf]
  %v9700 = vld [vmem:[%s9691 + $0x20] sm:$0xf]
  %v9701 = vld [vmem:[%s9691 + $0x24] sm:$0xf]
  %v9702 = vld [vmem:[%s9691 + $0x28] sm:$0xf]
  %v9703 = vld [vmem:[%s9691 + $0x2c] sm:$0xf]
  %v9704 = vld [vmem:[%s9691 + $0x30] sm:$0xf]
  %v9705 = vld [vmem:[%s9691 + $0x34] sm:$0xf]
  %v9706 = vld [vmem:[%s9691 + $0x38] sm:$0xf]
  %v9707 = vld [vmem:[%s9691 + $0x3c] sm:$0xf]
  %v9724 = vunpack.c.l.b16 %v9692
  %v9725 = vunpack.c.l.b16 %v9693
  %v9726 = vunpack.c.l.b16 %v9694
  %v9727 = vunpack.c.l.b16 %v9695
  %v9728 = vunpack.c.l.b16 %v9696
  %v9729 = vunpack.c.l.b16 %v9697
  %v9730 = vunpack.c.l.b16 %v9698
  %v9731 = vunpack.c.l.b16 %v9699
  %v9732 = vunpack.c.l.b16 %v9700
  %v9733 = vunpack.c.l.b16 %v9701
  %v9734 = vunpack.c.l.b16 %v9702
  %v9735 = vunpack.c.l.b16 %v9703
  %v9736 = vunpack.c.l.b16 %v9704
  %v9737 = vunpack.c.l.b16 %v9705
  %v9738 = vunpack.c.l.b16 %v9706
  %v9739 = vunpack.c.l.b16 %v9707
  %v9740 = vpack.c.b16 %v9725, %v9724
  %v9741 = vpack.c.b16 %v9727, %v9726
  %v9742 = vpack.c.b16 %v9729, %v9728
  %v9743 = vpack.c.b16 %v9731, %v9730
  %v9744 = vpack.c.b16 %v9733, %v9732
  %v9745 = vpack.c.b16 %v9735, %v9734
  %v9746 = vpack.c.b16 %v9737, %v9736
  %v9747 = vpack.c.b16 %v9739, %v9738
  %9756 = vmatprep.subr.bf16.mxu0 0
  %9757 = vmatpush1.bf16.msra.mxu0 %v9740
  %9758 = vmatprep.subr.bf16.mxu0 0
  %9759 = vmatpush1.bf16.msra.mxu0 %v9741
  %9760 = vmatprep.subr.bf16.mxu0 0
  %9761 = vmatpush1.bf16.msra.mxu0 %v9742
  %9762 = vmatprep.subr.bf16.mxu0 0
  %9763 = vmatpush1.bf16.msra.mxu0 %v9743
  %9764 = vmatprep.subr.bf16.mxu0 0
  %9765 = vmatpush1.bf16.msra.mxu0 %v9744
  %9766 = vmatprep.subr.bf16.mxu0 0
  %9767 = vmatpush1.bf16.msra.mxu0 %v9745
  %9768 = vmatprep.subr.bf16.mxu0 0
  %9769 = vmatpush1.bf16.msra.mxu0 %v9746
  %9770 = vmatprep.subr.bf16.mxu0 0
  %9771 = vmatpush1.bf16.msra.mxu0 %v9747
  %9772 = vmatprep.subr.bf16.mxu0 0
  %9773 = vmatpush1.bf16.msra.mxu0 0
  %9774 = vmatprep.subr.bf16.mxu0 0
  %9775 = vmatpush1.bf16.msra.mxu0 0
  %9776 = vmatprep.subr.bf16.mxu0 0
  %9777 = vmatpush1.bf16.msra.mxu0 0
  %9778 = vmatprep.subr.bf16.mxu0 0
  %9779 = vmatpush1.bf16.msra.mxu0 0
  %9780 = vmatprep.subr.bf16.mxu0 0
  %9781 = vmatpush1.bf16.msra.mxu0 0
  %9782 = vmatprep.subr.bf16.mxu0 0
  %9783 = vmatpush1.bf16.msra.mxu0 0
  %9784 = vmatprep.subr.bf16.mxu0 0
  %9785 = vmatpush1.bf16.msra.mxu0 0
  %9786 = vmatprep.subr.bf16.mxu0 0
  %9787 = vmatpush1.bf16.msra.mxu0 0
  %9788 = vmatprep.mubr.bf16.mxu0 0
  %9789 = vmatmul.mubr.bf16.gmra.mrb[0].mxu0 %v9683
  %v9790 = vpop.f32.mrb[0].mxu0
  %v9791 = vadd.f32 0.0, %v9790
  %v9792 = vpop.f32.mrb[0].mxu0
  %v9793 = vpop.f32.mrb[0].mxu0
  %v9794 = vadd.f32 0.0, %v9793
  %v9795 = vpop.f32.mrb[0].mxu0
  %9796 = vmatprep.mubr.bf16.mxu0 0
  %9797 = vmatmul.mubr.bf16.gmra.mrb[0].mxu0 %v9684
  %v9798 = vpop.f32.mrb[0].mxu0
  %v9799 = vadd.f32 0.0, %v9798
  %v9800 = vpop.f32.mrb[0].mxu0
  %v9801 = vpop.f32.mrb[0].mxu0
  %v9802 = vadd.f32 0.0, %v9801
  %v9803 = vpop.f32.mrb[0].mxu0
  %9804 = vmatprep.mubr.bf16.mxu0 0
  %9805 = vmatmul.mubr.bf16.gmra.mrb[0].mxu0 %v9685
  %v9806 = vpop.f32.mrb[0].mxu0
  %v9807 = vadd.f32 0.0, %v9806
  %v9808 = vpop.f32.mrb[0].mxu0
  %v9809 = vpop.f32.mrb[0].mxu0
  %v9810 = vadd.f32 0.0, %v9809
  %v9811 = vpop.f32.mrb[0].mxu0
  %9812 = vmatprep.mubr.bf16.mxu0 0
  %9813 = vmatmul.mubr.bf16.gmra.mrb[0].mxu0 %v9686
  %v9814 = vpop.f32.mrb[0].mxu0
  %v9815 = vadd.f32 0.0, %v9814
  %v9816 = vpop.f32.mrb[0].mxu0
  %v9817 = vpop.f32.mrb[0].mxu0
  %v9818 = vadd.f32 0.0, %v9817
  %v9819 = vpop.f32.mrb[0].mxu0
  %9820 = vmatprep.mubr.bf16.mxu0 0
  %9821 = vmatmul.mubr.bf16.gmra.mrb[0].mxu0 %v9687
  %v9822 = vpop.f32.mrb[0].mxu0
  %v9823 = vadd.f32 0.0, %v9822
  %v9824 = vpop.f32.mrb[0].mxu0
  %v9825 = vpop.f32.mrb[0].mxu0
  %v9826 = vadd.f32 0.0, %v9825
  %v9827 = vpop.f32.mrb[0].mxu0
  %9828 = vmatprep.mubr.bf16.mxu0 0
  %9829 = vmatmul.mubr.bf16.gmra.mrb[0].mxu0 %v9688
  %v9830 = vpop.f32.mrb[0].mxu0
  %v9831 = vadd.f32 0.0, %v9830
  %v9832 = vpop.f32.mrb[0].mxu0
  %v9833 = vpop.f32.mrb[0].mxu0
  %v9834 = vadd.f32 0.0, %v9833
  %v9835 = vpop.f32.mrb[0].mxu0
  %9836 = vmatprep.mubr.bf16.mxu0 0
  %9837 = vmatmul.mubr.bf16.gmra.mrb[0].mxu0 %v9689
  %v9838 = vpop.f32.mrb[0].mxu0
  %v9839 = vadd.f32 0.0, %v9838
  %v9840 = vpop.f32.mrb[0].mxu0
  %v9841 = vpop.f32.mrb[0].mxu0
  %v9842 = vadd.f32 0.0, %v9841
  %v9843 = vpop.f32.mrb[0].mxu0
  %9844 = vmatprep.mubr.bf16.mxu0 0
  %9845 = vmatmul.mubr.bf16.gmra.mrb[0].mxu0 %v9690
  %v9846 = vpop.f32.mrb[0].mxu0
  %v9847 = vadd.f32 0.0, %v9846
  %v9848 = vpop.f32.mrb[0].mxu0
  %v9849 = vpop.f32.mrb[0].mxu0
  %v9850 = vadd.f32 0.0, %v9849
  %v9851 = vpop.f32.mrb[0].mxu0
  %9852 = vdwg.mxu0
  %v9853 = vadd.f32 %v9280, %v9791
  %v9854 = vadd.f32 %v9281, %v9794
  %v9855 = vadd.f32 %v9282, %v9799
  %v9856 = vadd.f32 %v9283, %v9802
  %v9857 = vadd.f32 %v9284, %v9807
  %v9858 = vadd.f32 %v9285, %v9810
  %v9859 = vadd.f32 %v9286, %v9815
  %v9860 = vadd.f32 %v9287, %v9818
  %v9861 = vadd.f32 %v9288, %v9823
  %v9862 = vadd.f32 %v9289, %v9826
  %v9863 = vadd.f32 %v9290, %v9831
  %v9864 = vadd.f32 %v9291, %v9834
  %v9865 = vadd.f32 %v9292, %v9839
  %v9866 = vadd.f32 %v9293, %v9842
  %v9867 = vadd.f32 %v9294, %v9847
  %v9868 = vadd.f32 %v9295, %v9850
  %v9869 = vmax.f32 %v9853, 0.0
  %v9870 = vmax.f32 %v9854, 0.0
  %v9871 = vmax.f32 %v9855, 0.0
  %v9872 = vmax.f32 %v9856, 0.0
  %v9873 = vmax.f32 %v9857, 0.0
  %v9874 = vmax.f32 %v9858, 0.0
  %v9875 = vmax.f32 %v9859, 0.0
  %v9876 = vmax.f32 %v9860, 0.0
  %v9877 = vmax.f32 %v9861, 0.0
  %v9878 = vmax.f32 %v9862, 0.0
  %v9879 = vmax.f32 %v9863, 0.0
  %v9880 = vmax.f32 %v9864, 0.0
  %v9881 = vmax.f32 %v9865, 0.0
  %v9882 = vmax.f32 %v9866, 0.0
  %v9883 = vmax.f32 %v9867, 0.0
  %v9884 = vmax.f32 %v9868, 0.0
  %v9885 = vpack.c.bf16 %v9870, %v9869
  %v9886 = vpack.c.bf16 %v9872, %v9871
  %v9887 = vpack.c.bf16 %v9874, %v9873
  %v9888 = vpack.c.bf16 %v9876, %v9875
  %v9889 = vpack.c.bf16 %v9878, %v9877
  %v9890 = vpack.c.bf16 %v9880, %v9879
  %v9891 = vpack.c.bf16 %v9882, %v9881
  %v9892 = vpack.c.bf16 %v9884, %v9883
  %v9893 = vld [vmem:[%s4] sm:$0xf]
  %v9894 = vld [vmem:[%s4 + $0x4] sm:$0xf]
  %v9895 = vld [vmem:[%s4 + $0x8] sm:$0xf]
  %v9896 = vld [vmem:[%s4 + $0xc] sm:$0xf]
  %v9901 = vunpack.c.l.b16 %v9893
  %v9902 = vunpack.c.l.b16 %v9894
  %v9903 = vunpack.c.l.b16 %v9895
  %v9904 = vunpack.c.l.b16 %v9896
  %v9905 = vpack.c.b16 %v9902, %v9901
  %v9906 = vpack.c.b16 %v9904, %v9903
  %9909 = vmatprep.subr.bf16.mxu0 0
  %9910 = vmatpush1.bf16.msra.mxu0 %v9885
  %9911 = vmatprep.subr.bf16.mxu0 0
  %9912 = vmatpush1.bf16.msra.mxu0 %v9886
  %9913 = vmatprep.subr.bf16.mxu0 0
  %9914 = vmatpush1.bf16.msra.mxu0 %v9887
  %9915 = vmatprep.subr.bf16.mxu0 0
  %9916 = vmatpush1.bf16.msra.mxu0 %v9888
  %9917 = vmatprep.subr.bf16.mxu0 0
  %9918 = vmatpush1.bf16.msra.mxu0 %v9889
  %9919 = vmatprep.subr.bf16.mxu0 0
  %9920 = vmatpush1.bf16.msra.mxu0 %v9890
  %9921 = vmatprep.subr.bf16.mxu0 0
  %9922 = vmatpush1.bf16.msra.mxu0 %v9891
  %9923 = vmatprep.subr.bf16.mxu0 0
  %9924 = vmatpush1.bf16.msra.mxu0 %v9892
  %9925 = vmatprep.subr.bf16.mxu0 0
  %9926 = vmatpush1.bf16.msra.mxu0 0
  %9927 = vmatprep.subr.bf16.mxu0 0
  %9928 = vmatpush1.bf16.msra.mxu0 0
  %9929 = vmatprep.subr.bf16.mxu0 0
  %9930 = vmatpush1.bf16.msra.mxu0 0
  %9931 = vmatprep.subr.bf16.mxu0 0
  %9932 = vmatpush1.bf16.msra.mxu0 0
  %9933 = vmatprep.subr.bf16.mxu0 0
  %9934 = vmatpush1.bf16.msra.mxu0 0
  %9935 = vmatprep.subr.bf16.mxu0 0
  %9936 = vmatpush1.bf16.msra.mxu0 0
  %9937 = vmatprep.subr.bf16.mxu0 0
  %9938 = vmatpush1.bf16.msra.mxu0 0
  %9939 = vmatprep.subr.bf16.mxu0 0
  %9940 = vmatpush1.bf16.msra.mxu0 0
  %9941 = vmatprep.mubr.bf16.mxu0 0
  %9942 = vmatmul.mubr.bf16.gmra.mrb[0].mxu0 %v9905
  %v9943 = vpop.f32.mrb[0].mxu0
  %v9944 = vadd.f32 0.0, %v9943
  %v9945 = vpop.f32.mrb[0].mxu0
  %v9946 = vpop.f32.mrb[0].mxu0
  %v9947 = vadd.f32 0.0, %v9946
  %v9948 = vpop.f32.mrb[0].mxu0
  %9949 = vmatprep.mubr.bf16.mxu0 0
  %9950 = vmatmul.mubr.bf16.gmra.mrb[0].mxu0 %v9906
  %v9951 = vpop.f32.mrb[0].mxu0
  %v9952 = vadd.f32 0.0, %v9951
  %v9953 = vpop.f32.mrb[0].mxu0
  %v9954 = vpop.f32.mrb[0].mxu0
  %v9955 = vadd.f32 0.0, %v9954
  %v9956 = vpop.f32.mrb[0].mxu0
  %9957 = vdwg.mxu0
  %v9958 = vpack.c.bf16 %v9947, %v9944
  %v9959 = vpack.c.bf16 %v9955, %v9952
  %v9960 = vld [vmem:[%s5] sm:$0xf]
  %v9961 = vld [vmem:[%s5 + $0x4] sm:$0xf]
  %v9962 = vld [vmem:[%s5 + $0x8] sm:$0xf]
  %v9963 = vld [vmem:[%s5 + $0xc] sm:$0xf]
  %v9964 = vld [vmem:[%s5 + $0x10] sm:$0xf]
  %v9965 = vld [vmem:[%s5 + $0x14] sm:$0xf]
  %v9966 = vld [vmem:[%s5 + $0x18] sm:$0xf]
  %v9967 = vld [vmem:[%s5 + $0x1c] sm:$0xf]
  %v9968 = vld [vmem:[%s5 + $0x20] sm:$0xf]
  %v9969 = vld [vmem:[%s5 + $0x24] sm:$0xf]
  %v9970 = vld [vmem:[%s5 + $0x28] sm:$0xf]
  %v9971 = vld [vmem:[%s5 + $0x2c] sm:$0xf]
  %v9972 = vld [vmem:[%s5 + $0x30] sm:$0xf]
  %v9973 = vld [vmem:[%s5 + $0x34] sm:$0xf]
  %v9974 = vld [vmem:[%s5 + $0x38] sm:$0xf]
  %v9975 = vld [vmem:[%s5 + $0x3c] sm:$0xf]
  %s9976 = scalar_lea.vmem %s4, 16
  %v9977 = vld [vmem:[%s9976] sm:$0xf]
  %v9978 = vld [vmem:[%s9976 + $0x4] sm:$0xf]
  %v9979 = vld [vmem:[%s9976 + $0x8] sm:$0xf]
  %v9980 = vld [vmem:[%s9976 + $0xc] sm:$0xf]
  %v9985 = vunpack.c.l.b16 %v9977
  %v9986 = vunpack.c.l.b16 %v9978
  %v9987 = vunpack.c.l.b16 %v9979
  %v9988 = vunpack.c.l.b16 %v9980
  %v9989 = vpack.c.b16 %v9986, %v9985
  %v9990 = vpack.c.b16 %v9988, %v9987
  %9993 = vmatprep.subr.bf16.mxu0 0
  %9994 = vmatpush1.bf16.msra.mxu0 %v9885
  %9995 = vmatprep.subr.bf16.mxu0 0
  %9996 = vmatpush1.bf16.msra.mxu0 %v9886
  %9997 = vmatprep.subr.bf16.mxu0 0
  %9998 = vmatpush1.bf16.msra.mxu0 %v9887
  %9999 = vmatprep.subr.bf16.mxu0 0
  %10000 = vmatpush1.bf16.msra.mxu0 %v9888
  %10001 = vmatprep.subr.bf16.mxu0 0
  %10002 = vmatpush1.bf16.msra.mxu0 %v9889
  %10003 = vmatprep.subr.bf16.mxu0 0
  %10004 = vmatpush1.bf16.msra.mxu0 %v9890
  %10005 = vmatprep.subr.bf16.mxu0 0
  %10006 = vmatpush1.bf16.msra.mxu0 %v9891
  %10007 = vmatprep.subr.bf16.mxu0 0
  %10008 = vmatpush1.bf16.msra.mxu0 %v9892
  %10009 = vmatprep.subr.bf16.mxu0 0
  %10010 = vmatpush1.bf16.msra.mxu0 0
  %10011 = vmatprep.subr.bf16.mxu0 0
  %10012 = vmatpush1.bf16.msra.mxu0 0
  %10013 = vmatprep.subr.bf16.mxu0 0
  %10014 = vmatpush1.bf16.msra.mxu0 0
  %10015 = vmatprep.subr.bf16.mxu0 0
  %10016 = vmatpush1.bf16.msra.mxu0 0
  %10017 = vmatprep.subr.bf16.mxu0 0
  %10018 = vmatpush1.bf16.msra.mxu0 0
  %10019 = vmatprep.subr.bf16.mxu0 0
  %10020 = vmatpush1.bf16.msra.mxu0 0
  %10021 = vmatprep.subr.bf16.mxu0 0
  %10022 = vmatpush1.bf16.msra.mxu0 0
  %10023 = vmatprep.subr.bf16.mxu0 0
  %10024 = vmatpush1.bf16.msra.mxu0 0
  %10025 = vmatprep.mubr.bf16.mxu0 0
  %10026 = vmatmul.mubr.bf16.gmra.mrb[0].mxu0 %v9989
  %v10027 = vpop.f32.mrb[0].mxu0
  %v10028 = vadd.f32 0.0, %v10027
  %v10029 = vpop.f32.mrb[0].mxu0
  %v10030 = vpop.f32.mrb[0].mxu0
  %v10031 = vadd.f32 0.0, %v10030
  %v10032 = vpop.f32.mrb[0].mxu0
  %10033 = vmatprep.mubr.bf16.mxu0 0
  %10034 = vmatmul.mubr.bf16.gmra.mrb[0].mxu0 %v9990
  %v10035 = vpop.f32.mrb[0].mxu0
  %v10036 = vadd.f32 0.0, %v10035
  %v10037 = vpop.f32.mrb[0].mxu0
  %v10038 = vpop.f32.mrb[0].mxu0
  %v10039 = vadd.f32 0.0, %v10038
  %v10040 = vpop.f32.mrb[0].mxu0
  %10041 = vdwg.mxu0
  %v10042 = vpack.c.bf16 %v10031, %v10028
  %v10043 = vpack.c.bf16 %v10039, %v10036
  %s10044 = scalar_lea.vmem %s5, 64
  %v10045 = vld [vmem:[%s10044] sm:$0xf]
  %v10046 = vld [vmem:[%s10044 + $0x4] sm:$0xf]
  %v10047 = vld [vmem:[%s10044 + $0x8] sm:$0xf]
  %v10048 = vld [vmem:[%s10044 + $0xc] sm:$0xf]
  %v10049 = vld [vmem:[%s10044 + $0x10] sm:$0xf]
  %v10050 = vld [vmem:[%s10044 + $0x14] sm:$0xf]
  %v10051 = vld [vmem:[%s10044 + $0x18] sm:$0xf]
  %v10052 = vld [vmem:[%s10044 + $0x1c] sm:$0xf]
  %v10053 = vld [vmem:[%s10044 + $0x20] sm:$0xf]
  %v10054 = vld [vmem:[%s10044 + $0x24] sm:$0xf]
  %v10055 = vld [vmem:[%s10044 + $0x28] sm:$0xf]
  %v10056 = vld [vmem:[%s10044 + $0x2c] sm:$0xf]
  %v10057 = vld [vmem:[%s10044 + $0x30] sm:$0xf]
  %v10058 = vld [vmem:[%s10044 + $0x34] sm:$0xf]
  %v10059 = vld [vmem:[%s10044 + $0x38] sm:$0xf]
  %v10060 = vld [vmem:[%s10044 + $0x3c] sm:$0xf]
  %v10077 = vunpack.c.l.b16 %v10045
  %v10078 = vunpack.c.l.b16 %v10046
  %v10079 = vunpack.c.l.b16 %v10047
  %v10080 = vunpack.c.l.b16 %v10048
  %v10081 = vunpack.c.l.b16 %v10049
  %v10082 = vunpack.c.l.b16 %v10050
  %v10083 = vunpack.c.l.b16 %v10051
  %v10084 = vunpack.c.l.b16 %v10052
  %v10085 = vunpack.c.l.b16 %v10053
  %v10086 = vunpack.c.l.b16 %v10054
  %v10087 = vunpack.c.l.b16 %v10055
  %v10088 = vunpack.c.l.b16 %v10056
  %v10089 = vunpack.c.l.b16 %v10057
  %v10090 = vunpack.c.l.b16 %v10058
  %v10091 = vunpack.c.l.b16 %v10059
  %v10092 = vunpack.c.l.b16 %v10060
  %v10093 = vpack.c.b16 %v10078, %v10077
  %v10094 = vpack.c.b16 %v10080, %v10079
  %v10095 = vpack.c.b16 %v10082, %v10081
  %v10096 = vpack.c.b16 %v10084, %v10083
  %v10097 = vpack.c.b16 %v10086, %v10085
  %v10098 = vpack.c.b16 %v10088, %v10087
  %v10099 = vpack.c.b16 %v10090, %v10089
  %v10100 = vpack.c.b16 %v10092, %v10091
  %10109 = vmatprep.subr.bf16.mxu0 0
  %10110 = vmatpush1.bf16.msra.mxu0 %v10093
  %10111 = vmatprep.subr.bf16.mxu0 0
  %10112 = vmatpush1.bf16.msra.mxu0 %v10094
  %10113 = vmatprep.subr.bf16.mxu0 0
  %10114 = vmatpush1.bf16.msra.mxu0 %v10095
  %10115 = vmatprep.subr.bf16.mxu0 0
  %10116 = vmatpush1.bf16.msra.mxu0 %v10096
  %10117 = vmatprep.subr.bf16.mxu0 0
  %10118 = vmatpush1.bf16.msra.mxu0 %v10097
  %10119 = vmatprep.subr.bf16.mxu0 0
  %10120 = vmatpush1.bf16.msra.mxu0 %v10098
  %10121 = vmatprep.subr.bf16.mxu0 0
  %10122 = vmatpush1.bf16.msra.mxu0 %v10099
  %10123 = vmatprep.subr.bf16.mxu0 0
  %10124 = vmatpush1.bf16.msra.mxu0 %v10100
  %10125 = vmatprep.subr.bf16.mxu0 0
  %10126 = vmatpush1.bf16.msra.mxu0 0
  %10127 = vmatprep.subr.bf16.mxu0 0
  %10128 = vmatpush1.bf16.msra.mxu0 0
  %10129 = vmatprep.subr.bf16.mxu0 0
  %10130 = vmatpush1.bf16.msra.mxu0 0
  %10131 = vmatprep.subr.bf16.mxu0 0
  %10132 = vmatpush1.bf16.msra.mxu0 0
  %10133 = vmatprep.subr.bf16.mxu0 0
  %10134 = vmatpush1.bf16.msra.mxu0 0
  %10135 = vmatprep.subr.bf16.mxu0 0
  %10136 = vmatpush1.bf16.msra.mxu0 0
  %10137 = vmatprep.subr.bf16.mxu0 0
  %10138 = vmatpush1.bf16.msra.mxu0 0
  %10139 = vmatprep.subr.bf16.mxu0 0
  %10140 = vmatpush1.bf16.msra.mxu0 0
  %10141 = vmatprep.mubr.bf16.mxu0 0
  %10142 = vmatmul.mubr.bf16.gmra.mrb[0].mxu0 %v10042
  %v10143 = vpop.f32.mrb[0].mxu0
  %v10144 = vadd.f32 0.0, %v10143
  %v10145 = vpop.f32.mrb[0].mxu0
  %v10146 = vpop.f32.mrb[0].mxu0
  %v10147 = vadd.f32 0.0, %v10146
  %v10148 = vpop.f32.mrb[0].mxu0
  %10149 = vmatprep.mubr.bf16.mxu0 0
  %10150 = vmatmul.mubr.bf16.gmra.mrb[0].mxu0 %v10043
  %v10151 = vpop.f32.mrb[0].mxu0
  %v10152 = vadd.f32 0.0, %v10151
  %v10153 = vpop.f32.mrb[0].mxu0
  %v10154 = vpop.f32.mrb[0].mxu0
  %v10155 = vadd.f32 0.0, %v10154
  %v10156 = vpop.f32.mrb[0].mxu0
  %10157 = vdwg.mxu0
  %v10174 = vunpack.c.l.b16 %v9960
  %v10175 = vunpack.c.l.b16 %v9961
  %v10176 = vunpack.c.l.b16 %v9962
  %v10177 = vunpack.c.l.b16 %v9963
  %v10178 = vunpack.c.l.b16 %v9964
  %v10179 = vunpack.c.l.b16 %v9965
  %v10180 = vunpack.c.l.b16 %v9966
  %v10181 = vunpack.c.l.b16 %v9967
  %v10182 = vunpack.c.l.b16 %v9968
  %v10183 = vunpack.c.l.b16 %v9969
  %v10184 = vunpack.c.l.b16 %v9970
  %v10185 = vunpack.c.l.b16 %v9971
  %v10186 = vunpack.c.l.b16 %v9972
  %v10187 = vunpack.c.l.b16 %v9973
  %v10188 = vunpack.c.l.b16 %v9974
  %v10189 = vunpack.c.l.b16 %v9975
  %v10190 = vpack.c.b16 %v10175, %v10174
  %v10191 = vpack.c.b16 %v10177, %v10176
  %v10192 = vpack.c.b16 %v10179, %v10178
  %v10193 = vpack.c.b16 %v10181, %v10180
  %v10194 = vpack.c.b16 %v10183, %v10182
  %v10195 = vpack.c.b16 %v10185, %v10184
  %v10196 = vpack.c.b16 %v10187, %v10186
  %v10197 = vpack.c.b16 %v10189, %v10188
  %10206 = vmatprep.subr.bf16.mxu0 0
  %10207 = vmatpush1.bf16.msra.mxu0 %v10190
  %10208 = vmatprep.subr.bf16.mxu0 0
  %10209 = vmatpush1.bf16.msra.mxu0 %v10191
  %10210 = vmatprep.subr.bf16.mxu0 0
  %10211 = vmatpush1.bf16.msra.mxu0 %v10192
  %10212 = vmatprep.subr.bf16.mxu0 0
  %10213 = vmatpush1.bf16.msra.mxu0 %v10193
  %10214 = vmatprep.subr.bf16.mxu0 0
  %10215 = vmatpush1.bf16.msra.mxu0 %v10194
  %10216 = vmatprep.subr.bf16.mxu0 0
  %10217 = vmatpush1.bf16.msra.mxu0 %v10195
  %10218 = vmatprep.subr.bf16.mxu0 0
  %10219 = vmatpush1.bf16.msra.mxu0 %v10196
  %10220 = vmatprep.subr.bf16.mxu0 0
  %10221 = vmatpush1.bf16.msra.mxu0 %v10197
  %10222 = vmatprep.subr.bf16.mxu0 0
  %10223 = vmatpush1.bf16.msra.mxu0 0
  %10224 = vmatprep.subr.bf16.mxu0 0
  %10225 = vmatpush1.bf16.msra.mxu0 0
  %10226 = vmatprep.subr.bf16.mxu0 0
  %10227 = vmatpush1.bf16.msra.mxu0 0
  %10228 = vmatprep.subr.bf16.mxu0 0
  %10229 = vmatpush1.bf16.msra.mxu0 0
  %10230 = vmatprep.subr.bf16.mxu0 0
  %10231 = vmatpush1.bf16.msra.mxu0 0
  %10232 = vmatprep.subr.bf16.mxu0 0
  %10233 = vmatpush1.bf16.msra.mxu0 0
  %10234 = vmatprep.subr.bf16.mxu0 0
  %10235 = vmatpush1.bf16.msra.mxu0 0
  %10236 = vmatprep.subr.bf16.mxu0 0
  %10237 = vmatpush1.bf16.msra.mxu0 0
  %10238 = vmatprep.mubr.bf16.mxu0 0
  %10239 = vmatmul.mubr.bf16.gmra.mrb[0].mxu0 %v9958
  %v10240 = vpop.f32.mrb[0].mxu0
  %v10241 = vadd.f32 %v10144, %v10240
  %v10242 = vpop.f32.mrb[0].mxu0
  %v10243 = vpop.f32.mrb[0].mxu0
  %v10244 = vadd.f32 %v10147, %v10243
  %v10245 = vpop.f32.mrb[0].mxu0
  %10246 = vmatprep.mubr.bf16.mxu0 0
  %10247 = vmatmul.mubr.bf16.gmra.mrb[0].mxu0 %v9959
  %v10248 = vpop.f32.mrb[0].mxu0
  %v10249 = vadd.f32 %v10152, %v10248
  %v10250 = vpop.f32.mrb[0].mxu0
  %v10251 = vpop.f32.mrb[0].mxu0
  %v10252 = vadd.f32 %v10155, %v10251
  %v10253 = vpop.f32.mrb[0].mxu0
  %10254 = vdwg.mxu0
  %s10255 = scalar_lea.vmem %s4, 32
  %v10256 = vld [vmem:[%s10255] sm:$0xf]
  %v10257 = vld [vmem:[%s10255 + $0x4] sm:$0xf]
  %v10258 = vld [vmem:[%s10255 + $0x8] sm:$0xf]
  %v10259 = vld [vmem:[%s10255 + $0xc] sm:$0xf]
  %v10264 = vunpack.c.l.b16 %v10256
  %v10265 = vunpack.c.l.b16 %v10257
  %v10266 = vunpack.c.l.b16 %v10258
  %v10267 = vunpack.c.l.b16 %v10259
  %v10268 = vpack.c.b16 %v10265, %v10264
  %v10269 = vpack.c.b16 %v10267, %v10266
  %10272 = vmatprep.subr.bf16.mxu0 0
  %10273 = vmatpush1.bf16.msra.mxu0 %v9885
  %10274 = vmatprep.subr.bf16.mxu0 0
  %10275 = vmatpush1.bf16.msra.mxu0 %v9886
  %10276 = vmatprep.subr.bf16.mxu0 0
  %10277 = vmatpush1.bf16.msra.mxu0 %v9887
  %10278 = vmatprep.subr.bf16.mxu0 0
  %10279 = vmatpush1.bf16.msra.mxu0 %v9888
  %10280 = vmatprep.subr.bf16.mxu0 0
  %10281 = vmatpush1.bf16.msra.mxu0 %v9889
  %10282 = vmatprep.subr.bf16.mxu0 0
  %10283 = vmatpush1.bf16.msra.mxu0 %v9890
  %10284 = vmatprep.subr.bf16.mxu0 0
  %10285 = vmatpush1.bf16.msra.mxu0 %v9891
  %10286 = vmatprep.subr.bf16.mxu0 0
  %10287 = vmatpush1.bf16.msra.mxu0 %v9892
  %10288 = vmatprep.subr.bf16.mxu0 0
  %10289 = vmatpush1.bf16.msra.mxu0 0
  %10290 = vmatprep.subr.bf16.mxu0 0
  %10291 = vmatpush1.bf16.msra.mxu0 0
  %10292 = vmatprep.subr.bf16.mxu0 0
  %10293 = vmatpush1.bf16.msra.mxu0 0
  %10294 = vmatprep.subr.bf16.mxu0 0
  %10295 = vmatpush1.bf16.msra.mxu0 0
  %10296 = vmatprep.subr.bf16.mxu0 0
  %10297 = vmatpush1.bf16.msra.mxu0 0
  %10298 = vmatprep.subr.bf16.mxu0 0
  %10299 = vmatpush1.bf16.msra.mxu0 0
  %10300 = vmatprep.subr.bf16.mxu0 0
  %10301 = vmatpush1.bf16.msra.mxu0 0
  %10302 = vmatprep.subr.bf16.mxu0 0
  %10303 = vmatpush1.bf16.msra.mxu0 0
  %10304 = vmatprep.mubr.bf16.mxu0 0
  %10305 = vmatmul.mubr.bf16.gmra.mrb[0].mxu0 %v10268
  %v10306 = vpop.f32.mrb[0].mxu0
  %v10307 = vadd.f32 0.0, %v10306
  %v10308 = vpop.f32.mrb[0].mxu0
  %v10309 = vpop.f32.mrb[0].mxu0
  %v10310 = vadd.f32 0.0, %v10309
  %v10311 = vpop.f32.mrb[0].mxu0
  %10312 = vmatprep.mubr.bf16.mxu0 0
  %10313 = vmatmul.mubr.bf16.gmra.mrb[0].mxu0 %v10269
  %v10314 = vpop.f32.mrb[0].mxu0
  %v10315 = vadd.f32 0.0, %v10314
  %v10316 = vpop.f32.mrb[0].mxu0
  %v10317 = vpop.f32.mrb[0].mxu0
  %v10318 = vadd.f32 0.0, %v10317
  %v10319 = vpop.f32.mrb[0].mxu0
  %10320 = vdwg.mxu0
  %v10321 = vpack.c.bf16 %v10310, %v10307
  %v10322 = vpack.c.bf16 %v10318, %v10315
  %s10323 = scalar_lea.vmem %s5, 128
  %v10324 = vld [vmem:[%s10323] sm:$0xf]
  %v10325 = vld [vmem:[%s10323 + $0x4] sm:$0xf]
  %v10326 = vld [vmem:[%s10323 + $0x8] sm:$0xf]
  %v10327 = vld [vmem:[%s10323 + $0xc] sm:$0xf]
  %v10328 = vld [vmem:[%s10323 + $0x10] sm:$0xf]
  %v10329 = vld [vmem:[%s10323 + $0x14] sm:$0xf]
  %v10330 = vld [vmem:[%s10323 + $0x18] sm:$0xf]
  %v10331 = vld [vmem:[%s10323 + $0x1c] sm:$0xf]
  %v10332 = vld [vmem:[%s10323 + $0x20] sm:$0xf]
  %v10333 = vld [vmem:[%s10323 + $0x24] sm:$0xf]
  %v10334 = vld [vmem:[%s10323 + $0x28] sm:$0xf]
  %v10335 = vld [vmem:[%s10323 + $0x2c] sm:$0xf]
  %v10336 = vld [vmem:[%s10323 + $0x30] sm:$0xf]
  %v10337 = vld [vmem:[%s10323 + $0x34] sm:$0xf]
  %v10338 = vld [vmem:[%s10323 + $0x38] sm:$0xf]
  %v10339 = vld [vmem:[%s10323 + $0x3c] sm:$0xf]
  %v10356 = vunpack.c.l.b16 %v10324
  %v10357 = vunpack.c.l.b16 %v10325
  %v10358 = vunpack.c.l.b16 %v10326
  %v10359 = vunpack.c.l.b16 %v10327
  %v10360 = vunpack.c.l.b16 %v10328
  %v10361 = vunpack.c.l.b16 %v10329
  %v10362 = vunpack.c.l.b16 %v10330
  %v10363 = vunpack.c.l.b16 %v10331
  %v10364 = vunpack.c.l.b16 %v10332
  %v10365 = vunpack.c.l.b16 %v10333
  %v10366 = vunpack.c.l.b16 %v10334
  %v10367 = vunpack.c.l.b16 %v10335
  %v10368 = vunpack.c.l.b16 %v10336
  %v10369 = vunpack.c.l.b16 %v10337
  %v10370 = vunpack.c.l.b16 %v10338
  %v10371 = vunpack.c.l.b16 %v10339
  %v10372 = vpack.c.b16 %v10357, %v10356
  %v10373 = vpack.c.b16 %v10359, %v10358
  %v10374 = vpack.c.b16 %v10361, %v10360
  %v10375 = vpack.c.b16 %v10363, %v10362
  %v10376 = vpack.c.b16 %v10365, %v10364
  %v10377 = vpack.c.b16 %v10367, %v10366
  %v10378 = vpack.c.b16 %v10369, %v10368
  %v10379 = vpack.c.b16 %v10371, %v10370
  %10388 = vmatprep.subr.bf16.mxu0 0
  %10389 = vmatpush1.bf16.msra.mxu0 %v10372
  %10390 = vmatprep.subr.bf16.mxu0 0
  %10391 = vmatpush1.bf16.msra.mxu0 %v10373
  %10392 = vmatprep.subr.bf16.mxu0 0
  %10393 = vmatpush1.bf16.msra.mxu0 %v10374
  %10394 = vmatprep.subr.bf16.mxu0 0
  %10395 = vmatpush1.bf16.msra.mxu0 %v10375
  %10396 = vmatprep.subr.bf16.mxu0 0
  %10397 = vmatpush1.bf16.msra.mxu0 %v10376
  %10398 = vmatprep.subr.bf16.mxu0 0
  %10399 = vmatpush1.bf16.msra.mxu0 %v10377
  %10400 = vmatprep.subr.bf16.mxu0 0
  %10401 = vmatpush1.bf16.msra.mxu0 %v10378
  %10402 = vmatprep.subr.bf16.mxu0 0
  %10403 = vmatpush1.bf16.msra.mxu0 %v10379
  %10404 = vmatprep.subr.bf16.mxu0 0
  %10405 = vmatpush1.bf16.msra.mxu0 0
  %10406 = vmatprep.subr.bf16.mxu0 0
  %10407 = vmatpush1.bf16.msra.mxu0 0
  %10408 = vmatprep.subr.bf16.mxu0 0
  %10409 = vmatpush1.bf16.msra.mxu0 0
  %10410 = vmatprep.subr.bf16.mxu0 0
  %10411 = vmatpush1.bf16.msra.mxu0 0
  %10412 = vmatprep.subr.bf16.mxu0 0
  %10413 = vmatpush1.bf16.msra.mxu0 0
  %10414 = vmatprep.subr.bf16.mxu0 0
  %10415 = vmatpush1.bf16.msra.mxu0 0
  %10416 = vmatprep.subr.bf16.mxu0 0
  %10417 = vmatpush1.bf16.msra.mxu0 0
  %10418 = vmatprep.subr.bf16.mxu0 0
  %10419 = vmatpush1.bf16.msra.mxu0 0
  %10420 = vmatprep.mubr.bf16.mxu0 0
  %10421 = vmatmul.mubr.bf16.gmra.mrb[0].mxu0 %v10321
  %v10422 = vpop.f32.mrb[0].mxu0
  %v10423 = vadd.f32 0.0, %v10422
  %v10424 = vpop.f32.mrb[0].mxu0
  %v10425 = vpop.f32.mrb[0].mxu0
  %v10426 = vadd.f32 0.0, %v10425
  %v10427 = vpop.f32.mrb[0].mxu0
  %10428 = vmatprep.mubr.bf16.mxu0 0
  %10429 = vmatmul.mubr.bf16.gmra.mrb[0].mxu0 %v10322
  %v10430 = vpop.f32.mrb[0].mxu0
  %v10431 = vadd.f32 0.0, %v10430
  %v10432 = vpop.f32.mrb[0].mxu0
  %v10433 = vpop.f32.mrb[0].mxu0
  %v10434 = vadd.f32 0.0, %v10433
  %v10435 = vpop.f32.mrb[0].mxu0
  %10436 = vdwg.mxu0
  %v10437 = vadd.f32 %v10241, %v10423
  %v10438 = vadd.f32 %v10244, %v10426
  %v10439 = vadd.f32 %v10249, %v10431
  %v10440 = vadd.f32 %v10252, %v10434
  %s10441 = scalar_lea.vmem %s4, 48
  %v10442 = vld [vmem:[%s10441] sm:$0xf]
  %v10443 = vld [vmem:[%s10441 + $0x4] sm:$0xf]
  %v10444 = vld [vmem:[%s10441 + $0x8] sm:$0xf]
  %v10445 = vld [vmem:[%s10441 + $0xc] sm:$0xf]
  %v10450 = vunpack.c.l.b16 %v10442
  %v10451 = vunpack.c.l.b16 %v10443
  %v10452 = vunpack.c.l.b16 %v10444
  %v10453 = vunpack.c.l.b16 %v10445
  %v10454 = vpack.c.b16 %v10451, %v10450
  %v10455 = vpack.c.b16 %v10453, %v10452
  %10458 = vmatprep.subr.bf16.mxu0 0
  %10459 = vmatpush1.bf16.msra.mxu0 %v9885
  %10460 = vmatprep.subr.bf16.mxu0 0
  %10461 = vmatpush1.bf16.msra.mxu0 %v9886
  %10462 = vmatprep.subr.bf16.mxu0 0
  %10463 = vmatpush1.bf16.msra.mxu0 %v9887
  %10464 = vmatprep.subr.bf16.mxu0 0
  %10465 = vmatpush1.bf16.msra.mxu0 %v9888
  %10466 = vmatprep.subr.bf16.mxu0 0
  %10467 = vmatpush1.bf16.msra.mxu0 %v9889
  %10468 = vmatprep.subr.bf16.mxu0 0
  %10469 = vmatpush1.bf16.msra.mxu0 %v9890
  %10470 = vmatprep.subr.bf16.mxu0 0
  %10471 = vmatpush1.bf16.msra.mxu0 %v9891
  %10472 = vmatprep.subr.bf16.mxu0 0
  %10473 = vmatpush1.bf16.msra.mxu0 %v9892
  %10474 = vmatprep.subr.bf16.mxu0 0
  %10475 = vmatpush1.bf16.msra.mxu0 0
  %10476 = vmatprep.subr.bf16.mxu0 0
  %10477 = vmatpush1.bf16.msra.mxu0 0
  %10478 = vmatprep.subr.bf16.mxu0 0
  %10479 = vmatpush1.bf16.msra.mxu0 0
  %10480 = vmatprep.subr.bf16.mxu0 0
  %10481 = vmatpush1.bf16.msra.mxu0 0
  %10482 = vmatprep.subr.bf16.mxu0 0
  %10483 = vmatpush1.bf16.msra.mxu0 0
  %10484 = vmatprep.subr.bf16.mxu0 0
  %10485 = vmatpush1.bf16.msra.mxu0 0
  %10486 = vmatprep.subr.bf16.mxu0 0
  %10487 = vmatpush1.bf16.msra.mxu0 0
  %10488 = vmatprep.subr.bf16.mxu0 0
  %10489 = vmatpush1.bf16.msra.mxu0 0
  %10490 = vmatprep.mubr.bf16.mxu0 0
  %10491 = vmatmul.mubr.bf16.gmra.mrb[0].mxu0 %v10454
  %v10492 = vpop.f32.mrb[0].mxu0
  %v10493 = vadd.f32 0.0, %v10492
  %v10494 = vpop.f32.mrb[0].mxu0
  %v10495 = vpop.f32.mrb[0].mxu0
  %v10496 = vadd.f32 0.0, %v10495
  %v10497 = vpop.f32.mrb[0].mxu0
  %10498 = vmatprep.mubr.bf16.mxu0 0
  %10499 = vmatmul.mubr.bf16.gmra.mrb[0].mxu0 %v10455
  %v10500 = vpop.f32.mrb[0].mxu0
  %v10501 = vadd.f32 0.0, %v10500
  %v10502 = vpop.f32.mrb[0].mxu0
  %v10503 = vpop.f32.mrb[0].mxu0
  %v10504 = vadd.f32 0.0, %v10503
  %v10505 = vpop.f32.mrb[0].mxu0
  %10506 = vdwg.mxu0
  %v10507 = vpack.c.bf16 %v10496, %v10493
  %v10508 = vpack.c.bf16 %v10504, %v10501
  %s10509 = scalar_lea.vmem %s5, 192
  %v10510 = vld [vmem:[%s10509] sm:$0xf]
  %v10511 = vld [vmem:[%s10509 + $0x4] sm:$0xf]
  %v10512 = vld [vmem:[%s10509 + $0x8] sm:$0xf]
  %v10513 = vld [vmem:[%s10509 + $0xc] sm:$0xf]
  %v10514 = vld [vmem:[%s10509 + $0x10] sm:$0xf]
  %v10515 = vld [vmem:[%s10509 + $0x14] sm:$0xf]
  %v10516 = vld [vmem:[%s10509 + $0x18] sm:$0xf]
  %v10517 = vld [vmem:[%s10509 + $0x1c] sm:$0xf]
  %v10518 = vld [vmem:[%s10509 + $0x20] sm:$0xf]
  %v10519 = vld [vmem:[%s10509 + $0x24] sm:$0xf]
  %v10520 = vld [vmem:[%s10509 + $0x28] sm:$0xf]
  %v10521 = vld [vmem:[%s10509 + $0x2c] sm:$0xf]
  %v10522 = vld [vmem:[%s10509 + $0x30] sm:$0xf]
  %v10523 = vld [vmem:[%s10509 + $0x34] sm:$0xf]
  %v10524 = vld [vmem:[%s10509 + $0x38] sm:$0xf]
  %v10525 = vld [vmem:[%s10509 + $0x3c] sm:$0xf]
  %v10542 = vunpack.c.l.b16 %v10510
  %v10543 = vunpack.c.l.b16 %v10511
  %v10544 = vunpack.c.l.b16 %v10512
  %v10545 = vunpack.c.l.b16 %v10513
  %v10546 = vunpack.c.l.b16 %v10514
  %v10547 = vunpack.c.l.b16 %v10515
  %v10548 = vunpack.c.l.b16 %v10516
  %v10549 = vunpack.c.l.b16 %v10517
  %v10550 = vunpack.c.l.b16 %v10518
  %v10551 = vunpack.c.l.b16 %v10519
  %v10552 = vunpack.c.l.b16 %v10520
  %v10553 = vunpack.c.l.b16 %v10521
  %v10554 = vunpack.c.l.b16 %v10522
  %v10555 = vunpack.c.l.b16 %v10523
  %v10556 = vunpack.c.l.b16 %v10524
  %v10557 = vunpack.c.l.b16 %v10525
  %v10558 = vpack.c.b16 %v10543, %v10542
  %v10559 = vpack.c.b16 %v10545, %v10544
  %v10560 = vpack.c.b16 %v10547, %v10546
  %v10561 = vpack.c.b16 %v10549, %v10548
  %v10562 = vpack.c.b16 %v10551, %v10550
  %v10563 = vpack.c.b16 %v10553, %v10552
  %v10564 = vpack.c.b16 %v10555, %v10554
  %v10565 = vpack.c.b16 %v10557, %v10556
  %10574 = vmatprep.subr.bf16.mxu0 0
  %10575 = vmatpush1.bf16.msra.mxu0 %v10558
  %10576 = vmatprep.subr.bf16.mxu0 0
  %10577 = vmatpush1.bf16.msra.mxu0 %v10559
  %10578 = vmatprep.subr.bf16.mxu0 0
  %10579 = vmatpush1.bf16.msra.mxu0 %v10560
  %10580 = vmatprep.subr.bf16.mxu0 0
  %10581 = vmatpush1.bf16.msra.mxu0 %v10561
  %10582 = vmatprep.subr.bf16.mxu0 0
  %10583 = vmatpush1.bf16.msra.mxu0 %v10562
  %10584 = vmatprep.subr.bf16.mxu0 0
  %10585 = vmatpush1.bf16.msra.mxu0 %v10563
  %10586 = vmatprep.subr.bf16.mxu0 0
  %10587 = vmatpush1.bf16.msra.mxu0 %v10564
  %10588 = vmatprep.subr.bf16.mxu0 0
  %10589 = vmatpush1.bf16.msra.mxu0 %v10565
  %10590 = vmatprep.subr.bf16.mxu0 0
  %10591 = vmatpush1.bf16.msra.mxu0 0
  %10592 = vmatprep.subr.bf16.mxu0 0
  %10593 = vmatpush1.bf16.msra.mxu0 0
  %10594 = vmatprep.subr.bf16.mxu0 0
  %10595 = vmatpush1.bf16.msra.mxu0 0
  %10596 = vmatprep.subr.bf16.mxu0 0
  %10597 = vmatpush1.bf16.msra.mxu0 0
  %10598 = vmatprep.subr.bf16.mxu0 0
  %10599 = vmatpush1.bf16.msra.mxu0 0
  %10600 = vmatprep.subr.bf16.mxu0 0
  %10601 = vmatpush1.bf16.msra.mxu0 0
  %10602 = vmatprep.subr.bf16.mxu0 0
  %10603 = vmatpush1.bf16.msra.mxu0 0
  %10604 = vmatprep.subr.bf16.mxu0 0
  %10605 = vmatpush1.bf16.msra.mxu0 0
  %10606 = vmatprep.mubr.bf16.mxu0 0
  %10607 = vmatmul.mubr.bf16.gmra.mrb[0].mxu0 %v10507
  %v10608 = vpop.f32.mrb[0].mxu0
  %v10609 = vadd.f32 0.0, %v10608
  %v10610 = vpop.f32.mrb[0].mxu0
  %v10611 = vpop.f32.mrb[0].mxu0
  %v10612 = vadd.f32 0.0, %v10611
  %v10613 = vpop.f32.mrb[0].mxu0
  %10614 = vmatprep.mubr.bf16.mxu0 0
  %10615 = vmatmul.mubr.bf16.gmra.mrb[0].mxu0 %v10508
  %v10616 = vpop.f32.mrb[0].mxu0
  %v10617 = vadd.f32 0.0, %v10616
  %v10618 = vpop.f32.mrb[0].mxu0
  %v10619 = vpop.f32.mrb[0].mxu0
  %v10620 = vadd.f32 0.0, %v10619
  %v10621 = vpop.f32.mrb[0].mxu0
  %10622 = vdwg.mxu0
  %v10623 = vadd.f32 %v10437, %v10609
  %v10624 = vadd.f32 %v10438, %v10612
  %v10625 = vadd.f32 %v10439, %v10617
  %v10626 = vadd.f32 %v10440, %v10620
  %s10627 = scalar_lea.vmem %s4, 64
  %v10628 = vld [vmem:[%s10627] sm:$0xf]
  %v10629 = vld [vmem:[%s10627 + $0x4] sm:$0xf]
  %v10630 = vld [vmem:[%s10627 + $0x8] sm:$0xf]
  %v10631 = vld [vmem:[%s10627 + $0xc] sm:$0xf]
  %v10636 = vunpack.c.l.b16 %v10628
  %v10637 = vunpack.c.l.b16 %v10629
  %v10638 = vunpack.c.l.b16 %v10630
  %v10639 = vunpack.c.l.b16 %v10631
  %v10640 = vpack.c.b16 %v10637, %v10636
  %v10641 = vpack.c.b16 %v10639, %v10638
  %10644 = vmatprep.subr.bf16.mxu0 0
  %10645 = vmatpush1.bf16.msra.mxu0 %v9885
  %10646 = vmatprep.subr.bf16.mxu0 0
  %10647 = vmatpush1.bf16.msra.mxu0 %v9886
  %10648 = vmatprep.subr.bf16.mxu0 0
  %10649 = vmatpush1.bf16.msra.mxu0 %v9887
  %10650 = vmatprep.subr.bf16.mxu0 0
  %10651 = vmatpush1.bf16.msra.mxu0 %v9888
  %10652 = vmatprep.subr.bf16.mxu0 0
  %10653 = vmatpush1.bf16.msra.mxu0 %v9889
  %10654 = vmatprep.subr.bf16.mxu0 0
  %10655 = vmatpush1.bf16.msra.mxu0 %v9890
  %10656 = vmatprep.subr.bf16.mxu0 0
  %10657 = vmatpush1.bf16.msra.mxu0 %v9891
  %10658 = vmatprep.subr.bf16.mxu0 0
  %10659 = vmatpush1.bf16.msra.mxu0 %v9892
  %10660 = vmatprep.subr.bf16.mxu0 0
  %10661 = vmatpush1.bf16.msra.mxu0 0
  %10662 = vmatprep.subr.bf16.mxu0 0
  %10663 = vmatpush1.bf16.msra.mxu0 0
  %10664 = vmatprep.subr.bf16.mxu0 0
  %10665 = vmatpush1.bf16.msra.mxu0 0
  %10666 = vmatprep.subr.bf16.mxu0 0
  %10667 = vmatpush1.bf16.msra.mxu0 0
  %10668 = vmatprep.subr.bf16.mxu0 0
  %10669 = vmatpush1.bf16.msra.mxu0 0
  %10670 = vmatprep.subr.bf16.mxu0 0
  %10671 = vmatpush1.bf16.msra.mxu0 0
  %10672 = vmatprep.subr.bf16.mxu0 0
  %10673 = vmatpush1.bf16.msra.mxu0 0
  %10674 = vmatprep.subr.bf16.mxu0 0
  %10675 = vmatpush1.bf16.msra.mxu0 0
  %10676 = vmatprep.mubr.bf16.mxu0 0
  %10677 = vmatmul.mubr.bf16.gmra.mrb[0].mxu0 %v10640
  %v10678 = vpop.f32.mrb[0].mxu0
  %v10679 = vadd.f32 0.0, %v10678
  %v10680 = vpop.f32.mrb[0].mxu0
  %v10681 = vpop.f32.mrb[0].mxu0
  %v10682 = vadd.f32 0.0, %v10681
  %v10683 = vpop.f32.mrb[0].mxu0
  %10684 = vmatprep.mubr.bf16.mxu0 0
  %10685 = vmatmul.mubr.bf16.gmra.mrb[0].mxu0 %v10641
  %v10686 = vpop.f32.mrb[0].mxu0
  %v10687 = vadd.f32 0.0, %v10686
  %v10688 = vpop.f32.mrb[0].mxu0
  %v10689 = vpop.f32.mrb[0].mxu0
  %v10690 = vadd.f32 0.0, %v10689
  %v10691 = vpop.f32.mrb[0].mxu0
  %10692 = vdwg.mxu0
  %v10693 = vpack.c.bf16 %v10682, %v10679
  %v10694 = vpack.c.bf16 %v10690, %v10687
  %s10695 = scalar_lea.vmem %s5, 256
  %v10696 = vld [vmem:[%s10695] sm:$0xf]
  %v10697 = vld [vmem:[%s10695 + $0x4] sm:$0xf]
  %v10698 = vld [vmem:[%s10695 + $0x8] sm:$0xf]
  %v10699 = vld [vmem:[%s10695 + $0xc] sm:$0xf]
  %v10700 = vld [vmem:[%s10695 + $0x10] sm:$0xf]
  %v10701 = vld [vmem:[%s10695 + $0x14] sm:$0xf]
  %v10702 = vld [vmem:[%s10695 + $0x18] sm:$0xf]
  %v10703 = vld [vmem:[%s10695 + $0x1c] sm:$0xf]
  %v10704 = vld [vmem:[%s10695 + $0x20] sm:$0xf]
  %v10705 = vld [vmem:[%s10695 + $0x24] sm:$0xf]
  %v10706 = vld [vmem:[%s10695 + $0x28] sm:$0xf]
  %v10707 = vld [vmem:[%s10695 + $0x2c] sm:$0xf]
  %v10708 = vld [vmem:[%s10695 + $0x30] sm:$0xf]
  %v10709 = vld [vmem:[%s10695 + $0x34] sm:$0xf]
  %v10710 = vld [vmem:[%s10695 + $0x38] sm:$0xf]
  %v10711 = vld [vmem:[%s10695 + $0x3c] sm:$0xf]
  %v10728 = vunpack.c.l.b16 %v10696
  %v10729 = vunpack.c.l.b16 %v10697
  %v10730 = vunpack.c.l.b16 %v10698
  %v10731 = vunpack.c.l.b16 %v10699
  %v10732 = vunpack.c.l.b16 %v10700
  %v10733 = vunpack.c.l.b16 %v10701
  %v10734 = vunpack.c.l.b16 %v10702
  %v10735 = vunpack.c.l.b16 %v10703
  %v10736 = vunpack.c.l.b16 %v10704
  %v10737 = vunpack.c.l.b16 %v10705
  %v10738 = vunpack.c.l.b16 %v10706
  %v10739 = vunpack.c.l.b16 %v10707
  %v10740 = vunpack.c.l.b16 %v10708
  %v10741 = vunpack.c.l.b16 %v10709
  %v10742 = vunpack.c.l.b16 %v10710
  %v10743 = vunpack.c.l.b16 %v10711
  %v10744 = vpack.c.b16 %v10729, %v10728
  %v10745 = vpack.c.b16 %v10731, %v10730
  %v10746 = vpack.c.b16 %v10733, %v10732
  %v10747 = vpack.c.b16 %v10735, %v10734
  %v10748 = vpack.c.b16 %v10737, %v10736
  %v10749 = vpack.c.b16 %v10739, %v10738
  %v10750 = vpack.c.b16 %v10741, %v10740
  %v10751 = vpack.c.b16 %v10743, %v10742
  %10760 = vmatprep.subr.bf16.mxu0 0
  %10761 = vmatpush1.bf16.msra.mxu0 %v10744
  %10762 = vmatprep.subr.bf16.mxu0 0
  %10763 = vmatpush1.bf16.msra.mxu0 %v10745
  %10764 = vmatprep.subr.bf16.mxu0 0
  %10765 = vmatpush1.bf16.msra.mxu0 %v10746
  %10766 = vmatprep.subr.bf16.mxu0 0
  %10767 = vmatpush1.bf16.msra.mxu0 %v10747
  %10768 = vmatprep.subr.bf16.mxu0 0
  %10769 = vmatpush1.bf16.msra.mxu0 %v10748
  %10770 = vmatprep.subr.bf16.mxu0 0
  %10771 = vmatpush1.bf16.msra.mxu0 %v10749
  %10772 = vmatprep.subr.bf16.mxu0 0
  %10773 = vmatpush1.bf16.msra.mxu0 %v10750
  %10774 = vmatprep.subr.bf16.mxu0 0
  %10775 = vmatpush1.bf16.msra.mxu0 %v10751
  %10776 = vmatprep.subr.bf16.mxu0 0
  %10777 = vmatpush1.bf16.msra.mxu0 0
  %10778 = vmatprep.subr.bf16.mxu0 0
  %10779 = vmatpush1.bf16.msra.mxu0 0
  %10780 = vmatprep.subr.bf16.mxu0 0
  %10781 = vmatpush1.bf16.msra.mxu0 0
  %10782 = vmatprep.subr.bf16.mxu0 0
  %10783 = vmatpush1.bf16.msra.mxu0 0
  %10784 = vmatprep.subr.bf16.mxu0 0
  %10785 = vmatpush1.bf16.msra.mxu0 0
  %10786 = vmatprep.subr.bf16.mxu0 0
  %10787 = vmatpush1.bf16.msra.mxu0 0
  %10788 = vmatprep.subr.bf16.mxu0 0
  %10789 = vmatpush1.bf16.msra.mxu0 0
  %10790 = vmatprep.subr.bf16.mxu0 0
  %10791 = vmatpush1.bf16.msra.mxu0 0
  %10792 = vmatprep.mubr.bf16.mxu0 0
  %10793 = vmatmul.mubr.bf16.gmra.mrb[0].mxu0 %v10693
  %v10794 = vpop.f32.mrb[0].mxu0
  %v10795 = vadd.f32 0.0, %v10794
  %v10796 = vpop.f32.mrb[0].mxu0
  %v10797 = vpop.f32.mrb[0].mxu0
  %v10798 = vadd.f32 0.0, %v10797
  %v10799 = vpop.f32.mrb[0].mxu0
  %10800 = vmatprep.mubr.bf16.mxu0 0
  %10801 = vmatmul.mubr.bf16.gmra.mrb[0].mxu0 %v10694
  %v10802 = vpop.f32.mrb[0].mxu0
  %v10803 = vadd.f32 0.0, %v10802
  %v10804 = vpop.f32.mrb[0].mxu0
  %v10805 = vpop.f32.mrb[0].mxu0
  %v10806 = vadd.f32 0.0, %v10805
  %v10807 = vpop.f32.mrb[0].mxu0
  %10808 = vdwg.mxu0
  %v10809 = vadd.f32 %v10623, %v10795
  %v10810 = vadd.f32 %v10624, %v10798
  %v10811 = vadd.f32 %v10625, %v10803
  %v10812 = vadd.f32 %v10626, %v10806
  %s10813 = scalar_lea.vmem %s4, 80
  %v10814 = vld [vmem:[%s10813] sm:$0xf]
  %v10815 = vld [vmem:[%s10813 + $0x4] sm:$0xf]
  %v10816 = vld [vmem:[%s10813 + $0x8] sm:$0xf]
  %v10817 = vld [vmem:[%s10813 + $0xc] sm:$0xf]
  %v10822 = vunpack.c.l.b16 %v10814
  %v10823 = vunpack.c.l.b16 %v10815
  %v10824 = vunpack.c.l.b16 %v10816
  %v10825 = vunpack.c.l.b16 %v10817
  %v10826 = vpack.c.b16 %v10823, %v10822
  %v10827 = vpack.c.b16 %v10825, %v10824
  %10830 = vmatprep.subr.bf16.mxu0 0
  %10831 = vmatpush1.bf16.msra.mxu0 %v9885
  %10832 = vmatprep.subr.bf16.mxu0 0
  %10833 = vmatpush1.bf16.msra.mxu0 %v9886
  %10834 = vmatprep.subr.bf16.mxu0 0
  %10835 = vmatpush1.bf16.msra.mxu0 %v9887
  %10836 = vmatprep.subr.bf16.mxu0 0
  %10837 = vmatpush1.bf16.msra.mxu0 %v9888
  %10838 = vmatprep.subr.bf16.mxu0 0
  %10839 = vmatpush1.bf16.msra.mxu0 %v9889
  %10840 = vmatprep.subr.bf16.mxu0 0
  %10841 = vmatpush1.bf16.msra.mxu0 %v9890
  %10842 = vmatprep.subr.bf16.mxu0 0
  %10843 = vmatpush1.bf16.msra.mxu0 %v9891
  %10844 = vmatprep.subr.bf16.mxu0 0
  %10845 = vmatpush1.bf16.msra.mxu0 %v9892
  %10846 = vmatprep.subr.bf16.mxu0 0
  %10847 = vmatpush1.bf16.msra.mxu0 0
  %10848 = vmatprep.subr.bf16.mxu0 0
  %10849 = vmatpush1.bf16.msra.mxu0 0
  %10850 = vmatprep.subr.bf16.mxu0 0
  %10851 = vmatpush1.bf16.msra.mxu0 0
  %10852 = vmatprep.subr.bf16.mxu0 0
  %10853 = vmatpush1.bf16.msra.mxu0 0
  %10854 = vmatprep.subr.bf16.mxu0 0
  %10855 = vmatpush1.bf16.msra.mxu0 0
  %10856 = vmatprep.subr.bf16.mxu0 0
  %10857 = vmatpush1.bf16.msra.mxu0 0
  %10858 = vmatprep.subr.bf16.mxu0 0
  %10859 = vmatpush1.bf16.msra.mxu0 0
  %10860 = vmatprep.subr.bf16.mxu0 0
  %10861 = vmatpush1.bf16.msra.mxu0 0
  %10862 = vmatprep.mubr.bf16.mxu0 0
  %10863 = vmatmul.mubr.bf16.gmra.mrb[0].mxu0 %v10826
  %v10864 = vpop.f32.mrb[0].mxu0
  %v10865 = vadd.f32 0.0, %v10864
  %v10866 = vpop.f32.mrb[0].mxu0
  %v10867 = vpop.f32.mrb[0].mxu0
  %v10868 = vadd.f32 0.0, %v10867
  %v10869 = vpop.f32.mrb[0].mxu0
  %10870 = vmatprep.mubr.bf16.mxu0 0
  %10871 = vmatmul.mubr.bf16.gmra.mrb[0].mxu0 %v10827
  %v10872 = vpop.f32.mrb[0].mxu0
  %v10873 = vadd.f32 0.0, %v10872
  %v10874 = vpop.f32.mrb[0].mxu0
  %v10875 = vpop.f32.mrb[0].mxu0
  %v10876 = vadd.f32 0.0, %v10875
  %v10877 = vpop.f32.mrb[0].mxu0
  %10878 = vdwg.mxu0
  %v10879 = vpack.c.bf16 %v10868, %v10865
  %v10880 = vpack.c.bf16 %v10876, %v10873
  %s10881 = scalar_lea.vmem %s5, 320
  %v10882 = vld [vmem:[%s10881] sm:$0xf]
  %v10883 = vld [vmem:[%s10881 + $0x4] sm:$0xf]
  %v10884 = vld [vmem:[%s10881 + $0x8] sm:$0xf]
  %v10885 = vld [vmem:[%s10881 + $0xc] sm:$0xf]
  %v10886 = vld [vmem:[%s10881 + $0x10] sm:$0xf]
  %v10887 = vld [vmem:[%s10881 + $0x14] sm:$0xf]
  %v10888 = vld [vmem:[%s10881 + $0x18] sm:$0xf]
  %v10889 = vld [vmem:[%s10881 + $0x1c] sm:$0xf]
  %v10890 = vld [vmem:[%s10881 + $0x20] sm:$0xf]
  %v10891 = vld [vmem:[%s10881 + $0x24] sm:$0xf]
  %v10892 = vld [vmem:[%s10881 + $0x28] sm:$0xf]
  %v10893 = vld [vmem:[%s10881 + $0x2c] sm:$0xf]
  %v10894 = vld [vmem:[%s10881 + $0x30] sm:$0xf]
  %v10895 = vld [vmem:[%s10881 + $0x34] sm:$0xf]
  %v10896 = vld [vmem:[%s10881 + $0x38] sm:$0xf]
  %v10897 = vld [vmem:[%s10881 + $0x3c] sm:$0xf]
  %v10914 = vunpack.c.l.b16 %v10882
  %v10915 = vunpack.c.l.b16 %v10883
  %v10916 = vunpack.c.l.b16 %v10884
  %v10917 = vunpack.c.l.b16 %v10885
  %v10918 = vunpack.c.l.b16 %v10886
  %v10919 = vunpack.c.l.b16 %v10887
  %v10920 = vunpack.c.l.b16 %v10888
  %v10921 = vunpack.c.l.b16 %v10889
  %v10922 = vunpack.c.l.b16 %v10890
  %v10923 = vunpack.c.l.b16 %v10891
  %v10924 = vunpack.c.l.b16 %v10892
  %v10925 = vunpack.c.l.b16 %v10893
  %v10926 = vunpack.c.l.b16 %v10894
  %v10927 = vunpack.c.l.b16 %v10895
  %v10928 = vunpack.c.l.b16 %v10896
  %v10929 = vunpack.c.l.b16 %v10897
  %v10930 = vpack.c.b16 %v10915, %v10914
  %v10931 = vpack.c.b16 %v10917, %v10916
  %v10932 = vpack.c.b16 %v10919, %v10918
  %v10933 = vpack.c.b16 %v10921, %v10920
  %v10934 = vpack.c.b16 %v10923, %v10922
  %v10935 = vpack.c.b16 %v10925, %v10924
  %v10936 = vpack.c.b16 %v10927, %v10926
  %v10937 = vpack.c.b16 %v10929, %v10928
  %10946 = vmatprep.subr.bf16.mxu0 0
  %10947 = vmatpush1.bf16.msra.mxu0 %v10930
  %10948 = vmatprep.subr.bf16.mxu0 0
  %10949 = vmatpush1.bf16.msra.mxu0 %v10931
  %10950 = vmatprep.subr.bf16.mxu0 0
  %10951 = vmatpush1.bf16.msra.mxu0 %v10932
  %10952 = vmatprep.subr.bf16.mxu0 0
  %10953 = vmatpush1.bf16.msra.mxu0 %v10933
  %10954 = vmatprep.subr.bf16.mxu0 0
  %10955 = vmatpush1.bf16.msra.mxu0 %v10934
  %10956 = vmatprep.subr.bf16.mxu0 0
  %10957 = vmatpush1.bf16.msra.mxu0 %v10935
  %10958 = vmatprep.subr.bf16.mxu0 0
  %10959 = vmatpush1.bf16.msra.mxu0 %v10936
  %10960 = vmatprep.subr.bf16.mxu0 0
  %10961 = vmatpush1.bf16.msra.mxu0 %v10937
  %10962 = vmatprep.subr.bf16.mxu0 0
  %10963 = vmatpush1.bf16.msra.mxu0 0
  %10964 = vmatprep.subr.bf16.mxu0 0
  %10965 = vmatpush1.bf16.msra.mxu0 0
  %10966 = vmatprep.subr.bf16.mxu0 0
  %10967 = vmatpush1.bf16.msra.mxu0 0
  %10968 = vmatprep.subr.bf16.mxu0 0
  %10969 = vmatpush1.bf16.msra.mxu0 0
  %10970 = vmatprep.subr.bf16.mxu0 0
  %10971 = vmatpush1.bf16.msra.mxu0 0
  %10972 = vmatprep.subr.bf16.mxu0 0
  %10973 = vmatpush1.bf16.msra.mxu0 0
  %10974 = vmatprep.subr.bf16.mxu0 0
  %10975 = vmatpush1.bf16.msra.mxu0 0
  %10976 = vmatprep.subr.bf16.mxu0 0
  %10977 = vmatpush1.bf16.msra.mxu0 0
  %10978 = vmatprep.mubr.bf16.mxu0 0
  %10979 = vmatmul.mubr.bf16.gmra.mrb[0].mxu0 %v10879
  %v10980 = vpop.f32.mrb[0].mxu0
  %v10981 = vadd.f32 0.0, %v10980
  %v10982 = vpop.f32.mrb[0].mxu0
  %v10983 = vpop.f32.mrb[0].mxu0
  %v10984 = vadd.f32 0.0, %v10983
  %v10985 = vpop.f32.mrb[0].mxu0
  %10986 = vmatprep.mubr.bf16.mxu0 0
  %10987 = vmatmul.mubr.bf16.gmra.mrb[0].mxu0 %v10880
  %v10988 = vpop.f32.mrb[0].mxu0
  %v10989 = vadd.f32 0.0, %v10988
  %v10990 = vpop.f32.mrb[0].mxu0
  %v10991 = vpop.f32.mrb[0].mxu0
  %v10992 = vadd.f32 0.0, %v10991
  %v10993 = vpop.f32.mrb[0].mxu0
  %10994 = vdwg.mxu0
  %v10995 = vadd.f32 %v10809, %v10981
  %v10996 = vadd.f32 %v10810, %v10984
  %v10997 = vadd.f32 %v10811, %v10989
  %v10998 = vadd.f32 %v10812, %v10992
  %s10999 = scalar_lea.vmem %s4, 96
  %v11000 = vld [vmem:[%s10999] sm:$0xf]
  %v11001 = vld [vmem:[%s10999 + $0x4] sm:$0xf]
  %v11002 = vld [vmem:[%s10999 + $0x8] sm:$0xf]
  %v11003 = vld [vmem:[%s10999 + $0xc] sm:$0xf]
  %v11008 = vunpack.c.l.b16 %v11000
  %v11009 = vunpack.c.l.b16 %v11001
  %v11010 = vunpack.c.l.b16 %v11002
  %v11011 = vunpack.c.l.b16 %v11003
  %v11012 = vpack.c.b16 %v11009, %v11008
  %v11013 = vpack.c.b16 %v11011, %v11010
  %11016 = vmatprep.subr.bf16.mxu0 0
  %11017 = vmatpush1.bf16.msra.mxu0 %v9885
  %11018 = vmatprep.subr.bf16.mxu0 0
  %11019 = vmatpush1.bf16.msra.mxu0 %v9886
  %11020 = vmatprep.subr.bf16.mxu0 0
  %11021 = vmatpush1.bf16.msra.mxu0 %v9887
  %11022 = vmatprep.subr.bf16.mxu0 0
  %11023 = vmatpush1.bf16.msra.mxu0 %v9888
  %11024 = vmatprep.subr.bf16.mxu0 0
  %11025 = vmatpush1.bf16.msra.mxu0 %v9889
  %11026 = vmatprep.subr.bf16.mxu0 0
  %11027 = vmatpush1.bf16.msra.mxu0 %v9890
  %11028 = vmatprep.subr.bf16.mxu0 0
  %11029 = vmatpush1.bf16.msra.mxu0 %v9891
  %11030 = vmatprep.subr.bf16.mxu0 0
  %11031 = vmatpush1.bf16.msra.mxu0 %v9892
  %11032 = vmatprep.subr.bf16.mxu0 0
  %11033 = vmatpush1.bf16.msra.mxu0 0
  %11034 = vmatprep.subr.bf16.mxu0 0
  %11035 = vmatpush1.bf16.msra.mxu0 0
  %11036 = vmatprep.subr.bf16.mxu0 0
  %11037 = vmatpush1.bf16.msra.mxu0 0
  %11038 = vmatprep.subr.bf16.mxu0 0
  %11039 = vmatpush1.bf16.msra.mxu0 0
  %11040 = vmatprep.subr.bf16.mxu0 0
  %11041 = vmatpush1.bf16.msra.mxu0 0
  %11042 = vmatprep.subr.bf16.mxu0 0
  %11043 = vmatpush1.bf16.msra.mxu0 0
  %11044 = vmatprep.subr.bf16.mxu0 0
  %11045 = vmatpush1.bf16.msra.mxu0 0
  %11046 = vmatprep.subr.bf16.mxu0 0
  %11047 = vmatpush1.bf16.msra.mxu0 0
  %11048 = vmatprep.mubr.bf16.mxu0 0
  %11049 = vmatmul.mubr.bf16.gmra.mrb[0].mxu0 %v11012
  %v11050 = vpop.f32.mrb[0].mxu0
  %v11051 = vadd.f32 0.0, %v11050
  %v11052 = vpop.f32.mrb[0].mxu0
  %v11053 = vpop.f32.mrb[0].mxu0
  %v11054 = vadd.f32 0.0, %v11053
  %v11055 = vpop.f32.mrb[0].mxu0
  %11056 = vmatprep.mubr.bf16.mxu0 0
  %11057 = vmatmul.mubr.bf16.gmra.mrb[0].mxu0 %v11013
  %v11058 = vpop.f32.mrb[0].mxu0
  %v11059 = vadd.f32 0.0, %v11058
  %v11060 = vpop.f32.mrb[0].mxu0
  %v11061 = vpop.f32.mrb[0].mxu0
  %v11062 = vadd.f32 0.0, %v11061
  %v11063 = vpop.f32.mrb[0].mxu0
  %11064 = vdwg.mxu0
  %v11065 = vpack.c.bf16 %v11054, %v11051
  %v11066 = vpack.c.bf16 %v11062, %v11059
  %s11067 = scalar_lea.vmem %s5, 384
  %v11068 = vld [vmem:[%s11067] sm:$0xf]
  %v11069 = vld [vmem:[%s11067 + $0x4] sm:$0xf]
  %v11070 = vld [vmem:[%s11067 + $0x8] sm:$0xf]
  %v11071 = vld [vmem:[%s11067 + $0xc] sm:$0xf]
  %v11072 = vld [vmem:[%s11067 + $0x10] sm:$0xf]
  %v11073 = vld [vmem:[%s11067 + $0x14] sm:$0xf]
  %v11074 = vld [vmem:[%s11067 + $0x18] sm:$0xf]
  %v11075 = vld [vmem:[%s11067 + $0x1c] sm:$0xf]
  %v11076 = vld [vmem:[%s11067 + $0x20] sm:$0xf]
  %v11077 = vld [vmem:[%s11067 + $0x24] sm:$0xf]
  %v11078 = vld [vmem:[%s11067 + $0x28] sm:$0xf]
  %v11079 = vld [vmem:[%s11067 + $0x2c] sm:$0xf]
  %v11080 = vld [vmem:[%s11067 + $0x30] sm:$0xf]
  %v11081 = vld [vmem:[%s11067 + $0x34] sm:$0xf]
  %v11082 = vld [vmem:[%s11067 + $0x38] sm:$0xf]
  %v11083 = vld [vmem:[%s11067 + $0x3c] sm:$0xf]
  %v11100 = vunpack.c.l.b16 %v11068
  %v11101 = vunpack.c.l.b16 %v11069
  %v11102 = vunpack.c.l.b16 %v11070
  %v11103 = vunpack.c.l.b16 %v11071
  %v11104 = vunpack.c.l.b16 %v11072
  %v11105 = vunpack.c.l.b16 %v11073
  %v11106 = vunpack.c.l.b16 %v11074
  %v11107 = vunpack.c.l.b16 %v11075
  %v11108 = vunpack.c.l.b16 %v11076
  %v11109 = vunpack.c.l.b16 %v11077
  %v11110 = vunpack.c.l.b16 %v11078
  %v11111 = vunpack.c.l.b16 %v11079
  %v11112 = vunpack.c.l.b16 %v11080
  %v11113 = vunpack.c.l.b16 %v11081
  %v11114 = vunpack.c.l.b16 %v11082
  %v11115 = vunpack.c.l.b16 %v11083
  %v11116 = vpack.c.b16 %v11101, %v11100
  %v11117 = vpack.c.b16 %v11103, %v11102
  %v11118 = vpack.c.b16 %v11105, %v11104
  %v11119 = vpack.c.b16 %v11107, %v11106
  %v11120 = vpack.c.b16 %v11109, %v11108
  %v11121 = vpack.c.b16 %v11111, %v11110
  %v11122 = vpack.c.b16 %v11113, %v11112
  %v11123 = vpack.c.b16 %v11115, %v11114
  %11132 = vmatprep.subr.bf16.mxu0 0
  %11133 = vmatpush1.bf16.msra.mxu0 %v11116
  %11134 = vmatprep.subr.bf16.mxu0 0
  %11135 = vmatpush1.bf16.msra.mxu0 %v11117
  %11136 = vmatprep.subr.bf16.mxu0 0
  %11137 = vmatpush1.bf16.msra.mxu0 %v11118
  %11138 = vmatprep.subr.bf16.mxu0 0
  %11139 = vmatpush1.bf16.msra.mxu0 %v11119
  %11140 = vmatprep.subr.bf16.mxu0 0
  %11141 = vmatpush1.bf16.msra.mxu0 %v11120
  %11142 = vmatprep.subr.bf16.mxu0 0
  %11143 = vmatpush1.bf16.msra.mxu0 %v11121
  %11144 = vmatprep.subr.bf16.mxu0 0
  %11145 = vmatpush1.bf16.msra.mxu0 %v11122
  %11146 = vmatprep.subr.bf16.mxu0 0
  %11147 = vmatpush1.bf16.msra.mxu0 %v11123
  %11148 = vmatprep.subr.bf16.mxu0 0
  %11149 = vmatpush1.bf16.msra.mxu0 0
  %11150 = vmatprep.subr.bf16.mxu0 0
  %11151 = vmatpush1.bf16.msra.mxu0 0
  %11152 = vmatprep.subr.bf16.mxu0 0
  %11153 = vmatpush1.bf16.msra.mxu0 0
  %11154 = vmatprep.subr.bf16.mxu0 0
  %11155 = vmatpush1.bf16.msra.mxu0 0
  %11156 = vmatprep.subr.bf16.mxu0 0
  %11157 = vmatpush1.bf16.msra.mxu0 0
  %11158 = vmatprep.subr.bf16.mxu0 0
  %11159 = vmatpush1.bf16.msra.mxu0 0
  %11160 = vmatprep.subr.bf16.mxu0 0
  %11161 = vmatpush1.bf16.msra.mxu0 0
  %11162 = vmatprep.subr.bf16.mxu0 0
  %11163 = vmatpush1.bf16.msra.mxu0 0
  %11164 = vmatprep.mubr.bf16.mxu0 0
  %11165 = vmatmul.mubr.bf16.gmra.mrb[0].mxu0 %v11065
  %v11166 = vpop.f32.mrb[0].mxu0
  %v11167 = vadd.f32 0.0, %v11166
  %v11168 = vpop.f32.mrb[0].mxu0
  %v11169 = vpop.f32.mrb[0].mxu0
  %v11170 = vadd.f32 0.0, %v11169
  %v11171 = vpop.f32.mrb[0].mxu0
  %11172 = vmatprep.mubr.bf16.mxu0 0
  %11173 = vmatmul.mubr.bf16.gmra.mrb[0].mxu0 %v11066
  %v11174 = vpop.f32.mrb[0].mxu0
  %v11175 = vadd.f32 0.0, %v11174
  %v11176 = vpop.f32.mrb[0].mxu0
  %v11177 = vpop.f32.mrb[0].mxu0
  %v11178 = vadd.f32 0.0, %v11177
  %v11179 = vpop.f32.mrb[0].mxu0
  %11180 = vdwg.mxu0
  %v11181 = vadd.f32 %v10995, %v11167
  %v11182 = vadd.f32 %v10996, %v11170
  %v11183 = vadd.f32 %v10997, %v11175
  %v11184 = vadd.f32 %v10998, %v11178
  %s11185 = scalar_lea.vmem %s4, 112
  %v11186 = vld [vmem:[%s11185] sm:$0xf]
  %v11187 = vld [vmem:[%s11185 + $0x4] sm:$0xf]
  %v11188 = vld [vmem:[%s11185 + $0x8] sm:$0xf]
  %v11189 = vld [vmem:[%s11185 + $0xc] sm:$0xf]
  %v11194 = vunpack.c.l.b16 %v11186
  %v11195 = vunpack.c.l.b16 %v11187
  %v11196 = vunpack.c.l.b16 %v11188
  %v11197 = vunpack.c.l.b16 %v11189
  %v11198 = vpack.c.b16 %v11195, %v11194
  %v11199 = vpack.c.b16 %v11197, %v11196
  %11202 = vmatprep.subr.bf16.mxu0 0
  %11203 = vmatpush1.bf16.msra.mxu0 %v9885
  %11204 = vmatprep.subr.bf16.mxu0 0
  %11205 = vmatpush1.bf16.msra.mxu0 %v9886
  %11206 = vmatprep.subr.bf16.mxu0 0
  %11207 = vmatpush1.bf16.msra.mxu0 %v9887
  %11208 = vmatprep.subr.bf16.mxu0 0
  %11209 = vmatpush1.bf16.msra.mxu0 %v9888
  %11210 = vmatprep.subr.bf16.mxu0 0
  %11211 = vmatpush1.bf16.msra.mxu0 %v9889
  %11212 = vmatprep.subr.bf16.mxu0 0
  %11213 = vmatpush1.bf16.msra.mxu0 %v9890
  %11214 = vmatprep.subr.bf16.mxu0 0
  %11215 = vmatpush1.bf16.msra.mxu0 %v9891
  %11216 = vmatprep.subr.bf16.mxu0 0
  %11217 = vmatpush1.bf16.msra.mxu0 %v9892
  %11218 = vmatprep.subr.bf16.mxu0 0
  %11219 = vmatpush1.bf16.msra.mxu0 0
  %11220 = vmatprep.subr.bf16.mxu0 0
  %11221 = vmatpush1.bf16.msra.mxu0 0
  %11222 = vmatprep.subr.bf16.mxu0 0
  %11223 = vmatpush1.bf16.msra.mxu0 0
  %11224 = vmatprep.subr.bf16.mxu0 0
  %11225 = vmatpush1.bf16.msra.mxu0 0
  %11226 = vmatprep.subr.bf16.mxu0 0
  %11227 = vmatpush1.bf16.msra.mxu0 0
  %11228 = vmatprep.subr.bf16.mxu0 0
  %11229 = vmatpush1.bf16.msra.mxu0 0
  %11230 = vmatprep.subr.bf16.mxu0 0
  %11231 = vmatpush1.bf16.msra.mxu0 0
  %11232 = vmatprep.subr.bf16.mxu0 0
  %11233 = vmatpush1.bf16.msra.mxu0 0
  %11234 = vmatprep.mubr.bf16.mxu0 0
  %11235 = vmatmul.mubr.bf16.gmra.mrb[0].mxu0 %v11198
  %v11236 = vpop.f32.mrb[0].mxu0
  %v11237 = vadd.f32 0.0, %v11236
  %v11238 = vpop.f32.mrb[0].mxu0
  %v11239 = vpop.f32.mrb[0].mxu0
  %v11240 = vadd.f32 0.0, %v11239
  %v11241 = vpop.f32.mrb[0].mxu0
  %11242 = vmatprep.mubr.bf16.mxu0 0
  %11243 = vmatmul.mubr.bf16.gmra.mrb[0].mxu0 %v11199
  %v11244 = vpop.f32.mrb[0].mxu0
  %v11245 = vadd.f32 0.0, %v11244
  %v11246 = vpop.f32.mrb[0].mxu0
  %v11247 = vpop.f32.mrb[0].mxu0
  %v11248 = vadd.f32 0.0, %v11247
  %v11249 = vpop.f32.mrb[0].mxu0
  %11250 = vdwg.mxu0
  %v11251 = vpack.c.bf16 %v11240, %v11237
  %v11252 = vpack.c.bf16 %v11248, %v11245
  %s11253 = scalar_lea.vmem %s5, 448
  %v11254 = vld [vmem:[%s11253] sm:$0xf]
  %v11255 = vld [vmem:[%s11253 + $0x4] sm:$0xf]
  %v11256 = vld [vmem:[%s11253 + $0x8] sm:$0xf]
  %v11257 = vld [vmem:[%s11253 + $0xc] sm:$0xf]
  %v11258 = vld [vmem:[%s11253 + $0x10] sm:$0xf]
  %v11259 = vld [vmem:[%s11253 + $0x14] sm:$0xf]
  %v11260 = vld [vmem:[%s11253 + $0x18] sm:$0xf]
  %v11261 = vld [vmem:[%s11253 + $0x1c] sm:$0xf]
  %v11262 = vld [vmem:[%s11253 + $0x20] sm:$0xf]
  %v11263 = vld [vmem:[%s11253 + $0x24] sm:$0xf]
  %v11264 = vld [vmem:[%s11253 + $0x28] sm:$0xf]
  %v11265 = vld [vmem:[%s11253 + $0x2c] sm:$0xf]
  %v11266 = vld [vmem:[%s11253 + $0x30] sm:$0xf]
  %v11267 = vld [vmem:[%s11253 + $0x34] sm:$0xf]
  %v11268 = vld [vmem:[%s11253 + $0x38] sm:$0xf]
  %v11269 = vld [vmem:[%s11253 + $0x3c] sm:$0xf]
  %v11286 = vunpack.c.l.b16 %v11254
  %v11287 = vunpack.c.l.b16 %v11255
  %v11288 = vunpack.c.l.b16 %v11256
  %v11289 = vunpack.c.l.b16 %v11257
  %v11290 = vunpack.c.l.b16 %v11258
  %v11291 = vunpack.c.l.b16 %v11259
  %v11292 = vunpack.c.l.b16 %v11260
  %v11293 = vunpack.c.l.b16 %v11261
  %v11294 = vunpack.c.l.b16 %v11262
  %v11295 = vunpack.c.l.b16 %v11263
  %v11296 = vunpack.c.l.b16 %v11264
  %v11297 = vunpack.c.l.b16 %v11265
  %v11298 = vunpack.c.l.b16 %v11266
  %v11299 = vunpack.c.l.b16 %v11267
  %v11300 = vunpack.c.l.b16 %v11268
  %v11301 = vunpack.c.l.b16 %v11269
  %v11302 = vpack.c.b16 %v11287, %v11286
  %v11303 = vpack.c.b16 %v11289, %v11288
  %v11304 = vpack.c.b16 %v11291, %v11290
  %v11305 = vpack.c.b16 %v11293, %v11292
  %v11306 = vpack.c.b16 %v11295, %v11294
  %v11307 = vpack.c.b16 %v11297, %v11296
  %v11308 = vpack.c.b16 %v11299, %v11298
  %v11309 = vpack.c.b16 %v11301, %v11300
  %11318 = vmatprep.subr.bf16.mxu0 0
  %11319 = vmatpush1.bf16.msra.mxu0 %v11302
  %11320 = vmatprep.subr.bf16.mxu0 0
  %11321 = vmatpush1.bf16.msra.mxu0 %v11303
  %11322 = vmatprep.subr.bf16.mxu0 0
  %11323 = vmatpush1.bf16.msra.mxu0 %v11304
  %11324 = vmatprep.subr.bf16.mxu0 0
  %11325 = vmatpush1.bf16.msra.mxu0 %v11305
  %11326 = vmatprep.subr.bf16.mxu0 0
  %11327 = vmatpush1.bf16.msra.mxu0 %v11306
  %11328 = vmatprep.subr.bf16.mxu0 0
  %11329 = vmatpush1.bf16.msra.mxu0 %v11307
  %11330 = vmatprep.subr.bf16.mxu0 0
  %11331 = vmatpush1.bf16.msra.mxu0 %v11308
  %11332 = vmatprep.subr.bf16.mxu0 0
  %11333 = vmatpush1.bf16.msra.mxu0 %v11309
  %11334 = vmatprep.subr.bf16.mxu0 0
  %11335 = vmatpush1.bf16.msra.mxu0 0
  %11336 = vmatprep.subr.bf16.mxu0 0
  %11337 = vmatpush1.bf16.msra.mxu0 0
  %11338 = vmatprep.subr.bf16.mxu0 0
  %11339 = vmatpush1.bf16.msra.mxu0 0
  %11340 = vmatprep.subr.bf16.mxu0 0
  %11341 = vmatpush1.bf16.msra.mxu0 0
  %11342 = vmatprep.subr.bf16.mxu0 0
  %11343 = vmatpush1.bf16.msra.mxu0 0
  %11344 = vmatprep.subr.bf16.mxu0 0
  %11345 = vmatpush1.bf16.msra.mxu0 0
  %11346 = vmatprep.subr.bf16.mxu0 0
  %11347 = vmatpush1.bf16.msra.mxu0 0
  %11348 = vmatprep.subr.bf16.mxu0 0
  %11349 = vmatpush1.bf16.msra.mxu0 0
  %11350 = vmatprep.mubr.bf16.mxu0 0
  %11351 = vmatmul.mubr.bf16.gmra.mrb[0].mxu0 %v11251
  %v11352 = vpop.f32.mrb[0].mxu0
  %v11353 = vadd.f32 0.0, %v11352
  %v11354 = vpop.f32.mrb[0].mxu0
  %v11355 = vpop.f32.mrb[0].mxu0
  %v11356 = vadd.f32 0.0, %v11355
  %v11357 = vpop.f32.mrb[0].mxu0
  %11358 = vmatprep.mubr.bf16.mxu0 0
  %11359 = vmatmul.mubr.bf16.gmra.mrb[0].mxu0 %v11252
  %v11360 = vpop.f32.mrb[0].mxu0
  %v11361 = vadd.f32 0.0, %v11360
  %v11362 = vpop.f32.mrb[0].mxu0
  %v11363 = vpop.f32.mrb[0].mxu0
  %v11364 = vadd.f32 0.0, %v11363
  %v11365 = vpop.f32.mrb[0].mxu0
  %11366 = vdwg.mxu0
  %v11367 = vadd.f32 %v11181, %v11353
  %v11368 = vadd.f32 %v11182, %v11356
  %v11369 = vadd.f32 %v11183, %v11361
  %v11370 = vadd.f32 %v11184, %v11364
  %s11371 = scalar_lea.vmem %s4, 128
  %v11372 = vld [vmem:[%s11371] sm:$0xf]
  %v11373 = vld [vmem:[%s11371 + $0x4] sm:$0xf]
  %v11374 = vld [vmem:[%s11371 + $0x8] sm:$0xf]
  %v11375 = vld [vmem:[%s11371 + $0xc] sm:$0xf]
  %v11380 = vunpack.c.l.b16 %v11372
  %v11381 = vunpack.c.l.b16 %v11373
  %v11382 = vunpack.c.l.b16 %v11374
  %v11383 = vunpack.c.l.b16 %v11375
  %v11384 = vpack.c.b16 %v11381, %v11380
  %v11385 = vpack.c.b16 %v11383, %v11382
  %11388 = vmatprep.subr.bf16.mxu0 0
  %11389 = vmatpush1.bf16.msra.mxu0 %v9885
  %11390 = vmatprep.subr.bf16.mxu0 0
  %11391 = vmatpush1.bf16.msra.mxu0 %v9886
  %11392 = vmatprep.subr.bf16.mxu0 0
  %11393 = vmatpush1.bf16.msra.mxu0 %v9887
  %11394 = vmatprep.subr.bf16.mxu0 0
  %11395 = vmatpush1.bf16.msra.mxu0 %v9888
  %11396 = vmatprep.subr.bf16.mxu0 0
  %11397 = vmatpush1.bf16.msra.mxu0 %v9889
  %11398 = vmatprep.subr.bf16.mxu0 0
  %11399 = vmatpush1.bf16.msra.mxu0 %v9890
  %11400 = vmatprep.subr.bf16.mxu0 0
  %11401 = vmatpush1.bf16.msra.mxu0 %v9891
  %11402 = vmatprep.subr.bf16.mxu0 0
  %11403 = vmatpush1.bf16.msra.mxu0 %v9892
  %11404 = vmatprep.subr.bf16.mxu0 0
  %11405 = vmatpush1.bf16.msra.mxu0 0
  %11406 = vmatprep.subr.bf16.mxu0 0
  %11407 = vmatpush1.bf16.msra.mxu0 0
  %11408 = vmatprep.subr.bf16.mxu0 0
  %11409 = vmatpush1.bf16.msra.mxu0 0
  %11410 = vmatprep.subr.bf16.mxu0 0
  %11411 = vmatpush1.bf16.msra.mxu0 0
  %11412 = vmatprep.subr.bf16.mxu0 0
  %11413 = vmatpush1.bf16.msra.mxu0 0
  %11414 = vmatprep.subr.bf16.mxu0 0
  %11415 = vmatpush1.bf16.msra.mxu0 0
  %11416 = vmatprep.subr.bf16.mxu0 0
  %11417 = vmatpush1.bf16.msra.mxu0 0
  %11418 = vmatprep.subr.bf16.mxu0 0
  %11419 = vmatpush1.bf16.msra.mxu0 0
  %11420 = vmatprep.mubr.bf16.mxu0 0
  %11421 = vmatmul.mubr.bf16.gmra.mrb[0].mxu0 %v11384
  %v11422 = vpop.f32.mrb[0].mxu0
  %v11423 = vadd.f32 0.0, %v11422
  %v11424 = vpop.f32.mrb[0].mxu0
  %v11425 = vpop.f32.mrb[0].mxu0
  %v11426 = vadd.f32 0.0, %v11425
  %v11427 = vpop.f32.mrb[0].mxu0
  %11428 = vmatprep.mubr.bf16.mxu0 0
  %11429 = vmatmul.mubr.bf16.gmra.mrb[0].mxu0 %v11385
  %v11430 = vpop.f32.mrb[0].mxu0
  %v11431 = vadd.f32 0.0, %v11430
  %v11432 = vpop.f32.mrb[0].mxu0
  %v11433 = vpop.f32.mrb[0].mxu0
  %v11434 = vadd.f32 0.0, %v11433
  %v11435 = vpop.f32.mrb[0].mxu0
  %11436 = vdwg.mxu0
  %v11437 = vpack.c.bf16 %v11426, %v11423
  %v11438 = vpack.c.bf16 %v11434, %v11431
  %s11439 = scalar_lea.vmem %s5, 512
  %v11440 = vld [vmem:[%s11439] sm:$0xf]
  %v11441 = vld [vmem:[%s11439 + $0x4] sm:$0xf]
  %v11442 = vld [vmem:[%s11439 + $0x8] sm:$0xf]
  %v11443 = vld [vmem:[%s11439 + $0xc] sm:$0xf]
  %v11444 = vld [vmem:[%s11439 + $0x10] sm:$0xf]
  %v11445 = vld [vmem:[%s11439 + $0x14] sm:$0xf]
  %v11446 = vld [vmem:[%s11439 + $0x18] sm:$0xf]
  %v11447 = vld [vmem:[%s11439 + $0x1c] sm:$0xf]
  %v11448 = vld [vmem:[%s11439 + $0x20] sm:$0xf]
  %v11449 = vld [vmem:[%s11439 + $0x24] sm:$0xf]
  %v11450 = vld [vmem:[%s11439 + $0x28] sm:$0xf]
  %v11451 = vld [vmem:[%s11439 + $0x2c] sm:$0xf]
  %v11452 = vld [vmem:[%s11439 + $0x30] sm:$0xf]
  %v11453 = vld [vmem:[%s11439 + $0x34] sm:$0xf]
  %v11454 = vld [vmem:[%s11439 + $0x38] sm:$0xf]
  %v11455 = vld [vmem:[%s11439 + $0x3c] sm:$0xf]
  %v11472 = vunpack.c.l.b16 %v11440
  %v11473 = vunpack.c.l.b16 %v11441
  %v11474 = vunpack.c.l.b16 %v11442
  %v11475 = vunpack.c.l.b16 %v11443
  %v11476 = vunpack.c.l.b16 %v11444
  %v11477 = vunpack.c.l.b16 %v11445
  %v11478 = vunpack.c.l.b16 %v11446
  %v11479 = vunpack.c.l.b16 %v11447
  %v11480 = vunpack.c.l.b16 %v11448
  %v11481 = vunpack.c.l.b16 %v11449
  %v11482 = vunpack.c.l.b16 %v11450
  %v11483 = vunpack.c.l.b16 %v11451
  %v11484 = vunpack.c.l.b16 %v11452
  %v11485 = vunpack.c.l.b16 %v11453
  %v11486 = vunpack.c.l.b16 %v11454
  %v11487 = vunpack.c.l.b16 %v11455
  %v11488 = vpack.c.b16 %v11473, %v11472
  %v11489 = vpack.c.b16 %v11475, %v11474
  %v11490 = vpack.c.b16 %v11477, %v11476
  %v11491 = vpack.c.b16 %v11479, %v11478
  %v11492 = vpack.c.b16 %v11481, %v11480
  %v11493 = vpack.c.b16 %v11483, %v11482
  %v11494 = vpack.c.b16 %v11485, %v11484
  %v11495 = vpack.c.b16 %v11487, %v11486
  %11504 = vmatprep.subr.bf16.mxu0 0
  %11505 = vmatpush1.bf16.msra.mxu0 %v11488
  %11506 = vmatprep.subr.bf16.mxu0 0
  %11507 = vmatpush1.bf16.msra.mxu0 %v11489
  %11508 = vmatprep.subr.bf16.mxu0 0
  %11509 = vmatpush1.bf16.msra.mxu0 %v11490
  %11510 = vmatprep.subr.bf16.mxu0 0
  %11511 = vmatpush1.bf16.msra.mxu0 %v11491
  %11512 = vmatprep.subr.bf16.mxu0 0
  %11513 = vmatpush1.bf16.msra.mxu0 %v11492
  %11514 = vmatprep.subr.bf16.mxu0 0
  %11515 = vmatpush1.bf16.msra.mxu0 %v11493
  %11516 = vmatprep.subr.bf16.mxu0 0
  %11517 = vmatpush1.bf16.msra.mxu0 %v11494
  %11518 = vmatprep.subr.bf16.mxu0 0
  %11519 = vmatpush1.bf16.msra.mxu0 %v11495
  %11520 = vmatprep.subr.bf16.mxu0 0
  %11521 = vmatpush1.bf16.msra.mxu0 0
  %11522 = vmatprep.subr.bf16.mxu0 0
  %11523 = vmatpush1.bf16.msra.mxu0 0
  %11524 = vmatprep.subr.bf16.mxu0 0
  %11525 = vmatpush1.bf16.msra.mxu0 0
  %11526 = vmatprep.subr.bf16.mxu0 0
  %11527 = vmatpush1.bf16.msra.mxu0 0
  %11528 = vmatprep.subr.bf16.mxu0 0
  %11529 = vmatpush1.bf16.msra.mxu0 0
  %11530 = vmatprep.subr.bf16.mxu0 0
  %11531 = vmatpush1.bf16.msra.mxu0 0
  %11532 = vmatprep.subr.bf16.mxu0 0
  %11533 = vmatpush1.bf16.msra.mxu0 0
  %11534 = vmatprep.subr.bf16.mxu0 0
  %11535 = vmatpush1.bf16.msra.mxu0 0
  %11536 = vmatprep.mubr.bf16.mxu0 0
  %11537 = vmatmul.mubr.bf16.gmra.mrb[0].mxu0 %v11437
  %v11538 = vpop.f32.mrb[0].mxu0
  %v11539 = vadd.f32 0.0, %v11538
  %v11540 = vpop.f32.mrb[0].mxu0
  %v11541 = vpop.f32.mrb[0].mxu0
  %v11542 = vadd.f32 0.0, %v11541
  %v11543 = vpop.f32.mrb[0].mxu0
  %11544 = vmatprep.mubr.bf16.mxu0 0
  %11545 = vmatmul.mubr.bf16.gmra.mrb[0].mxu0 %v11438
  %v11546 = vpop.f32.mrb[0].mxu0
  %v11547 = vadd.f32 0.0, %v11546
  %v11548 = vpop.f32.mrb[0].mxu0
  %v11549 = vpop.f32.mrb[0].mxu0
  %v11550 = vadd.f32 0.0, %v11549
  %v11551 = vpop.f32.mrb[0].mxu0
  %11552 = vdwg.mxu0
  %v11553 = vadd.f32 %v11367, %v11539
  %v11554 = vadd.f32 %v11368, %v11542
  %v11555 = vadd.f32 %v11369, %v11547
  %v11556 = vadd.f32 %v11370, %v11550
  %v11557 = vmax.f32 %v11553, 0.0
  %v11558 = vmax.f32 %v11554, 0.0
  %v11559 = vmax.f32 %v11555, 0.0
  %v11560 = vmax.f32 %v11556, 0.0
  %v11561 = vld [vmem:[%s6] sm:$0xff]
  %v11562 = vld [vmem:[%s6 + $0x8] sm:$0xff]
  %v11563 = vld [vmem:[%s6 + $0x10] sm:$0xff]
  %v11564 = vld [vmem:[%s6 + $0x18] sm:$0xff]
  %v11565 = vmul.f32 %v11557, %v11561
  %v11566 = vmul.f32 %v11558, %v11562
  %v11567 = vmul.f32 %v11559, %v11563
  %v11568 = vmul.f32 %v11560, %v11564
  %11569 = vadd.xlane.f32.xlu0 %v11565
  %v11570 = vpop.xlane.xlu0 %11569
  %11571 = vadd.xlane.f32.xlu0 %v11566
  %v11572 = vpop.xlane.xlu0 %11571
  %11573 = vadd.xlane.f32.xlu0 %v11567
  %v11574 = vpop.xlane.xlu0 %11573
  %11575 = vadd.xlane.f32.xlu0 %v11568
  %v11576 = vpop.xlane.xlu0 %11575
  %v11577 = vld [vmem:[%s7] sm:$0x3]
  %vm11578 = vcmask 261120
  %v11580 = vsel %vm11578, %v11577, 0
  %11582 = vmatprep.subr.mxu0 0.0
  %11583 = vmatpush1.msra.mxu0 %v11570
  %11584 = vmatprep.subr.mxu0 0.0
  %11585 = vmatpush1.msra.mxu0 %v11572
  %11586 = vmatprep.subr.mxu0 0.0
  %11587 = vmatpush1.msra.mxu0 %v11574
  %11588 = vmatprep.subr.mxu0 0.0
  %11589 = vmatpush1.msra.mxu0 %v11576
  %11590 = vmatprep.subr.mxu0 0.0
  %11591 = vmatpush1.msra.mxu0 0.0
  %11592 = vmatprep.subr.mxu0 0.0
  %11593 = vmatpush1.msra.mxu0 0.0
  %11594 = vmatprep.subr.mxu0 0.0
  %11595 = vmatpush1.msra.mxu0 0.0
  %11596 = vmatprep.subr.mxu0 0.0
  %11597 = vmatpush1.msra.mxu0 0.0
  %11598 = vmatprep.subr.mxu0 0.0
  %11599 = vmatpush1.msra.mxu0 0.0
  %11600 = vmatprep.subr.mxu0 0.0
  %11601 = vmatpush1.msra.mxu0 0.0
  %11602 = vmatprep.subr.mxu0 0.0
  %11603 = vmatpush1.msra.mxu0 0.0
  %11604 = vmatprep.subr.mxu0 0.0
  %11605 = vmatpush1.msra.mxu0 0.0
  %11606 = vmatprep.subr.mxu0 0.0
  %11607 = vmatpush1.msra.mxu0 0.0
  %11608 = vmatprep.subr.mxu0 0.0
  %11609 = vmatpush1.msra.mxu0 0.0
  %11610 = vmatprep.subr.mxu0 0.0
  %11611 = vmatpush1.msra.mxu0 0.0
  %11612 = vmatprep.subr.mxu0 0.0
  %11613 = vmatpush1.msra.mxu0 0.0
  %11614 = vmatprep.subr.mxu0 0.0
  %11615 = vmatpush1.msra.mxu0 0.0
  %11616 = vmatprep.subr.mxu0 0.0
  %11617 = vmatpush1.msra.mxu0 0.0
  %11618 = vmatprep.subr.mxu0 0.0
  %11619 = vmatpush1.msra.mxu0 0.0
  %11620 = vmatprep.subr.mxu0 0.0
  %11621 = vmatpush1.msra.mxu0 0.0
  %11622 = vmatprep.subr.mxu0 0.0
  %11623 = vmatpush1.msra.mxu0 0.0
  %11624 = vmatprep.subr.mxu0 0.0
  %11625 = vmatpush1.msra.mxu0 0.0
  %11626 = vmatprep.subr.mxu0 0.0
  %11627 = vmatpush1.msra.mxu0 0.0
  %11628 = vmatprep.subr.mxu0 0.0
  %11629 = vmatpush1.msra.mxu0 0.0
  %11630 = vmatprep.subr.mxu0 0.0
  %11631 = vmatpush1.msra.mxu0 0.0
  %11632 = vmatprep.subr.mxu0 0.0
  %11633 = vmatpush1.msra.mxu0 0.0
  %11634 = vmatprep.subr.mxu0 0.0
  %11635 = vmatpush1.msra.mxu0 0.0
  %11636 = vmatprep.subr.mxu0 0.0
  %11637 = vmatpush1.msra.mxu0 0.0
  %11638 = vmatprep.subr.mxu0 0.0
  %11639 = vmatpush1.msra.mxu0 0.0
  %11640 = vmatprep.subr.mxu0 0.0
  %11641 = vmatpush1.msra.mxu0 0.0
  %11642 = vmatprep.subr.mxu0 0.0
  %11643 = vmatpush1.msra.mxu0 0.0
  %11644 = vmatprep.subr.mxu0 0.0
  %11645 = vmatpush1.msra.mxu0 0.0
  %11646 = vmatprep.mubr.f32.mxu0 0.0
  %11647 = vmatmul.mubr.f32.gmra.mrb[0].mxu0 %v11580
  %v11648 = vpop.f32.mrb[0].mxu0
  %v11649 = vadd.f32 0.0, %v11648
  %v11650 = vpop.f32.mrb[0].mxu0
  %11651 = vdwg.mxu0
  %v11652 = vsub.f32 0.0, %v11649
  %v11653 = vmul.f32 %v11652, 1.442695
  %v11654 = vpow.pop %v11653
  %v11655 = vadd.f32 %v11654, 1.0
  %v11656 = vrcp.pop %v11655
  %v11657 = vmul.f32 1.0, %v11656
  %vm11658 = vcmask 1024
  %11659 = vst.msk [vmem:[%s8] sm:$0x3] %vm11658, %v11657
  // Predicated region
  $region34: #{cnn_discriminator_forward.1} parent=0 // pred_check
    _
  $region35: #{cnn_discriminator_forward.1} parent=0 // pred_check_branch
    %11661 = sbr.rel (0) target = $region37
  $region36: #{cnn_discriminator_forward.1} parent=0 // pred_region
    _
  $region37: #{cnn_discriminator_forward.1} parent=0 // pred_fallthru
    _
  // Predicated region
  $region38: #{cnn_discriminator_forward.1} parent=0 // pred_check
    _
  $region39: #{cnn_discriminator_forward.1} parent=0 // pred_check_branch
    %11663 = sbr.rel (0) target = $region41
  $region40: #{cnn_discriminator_forward.1} parent=0 // pred_region
    _
  $region41: #{cnn_discriminator_forward.1} parent=0 // pred_fallthru
    _

</llo_original>
